<compile_context>
chip_gen: v7x
topology: tpu7x:2x2x1
jax: 0.10.0
libtpu: 0.0.40
codegen_flags: <defaults>
</compile_context>

<pallas_src>
import jax
import jax.numpy as jnp
from jax.experimental import pallas as pl
from jax.experimental.pallas import tpu as pltpu

IN_FEATURES = 3681                     # 2048 (proj_a) + 1633 (proj_b)
OUT_FEATURES = 2048
PROJ_A_DIM = 2048
PROJ_B_DIM = IN_FEATURES - PROJ_A_DIM  # 1633
PROJ_B_PAD = 1664                      # 13 * 128  (lane aligned)
K_PAD = PROJ_A_DIM + PROJ_B_PAD        # 3712 = 29 * 128
B_PAD = 8                              # full sublane group
TN = 512                               # output-column tile -> 4 grid steps


# ------------------------- Pallas kernel ------------------------------------
def _fused_head_kernel(feat_ref, pa_ref, pb_ref, w_ref, b_ref, o_ref):
    # feat_ref: [B_PAD, C] f32   pa_ref: [C, 2048] f32   pb_ref: [C, 1664] f32
    # w_ref:    [K_PAD, TN] bf16 b_ref:  [1, TN] f32     o_ref:  [B_PAD, TN] f32
    feat = feat_ref[...]
    # synthetic-backbone projections + torch.cat(dim=1); recomputed per output
    # tile (tiny [8,C]x[C,2048] work, hidden under the weight-tile DMA) so the
    # kernel stays correct under megacore 'parallel' sharding of the grid axis.
    xa = jnp.dot(feat, pa_ref[...], preferred_element_type=jnp.float32)
    xb = jnp.dot(feat, pb_ref[...], preferred_element_type=jnp.float32)
    x_base = jnp.concatenate([xa, xb], axis=1).astype(jnp.bfloat16)  # [B_PAD, K_PAD]
    # nn.Dropout() is identity in eval mode.
    acc = jnp.dot(x_base, w_ref[...], preferred_element_type=jnp.float32)
    o_ref[...] = (acc + b_ref[...]).astype(o_ref.dtype)


def fused_head_pallas(feat_pad, proj_a, proj_b_pad, w_t_pad, bias2d):
    """feat_pad: [B_PAD, C] f32, proj_a: [C, 2048] f32, proj_b_pad: [C, 1664] f32,
       w_t_pad: [K_PAD, 2048] bf16 (pre-transposed + zero-padded), bias2d: [1, 2048] f32."""
    b_pad, c = feat_pad.shape
    k_pad, n = w_t_pad.shape
    assert b_pad == B_PAD and k_pad == K_PAD and n == OUT_FEATURES and n % TN == 0

    flops = 2 * b_pad * (c * (PROJ_A_DIM + PROJ_B_PAD) + k_pad * n)
    bytes_accessed = (w_t_pad.size * 2 + feat_pad.size * 4 + proj_a.size * 4
                      + proj_b_pad.size * 4 + bias2d.size * 4 + b_pad * n * 4)

    return pl.pallas_call(
        _fused_head_kernel,
        out_shape=jax.ShapeDtypeStruct((b_pad, n), jnp.float32),
        grid_spec=pltpu.PrefetchScalarGridSpec(
            num_scalar_prefetch=0,
            grid=(n // TN,),
            in_specs=[
                pl.BlockSpec((b_pad, c), lambda j: (0, 0)),          # pooled features
                pl.BlockSpec((c, PROJ_A_DIM), lambda j: (0, 0)),     # proj_a (resident)
                pl.BlockSpec((c, PROJ_B_PAD), lambda j: (0, 0)),     # proj_b (resident)
                pl.BlockSpec((k_pad, TN), lambda j: (0, j)),         # bf16 weight column tile
                pl.BlockSpec((1, TN), lambda j: (0, j)),             # bias tile
            ],
            out_specs=pl.BlockSpec((b_pad, TN), lambda j: (0, j)),
        ),
        compiler_params=pltpu.CompilerParams(
            dimension_semantics=("parallel",),
            vmem_limit_bytes=48 * 1024 * 1024,
        ),
        cost_estimate=pl.CostEstimate(
            flops=flops, transcendentals=0, bytes_accessed=bytes_accessed),
    )(feat_pad, proj_a, proj_b_pad, w_t_pad, bias2d)


# ------------------------- Module wrapper ------------------------------------
def init_params(key, in_channels):
    k1, k2, k3, k4 = jax.random.split(key, 4)
    # TODO(synk): the real self.model is a truncated pretrained AADB checkpoint
    # (children()[:-6]); replaced here by a deterministic synthetic stand-in
    # (GAP + two projections) whose outputs concatenate to 3681 features.
    proj_a = jax.random.normal(k1, (in_channels, PROJ_A_DIM), jnp.float32) * 0.02
    proj_b = jax.random.normal(k2, (in_channels, PROJ_B_DIM), jnp.float32) * 0.02
    # classifier: nn.Linear(3681, 2048), PyTorch weight layout [out, in]
    bound = 1.0 / (IN_FEATURES ** 0.5)
    cls_w = jax.random.uniform(k3, (OUT_FEATURES, IN_FEATURES), jnp.float32, -bound, bound)
    cls_b = jax.random.uniform(k4, (OUT_FEATURES,), jnp.float32, -bound, bound)

    # Kernel-ready tensors, prepared ONCE at init (no per-forward transpose/pad):
    proj_b_pad = jnp.pad(proj_b, ((0, 0), (0, PROJ_B_PAD - PROJ_B_DIM)))          # [C, 1664]
    cls_w_t_pad = jnp.pad(cls_w.T, ((0, K_PAD - IN_FEATURES), (0, 0)))            # [3712, 2048]
    cls_w_t_pad = cls_w_t_pad.astype(jnp.bfloat16)
    cls_b2d = cls_b.reshape(1, OUT_FEATURES)

    return {
        # originals (reference / semantics)
        "proj_a": proj_a, "proj_b": proj_b, "cls_w": cls_w, "cls_b": cls_b,
        # kernel-ready
        "proj_b_pad": proj_b_pad, "cls_w_t_pad": cls_w_t_pad, "cls_b2d": cls_b2d,
    }


def mo_forward(params, x_nchw):
    B, C, H, W = x_nchw.shape
    # synthetic backbone global-average pool (tiny -> plain jnp, per perf review)
    feat = jnp.mean(x_nchw.reshape(B, C, H * W), axis=-1)          # [B, C]
    feat_pad = jnp.pad(feat, ((0, B_PAD - B), (0, 0)))             # [B_PAD, C]
    out_pad = fused_head_pallas(feat_pad, params["proj_a"], params["proj_b_pad"],
                                params["cls_w_t_pad"], params["cls_b2d"])
    return out_pad[:B]                                             # [B, 2048]


if __name__ == "__main__":
    key = jax.random.PRNGKey(0)
    k_in, k_par = jax.random.split(key)

    B, C, H, W = 2, 4, 16, 16
    x = jax.random.normal(k_in, (B, C, H, W), jnp.float32)
    params = init_params(k_par, C)

    out = jax.block_until_ready(mo_forward(params, x))

    # sanity: pure-JAX f32 reference of the same forward pass
    feat = jnp.mean(x.reshape(B, C, H * W), axis=-1)
    x_base = jnp.concatenate((feat @ params["proj_a"], feat @ params["proj_b"]), axis=1)
    ref = x_base @ params["cls_w"].T + params["cls_b"]
    assert out.shape == (B, OUT_FEATURES)
    assert jnp.allclose(out, ref, atol=2e-3, rtol=2e-2), float(jnp.max(jnp.abs(out - ref)))

    print("KERNEL_OK")
</pallas_src>

<mosaic_0001>
module attributes {stable_mosaic.version = 11 : i64} {
  func.func @_fused_head_kernel(%arg0: i32, %arg1: memref<8x4xf32, #tpu.memory_space<vmem>>, %arg2: memref<4x2048xf32, #tpu.memory_space<vmem>>, %arg3: memref<4x1664xf32, #tpu.memory_space<vmem>>, %arg4: memref<3712x512xbf16, #tpu.memory_space<vmem>>, %arg5: memref<1x512xf32, #tpu.memory_space<vmem>>, %arg6: memref<8x512xf32, #tpu.memory_space<vmem>>) attributes {dimension_semantics = [#tpu.dimension_semantics<parallel>], iteration_bounds = array<i64: 4>, scalar_prefetch = 0 : i64, scratch_operands = 0 : i64, tpu.core_type = #tpu.core_type<tc>, window_params = [{pipeline_mode = #tpu.pipeline_mode<synchronous>, transform_indices = @transform_0, window_bounds = array<i64: 8, 4>}, {pipeline_mode = #tpu.pipeline_mode<synchronous>, transform_indices = @transform_1, window_bounds = array<i64: 4, 2048>}, {pipeline_mode = #tpu.pipeline_mode<synchronous>, transform_indices = @transform_2, window_bounds = array<i64: 4, 1664>}, {transform_indices = @transform_3, window_bounds = array<i64: 3712, 512>}, {transform_indices = @transform_4, window_bounds = array<i64: 1, 512>}, {transform_indices = @transform_5, window_bounds = array<i64: 8, 512>}]} {
    %c0 = arith.constant 0 : index
    %c0_0 = arith.constant 0 : index
    %0 = vector.load %arg1[%c0, %c0_0] : memref<8x4xf32, #tpu.memory_space<vmem>>, vector<8x4xf32>
    %c0_1 = arith.constant 0 : index
    %c0_2 = arith.constant 0 : index
    %1 = vector.load %arg2[%c0_1, %c0_2] : memref<4x2048xf32, #tpu.memory_space<vmem>>, vector<4x2048xf32>
    %cst = arith.constant dense<0.000000e+00> : vector<8x2048xf32>
    %2 = tpu.matmul %0, %1, %cst {dimension_numbers = #tpu.dot_dimension_numbers<[1], [0], [0], [1], [0, 0, 1, 1], [], []>} : vector<8x4xf32>, vector<4x2048xf32>, vector<8x2048xf32> -> vector<8x2048xf32>
    %c0_3 = arith.constant 0 : index
    %c0_4 = arith.constant 0 : index
    %3 = vector.load %arg3[%c0_3, %c0_4] : memref<4x1664xf32, #tpu.memory_space<vmem>>, vector<4x1664xf32>
    %cst_5 = arith.constant dense<0.000000e+00> : vector<8x1664xf32>
    %4 = tpu.matmul %0, %3, %cst_5 {dimension_numbers = #tpu.dot_dimension_numbers<[1], [0], [0], [1], [0, 0, 1, 1], [], []>} : vector<8x4xf32>, vector<4x1664xf32>, vector<8x1664xf32> -> vector<8x1664xf32>
    %5 = tpu.concatenate %2, %4 in 1 : vector<8x2048xf32>, vector<8x1664xf32> -> vector<8x3712xf32>
    %6 = arith.truncf %5 : vector<8x3712xf32> to vector<8x3712xbf16>
    %c0_6 = arith.constant 0 : index
    %c0_7 = arith.constant 0 : index
    %7 = vector.load %arg4[%c0_6, %c0_7] : memref<3712x512xbf16, #tpu.memory_space<vmem>>, vector<3712x512xbf16>
    %cst_8 = arith.constant dense<0.000000e+00> : vector<8x512xf32>
    %8 = tpu.matmul %6, %7, %cst_8 {dimension_numbers = #tpu.dot_dimension_numbers<[1], [0], [0], [1], [0, 0, 1, 1], [], []>} : vector<8x3712xbf16>, vector<3712x512xbf16>, vector<8x512xf32> -> vector<8x512xf32>
    %c0_9 = arith.constant 0 : index
    %c0_10 = arith.constant 0 : index
    %9 = vector.load %arg5[%c0_9, %c0_10] : memref<1x512xf32, #tpu.memory_space<vmem>>, vector<1x512xf32>
    %10 = vector.broadcast %9 : vector<1x512xf32> to vector<8x512xf32>
    %11 = arith.addf %8, %10 : vector<8x512xf32>
    %c0_11 = arith.constant 0 : index
    %c0_12 = arith.constant 0 : index
    %12 = vector.load %arg6[%c0_11, %c0_12] : memref<8x512xf32, #tpu.memory_space<vmem>>, vector<8x512xf32>
    tpu.vector_store %arg6[%c0_11, %c0_12], %11 {strides = array<i32>} : memref<8x512xf32, #tpu.memory_space<vmem>>, vector<8x512xf32>,
    return
  }
  func.func @transform_0(%arg0: i32) -> (i32, i32) {
    %c0_i32 = arith.constant 0 : i32
    %c0_i32_0 = arith.constant 0 : i32
    %c0_i32_1 = arith.constant 0 : i32
    return %c0_i32, %c0_i32_0 : i32, i32
  }
  func.func @transform_1(%arg0: i32) -> (i32, i32) {
    %c0_i32 = arith.constant 0 : i32
    %c0_i32_0 = arith.constant 0 : i32
    %c0_i32_1 = arith.constant 0 : i32
    return %c0_i32, %c0_i32_0 : i32, i32
  }
  func.func @transform_2(%arg0: i32) -> (i32, i32) {
    %c0_i32 = arith.constant 0 : i32
    %c0_i32_0 = arith.constant 0 : i32
    %c0_i32_1 = arith.constant 0 : i32
    return %c0_i32, %c0_i32_0 : i32, i32
  }
  func.func @transform_3(%arg0: i32) -> (i32, i32) {
    %c0_i32 = arith.constant 0 : i32
    %c0_i32_0 = arith.constant 0 : i32
    return %c0_i32, %arg0 : i32, i32
  }
  func.func @transform_4(%arg0: i32) -> (i32, i32) {
    %c0_i32 = arith.constant 0 : i32
    %c0_i32_0 = arith.constant 0 : i32
    return %c0_i32, %arg0 : i32, i32
  }
  func.func @transform_5(%arg0: i32) -> (i32, i32) {
    %c0_i32 = arith.constant 0 : i32
    %c0_i32_0 = arith.constant 0 : i32
    return %c0_i32, %arg0 : i32, i32
  }
}

</mosaic_0001>

<llo_original>
// kernel: tpu_custom_call.1
$region0: #{tpu_custom_call.1}
  #allocation0 [shape = 'u32[]', space=smem, size = 0x4, offset = 0x4, fixed_abs, tag = 'smem constant byte address 0x4 - core index']
  #allocation1 [shape = 'u32[144,128]{1,0:T(1,128)}', space=vmem, size = 0x12000, scoped, tag = 'internal scratch']
  %s0 = inlined_call_operand.vmem [shape: f32[8,4], index: 0, kind: input, shape index: {}]
  %s1 = inlined_call_operand.hbm [shape: f32[4,2048], index: 1, kind: input, shape index: {}]
  %s2 = inlined_call_operand.hbm [shape: f32[4,1664], index: 2, kind: input, shape index: {}]
  %s3 = inlined_call_operand.hbm [shape: bf16[3712,2048], index: 3, kind: input, shape index: {}]
  %s4 = inlined_call_operand.hbm [shape: f32[1,2048], index: 4, kind: input, shape index: {}]
  %s5 = inlined_call_operand.hbm [shape: f32[8,2048], index: 5, kind: output, shape index: {}]
  %s6 = sld [smem:[#allocation0]]
  $region69: #{tpu_custom_call.1} parent=0
    _
  %s8 = ssub.s32 1, %s6
  %s9 = scalar_select 0, %s8, %s6
  $region1: #{tpu_custom_call.1} parent=0
    #allocation2 [shape = 'u8[32768]{0}', space=vmem, size = 0x8000, scoped, tag = 'input window, operand 1, single buffered']
    #allocation3 [shape = 's32[2]{0}', space=sflag, size = 0x8, scoped, tag = 'scoped memory for tpu_custom_call.1']
    #allocation4 [shape = 's32[2]{0}', space=sflag, size = 0x8, scoped, tag = 'scoped memory for tpu_custom_call.1']
    #allocation5 [shape = 'u8[26624]{0}', space=vmem, size = 0x6800, scoped, tag = 'input window, operand 2, single buffered']
    #allocation6 [shape = 's32[1]{0}', space=sflag, size = 0x4, scoped, tag = 'scoped memory for tpu_custom_call.1']
    #allocation7 [shape = 'u8[7602176]{0}', space=vmem, size = 0x740000, scoped, tag = 'input window, operand 3']
    #allocation8 [shape = 'u8[4096]{0}', space=vmem, size = 0x1000, scoped, tag = 'input window, operand 4']
    #allocation9 [shape = 'u8[32768]{0}', space=vmem, size = 0x8000, scoped, tag = 'output window, operand 0']
    %10 = vsyncpa [#allocation3], 0
    %11 = vsyncpa [#allocation6], 0
    %12 = vsyncpa [#allocation4], 0
    %s13 = scalar_lea.sflag [#allocation4], 1
    %14 = vsyncpa %s13, 0
    loop: start=0, step=1, limit=6
    $region2: #{tpu_custom_call.1} parent=1 // loop_pre_header
      _
    $region3: #{tpu_custom_call.1} parent=1 // loop_header
      %s16 = sphi 0, %s20
      %p17 = scmp.ge.s32.totalorder %s16, 6
      %s24 = sphi 0, %s24
      %s26 = sphi 0, %s24
      %s27 = sphi 0, %s26
      %s41 = sphi 0, %s27
      %s45 = sphi 0, %s45
      %s47 = sphi 0, %s45
      %s48 = sphi 0, %s47
      %s62 = sphi 0, %s48
      %s66 = sphi 0, %s66
      %s68 = sphi 0, %s66
      %s69 = sphi 0, %s68
      %s83 = sphi 0, %s69
      %s89 = sphi 0, %s91
      %s92 = sphi 0, %s89
      %s93 = sphi 0, %s92
      %s109 = sphi 0, %s93
      %s115 = sphi 0, %s117
      %s118 = sphi 0, %s115
      %s119 = sphi 0, %s118
      %s135 = sphi 0, %s119
      %s141 = sphi 0, %s143
      %s144 = sphi 0, %s141
      %s145 = sphi 0, %s144
      %s161 = sphi 0, %s145
    $region4: #{tpu_custom_call.1} parent=1 // loop_header_branch
      %19 = sbr.rel (%p17) target = $region8
    $region5: #{tpu_custom_call.1} parent=1 // loop_body
      %s21 = ssub.s32 %s16, 1
      %s22 = ssub.s32 %s16, 2
      %s23 = sadd.s32 %s16, 1
      %s25 = sadd.s32 %s24, 1
      %p28 = scmp.eq.s32.totalorder %s16, 3
      %p29 = scmp.ne.s32.totalorder %s24, %s26
      %p30 = scmp.eq.s32.totalorder %s16, 0
      %p31 = por %p29, %p30
      %p32 = scmp.ne.s32.totalorder %s24, %s26
      %p33 = scmp.eq.s32.totalorder %s21, 3
      %p34 = por %p32, %p33
      %p35 = scmp.ne.s32.totalorder %s26, %s27
      %p36 = scmp.eq.s32.totalorder %s21, 0
      %p37 = por %p35, %p36
      %p38 = scmp.ne.s32.totalorder %s26, %s27
      %p39 = scmp.eq.s32.totalorder %s22, 3
      %p40 = por %p38, %p39
      %p42 = scmp.ne.s32.totalorder %s27, %s41
      %p43 = scmp.eq.s32.totalorder %s22, 0
      %p44 = por %p42, %p43
      %s46 = sadd.s32 %s45, 1
      %p49 = scmp.eq.s32.totalorder %s16, 3
      %p50 = scmp.ne.s32.totalorder %s45, %s47
      %p51 = scmp.eq.s32.totalorder %s16, 0
      %p52 = por %p50, %p51
      %p53 = scmp.ne.s32.totalorder %s45, %s47
      %p54 = scmp.eq.s32.totalorder %s21, 3
      %p55 = por %p53, %p54
      %p56 = scmp.ne.s32.totalorder %s47, %s48
      %p57 = scmp.eq.s32.totalorder %s21, 0
      %p58 = por %p56, %p57
      %p59 = scmp.ne.s32.totalorder %s47, %s48
      %p60 = scmp.eq.s32.totalorder %s22, 3
      %p61 = por %p59, %p60
      %p63 = scmp.ne.s32.totalorder %s48, %s62
      %p64 = scmp.eq.s32.totalorder %s22, 0
      %p65 = por %p63, %p64
      %s67 = sadd.s32 %s66, 1
      %p70 = scmp.eq.s32.totalorder %s16, 3
      %p71 = scmp.ne.s32.totalorder %s66, %s68
      %p72 = scmp.eq.s32.totalorder %s16, 0
      %p73 = por %p71, %p72
      %p74 = scmp.ne.s32.totalorder %s66, %s68
      %p75 = scmp.eq.s32.totalorder %s21, 3
      %p76 = por %p74, %p75
      %p77 = scmp.ne.s32.totalorder %s68, %s69
      %p78 = scmp.eq.s32.totalorder %s21, 0
      %p79 = por %p77, %p78
      %p80 = scmp.ne.s32.totalorder %s68, %s69
      %p81 = scmp.eq.s32.totalorder %s22, 3
      %p82 = por %p80, %p81
      %p84 = scmp.ne.s32.totalorder %s69, %s83
      %p85 = scmp.eq.s32.totalorder %s22, 0
      %p86 = por %p84, %p85
      %s87 = ssub.s32 %s16, %s23
      %p88 = scmp.eq.s32.totalorder %s87, 0
      %s90 = sadd.s32 %s89, 1
      %s91 = scalar_select %p88, %s89, %s90
      %p94 = pneg %p88
      %p95 = scmp.eq.s32.totalorder %s16, 3
      %p96 = por %p94, %p95
      %p97 = scmp.ne.s32.totalorder %s89, %s92
      %p98 = scmp.eq.s32.totalorder %s16, 0
      %p99 = por %p97, %p98
      %p100 = scmp.ne.s32.totalorder %s89, %s92
      %p101 = scmp.eq.s32.totalorder %s21, 3
      %p102 = por %p100, %p101
      %p103 = scmp.ne.s32.totalorder %s92, %s93
      %p104 = scmp.eq.s32.totalorder %s21, 0
      %p105 = por %p103, %p104
      %p106 = scmp.ne.s32.totalorder %s92, %s93
      %p107 = scmp.eq.s32.totalorder %s22, 3
      %p108 = por %p106, %p107
      %p110 = scmp.ne.s32.totalorder %s93, %s109
      %p111 = scmp.eq.s32.totalorder %s22, 0
      %p112 = por %p110, %p111
      %s113 = ssub.s32 %s16, %s23
      %p114 = scmp.eq.s32.totalorder %s113, 0
      %s116 = sadd.s32 %s115, 1
      %s117 = scalar_select %p114, %s115, %s116
      %p120 = pneg %p114
      %p121 = scmp.eq.s32.totalorder %s16, 3
      %p122 = por %p120, %p121
      %p123 = scmp.ne.s32.totalorder %s115, %s118
      %p124 = scmp.eq.s32.totalorder %s16, 0
      %p125 = por %p123, %p124
      %p126 = scmp.ne.s32.totalorder %s115, %s118
      %p127 = scmp.eq.s32.totalorder %s21, 3
      %p128 = por %p126, %p127
      %p129 = scmp.ne.s32.totalorder %s118, %s119
      %p130 = scmp.eq.s32.totalorder %s21, 0
      %p131 = por %p129, %p130
      %p132 = scmp.ne.s32.totalorder %s118, %s119
      %p133 = scmp.eq.s32.totalorder %s22, 3
      %p134 = por %p132, %p133
      %p136 = scmp.ne.s32.totalorder %s119, %s135
      %p137 = scmp.eq.s32.totalorder %s22, 0
      %p138 = por %p136, %p137
      %s139 = ssub.s32 %s16, %s23
      %p140 = scmp.eq.s32.totalorder %s139, 0
      %s142 = sadd.s32 %s141, 1
      %s143 = scalar_select %p140, %s141, %s142
      %p146 = pneg %p140
      %p147 = scmp.eq.s32.totalorder %s16, 3
      %p148 = por %p146, %p147
      %p149 = scmp.ne.s32.totalorder %s141, %s144
      %p150 = scmp.eq.s32.totalorder %s16, 0
      %p151 = por %p149, %p150
      %p152 = scmp.ne.s32.totalorder %s141, %s144
      %p153 = scmp.eq.s32.totalorder %s21, 3
      %p154 = por %p152, %p153
      %p155 = scmp.ne.s32.totalorder %s144, %s145
      %p156 = scmp.eq.s32.totalorder %s21, 0
      %p157 = por %p155, %p156
      %p158 = scmp.ne.s32.totalorder %s144, %s145
      %p159 = scmp.eq.s32.totalorder %s22, 3
      %p160 = por %p158, %p159
      %p162 = scmp.ne.s32.totalorder %s145, %s161
      %p163 = scmp.eq.s32.totalorder %s22, 0
      %p164 = por %p162, %p163
      %p165 = scmp.le.s32.totalorder 1, %s16
      %p166 = scmp.lt.s32.totalorder %s16, 5
      %p167 = pnand %p165, %p166
      %p168 = pneg %p167
      // Predicated region
      $region9: #{tpu_custom_call.1} parent=5 // pred_check
        _
      $region10: #{tpu_custom_call.1} parent=5 // pred_check_branch
        %170 = sbr.rel (%p167) target = $region12
      $region11: #{tpu_custom_call.1} parent=5 // pred_region
        %s171 = ssub.s32 %s16, 1
        // Predicated region
        $region13: #{tpu_custom_call.1} parent=11 // pred_check
          %p172 = pneg %p37
        $region14: #{tpu_custom_call.1} parent=11 // pred_check_branch
          %174 = sbr.rel (%p172) target = $region16
        $region15: #{tpu_custom_call.1} parent=11 // pred_region
          _
        $region16: #{tpu_custom_call.1} parent=11 // pred_fallthru
          _
        // Predicated region
        $region17: #{tpu_custom_call.1} parent=11 // pred_check
          %p175 = pneg %p58
        $region18: #{tpu_custom_call.1} parent=11 // pred_check_branch
          %177 = sbr.rel (%p175) target = $region20
        $region19: #{tpu_custom_call.1} parent=11 // pred_region
          %s179 = ssub.s32 1024, 1024
          %180 = vsyncadd [#allocation3], %s179
          %s182 = sshll.u32 [#allocation2], 4
          %s183 = int_to_ptr.vmem [resolvable:$true] %s182
          %185 = dma.hbm_to_vmem [thread:$0]  %s1, 1024, %s183, [#allocation3]
        $region20: #{tpu_custom_call.1} parent=11 // pred_fallthru
          _
        // Predicated region
        $region21: #{tpu_custom_call.1} parent=11 // pred_check
          %p186 = pneg %p79
        $region22: #{tpu_custom_call.1} parent=11 // pred_check_branch
          %188 = sbr.rel (%p186) target = $region24
        $region23: #{tpu_custom_call.1} parent=11 // pred_region
          %s190 = ssub.s32 832, 832
          %191 = vsyncadd [#allocation6], %s190
          %s193 = sshll.u32 [#allocation5], 4
          %s194 = int_to_ptr.vmem [resolvable:$true] %s193
          %196 = dma.hbm_to_vmem [thread:$0]  %s2, 832, %s194, [#allocation6]
        $region24: #{tpu_custom_call.1} parent=11 // pred_fallthru
          _
      $region12: #{tpu_custom_call.1} parent=5 // pred_fallthru
        _
      %p197 = scmp.lt.s32.totalorder %s16, 4
      // Predicated region
      $region25: #{tpu_custom_call.1} parent=5 // pred_check
        %p198 = pneg %p197
      $region26: #{tpu_custom_call.1} parent=5 // pred_check_branch
        %200 = sbr.rel (%p198) target = $region28
      $region27: #{tpu_custom_call.1} parent=5 // pred_region
        // Predicated region
        $region29: #{tpu_custom_call.1} parent=27 // pred_check
          %p201 = pneg %p99
        $region30: #{tpu_custom_call.1} parent=27 // pred_check_branch
          %203 = sbr.rel (%p201) target = $region32
        $region31: #{tpu_custom_call.1} parent=27 // pred_region
          %s204 = sand.u32 %s16, 1
          %s205 = scalar_lea.sflag [#allocation3], %s204
          %s206 = sand.u32 %s89, 1
          %s207 = smul.addr %s206, 7424
          %s208 = scalar_lea.vmem [#allocation7], %s207
          %s209 = smul.u32 4, %s16
          %s211 = ssub.s32 118784, 118784
          %212 = vsyncadd %s205, %s211
          %s213 = smul.addr %s209, 64
          %s214 = scalar_lea.hbm %s3, %s213
          %s215 = sshll.u32 %s208, 4
          %s216 = int_to_ptr.vmem [resolvable:$true] %s215
          %221 = dma.hbm_to_vmem [thread:$0]  %s214, 118784, %s216, %s205, 1024, 256, 16
        $region32: #{tpu_custom_call.1} parent=27 // pred_fallthru
          _
        // Predicated region
        $region33: #{tpu_custom_call.1} parent=27 // pred_check
          %p222 = pneg %p125
        $region34: #{tpu_custom_call.1} parent=27 // pred_check_branch
          %224 = sbr.rel (%p222) target = $region36
        $region35: #{tpu_custom_call.1} parent=27 // pred_region
          %s225 = sand.u32 %s16, 1
          %s226 = scalar_lea.sflag [#allocation3], %s225
          %s227 = sand.u32 %s115, 1
          %s228 = smul.addr %s227, 4
          %s229 = scalar_lea.vmem [#allocation8], %s228
          %s230 = smul.u32 4, %s16
          %s232 = ssub.s32 64, 64
          %233 = vsyncadd %s226, %s232
          %s234 = smul.addr %s230, 16
          %s235 = scalar_lea.hbm %s4, %s234
          %s237 = sshll.u32 %s229, 4
          %s238 = int_to_ptr.vmem [resolvable:$true] %s237
          %240 = dma.hbm_to_vmem [thread:$0]  %s235, 64, %s238, %s226
        $region36: #{tpu_custom_call.1} parent=27 // pred_fallthru
          _
      $region28: #{tpu_custom_call.1} parent=5 // pred_fallthru
        _
      %p241 = scmp.le.s32.totalorder 1, %s16
      %p242 = scmp.lt.s32.totalorder %s16, 5
      %p243 = pnand %p241, %p242
      %p244 = pneg %p243
      // Predicated region
      $region37: #{tpu_custom_call.1} parent=5 // pred_check
        _
      $region38: #{tpu_custom_call.1} parent=5 // pred_check_branch
        %246 = sbr.rel (%p243) target = $region40
      $region39: #{tpu_custom_call.1} parent=5 // pred_region
        %s247 = ssub.s32 %s16, 1
        // Predicated region
        $region41: #{tpu_custom_call.1} parent=39 // pred_check
          %p248 = pneg %p58
        $region42: #{tpu_custom_call.1} parent=39 // pred_check_branch
          %250 = sbr.rel (%p248) target = $region44
        $region43: #{tpu_custom_call.1} parent=39 // pred_region
          %251 = dma.done [#allocation3], 1024
        $region44: #{tpu_custom_call.1} parent=39 // pred_fallthru
          _
        // Predicated region
        $region45: #{tpu_custom_call.1} parent=39 // pred_check
          %p252 = pneg %p79
        $region46: #{tpu_custom_call.1} parent=39 // pred_check_branch
          %254 = sbr.rel (%p252) target = $region48
        $region47: #{tpu_custom_call.1} parent=39 // pred_region
          %255 = dma.done [#allocation6], 832
        $region48: #{tpu_custom_call.1} parent=39 // pred_fallthru
          _
        %s256 = sand.u32 %s21, 1
        %s257 = scalar_lea.sflag [#allocation3], %s256
        %s258 = sand.u32 %s92, 1
        %s259 = smul.addr %s258, 7424
        %s260 = scalar_lea.vmem [#allocation7], %s259
        // Predicated region
        $region49: #{tpu_custom_call.1} parent=39 // pred_check
          %p261 = pneg %p105
        $region50: #{tpu_custom_call.1} parent=39 // pred_check_branch
          %263 = sbr.rel (%p261) target = $region52
        $region51: #{tpu_custom_call.1} parent=39 // pred_region
          %264 = dma.done %s257, 118784
        $region52: #{tpu_custom_call.1} parent=39 // pred_fallthru
          _
        %s265 = sand.u32 %s21, 1
        %s266 = scalar_lea.sflag [#allocation3], %s265
        %s267 = sand.u32 %s118, 1
        %s268 = smul.addr %s267, 4
        %s269 = scalar_lea.vmem [#allocation8], %s268
        // Predicated region
        $region53: #{tpu_custom_call.1} parent=39 // pred_check
          %p270 = pneg %p131
        $region54: #{tpu_custom_call.1} parent=39 // pred_check_branch
          %272 = sbr.rel (%p270) target = $region56
        $region55: #{tpu_custom_call.1} parent=39 // pred_region
          %273 = dma.done %s266, 64
        $region56: #{tpu_custom_call.1} parent=39 // pred_fallthru
          _
        %p274 = pneg %p37
        %p275 = pneg %p34
        %p276 = pneg %p58
        %p277 = pneg %p55
        %p278 = pneg %p79
        %p279 = pneg %p76
        %s280 = sand.u32 %s21, 1
        %s281 = scalar_lea.sflag [#allocation3], %s280
        %s282 = sand.u32 %s92, 1
        %s283 = smul.addr %s282, 7424
        %s284 = scalar_lea.vmem [#allocation7], %s283
        %p285 = pneg %p105
        %p286 = pneg %p102
        %s287 = sand.u32 %s21, 1
        %s288 = scalar_lea.sflag [#allocation3], %s287
        %s289 = sand.u32 %s118, 1
        %s290 = smul.addr %s289, 4
        %s291 = scalar_lea.vmem [#allocation8], %s290
        %p292 = pneg %p131
        %p293 = pneg %p128
        %p294 = pneg %p157
        %p295 = pneg %p154
        %s296 = sand.u32 %s144, 1
        %s297 = scalar_lea.sflag [#allocation4], %s296
        %s298 = sand.u32 %s144, 1
        %s299 = smul.addr %s298, 32
        %s300 = scalar_lea.vmem [#allocation9], %s299
        %s301 = smul.u32 4, %s21
        %s302 = smul.u32 4, %s21
        %s303 = smul.u32 4, %s21
        %v305 = vld [vmem:[%s0] sm:$0xff]
        %v306 = vld [vmem:[#allocation2] sm:$0xff]
        %v307 = vld [vmem:[#allocation2 + $0x8] sm:$0xff]
        %v308 = vld [vmem:[#allocation2 + $0x10] sm:$0xff]
        %v309 = vld [vmem:[#allocation2 + $0x18] sm:$0xff]
        %v310 = vld [vmem:[#allocation2 + $0x20] sm:$0xff]
        %v311 = vld [vmem:[#allocation2 + $0x28] sm:$0xff]
        %v312 = vld [vmem:[#allocation2 + $0x30] sm:$0xff]
        %v313 = vld [vmem:[#allocation2 + $0x38] sm:$0xff]
        %v322 = vcombine.high %v306, %v306
        %v323 = vcombine.high %v307, %v307
        %v324 = vcombine.high %v308, %v308
        %v325 = vcombine.high %v309, %v309
        %v326 = vcombine.high %v310, %v310
        %v327 = vcombine.high %v311, %v311
        %v328 = vcombine.high %v312, %v312
        %v329 = vcombine.high %v313, %v313
        %vm330 = vcmask 31744
        %v332 = vsel %vm330, %v305, 0
        %vm334 = vcmask 1043456
        %v335 = vsel %vm334, %v306, 0
        %v337 = vsel %vm334, %v322, 0
        %v339 = vsel %vm334, %v307, 0
        %v341 = vsel %vm334, %v323, 0
        %v343 = vsel %vm334, %v308, 0
        %v345 = vsel %vm334, %v324, 0
        %v347 = vsel %vm334, %v309, 0
        %v349 = vsel %vm334, %v325, 0
        %v351 = vsel %vm334, %v310, 0
        %v353 = vsel %vm334, %v326, 0
        %v355 = vsel %vm334, %v311, 0
        %v357 = vsel %vm334, %v327, 0
        %v359 = vsel %vm334, %v312, 0
        %v361 = vsel %vm334, %v328, 0
        %v363 = vsel %vm334, %v313, 0
        %v365 = vsel %vm334, %v329, 0
        %367 = vmatprep.subr.mxu0 %v337
        %368 = vmatpush1.msra.mxu0 %v335
        %369 = vmatprep.subr.mxu0 0.0
        %370 = vmatpush1.msra.mxu0 0.0
        %371 = vmatprep.subr.mxu0 0.0
        %372 = vmatpush1.msra.mxu0 0.0
        %373 = vmatprep.subr.mxu0 0.0
        %374 = vmatpush1.msra.mxu0 0.0
        %375 = vmatprep.subr.mxu0 0.0
        %376 = vmatpush1.msra.mxu0 0.0
        %377 = vmatprep.subr.mxu0 0.0
        %378 = vmatpush1.msra.mxu0 0.0
        %379 = vmatprep.subr.mxu0 0.0
        %380 = vmatpush1.msra.mxu0 0.0
        %381 = vmatprep.subr.mxu0 0.0
        %382 = vmatpush1.msra.mxu0 0.0
        %383 = vmatprep.subr.mxu0 0.0
        %384 = vmatpush1.msra.mxu0 0.0
        %385 = vmatprep.subr.mxu0 0.0
        %386 = vmatpush1.msra.mxu0 0.0
        %387 = vmatprep.subr.mxu0 0.0
        %388 = vmatpush1.msra.mxu0 0.0
        %389 = vmatprep.subr.mxu0 0.0
        %390 = vmatpush1.msra.mxu0 0.0
        %391 = vmatprep.subr.mxu0 0.0
        %392 = vmatpush1.msra.mxu0 0.0
        %393 = vmatprep.subr.mxu0 0.0
        %394 = vmatpush1.msra.mxu0 0.0
        %395 = vmatprep.subr.mxu0 0.0
        %396 = vmatpush1.msra.mxu0 0.0
        %397 = vmatprep.subr.mxu0 0.0
        %398 = vmatpush1.msra.mxu0 0.0
        %399 = vmatprep.subr.mxu0 0.0
        %400 = vmatpush1.msra.mxu0 0.0
        %401 = vmatprep.subr.mxu0 0.0
        %402 = vmatpush1.msra.mxu0 0.0
        %403 = vmatprep.subr.mxu0 0.0
        %404 = vmatpush1.msra.mxu0 0.0
        %405 = vmatprep.subr.mxu0 0.0
        %406 = vmatpush1.msra.mxu0 0.0
        %407 = vmatprep.subr.mxu0 0.0
        %408 = vmatpush1.msra.mxu0 0.0
        %409 = vmatprep.subr.mxu0 0.0
        %410 = vmatpush1.msra.mxu0 0.0
        %411 = vmatprep.subr.mxu0 0.0
        %412 = vmatpush1.msra.mxu0 0.0
        %413 = vmatprep.subr.mxu0 0.0
        %414 = vmatpush1.msra.mxu0 0.0
        %415 = vmatprep.subr.mxu0 0.0
        %416 = vmatpush1.msra.mxu0 0.0
        %417 = vmatprep.subr.mxu0 0.0
        %418 = vmatpush1.msra.mxu0 0.0
        %419 = vmatprep.subr.mxu0 0.0
        %420 = vmatpush1.msra.mxu0 0.0
        %421 = vmatprep.subr.mxu0 0.0
        %422 = vmatpush1.msra.mxu0 0.0
        %423 = vmatprep.subr.mxu0 0.0
        %424 = vmatpush1.msra.mxu0 0.0
        %425 = vmatprep.subr.mxu0 0.0
        %426 = vmatpush1.msra.mxu0 0.0
        %427 = vmatprep.subr.mxu0 0.0
        %428 = vmatpush1.msra.mxu0 0.0
        %429 = vmatprep.subr.mxu0 0.0
        %430 = vmatpush1.msra.mxu0 0.0
        %431 = vmatprep.mubr.f32.mxu0 0.0
        %432 = vmatmul.mubr.f32.gmra.mrb[0].mxu0 %v332
        %v433 = vpop.f32.mrb[0].mxu0
        %v434 = vadd.f32 0.0, %v433
        %v435 = vpop.f32.mrb[0].mxu0
        %v436 = vadd.f32 0.0, %v435
        %437 = vdwg.mxu0
        %438 = vmatprep.subr.mxu0 %v341
        %439 = vmatpush1.msra.mxu0 %v339
        %440 = vmatprep.subr.mxu0 0.0
        %441 = vmatpush1.msra.mxu0 0.0
        %442 = vmatprep.subr.mxu0 0.0
        %443 = vmatpush1.msra.mxu0 0.0
        %444 = vmatprep.subr.mxu0 0.0
        %445 = vmatpush1.msra.mxu0 0.0
        %446 = vmatprep.subr.mxu0 0.0
        %447 = vmatpush1.msra.mxu0 0.0
        %448 = vmatprep.subr.mxu0 0.0
        %449 = vmatpush1.msra.mxu0 0.0
        %450 = vmatprep.subr.mxu0 0.0
        %451 = vmatpush1.msra.mxu0 0.0
        %452 = vmatprep.subr.mxu0 0.0
        %453 = vmatpush1.msra.mxu0 0.0
        %454 = vmatprep.subr.mxu0 0.0
        %455 = vmatpush1.msra.mxu0 0.0
        %456 = vmatprep.subr.mxu0 0.0
        %457 = vmatpush1.msra.mxu0 0.0
        %458 = vmatprep.subr.mxu0 0.0
        %459 = vmatpush1.msra.mxu0 0.0
        %460 = vmatprep.subr.mxu0 0.0
        %461 = vmatpush1.msra.mxu0 0.0
        %462 = vmatprep.subr.mxu0 0.0
        %463 = vmatpush1.msra.mxu0 0.0
        %464 = vmatprep.subr.mxu0 0.0
        %465 = vmatpush1.msra.mxu0 0.0
        %466 = vmatprep.subr.mxu0 0.0
        %467 = vmatpush1.msra.mxu0 0.0
        %468 = vmatprep.subr.mxu0 0.0
        %469 = vmatpush1.msra.mxu0 0.0
        %470 = vmatprep.subr.mxu0 0.0
        %471 = vmatpush1.msra.mxu0 0.0
        %472 = vmatprep.subr.mxu0 0.0
        %473 = vmatpush1.msra.mxu0 0.0
        %474 = vmatprep.subr.mxu0 0.0
        %475 = vmatpush1.msra.mxu0 0.0
        %476 = vmatprep.subr.mxu0 0.0
        %477 = vmatpush1.msra.mxu0 0.0
        %478 = vmatprep.subr.mxu0 0.0
        %479 = vmatpush1.msra.mxu0 0.0
        %480 = vmatprep.subr.mxu0 0.0
        %481 = vmatpush1.msra.mxu0 0.0
        %482 = vmatprep.subr.mxu0 0.0
        %483 = vmatpush1.msra.mxu0 0.0
        %484 = vmatprep.subr.mxu0 0.0
        %485 = vmatpush1.msra.mxu0 0.0
        %486 = vmatprep.subr.mxu0 0.0
        %487 = vmatpush1.msra.mxu0 0.0
        %488 = vmatprep.subr.mxu0 0.0
        %489 = vmatpush1.msra.mxu0 0.0
        %490 = vmatprep.subr.mxu0 0.0
        %491 = vmatpush1.msra.mxu0 0.0
        %492 = vmatprep.subr.mxu0 0.0
        %493 = vmatpush1.msra.mxu0 0.0
        %494 = vmatprep.subr.mxu0 0.0
        %495 = vmatpush1.msra.mxu0 0.0
        %496 = vmatprep.subr.mxu0 0.0
        %497 = vmatpush1.msra.mxu0 0.0
        %498 = vmatprep.subr.mxu0 0.0
        %499 = vmatpush1.msra.mxu0 0.0
        %500 = vmatprep.subr.mxu0 0.0
        %501 = vmatpush1.msra.mxu0 0.0
        %502 = vmatprep.mubr.f32.mxu0 0.0
        %503 = vmatmul.mubr.f32.gmra.mrb[0].mxu0 %v332
        %v504 = vpop.f32.mrb[0].mxu0
        %v505 = vadd.f32 0.0, %v504
        %v506 = vpop.f32.mrb[0].mxu0
        %v507 = vadd.f32 0.0, %v506
        %508 = vdwg.mxu0
        %509 = vmatprep.subr.mxu0 %v345
        %510 = vmatpush1.msra.mxu0 %v343
        %511 = vmatprep.subr.mxu0 0.0
        %512 = vmatpush1.msra.mxu0 0.0
        %513 = vmatprep.subr.mxu0 0.0
        %514 = vmatpush1.msra.mxu0 0.0
        %515 = vmatprep.subr.mxu0 0.0
        %516 = vmatpush1.msra.mxu0 0.0
        %517 = vmatprep.subr.mxu0 0.0
        %518 = vmatpush1.msra.mxu0 0.0
        %519 = vmatprep.subr.mxu0 0.0
        %520 = vmatpush1.msra.mxu0 0.0
        %521 = vmatprep.subr.mxu0 0.0
        %522 = vmatpush1.msra.mxu0 0.0
        %523 = vmatprep.subr.mxu0 0.0
        %524 = vmatpush1.msra.mxu0 0.0
        %525 = vmatprep.subr.mxu0 0.0
        %526 = vmatpush1.msra.mxu0 0.0
        %527 = vmatprep.subr.mxu0 0.0
        %528 = vmatpush1.msra.mxu0 0.0
        %529 = vmatprep.subr.mxu0 0.0
        %530 = vmatpush1.msra.mxu0 0.0
        %531 = vmatprep.subr.mxu0 0.0
        %532 = vmatpush1.msra.mxu0 0.0
        %533 = vmatprep.subr.mxu0 0.0
        %534 = vmatpush1.msra.mxu0 0.0
        %535 = vmatprep.subr.mxu0 0.0
        %536 = vmatpush1.msra.mxu0 0.0
        %537 = vmatprep.subr.mxu0 0.0
        %538 = vmatpush1.msra.mxu0 0.0
        %539 = vmatprep.subr.mxu0 0.0
        %540 = vmatpush1.msra.mxu0 0.0
        %541 = vmatprep.subr.mxu0 0.0
        %542 = vmatpush1.msra.mxu0 0.0
        %543 = vmatprep.subr.mxu0 0.0
        %544 = vmatpush1.msra.mxu0 0.0
        %545 = vmatprep.subr.mxu0 0.0
        %546 = vmatpush1.msra.mxu0 0.0
        %547 = vmatprep.subr.mxu0 0.0
        %548 = vmatpush1.msra.mxu0 0.0
        %549 = vmatprep.subr.mxu0 0.0
        %550 = vmatpush1.msra.mxu0 0.0
        %551 = vmatprep.subr.mxu0 0.0
        %552 = vmatpush1.msra.mxu0 0.0
        %553 = vmatprep.subr.mxu0 0.0
        %554 = vmatpush1.msra.mxu0 0.0
        %555 = vmatprep.subr.mxu0 0.0
        %556 = vmatpush1.msra.mxu0 0.0
        %557 = vmatprep.subr.mxu0 0.0
        %558 = vmatpush1.msra.mxu0 0.0
        %559 = vmatprep.subr.mxu0 0.0
        %560 = vmatpush1.msra.mxu0 0.0
        %561 = vmatprep.subr.mxu0 0.0
        %562 = vmatpush1.msra.mxu0 0.0
        %563 = vmatprep.subr.mxu0 0.0
        %564 = vmatpush1.msra.mxu0 0.0
        %565 = vmatprep.subr.mxu0 0.0
        %566 = vmatpush1.msra.mxu0 0.0
        %567 = vmatprep.subr.mxu0 0.0
        %568 = vmatpush1.msra.mxu0 0.0
        %569 = vmatprep.subr.mxu0 0.0
        %570 = vmatpush1.msra.mxu0 0.0
        %571 = vmatprep.subr.mxu0 0.0
        %572 = vmatpush1.msra.mxu0 0.0
        %573 = vmatprep.mubr.f32.mxu0 0.0
        %574 = vmatmul.mubr.f32.gmra.mrb[0].mxu0 %v332
        %v575 = vpop.f32.mrb[0].mxu0
        %v576 = vadd.f32 0.0, %v575
        %v577 = vpop.f32.mrb[0].mxu0
        %v578 = vadd.f32 0.0, %v577
        %579 = vdwg.mxu0
        %580 = vmatprep.subr.mxu0 %v349
        %581 = vmatpush1.msra.mxu0 %v347
        %582 = vmatprep.subr.mxu0 0.0
        %583 = vmatpush1.msra.mxu0 0.0
        %584 = vmatprep.subr.mxu0 0.0
        %585 = vmatpush1.msra.mxu0 0.0
        %586 = vmatprep.subr.mxu0 0.0
        %587 = vmatpush1.msra.mxu0 0.0
        %588 = vmatprep.subr.mxu0 0.0
        %589 = vmatpush1.msra.mxu0 0.0
        %590 = vmatprep.subr.mxu0 0.0
        %591 = vmatpush1.msra.mxu0 0.0
        %592 = vmatprep.subr.mxu0 0.0
        %593 = vmatpush1.msra.mxu0 0.0
        %594 = vmatprep.subr.mxu0 0.0
        %595 = vmatpush1.msra.mxu0 0.0
        %596 = vmatprep.subr.mxu0 0.0
        %597 = vmatpush1.msra.mxu0 0.0
        %598 = vmatprep.subr.mxu0 0.0
        %599 = vmatpush1.msra.mxu0 0.0
        %600 = vmatprep.subr.mxu0 0.0
        %601 = vmatpush1.msra.mxu0 0.0
        %602 = vmatprep.subr.mxu0 0.0
        %603 = vmatpush1.msra.mxu0 0.0
        %604 = vmatprep.subr.mxu0 0.0
        %605 = vmatpush1.msra.mxu0 0.0
        %606 = vmatprep.subr.mxu0 0.0
        %607 = vmatpush1.msra.mxu0 0.0
        %608 = vmatprep.subr.mxu0 0.0
        %609 = vmatpush1.msra.mxu0 0.0
        %610 = vmatprep.subr.mxu0 0.0
        %611 = vmatpush1.msra.mxu0 0.0
        %612 = vmatprep.subr.mxu0 0.0
        %613 = vmatpush1.msra.mxu0 0.0
        %614 = vmatprep.subr.mxu0 0.0
        %615 = vmatpush1.msra.mxu0 0.0
        %616 = vmatprep.subr.mxu0 0.0
        %617 = vmatpush1.msra.mxu0 0.0
        %618 = vmatprep.subr.mxu0 0.0
        %619 = vmatpush1.msra.mxu0 0.0
        %620 = vmatprep.subr.mxu0 0.0
        %621 = vmatpush1.msra.mxu0 0.0
        %622 = vmatprep.subr.mxu0 0.0
        %623 = vmatpush1.msra.mxu0 0.0
        %624 = vmatprep.subr.mxu0 0.0
        %625 = vmatpush1.msra.mxu0 0.0
        %626 = vmatprep.subr.mxu0 0.0
        %627 = vmatpush1.msra.mxu0 0.0
        %628 = vmatprep.subr.mxu0 0.0
        %629 = vmatpush1.msra.mxu0 0.0
        %630 = vmatprep.subr.mxu0 0.0
        %631 = vmatpush1.msra.mxu0 0.0
        %632 = vmatprep.subr.mxu0 0.0
        %633 = vmatpush1.msra.mxu0 0.0
        %634 = vmatprep.subr.mxu0 0.0
        %635 = vmatpush1.msra.mxu0 0.0
        %636 = vmatprep.subr.mxu0 0.0
        %637 = vmatpush1.msra.mxu0 0.0
        %638 = vmatprep.subr.mxu0 0.0
        %639 = vmatpush1.msra.mxu0 0.0
        %640 = vmatprep.subr.mxu0 0.0
        %641 = vmatpush1.msra.mxu0 0.0
        %642 = vmatprep.subr.mxu0 0.0
        %643 = vmatpush1.msra.mxu0 0.0
        %644 = vmatprep.mubr.f32.mxu0 0.0
        %645 = vmatmul.mubr.f32.gmra.mrb[0].mxu0 %v332
        %v646 = vpop.f32.mrb[0].mxu0
        %v647 = vadd.f32 0.0, %v646
        %v648 = vpop.f32.mrb[0].mxu0
        %v649 = vadd.f32 0.0, %v648
        %650 = vdwg.mxu0
        %651 = vmatprep.subr.mxu0 %v353
        %652 = vmatpush1.msra.mxu0 %v351
        %653 = vmatprep.subr.mxu0 0.0
        %654 = vmatpush1.msra.mxu0 0.0
        %655 = vmatprep.subr.mxu0 0.0
        %656 = vmatpush1.msra.mxu0 0.0
        %657 = vmatprep.subr.mxu0 0.0
        %658 = vmatpush1.msra.mxu0 0.0
        %659 = vmatprep.subr.mxu0 0.0
        %660 = vmatpush1.msra.mxu0 0.0
        %661 = vmatprep.subr.mxu0 0.0
        %662 = vmatpush1.msra.mxu0 0.0
        %663 = vmatprep.subr.mxu0 0.0
        %664 = vmatpush1.msra.mxu0 0.0
        %665 = vmatprep.subr.mxu0 0.0
        %666 = vmatpush1.msra.mxu0 0.0
        %667 = vmatprep.subr.mxu0 0.0
        %668 = vmatpush1.msra.mxu0 0.0
        %669 = vmatprep.subr.mxu0 0.0
        %670 = vmatpush1.msra.mxu0 0.0
        %671 = vmatprep.subr.mxu0 0.0
        %672 = vmatpush1.msra.mxu0 0.0
        %673 = vmatprep.subr.mxu0 0.0
        %674 = vmatpush1.msra.mxu0 0.0
        %675 = vmatprep.subr.mxu0 0.0
        %676 = vmatpush1.msra.mxu0 0.0
        %677 = vmatprep.subr.mxu0 0.0
        %678 = vmatpush1.msra.mxu0 0.0
        %679 = vmatprep.subr.mxu0 0.0
        %680 = vmatpush1.msra.mxu0 0.0
        %681 = vmatprep.subr.mxu0 0.0
        %682 = vmatpush1.msra.mxu0 0.0
        %683 = vmatprep.subr.mxu0 0.0
        %684 = vmatpush1.msra.mxu0 0.0
        %685 = vmatprep.subr.mxu0 0.0
        %686 = vmatpush1.msra.mxu0 0.0
        %687 = vmatprep.subr.mxu0 0.0
        %688 = vmatpush1.msra.mxu0 0.0
        %689 = vmatprep.subr.mxu0 0.0
        %690 = vmatpush1.msra.mxu0 0.0
        %691 = vmatprep.subr.mxu0 0.0
        %692 = vmatpush1.msra.mxu0 0.0
        %693 = vmatprep.subr.mxu0 0.0
        %694 = vmatpush1.msra.mxu0 0.0
        %695 = vmatprep.subr.mxu0 0.0
        %696 = vmatpush1.msra.mxu0 0.0
        %697 = vmatprep.subr.mxu0 0.0
        %698 = vmatpush1.msra.mxu0 0.0
        %699 = vmatprep.subr.mxu0 0.0
        %700 = vmatpush1.msra.mxu0 0.0
        %701 = vmatprep.subr.mxu0 0.0
        %702 = vmatpush1.msra.mxu0 0.0
        %703 = vmatprep.subr.mxu0 0.0
        %704 = vmatpush1.msra.mxu0 0.0
        %705 = vmatprep.subr.mxu0 0.0
        %706 = vmatpush1.msra.mxu0 0.0
        %707 = vmatprep.subr.mxu0 0.0
        %708 = vmatpush1.msra.mxu0 0.0
        %709 = vmatprep.subr.mxu0 0.0
        %710 = vmatpush1.msra.mxu0 0.0
        %711 = vmatprep.subr.mxu0 0.0
        %712 = vmatpush1.msra.mxu0 0.0
        %713 = vmatprep.subr.mxu0 0.0
        %714 = vmatpush1.msra.mxu0 0.0
        %715 = vmatprep.mubr.f32.mxu0 0.0
        %716 = vmatmul.mubr.f32.gmra.mrb[0].mxu0 %v332
        %v717 = vpop.f32.mrb[0].mxu0
        %v718 = vadd.f32 0.0, %v717
        %v719 = vpop.f32.mrb[0].mxu0
        %v720 = vadd.f32 0.0, %v719
        %721 = vdwg.mxu0
        %722 = vmatprep.subr.mxu0 %v357
        %723 = vmatpush1.msra.mxu0 %v355
        %724 = vmatprep.subr.mxu0 0.0
        %725 = vmatpush1.msra.mxu0 0.0
        %726 = vmatprep.subr.mxu0 0.0
        %727 = vmatpush1.msra.mxu0 0.0
        %728 = vmatprep.subr.mxu0 0.0
        %729 = vmatpush1.msra.mxu0 0.0
        %730 = vmatprep.subr.mxu0 0.0
        %731 = vmatpush1.msra.mxu0 0.0
        %732 = vmatprep.subr.mxu0 0.0
        %733 = vmatpush1.msra.mxu0 0.0
        %734 = vmatprep.subr.mxu0 0.0
        %735 = vmatpush1.msra.mxu0 0.0
        %736 = vmatprep.subr.mxu0 0.0
        %737 = vmatpush1.msra.mxu0 0.0
        %738 = vmatprep.subr.mxu0 0.0
        %739 = vmatpush1.msra.mxu0 0.0
        %740 = vmatprep.subr.mxu0 0.0
        %741 = vmatpush1.msra.mxu0 0.0
        %742 = vmatprep.subr.mxu0 0.0
        %743 = vmatpush1.msra.mxu0 0.0
        %744 = vmatprep.subr.mxu0 0.0
        %745 = vmatpush1.msra.mxu0 0.0
        %746 = vmatprep.subr.mxu0 0.0
        %747 = vmatpush1.msra.mxu0 0.0
        %748 = vmatprep.subr.mxu0 0.0
        %749 = vmatpush1.msra.mxu0 0.0
        %750 = vmatprep.subr.mxu0 0.0
        %751 = vmatpush1.msra.mxu0 0.0
        %752 = vmatprep.subr.mxu0 0.0
        %753 = vmatpush1.msra.mxu0 0.0
        %754 = vmatprep.subr.mxu0 0.0
        %755 = vmatpush1.msra.mxu0 0.0
        %756 = vmatprep.subr.mxu0 0.0
        %757 = vmatpush1.msra.mxu0 0.0
        %758 = vmatprep.subr.mxu0 0.0
        %759 = vmatpush1.msra.mxu0 0.0
        %760 = vmatprep.subr.mxu0 0.0
        %761 = vmatpush1.msra.mxu0 0.0
        %762 = vmatprep.subr.mxu0 0.0
        %763 = vmatpush1.msra.mxu0 0.0
        %764 = vmatprep.subr.mxu0 0.0
        %765 = vmatpush1.msra.mxu0 0.0
        %766 = vmatprep.subr.mxu0 0.0
        %767 = vmatpush1.msra.mxu0 0.0
        %768 = vmatprep.subr.mxu0 0.0
        %769 = vmatpush1.msra.mxu0 0.0
        %770 = vmatprep.subr.mxu0 0.0
        %771 = vmatpush1.msra.mxu0 0.0
        %772 = vmatprep.subr.mxu0 0.0
        %773 = vmatpush1.msra.mxu0 0.0
        %774 = vmatprep.subr.mxu0 0.0
        %775 = vmatpush1.msra.mxu0 0.0
        %776 = vmatprep.subr.mxu0 0.0
        %777 = vmatpush1.msra.mxu0 0.0
        %778 = vmatprep.subr.mxu0 0.0
        %779 = vmatpush1.msra.mxu0 0.0
        %780 = vmatprep.subr.mxu0 0.0
        %781 = vmatpush1.msra.mxu0 0.0
        %782 = vmatprep.subr.mxu0 0.0
        %783 = vmatpush1.msra.mxu0 0.0
        %784 = vmatprep.subr.mxu0 0.0
        %785 = vmatpush1.msra.mxu0 0.0
        %786 = vmatprep.mubr.f32.mxu0 0.0
        %787 = vmatmul.mubr.f32.gmra.mrb[0].mxu0 %v332
        %v788 = vpop.f32.mrb[0].mxu0
        %v789 = vadd.f32 0.0, %v788
        %v790 = vpop.f32.mrb[0].mxu0
        %v791 = vadd.f32 0.0, %v790
        %792 = vdwg.mxu0
        %793 = vmatprep.subr.mxu0 %v361
        %794 = vmatpush1.msra.mxu0 %v359
        %795 = vmatprep.subr.mxu0 0.0
        %796 = vmatpush1.msra.mxu0 0.0
        %797 = vmatprep.subr.mxu0 0.0
        %798 = vmatpush1.msra.mxu0 0.0
        %799 = vmatprep.subr.mxu0 0.0
        %800 = vmatpush1.msra.mxu0 0.0
        %801 = vmatprep.subr.mxu0 0.0
        %802 = vmatpush1.msra.mxu0 0.0
        %803 = vmatprep.subr.mxu0 0.0
        %804 = vmatpush1.msra.mxu0 0.0
        %805 = vmatprep.subr.mxu0 0.0
        %806 = vmatpush1.msra.mxu0 0.0
        %807 = vmatprep.subr.mxu0 0.0
        %808 = vmatpush1.msra.mxu0 0.0
        %809 = vmatprep.subr.mxu0 0.0
        %810 = vmatpush1.msra.mxu0 0.0
        %811 = vmatprep.subr.mxu0 0.0
        %812 = vmatpush1.msra.mxu0 0.0
        %813 = vmatprep.subr.mxu0 0.0
        %814 = vmatpush1.msra.mxu0 0.0
        %815 = vmatprep.subr.mxu0 0.0
        %816 = vmatpush1.msra.mxu0 0.0
        %817 = vmatprep.subr.mxu0 0.0
        %818 = vmatpush1.msra.mxu0 0.0
        %819 = vmatprep.subr.mxu0 0.0
        %820 = vmatpush1.msra.mxu0 0.0
        %821 = vmatprep.subr.mxu0 0.0
        %822 = vmatpush1.msra.mxu0 0.0
        %823 = vmatprep.subr.mxu0 0.0
        %824 = vmatpush1.msra.mxu0 0.0
        %825 = vmatprep.subr.mxu0 0.0
        %826 = vmatpush1.msra.mxu0 0.0
        %827 = vmatprep.subr.mxu0 0.0
        %828 = vmatpush1.msra.mxu0 0.0
        %829 = vmatprep.subr.mxu0 0.0
        %830 = vmatpush1.msra.mxu0 0.0
        %831 = vmatprep.subr.mxu0 0.0
        %832 = vmatpush1.msra.mxu0 0.0
        %833 = vmatprep.subr.mxu0 0.0
        %834 = vmatpush1.msra.mxu0 0.0
        %835 = vmatprep.subr.mxu0 0.0
        %836 = vmatpush1.msra.mxu0 0.0
        %837 = vmatprep.subr.mxu0 0.0
        %838 = vmatpush1.msra.mxu0 0.0
        %839 = vmatprep.subr.mxu0 0.0
        %840 = vmatpush1.msra.mxu0 0.0
        %841 = vmatprep.subr.mxu0 0.0
        %842 = vmatpush1.msra.mxu0 0.0
        %843 = vmatprep.subr.mxu0 0.0
        %844 = vmatpush1.msra.mxu0 0.0
        %845 = vmatprep.subr.mxu0 0.0
        %846 = vmatpush1.msra.mxu0 0.0
        %847 = vmatprep.subr.mxu0 0.0
        %848 = vmatpush1.msra.mxu0 0.0
        %849 = vmatprep.subr.mxu0 0.0
        %850 = vmatpush1.msra.mxu0 0.0
        %851 = vmatprep.subr.mxu0 0.0
        %852 = vmatpush1.msra.mxu0 0.0
        %853 = vmatprep.subr.mxu0 0.0
        %854 = vmatpush1.msra.mxu0 0.0
        %855 = vmatprep.subr.mxu0 0.0
        %856 = vmatpush1.msra.mxu0 0.0
        %857 = vmatprep.mubr.f32.mxu0 0.0
        %858 = vmatmul.mubr.f32.gmra.mrb[0].mxu0 %v332
        %v859 = vpop.f32.mrb[0].mxu0
        %v860 = vadd.f32 0.0, %v859
        %v861 = vpop.f32.mrb[0].mxu0
        %v862 = vadd.f32 0.0, %v861
        %863 = vdwg.mxu0
        %864 = vmatprep.subr.mxu0 %v365
        %865 = vmatpush1.msra.mxu0 %v363
        %866 = vmatprep.subr.mxu0 0.0
        %867 = vmatpush1.msra.mxu0 0.0
        %868 = vmatprep.subr.mxu0 0.0
        %869 = vmatpush1.msra.mxu0 0.0
        %870 = vmatprep.subr.mxu0 0.0
        %871 = vmatpush1.msra.mxu0 0.0
        %872 = vmatprep.subr.mxu0 0.0
        %873 = vmatpush1.msra.mxu0 0.0
        %874 = vmatprep.subr.mxu0 0.0
        %875 = vmatpush1.msra.mxu0 0.0
        %876 = vmatprep.subr.mxu0 0.0
        %877 = vmatpush1.msra.mxu0 0.0
        %878 = vmatprep.subr.mxu0 0.0
        %879 = vmatpush1.msra.mxu0 0.0
        %880 = vmatprep.subr.mxu0 0.0
        %881 = vmatpush1.msra.mxu0 0.0
        %882 = vmatprep.subr.mxu0 0.0
        %883 = vmatpush1.msra.mxu0 0.0
        %884 = vmatprep.subr.mxu0 0.0
        %885 = vmatpush1.msra.mxu0 0.0
        %886 = vmatprep.subr.mxu0 0.0
        %887 = vmatpush1.msra.mxu0 0.0
        %888 = vmatprep.subr.mxu0 0.0
        %889 = vmatpush1.msra.mxu0 0.0
        %890 = vmatprep.subr.mxu0 0.0
        %891 = vmatpush1.msra.mxu0 0.0
        %892 = vmatprep.subr.mxu0 0.0
        %893 = vmatpush1.msra.mxu0 0.0
        %894 = vmatprep.subr.mxu0 0.0
        %895 = vmatpush1.msra.mxu0 0.0
        %896 = vmatprep.subr.mxu0 0.0
        %897 = vmatpush1.msra.mxu0 0.0
        %898 = vmatprep.subr.mxu0 0.0
        %899 = vmatpush1.msra.mxu0 0.0
        %900 = vmatprep.subr.mxu0 0.0
        %901 = vmatpush1.msra.mxu0 0.0
        %902 = vmatprep.subr.mxu0 0.0
        %903 = vmatpush1.msra.mxu0 0.0
        %904 = vmatprep.subr.mxu0 0.0
        %905 = vmatpush1.msra.mxu0 0.0
        %906 = vmatprep.subr.mxu0 0.0
        %907 = vmatpush1.msra.mxu0 0.0
        %908 = vmatprep.subr.mxu0 0.0
        %909 = vmatpush1.msra.mxu0 0.0
        %910 = vmatprep.subr.mxu0 0.0
        %911 = vmatpush1.msra.mxu0 0.0
        %912 = vmatprep.subr.mxu0 0.0
        %913 = vmatpush1.msra.mxu0 0.0
        %914 = vmatprep.subr.mxu0 0.0
        %915 = vmatpush1.msra.mxu0 0.0
        %916 = vmatprep.subr.mxu0 0.0
        %917 = vmatpush1.msra.mxu0 0.0
        %918 = vmatprep.subr.mxu0 0.0
        %919 = vmatpush1.msra.mxu0 0.0
        %920 = vmatprep.subr.mxu0 0.0
        %921 = vmatpush1.msra.mxu0 0.0
        %922 = vmatprep.subr.mxu0 0.0
        %923 = vmatpush1.msra.mxu0 0.0
        %924 = vmatprep.subr.mxu0 0.0
        %925 = vmatpush1.msra.mxu0 0.0
        %926 = vmatprep.subr.mxu0 0.0
        %927 = vmatpush1.msra.mxu0 0.0
        %928 = vmatprep.mubr.f32.mxu0 0.0
        %929 = vmatmul.mubr.f32.gmra.mrb[0].mxu0 %v332
        %v930 = vpop.f32.mrb[0].mxu0
        %v931 = vadd.f32 0.0, %v930
        %v932 = vpop.f32.mrb[0].mxu0
        %v933 = vadd.f32 0.0, %v932
        %934 = vdwg.mxu0
        %v935 = vld [vmem:[#allocation5] sm:$0xff]
        %v936 = vld [vmem:[#allocation5 + $0x8] sm:$0xff]
        %v937 = vld [vmem:[#allocation5 + $0x10] sm:$0xff]
        %v938 = vld [vmem:[#allocation5 + $0x18] sm:$0xff]
        %v939 = vld [vmem:[#allocation5 + $0x20] sm:$0xff]
        %v940 = vld [vmem:[#allocation5 + $0x28] sm:$0xff]
        %v941 = vld [vmem:[#allocation5 + $0x30] sm:$0xf]
        %v949 = vcombine.high %v935, %v935
        %v950 = vcombine.high %v936, %v936
        %v951 = vcombine.high %v937, %v937
        %v952 = vcombine.high %v938, %v938
        %v953 = vcombine.high %v939, %v939
        %v954 = vcombine.high %v940, %v940
        %v955 = vsel %vm334, %v935, 0
        %v957 = vsel %vm334, %v949, 0
        %v959 = vsel %vm334, %v936, 0
        %v961 = vsel %vm334, %v950, 0
        %v963 = vsel %vm334, %v937, 0
        %v965 = vsel %vm334, %v951, 0
        %v967 = vsel %vm334, %v938, 0
        %v969 = vsel %vm334, %v952, 0
        %v971 = vsel %vm334, %v939, 0
        %v973 = vsel %vm334, %v953, 0
        %v975 = vsel %vm334, %v940, 0
        %v977 = vsel %vm334, %v954, 0
        %v979 = vsel %vm334, %v941, 0
        %981 = vmatprep.subr.mxu0 %v957
        %982 = vmatpush1.msra.mxu0 %v955
        %983 = vmatprep.subr.mxu0 0.0
        %984 = vmatpush1.msra.mxu0 0.0
        %985 = vmatprep.subr.mxu0 0.0
        %986 = vmatpush1.msra.mxu0 0.0
        %987 = vmatprep.subr.mxu0 0.0
        %988 = vmatpush1.msra.mxu0 0.0
        %989 = vmatprep.subr.mxu0 0.0
        %990 = vmatpush1.msra.mxu0 0.0
        %991 = vmatprep.subr.mxu0 0.0
        %992 = vmatpush1.msra.mxu0 0.0
        %993 = vmatprep.subr.mxu0 0.0
        %994 = vmatpush1.msra.mxu0 0.0
        %995 = vmatprep.subr.mxu0 0.0
        %996 = vmatpush1.msra.mxu0 0.0
        %997 = vmatprep.subr.mxu0 0.0
        %998 = vmatpush1.msra.mxu0 0.0
        %999 = vmatprep.subr.mxu0 0.0
        %1000 = vmatpush1.msra.mxu0 0.0
        %1001 = vmatprep.subr.mxu0 0.0
        %1002 = vmatpush1.msra.mxu0 0.0
        %1003 = vmatprep.subr.mxu0 0.0
        %1004 = vmatpush1.msra.mxu0 0.0
        %1005 = vmatprep.subr.mxu0 0.0
        %1006 = vmatpush1.msra.mxu0 0.0
        %1007 = vmatprep.subr.mxu0 0.0
        %1008 = vmatpush1.msra.mxu0 0.0
        %1009 = vmatprep.subr.mxu0 0.0
        %1010 = vmatpush1.msra.mxu0 0.0
        %1011 = vmatprep.subr.mxu0 0.0
        %1012 = vmatpush1.msra.mxu0 0.0
        %1013 = vmatprep.subr.mxu0 0.0
        %1014 = vmatpush1.msra.mxu0 0.0
        %1015 = vmatprep.subr.mxu0 0.0
        %1016 = vmatpush1.msra.mxu0 0.0
        %1017 = vmatprep.subr.mxu0 0.0
        %1018 = vmatpush1.msra.mxu0 0.0
        %1019 = vmatprep.subr.mxu0 0.0
        %1020 = vmatpush1.msra.mxu0 0.0
        %1021 = vmatprep.subr.mxu0 0.0
        %1022 = vmatpush1.msra.mxu0 0.0
        %1023 = vmatprep.subr.mxu0 0.0
        %1024 = vmatpush1.msra.mxu0 0.0
        %1025 = vmatprep.subr.mxu0 0.0
        %1026 = vmatpush1.msra.mxu0 0.0
        %1027 = vmatprep.subr.mxu0 0.0
        %1028 = vmatpush1.msra.mxu0 0.0
        %1029 = vmatprep.subr.mxu0 0.0
        %1030 = vmatpush1.msra.mxu0 0.0
        %1031 = vmatprep.subr.mxu0 0.0
        %1032 = vmatpush1.msra.mxu0 0.0
        %1033 = vmatprep.subr.mxu0 0.0
        %1034 = vmatpush1.msra.mxu0 0.0
        %1035 = vmatprep.subr.mxu0 0.0
        %1036 = vmatpush1.msra.mxu0 0.0
        %1037 = vmatprep.subr.mxu0 0.0
        %1038 = vmatpush1.msra.mxu0 0.0
        %1039 = vmatprep.subr.mxu0 0.0
        %1040 = vmatpush1.msra.mxu0 0.0
        %1041 = vmatprep.subr.mxu0 0.0
        %1042 = vmatpush1.msra.mxu0 0.0
        %1043 = vmatprep.subr.mxu0 0.0
        %1044 = vmatpush1.msra.mxu0 0.0
        %1045 = vmatprep.mubr.f32.mxu0 0.0
        %1046 = vmatmul.mubr.f32.gmra.mrb[0].mxu0 %v332
        %v1047 = vpop.f32.mrb[0].mxu0
        %v1048 = vadd.f32 0.0, %v1047
        %v1049 = vpop.f32.mrb[0].mxu0
        %v1050 = vadd.f32 0.0, %v1049
        %1051 = vdwg.mxu0
        %1052 = vmatprep.subr.mxu0 %v961
        %1053 = vmatpush1.msra.mxu0 %v959
        %1054 = vmatprep.subr.mxu0 0.0
        %1055 = vmatpush1.msra.mxu0 0.0
        %1056 = vmatprep.subr.mxu0 0.0
        %1057 = vmatpush1.msra.mxu0 0.0
        %1058 = vmatprep.subr.mxu0 0.0
        %1059 = vmatpush1.msra.mxu0 0.0
        %1060 = vmatprep.subr.mxu0 0.0
        %1061 = vmatpush1.msra.mxu0 0.0
        %1062 = vmatprep.subr.mxu0 0.0
        %1063 = vmatpush1.msra.mxu0 0.0
        %1064 = vmatprep.subr.mxu0 0.0
        %1065 = vmatpush1.msra.mxu0 0.0
        %1066 = vmatprep.subr.mxu0 0.0
        %1067 = vmatpush1.msra.mxu0 0.0
        %1068 = vmatprep.subr.mxu0 0.0
        %1069 = vmatpush1.msra.mxu0 0.0
        %1070 = vmatprep.subr.mxu0 0.0
        %1071 = vmatpush1.msra.mxu0 0.0
        %1072 = vmatprep.subr.mxu0 0.0
        %1073 = vmatpush1.msra.mxu0 0.0
        %1074 = vmatprep.subr.mxu0 0.0
        %1075 = vmatpush1.msra.mxu0 0.0
        %1076 = vmatprep.subr.mxu0 0.0
        %1077 = vmatpush1.msra.mxu0 0.0
        %1078 = vmatprep.subr.mxu0 0.0
        %1079 = vmatpush1.msra.mxu0 0.0
        %1080 = vmatprep.subr.mxu0 0.0
        %1081 = vmatpush1.msra.mxu0 0.0
        %1082 = vmatprep.subr.mxu0 0.0
        %1083 = vmatpush1.msra.mxu0 0.0
        %1084 = vmatprep.subr.mxu0 0.0
        %1085 = vmatpush1.msra.mxu0 0.0
        %1086 = vmatprep.subr.mxu0 0.0
        %1087 = vmatpush1.msra.mxu0 0.0
        %1088 = vmatprep.subr.mxu0 0.0
        %1089 = vmatpush1.msra.mxu0 0.0
        %1090 = vmatprep.subr.mxu0 0.0
        %1091 = vmatpush1.msra.mxu0 0.0
        %1092 = vmatprep.subr.mxu0 0.0
        %1093 = vmatpush1.msra.mxu0 0.0
        %1094 = vmatprep.subr.mxu0 0.0
        %1095 = vmatpush1.msra.mxu0 0.0
        %1096 = vmatprep.subr.mxu0 0.0
        %1097 = vmatpush1.msra.mxu0 0.0
        %1098 = vmatprep.subr.mxu0 0.0
        %1099 = vmatpush1.msra.mxu0 0.0
        %1100 = vmatprep.subr.mxu0 0.0
        %1101 = vmatpush1.msra.mxu0 0.0
        %1102 = vmatprep.subr.mxu0 0.0
        %1103 = vmatpush1.msra.mxu0 0.0
        %1104 = vmatprep.subr.mxu0 0.0
        %1105 = vmatpush1.msra.mxu0 0.0
        %1106 = vmatprep.subr.mxu0 0.0
        %1107 = vmatpush1.msra.mxu0 0.0
        %1108 = vmatprep.subr.mxu0 0.0
        %1109 = vmatpush1.msra.mxu0 0.0
        %1110 = vmatprep.subr.mxu0 0.0
        %1111 = vmatpush1.msra.mxu0 0.0
        %1112 = vmatprep.subr.mxu0 0.0
        %1113 = vmatpush1.msra.mxu0 0.0
        %1114 = vmatprep.subr.mxu0 0.0
        %1115 = vmatpush1.msra.mxu0 0.0
        %1116 = vmatprep.mubr.f32.mxu0 0.0
        %1117 = vmatmul.mubr.f32.gmra.mrb[0].mxu0 %v332
        %v1118 = vpop.f32.mrb[0].mxu0
        %v1119 = vadd.f32 0.0, %v1118
        %v1120 = vpop.f32.mrb[0].mxu0
        %v1121 = vadd.f32 0.0, %v1120
        %1122 = vdwg.mxu0
        %1123 = vmatprep.subr.mxu0 %v965
        %1124 = vmatpush1.msra.mxu0 %v963
        %1125 = vmatprep.subr.mxu0 0.0
        %1126 = vmatpush1.msra.mxu0 0.0
        %1127 = vmatprep.subr.mxu0 0.0
        %1128 = vmatpush1.msra.mxu0 0.0
        %1129 = vmatprep.subr.mxu0 0.0
        %1130 = vmatpush1.msra.mxu0 0.0
        %1131 = vmatprep.subr.mxu0 0.0
        %1132 = vmatpush1.msra.mxu0 0.0
        %1133 = vmatprep.subr.mxu0 0.0
        %1134 = vmatpush1.msra.mxu0 0.0
        %1135 = vmatprep.subr.mxu0 0.0
        %1136 = vmatpush1.msra.mxu0 0.0
        %1137 = vmatprep.subr.mxu0 0.0
        %1138 = vmatpush1.msra.mxu0 0.0
        %1139 = vmatprep.subr.mxu0 0.0
        %1140 = vmatpush1.msra.mxu0 0.0
        %1141 = vmatprep.subr.mxu0 0.0
        %1142 = vmatpush1.msra.mxu0 0.0
        %1143 = vmatprep.subr.mxu0 0.0
        %1144 = vmatpush1.msra.mxu0 0.0
        %1145 = vmatprep.subr.mxu0 0.0
        %1146 = vmatpush1.msra.mxu0 0.0
        %1147 = vmatprep.subr.mxu0 0.0
        %1148 = vmatpush1.msra.mxu0 0.0
        %1149 = vmatprep.subr.mxu0 0.0
        %1150 = vmatpush1.msra.mxu0 0.0
        %1151 = vmatprep.subr.mxu0 0.0
        %1152 = vmatpush1.msra.mxu0 0.0
        %1153 = vmatprep.subr.mxu0 0.0
        %1154 = vmatpush1.msra.mxu0 0.0
        %1155 = vmatprep.subr.mxu0 0.0
        %1156 = vmatpush1.msra.mxu0 0.0
        %1157 = vmatprep.subr.mxu0 0.0
        %1158 = vmatpush1.msra.mxu0 0.0
        %1159 = vmatprep.subr.mxu0 0.0
        %1160 = vmatpush1.msra.mxu0 0.0
        %1161 = vmatprep.subr.mxu0 0.0
        %1162 = vmatpush1.msra.mxu0 0.0
        %1163 = vmatprep.subr.mxu0 0.0
        %1164 = vmatpush1.msra.mxu0 0.0
        %1165 = vmatprep.subr.mxu0 0.0
        %1166 = vmatpush1.msra.mxu0 0.0
        %1167 = vmatprep.subr.mxu0 0.0
        %1168 = vmatpush1.msra.mxu0 0.0
        %1169 = vmatprep.subr.mxu0 0.0
        %1170 = vmatpush1.msra.mxu0 0.0
        %1171 = vmatprep.subr.mxu0 0.0
        %1172 = vmatpush1.msra.mxu0 0.0
        %1173 = vmatprep.subr.mxu0 0.0
        %1174 = vmatpush1.msra.mxu0 0.0
        %1175 = vmatprep.subr.mxu0 0.0
        %1176 = vmatpush1.msra.mxu0 0.0
        %1177 = vmatprep.subr.mxu0 0.0
        %1178 = vmatpush1.msra.mxu0 0.0
        %1179 = vmatprep.subr.mxu0 0.0
        %1180 = vmatpush1.msra.mxu0 0.0
        %1181 = vmatprep.subr.mxu0 0.0
        %1182 = vmatpush1.msra.mxu0 0.0
        %1183 = vmatprep.subr.mxu0 0.0
        %1184 = vmatpush1.msra.mxu0 0.0
        %1185 = vmatprep.subr.mxu0 0.0
        %1186 = vmatpush1.msra.mxu0 0.0
        %1187 = vmatprep.mubr.f32.mxu0 0.0
        %1188 = vmatmul.mubr.f32.gmra.mrb[0].mxu0 %v332
        %v1189 = vpop.f32.mrb[0].mxu0
        %v1190 = vadd.f32 0.0, %v1189
        %v1191 = vpop.f32.mrb[0].mxu0
        %v1192 = vadd.f32 0.0, %v1191
        %1193 = vdwg.mxu0
        %1194 = vmatprep.subr.mxu0 %v969
        %1195 = vmatpush1.msra.mxu0 %v967
        %1196 = vmatprep.subr.mxu0 0.0
        %1197 = vmatpush1.msra.mxu0 0.0
        %1198 = vmatprep.subr.mxu0 0.0
        %1199 = vmatpush1.msra.mxu0 0.0
        %1200 = vmatprep.subr.mxu0 0.0
        %1201 = vmatpush1.msra.mxu0 0.0
        %1202 = vmatprep.subr.mxu0 0.0
        %1203 = vmatpush1.msra.mxu0 0.0
        %1204 = vmatprep.subr.mxu0 0.0
        %1205 = vmatpush1.msra.mxu0 0.0
        %1206 = vmatprep.subr.mxu0 0.0
        %1207 = vmatpush1.msra.mxu0 0.0
        %1208 = vmatprep.subr.mxu0 0.0
        %1209 = vmatpush1.msra.mxu0 0.0
        %1210 = vmatprep.subr.mxu0 0.0
        %1211 = vmatpush1.msra.mxu0 0.0
        %1212 = vmatprep.subr.mxu0 0.0
        %1213 = vmatpush1.msra.mxu0 0.0
        %1214 = vmatprep.subr.mxu0 0.0
        %1215 = vmatpush1.msra.mxu0 0.0
        %1216 = vmatprep.subr.mxu0 0.0
        %1217 = vmatpush1.msra.mxu0 0.0
        %1218 = vmatprep.subr.mxu0 0.0
        %1219 = vmatpush1.msra.mxu0 0.0
        %1220 = vmatprep.subr.mxu0 0.0
        %1221 = vmatpush1.msra.mxu0 0.0
        %1222 = vmatprep.subr.mxu0 0.0
        %1223 = vmatpush1.msra.mxu0 0.0
        %1224 = vmatprep.subr.mxu0 0.0
        %1225 = vmatpush1.msra.mxu0 0.0
        %1226 = vmatprep.subr.mxu0 0.0
        %1227 = vmatpush1.msra.mxu0 0.0
        %1228 = vmatprep.subr.mxu0 0.0
        %1229 = vmatpush1.msra.mxu0 0.0
        %1230 = vmatprep.subr.mxu0 0.0
        %1231 = vmatpush1.msra.mxu0 0.0
        %1232 = vmatprep.subr.mxu0 0.0
        %1233 = vmatpush1.msra.mxu0 0.0
        %1234 = vmatprep.subr.mxu0 0.0
        %1235 = vmatpush1.msra.mxu0 0.0
        %1236 = vmatprep.subr.mxu0 0.0
        %1237 = vmatpush1.msra.mxu0 0.0
        %1238 = vmatprep.subr.mxu0 0.0
        %1239 = vmatpush1.msra.mxu0 0.0
        %1240 = vmatprep.subr.mxu0 0.0
        %1241 = vmatpush1.msra.mxu0 0.0
        %1242 = vmatprep.subr.mxu0 0.0
        %1243 = vmatpush1.msra.mxu0 0.0
        %1244 = vmatprep.subr.mxu0 0.0
        %1245 = vmatpush1.msra.mxu0 0.0
        %1246 = vmatprep.subr.mxu0 0.0
        %1247 = vmatpush1.msra.mxu0 0.0
        %1248 = vmatprep.subr.mxu0 0.0
        %1249 = vmatpush1.msra.mxu0 0.0
        %1250 = vmatprep.subr.mxu0 0.0
        %1251 = vmatpush1.msra.mxu0 0.0
        %1252 = vmatprep.subr.mxu0 0.0
        %1253 = vmatpush1.msra.mxu0 0.0
        %1254 = vmatprep.subr.mxu0 0.0
        %1255 = vmatpush1.msra.mxu0 0.0
        %1256 = vmatprep.subr.mxu0 0.0
        %1257 = vmatpush1.msra.mxu0 0.0
        %1258 = vmatprep.mubr.f32.mxu0 0.0
        %1259 = vmatmul.mubr.f32.gmra.mrb[0].mxu0 %v332
        %v1260 = vpop.f32.mrb[0].mxu0
        %v1261 = vadd.f32 0.0, %v1260
        %v1262 = vpop.f32.mrb[0].mxu0
        %v1263 = vadd.f32 0.0, %v1262
        %1264 = vdwg.mxu0
        %1265 = vmatprep.subr.mxu0 %v973
        %1266 = vmatpush1.msra.mxu0 %v971
        %1267 = vmatprep.subr.mxu0 0.0
        %1268 = vmatpush1.msra.mxu0 0.0
        %1269 = vmatprep.subr.mxu0 0.0
        %1270 = vmatpush1.msra.mxu0 0.0
        %1271 = vmatprep.subr.mxu0 0.0
        %1272 = vmatpush1.msra.mxu0 0.0
        %1273 = vmatprep.subr.mxu0 0.0
        %1274 = vmatpush1.msra.mxu0 0.0
        %1275 = vmatprep.subr.mxu0 0.0
        %1276 = vmatpush1.msra.mxu0 0.0
        %1277 = vmatprep.subr.mxu0 0.0
        %1278 = vmatpush1.msra.mxu0 0.0
        %1279 = vmatprep.subr.mxu0 0.0
        %1280 = vmatpush1.msra.mxu0 0.0
        %1281 = vmatprep.subr.mxu0 0.0
        %1282 = vmatpush1.msra.mxu0 0.0
        %1283 = vmatprep.subr.mxu0 0.0
        %1284 = vmatpush1.msra.mxu0 0.0
        %1285 = vmatprep.subr.mxu0 0.0
        %1286 = vmatpush1.msra.mxu0 0.0
        %1287 = vmatprep.subr.mxu0 0.0
        %1288 = vmatpush1.msra.mxu0 0.0
        %1289 = vmatprep.subr.mxu0 0.0
        %1290 = vmatpush1.msra.mxu0 0.0
        %1291 = vmatprep.subr.mxu0 0.0
        %1292 = vmatpush1.msra.mxu0 0.0
        %1293 = vmatprep.subr.mxu0 0.0
        %1294 = vmatpush1.msra.mxu0 0.0
        %1295 = vmatprep.subr.mxu0 0.0
        %1296 = vmatpush1.msra.mxu0 0.0
        %1297 = vmatprep.subr.mxu0 0.0
        %1298 = vmatpush1.msra.mxu0 0.0
        %1299 = vmatprep.subr.mxu0 0.0
        %1300 = vmatpush1.msra.mxu0 0.0
        %1301 = vmatprep.subr.mxu0 0.0
        %1302 = vmatpush1.msra.mxu0 0.0
        %1303 = vmatprep.subr.mxu0 0.0
        %1304 = vmatpush1.msra.mxu0 0.0
        %1305 = vmatprep.subr.mxu0 0.0
        %1306 = vmatpush1.msra.mxu0 0.0
        %1307 = vmatprep.subr.mxu0 0.0
        %1308 = vmatpush1.msra.mxu0 0.0
        %1309 = vmatprep.subr.mxu0 0.0
        %1310 = vmatpush1.msra.mxu0 0.0
        %1311 = vmatprep.subr.mxu0 0.0
        %1312 = vmatpush1.msra.mxu0 0.0
        %1313 = vmatprep.subr.mxu0 0.0
        %1314 = vmatpush1.msra.mxu0 0.0
        %1315 = vmatprep.subr.mxu0 0.0
        %1316 = vmatpush1.msra.mxu0 0.0
        %1317 = vmatprep.subr.mxu0 0.0
        %1318 = vmatpush1.msra.mxu0 0.0
        %1319 = vmatprep.subr.mxu0 0.0
        %1320 = vmatpush1.msra.mxu0 0.0
        %1321 = vmatprep.subr.mxu0 0.0
        %1322 = vmatpush1.msra.mxu0 0.0
        %1323 = vmatprep.subr.mxu0 0.0
        %1324 = vmatpush1.msra.mxu0 0.0
        %1325 = vmatprep.subr.mxu0 0.0
        %1326 = vmatpush1.msra.mxu0 0.0
        %1327 = vmatprep.subr.mxu0 0.0
        %1328 = vmatpush1.msra.mxu0 0.0
        %1329 = vmatprep.mubr.f32.mxu0 0.0
        %1330 = vmatmul.mubr.f32.gmra.mrb[0].mxu0 %v332
        %v1331 = vpop.f32.mrb[0].mxu0
        %v1332 = vadd.f32 0.0, %v1331
        %v1333 = vpop.f32.mrb[0].mxu0
        %v1334 = vadd.f32 0.0, %v1333
        %1335 = vdwg.mxu0
        %1336 = vmatprep.subr.mxu0 %v977
        %1337 = vmatpush1.msra.mxu0 %v975
        %1338 = vmatprep.subr.mxu0 0.0
        %1339 = vmatpush1.msra.mxu0 0.0
        %1340 = vmatprep.subr.mxu0 0.0
        %1341 = vmatpush1.msra.mxu0 0.0
        %1342 = vmatprep.subr.mxu0 0.0
        %1343 = vmatpush1.msra.mxu0 0.0
        %1344 = vmatprep.subr.mxu0 0.0
        %1345 = vmatpush1.msra.mxu0 0.0
        %1346 = vmatprep.subr.mxu0 0.0
        %1347 = vmatpush1.msra.mxu0 0.0
        %1348 = vmatprep.subr.mxu0 0.0
        %1349 = vmatpush1.msra.mxu0 0.0
        %1350 = vmatprep.subr.mxu0 0.0
        %1351 = vmatpush1.msra.mxu0 0.0
        %1352 = vmatprep.subr.mxu0 0.0
        %1353 = vmatpush1.msra.mxu0 0.0
        %1354 = vmatprep.subr.mxu0 0.0
        %1355 = vmatpush1.msra.mxu0 0.0
        %1356 = vmatprep.subr.mxu0 0.0
        %1357 = vmatpush1.msra.mxu0 0.0
        %1358 = vmatprep.subr.mxu0 0.0
        %1359 = vmatpush1.msra.mxu0 0.0
        %1360 = vmatprep.subr.mxu0 0.0
        %1361 = vmatpush1.msra.mxu0 0.0
        %1362 = vmatprep.subr.mxu0 0.0
        %1363 = vmatpush1.msra.mxu0 0.0
        %1364 = vmatprep.subr.mxu0 0.0
        %1365 = vmatpush1.msra.mxu0 0.0
        %1366 = vmatprep.subr.mxu0 0.0
        %1367 = vmatpush1.msra.mxu0 0.0
        %1368 = vmatprep.subr.mxu0 0.0
        %1369 = vmatpush1.msra.mxu0 0.0
        %1370 = vmatprep.subr.mxu0 0.0
        %1371 = vmatpush1.msra.mxu0 0.0
        %1372 = vmatprep.subr.mxu0 0.0
        %1373 = vmatpush1.msra.mxu0 0.0
        %1374 = vmatprep.subr.mxu0 0.0
        %1375 = vmatpush1.msra.mxu0 0.0
        %1376 = vmatprep.subr.mxu0 0.0
        %1377 = vmatpush1.msra.mxu0 0.0
        %1378 = vmatprep.subr.mxu0 0.0
        %1379 = vmatpush1.msra.mxu0 0.0
        %1380 = vmatprep.subr.mxu0 0.0
        %1381 = vmatpush1.msra.mxu0 0.0
        %1382 = vmatprep.subr.mxu0 0.0
        %1383 = vmatpush1.msra.mxu0 0.0
        %1384 = vmatprep.subr.mxu0 0.0
        %1385 = vmatpush1.msra.mxu0 0.0
        %1386 = vmatprep.subr.mxu0 0.0
        %1387 = vmatpush1.msra.mxu0 0.0
        %1388 = vmatprep.subr.mxu0 0.0
        %1389 = vmatpush1.msra.mxu0 0.0
        %1390 = vmatprep.subr.mxu0 0.0
        %1391 = vmatpush1.msra.mxu0 0.0
        %1392 = vmatprep.subr.mxu0 0.0
        %1393 = vmatpush1.msra.mxu0 0.0
        %1394 = vmatprep.subr.mxu0 0.0
        %1395 = vmatpush1.msra.mxu0 0.0
        %1396 = vmatprep.subr.mxu0 0.0
        %1397 = vmatpush1.msra.mxu0 0.0
        %1398 = vmatprep.subr.mxu0 0.0
        %1399 = vmatpush1.msra.mxu0 0.0
        %1400 = vmatprep.mubr.f32.mxu0 0.0
        %1401 = vmatmul.mubr.f32.gmra.mrb[0].mxu0 %v332
        %v1402 = vpop.f32.mrb[0].mxu0
        %v1403 = vadd.f32 0.0, %v1402
        %v1404 = vpop.f32.mrb[0].mxu0
        %v1405 = vadd.f32 0.0, %v1404
        %1406 = vdwg.mxu0
        %1407 = vmatprep.subr.mxu0 0.0
        %1408 = vmatpush1.msra.mxu0 %v979
        %1409 = vmatprep.subr.mxu0 0.0
        %1410 = vmatpush1.msra.mxu0 0.0
        %1411 = vmatprep.subr.mxu0 0.0
        %1412 = vmatpush1.msra.mxu0 0.0
        %1413 = vmatprep.subr.mxu0 0.0
        %1414 = vmatpush1.msra.mxu0 0.0
        %1415 = vmatprep.subr.mxu0 0.0
        %1416 = vmatpush1.msra.mxu0 0.0
        %1417 = vmatprep.subr.mxu0 0.0
        %1418 = vmatpush1.msra.mxu0 0.0
        %1419 = vmatprep.subr.mxu0 0.0
        %1420 = vmatpush1.msra.mxu0 0.0
        %1421 = vmatprep.subr.mxu0 0.0
        %1422 = vmatpush1.msra.mxu0 0.0
        %1423 = vmatprep.subr.mxu0 0.0
        %1424 = vmatpush1.msra.mxu0 0.0
        %1425 = vmatprep.subr.mxu0 0.0
        %1426 = vmatpush1.msra.mxu0 0.0
        %1427 = vmatprep.subr.mxu0 0.0
        %1428 = vmatpush1.msra.mxu0 0.0
        %1429 = vmatprep.subr.mxu0 0.0
        %1430 = vmatpush1.msra.mxu0 0.0
        %1431 = vmatprep.subr.mxu0 0.0
        %1432 = vmatpush1.msra.mxu0 0.0
        %1433 = vmatprep.subr.mxu0 0.0
        %1434 = vmatpush1.msra.mxu0 0.0
        %1435 = vmatprep.subr.mxu0 0.0
        %1436 = vmatpush1.msra.mxu0 0.0
        %1437 = vmatprep.subr.mxu0 0.0
        %1438 = vmatpush1.msra.mxu0 0.0
        %1439 = vmatprep.subr.mxu0 0.0
        %1440 = vmatpush1.msra.mxu0 0.0
        %1441 = vmatprep.subr.mxu0 0.0
        %1442 = vmatpush1.msra.mxu0 0.0
        %1443 = vmatprep.subr.mxu0 0.0
        %1444 = vmatpush1.msra.mxu0 0.0
        %1445 = vmatprep.subr.mxu0 0.0
        %1446 = vmatpush1.msra.mxu0 0.0
        %1447 = vmatprep.subr.mxu0 0.0
        %1448 = vmatpush1.msra.mxu0 0.0
        %1449 = vmatprep.subr.mxu0 0.0
        %1450 = vmatpush1.msra.mxu0 0.0
        %1451 = vmatprep.subr.mxu0 0.0
        %1452 = vmatpush1.msra.mxu0 0.0
        %1453 = vmatprep.subr.mxu0 0.0
        %1454 = vmatpush1.msra.mxu0 0.0
        %1455 = vmatprep.subr.mxu0 0.0
        %1456 = vmatpush1.msra.mxu0 0.0
        %1457 = vmatprep.subr.mxu0 0.0
        %1458 = vmatpush1.msra.mxu0 0.0
        %1459 = vmatprep.subr.mxu0 0.0
        %1460 = vmatpush1.msra.mxu0 0.0
        %1461 = vmatprep.subr.mxu0 0.0
        %1462 = vmatpush1.msra.mxu0 0.0
        %1463 = vmatprep.subr.mxu0 0.0
        %1464 = vmatpush1.msra.mxu0 0.0
        %1465 = vmatprep.subr.mxu0 0.0
        %1466 = vmatpush1.msra.mxu0 0.0
        %1467 = vmatprep.subr.mxu0 0.0
        %1468 = vmatpush1.msra.mxu0 0.0
        %1469 = vmatprep.subr.mxu0 0.0
        %1470 = vmatpush1.msra.mxu0 0.0
        %1471 = vmatprep.mubr.f32.mxu0 0.0
        %1472 = vmatmul.mubr.f32.gmra.mrb[0].mxu0 %v332
        %v1473 = vpop.f32.mrb[0].mxu0
        %v1474 = vadd.f32 0.0, %v1473
        %v1475 = vpop.f32.mrb[0].mxu0
        %1476 = vdwg.mxu0
        %v1477 = vpack.c.bf16 %v434, %v434
        %v1478 = vpack.c.bf16 %v436, %v436
        %v1479 = vpack.c.bf16 %v505, %v505
        %v1480 = vpack.c.bf16 %v507, %v507
        %v1481 = vpack.c.bf16 %v576, %v576
        %v1482 = vpack.c.bf16 %v578, %v578
        %v1483 = vpack.c.bf16 %v647, %v647
        %v1484 = vpack.c.bf16 %v649, %v649
        %v1485 = vpack.c.bf16 %v718, %v718
        %v1486 = vpack.c.bf16 %v720, %v720
        %v1487 = vpack.c.bf16 %v789, %v789
        %v1488 = vpack.c.bf16 %v791, %v791
        %v1489 = vpack.c.bf16 %v860, %v860
        %v1490 = vpack.c.bf16 %v862, %v862
        %v1491 = vpack.c.bf16 %v931, %v931
        %v1492 = vpack.c.bf16 %v933, %v933
        %v1493 = vpack.c.bf16 %v1048, %v1048
        %v1494 = vpack.c.bf16 %v1050, %v1050
        %v1495 = vpack.c.bf16 %v1119, %v1119
        %v1496 = vpack.c.bf16 %v1121, %v1121
        %v1497 = vpack.c.bf16 %v1190, %v1190
        %v1498 = vpack.c.bf16 %v1192, %v1192
        %v1499 = vpack.c.bf16 %v1261, %v1261
        %v1500 = vpack.c.bf16 %v1263, %v1263
        %v1501 = vpack.c.bf16 %v1332, %v1332
        %v1502 = vpack.c.bf16 %v1334, %v1334
        %v1503 = vpack.c.bf16 %v1403, %v1403
        %v1504 = vpack.c.bf16 %v1405, %v1405
        %v1505 = vpack.c.bf16 %v1474, %v1474
        %v1506 = vld [vmem:[%s260] sm:$0xff]
        %v1507 = vld [vmem:[%s260 + $0x8] sm:$0xff]
        %v1508 = vld [vmem:[%s260 + $0x10] sm:$0xff]
        %v1509 = vld [vmem:[%s260 + $0x18] sm:$0xff]
        %v1510 = vld [vmem:[%s260 + $0x20] sm:$0xff]
        %v1511 = vld [vmem:[%s260 + $0x28] sm:$0xff]
        %v1512 = vld [vmem:[%s260 + $0x30] sm:$0xff]
        %v1513 = vld [vmem:[%s260 + $0x38] sm:$0xff]
        %v1514 = vld [vmem:[%s260 + $0x40] sm:$0xff]
        %v1515 = vld [vmem:[%s260 + $0x48] sm:$0xff]
        %v1516 = vld [vmem:[%s260 + $0x50] sm:$0xff]
        %v1517 = vld [vmem:[%s260 + $0x58] sm:$0xff]
        %v1518 = vld [vmem:[%s260 + $0x60] sm:$0xff]
        %v1519 = vld [vmem:[%s260 + $0x68] sm:$0xff]
        %v1520 = vld [vmem:[%s260 + $0x70] sm:$0xff]
        %v1521 = vld [vmem:[%s260 + $0x78] sm:$0xff]
        %v1522 = vld [vmem:[%s260 + $0x80] sm:$0xff]
        %v1523 = vld [vmem:[%s260 + $0x88] sm:$0xff]
        %v1524 = vld [vmem:[%s260 + $0x90] sm:$0xff]
        %v1525 = vld [vmem:[%s260 + $0x98] sm:$0xff]
        %v1526 = vld [vmem:[%s260 + $0xa0] sm:$0xff]
        %v1527 = vld [vmem:[%s260 + $0xa8] sm:$0xff]
        %v1528 = vld [vmem:[%s260 + $0xb0] sm:$0xff]
        %v1529 = vld [vmem:[%s260 + $0xb8] sm:$0xff]
        %v1530 = vld [vmem:[%s260 + $0xc0] sm:$0xff]
        %v1531 = vld [vmem:[%s260 + $0xc8] sm:$0xff]
        %v1532 = vld [vmem:[%s260 + $0xd0] sm:$0xff]
        %v1533 = vld [vmem:[%s260 + $0xd8] sm:$0xff]
        %v1534 = vld [vmem:[%s260 + $0xe0] sm:$0xff]
        %v1535 = vld [vmem:[%s260 + $0xe8] sm:$0xff]
        %v1536 = vld [vmem:[%s260 + $0xf0] sm:$0xff]
        %v1537 = vld [vmem:[%s260 + $0xf8] sm:$0xff]
        %v1538 = vld [vmem:[%s260 + $0x100] sm:$0xff]
        %v1539 = vld [vmem:[%s260 + $0x108] sm:$0xff]
        %v1540 = vld [vmem:[%s260 + $0x110] sm:$0xff]
        %v1541 = vld [vmem:[%s260 + $0x118] sm:$0xff]
        %v1542 = vld [vmem:[%s260 + $0x120] sm:$0xff]
        %v1543 = vld [vmem:[%s260 + $0x128] sm:$0xff]
        %v1544 = vld [vmem:[%s260 + $0x130] sm:$0xff]
        %v1545 = vld [vmem:[%s260 + $0x138] sm:$0xff]
        %v1546 = vld [vmem:[%s260 + $0x140] sm:$0xff]
        %v1547 = vld [vmem:[%s260 + $0x148] sm:$0xff]
        %v1548 = vld [vmem:[%s260 + $0x150] sm:$0xff]
        %v1549 = vld [vmem:[%s260 + $0x158] sm:$0xff]
        %v1550 = vld [vmem:[%s260 + $0x160] sm:$0xff]
        %v1551 = vld [vmem:[%s260 + $0x168] sm:$0xff]
        %v1552 = vld [vmem:[%s260 + $0x170] sm:$0xff]
        %v1553 = vld [vmem:[%s260 + $0x178] sm:$0xff]
        %v1554 = vld [vmem:[%s260 + $0x180] sm:$0xff]
        %v1555 = vld [vmem:[%s260 + $0x188] sm:$0xff]
        %v1556 = vld [vmem:[%s260 + $0x190] sm:$0xff]
        %v1557 = vld [vmem:[%s260 + $0x198] sm:$0xff]
        %v1558 = vld [vmem:[%s260 + $0x1a0] sm:$0xff]
        %v1559 = vld [vmem:[%s260 + $0x1a8] sm:$0xff]
        %v1560 = vld [vmem:[%s260 + $0x1b0] sm:$0xff]
        %v1561 = vld [vmem:[%s260 + $0x1b8] sm:$0xff]
        %v1562 = vld [vmem:[%s260 + $0x1c0] sm:$0xff]
        %v1563 = vld [vmem:[%s260 + $0x1c8] sm:$0xff]
        %v1564 = vld [vmem:[%s260 + $0x1d0] sm:$0xff]
        %v1565 = vld [vmem:[%s260 + $0x1d8] sm:$0xff]
        %v1566 = vld [vmem:[%s260 + $0x1e0] sm:$0xff]
        %v1567 = vld [vmem:[%s260 + $0x1e8] sm:$0xff]
        %v1568 = vld [vmem:[%s260 + $0x1f0] sm:$0xff]
        %v1569 = vld [vmem:[%s260 + $0x1f8] sm:$0xff]
        %v1570 = vld [vmem:[%s260 + $0x200] sm:$0xff]
        %v1571 = vld [vmem:[%s260 + $0x208] sm:$0xff]
        %v1572 = vld [vmem:[%s260 + $0x210] sm:$0xff]
        %v1573 = vld [vmem:[%s260 + $0x218] sm:$0xff]
        %v1574 = vld [vmem:[%s260 + $0x220] sm:$0xff]
        %v1575 = vld [vmem:[%s260 + $0x228] sm:$0xff]
        %v1576 = vld [vmem:[%s260 + $0x230] sm:$0xff]
        %v1577 = vld [vmem:[%s260 + $0x238] sm:$0xff]
        %v1578 = vld [vmem:[%s260 + $0x240] sm:$0xff]
        %v1579 = vld [vmem:[%s260 + $0x248] sm:$0xff]
        %v1580 = vld [vmem:[%s260 + $0x250] sm:$0xff]
        %v1581 = vld [vmem:[%s260 + $0x258] sm:$0xff]
        %v1582 = vld [vmem:[%s260 + $0x260] sm:$0xff]
        %v1583 = vld [vmem:[%s260 + $0x268] sm:$0xff]
        %v1584 = vld [vmem:[%s260 + $0x270] sm:$0xff]
        %v1585 = vld [vmem:[%s260 + $0x278] sm:$0xff]
        %v1586 = vld [vmem:[%s260 + $0x280] sm:$0xff]
        %v1587 = vld [vmem:[%s260 + $0x288] sm:$0xff]
        %v1588 = vld [vmem:[%s260 + $0x290] sm:$0xff]
        %v1589 = vld [vmem:[%s260 + $0x298] sm:$0xff]
        %v1590 = vld [vmem:[%s260 + $0x2a0] sm:$0xff]
        %v1591 = vld [vmem:[%s260 + $0x2a8] sm:$0xff]
        %v1592 = vld [vmem:[%s260 + $0x2b0] sm:$0xff]
        %v1593 = vld [vmem:[%s260 + $0x2b8] sm:$0xff]
        %v1594 = vld [vmem:[%s260 + $0x2c0] sm:$0xff]
        %v1595 = vld [vmem:[%s260 + $0x2c8] sm:$0xff]
        %v1596 = vld [vmem:[%s260 + $0x2d0] sm:$0xff]
        %v1597 = vld [vmem:[%s260 + $0x2d8] sm:$0xff]
        %v1598 = vld [vmem:[%s260 + $0x2e0] sm:$0xff]
        %v1599 = vld [vmem:[%s260 + $0x2e8] sm:$0xff]
        %v1600 = vld [vmem:[%s260 + $0x2f0] sm:$0xff]
        %v1601 = vld [vmem:[%s260 + $0x2f8] sm:$0xff]
        %v1602 = vld [vmem:[%s260 + $0x300] sm:$0xff]
        %v1603 = vld [vmem:[%s260 + $0x308] sm:$0xff]
        %v1604 = vld [vmem:[%s260 + $0x310] sm:$0xff]
        %v1605 = vld [vmem:[%s260 + $0x318] sm:$0xff]
        %v1606 = vld [vmem:[%s260 + $0x320] sm:$0xff]
        %v1607 = vld [vmem:[%s260 + $0x328] sm:$0xff]
        %v1608 = vld [vmem:[%s260 + $0x330] sm:$0xff]
        %v1609 = vld [vmem:[%s260 + $0x338] sm:$0xff]
        %v1610 = vld [vmem:[%s260 + $0x340] sm:$0xff]
        %v1611 = vld [vmem:[%s260 + $0x348] sm:$0xff]
        %v1612 = vld [vmem:[%s260 + $0x350] sm:$0xff]
        %v1613 = vld [vmem:[%s260 + $0x358] sm:$0xff]
        %v1614 = vld [vmem:[%s260 + $0x360] sm:$0xff]
        %v1615 = vld [vmem:[%s260 + $0x368] sm:$0xff]
        %v1616 = vld [vmem:[%s260 + $0x370] sm:$0xff]
        %v1617 = vld [vmem:[%s260 + $0x378] sm:$0xff]
        %v1618 = vld [vmem:[%s260 + $0x380] sm:$0xff]
        %v1619 = vld [vmem:[%s260 + $0x388] sm:$0xff]
        %v1620 = vld [vmem:[%s260 + $0x390] sm:$0xff]
        %v1621 = vld [vmem:[%s260 + $0x398] sm:$0xff]
        %v1622 = vld [vmem:[%s260 + $0x3a0] sm:$0xff]
        %v1623 = vld [vmem:[%s260 + $0x3a8] sm:$0xff]
        %v1624 = vld [vmem:[%s260 + $0x3b0] sm:$0xff]
        %v1625 = vld [vmem:[%s260 + $0x3b8] sm:$0xff]
        %v1626 = vld [vmem:[%s260 + $0x3c0] sm:$0xff]
        %v1627 = vld [vmem:[%s260 + $0x3c8] sm:$0xff]
        %v1628 = vld [vmem:[%s260 + $0x3d0] sm:$0xff]
        %v1629 = vld [vmem:[%s260 + $0x3d8] sm:$0xff]
        %v1630 = vld [vmem:[%s260 + $0x3e0] sm:$0xff]
        %v1631 = vld [vmem:[%s260 + $0x3e8] sm:$0xff]
        %v1632 = vld [vmem:[%s260 + $0x3f0] sm:$0xff]
        %v1633 = vld [vmem:[%s260 + $0x3f8] sm:$0xff]
        %v1634 = vld [vmem:[%s260 + $0x400] sm:$0xff]
        %v1635 = vld [vmem:[%s260 + $0x408] sm:$0xff]
        %v1636 = vld [vmem:[%s260 + $0x410] sm:$0xff]
        %v1637 = vld [vmem:[%s260 + $0x418] sm:$0xff]
        %v1638 = vld [vmem:[%s260 + $0x420] sm:$0xff]
        %v1639 = vld [vmem:[%s260 + $0x428] sm:$0xff]
        %v1640 = vld [vmem:[%s260 + $0x430] sm:$0xff]
        %v1641 = vld [vmem:[%s260 + $0x438] sm:$0xff]
        %v1642 = vld [vmem:[%s260 + $0x440] sm:$0xff]
        %v1643 = vld [vmem:[%s260 + $0x448] sm:$0xff]
        %v1644 = vld [vmem:[%s260 + $0x450] sm:$0xff]
        %v1645 = vld [vmem:[%s260 + $0x458] sm:$0xff]
        %v1646 = vld [vmem:[%s260 + $0x460] sm:$0xff]
        %v1647 = vld [vmem:[%s260 + $0x468] sm:$0xff]
        %v1648 = vld [vmem:[%s260 + $0x470] sm:$0xff]
        %v1649 = vld [vmem:[%s260 + $0x478] sm:$0xff]
        %v1650 = vld [vmem:[%s260 + $0x480] sm:$0xff]
        %v1651 = vld [vmem:[%s260 + $0x488] sm:$0xff]
        %v1652 = vld [vmem:[%s260 + $0x490] sm:$0xff]
        %v1653 = vld [vmem:[%s260 + $0x498] sm:$0xff]
        %v1654 = vld [vmem:[%s260 + $0x4a0] sm:$0xff]
        %v1655 = vld [vmem:[%s260 + $0x4a8] sm:$0xff]
        %v1656 = vld [vmem:[%s260 + $0x4b0] sm:$0xff]
        %v1657 = vld [vmem:[%s260 + $0x4b8] sm:$0xff]
        %v1658 = vld [vmem:[%s260 + $0x4c0] sm:$0xff]
        %v1659 = vld [vmem:[%s260 + $0x4c8] sm:$0xff]
        %v1660 = vld [vmem:[%s260 + $0x4d0] sm:$0xff]
        %v1661 = vld [vmem:[%s260 + $0x4d8] sm:$0xff]
        %v1662 = vld [vmem:[%s260 + $0x4e0] sm:$0xff]
        %v1663 = vld [vmem:[%s260 + $0x4e8] sm:$0xff]
        %v1664 = vld [vmem:[%s260 + $0x4f0] sm:$0xff]
        %v1665 = vld [vmem:[%s260 + $0x4f8] sm:$0xff]
        %v1666 = vld [vmem:[%s260 + $0x500] sm:$0xff]
        %v1667 = vld [vmem:[%s260 + $0x508] sm:$0xff]
        %v1668 = vld [vmem:[%s260 + $0x510] sm:$0xff]
        %v1669 = vld [vmem:[%s260 + $0x518] sm:$0xff]
        %v1670 = vld [vmem:[%s260 + $0x520] sm:$0xff]
        %v1671 = vld [vmem:[%s260 + $0x528] sm:$0xff]
        %v1672 = vld [vmem:[%s260 + $0x530] sm:$0xff]
        %v1673 = vld [vmem:[%s260 + $0x538] sm:$0xff]
        %v1674 = vld [vmem:[%s260 + $0x540] sm:$0xff]
        %v1675 = vld [vmem:[%s260 + $0x548] sm:$0xff]
        %v1676 = vld [vmem:[%s260 + $0x550] sm:$0xff]
        %v1677 = vld [vmem:[%s260 + $0x558] sm:$0xff]
        %v1678 = vld [vmem:[%s260 + $0x560] sm:$0xff]
        %v1679 = vld [vmem:[%s260 + $0x568] sm:$0xff]
        %v1680 = vld [vmem:[%s260 + $0x570] sm:$0xff]
        %v1681 = vld [vmem:[%s260 + $0x578] sm:$0xff]
        %v1682 = vld [vmem:[%s260 + $0x580] sm:$0xff]
        %v1683 = vld [vmem:[%s260 + $0x588] sm:$0xff]
        %v1684 = vld [vmem:[%s260 + $0x590] sm:$0xff]
        %v1685 = vld [vmem:[%s260 + $0x598] sm:$0xff]
        %v1686 = vld [vmem:[%s260 + $0x5a0] sm:$0xff]
        %v1687 = vld [vmem:[%s260 + $0x5a8] sm:$0xff]
        %v1688 = vld [vmem:[%s260 + $0x5b0] sm:$0xff]
        %v1689 = vld [vmem:[%s260 + $0x5b8] sm:$0xff]
        %v1690 = vld [vmem:[%s260 + $0x5c0] sm:$0xff]
        %v1691 = vld [vmem:[%s260 + $0x5c8] sm:$0xff]
        %v1692 = vld [vmem:[%s260 + $0x5d0] sm:$0xff]
        %v1693 = vld [vmem:[%s260 + $0x5d8] sm:$0xff]
        %v1694 = vld [vmem:[%s260 + $0x5e0] sm:$0xff]
        %v1695 = vld [vmem:[%s260 + $0x5e8] sm:$0xff]
        %v1696 = vld [vmem:[%s260 + $0x5f0] sm:$0xff]
        %v1697 = vld [vmem:[%s260 + $0x5f8] sm:$0xff]
        %v1698 = vld [vmem:[%s260 + $0x600] sm:$0xff]
        %v1699 = vld [vmem:[%s260 + $0x608] sm:$0xff]
        %v1700 = vld [vmem:[%s260 + $0x610] sm:$0xff]
        %v1701 = vld [vmem:[%s260 + $0x618] sm:$0xff]
        %v1702 = vld [vmem:[%s260 + $0x620] sm:$0xff]
        %v1703 = vld [vmem:[%s260 + $0x628] sm:$0xff]
        %v1704 = vld [vmem:[%s260 + $0x630] sm:$0xff]
        %v1705 = vld [vmem:[%s260 + $0x638] sm:$0xff]
        %v1706 = vld [vmem:[%s260 + $0x640] sm:$0xff]
        %v1707 = vld [vmem:[%s260 + $0x648] sm:$0xff]
        %v1708 = vld [vmem:[%s260 + $0x650] sm:$0xff]
        %v1709 = vld [vmem:[%s260 + $0x658] sm:$0xff]
        %v1710 = vld [vmem:[%s260 + $0x660] sm:$0xff]
        %v1711 = vld [vmem:[%s260 + $0x668] sm:$0xff]
        %v1712 = vld [vmem:[%s260 + $0x670] sm:$0xff]
        %v1713 = vld [vmem:[%s260 + $0x678] sm:$0xff]
        %v1714 = vld [vmem:[%s260 + $0x680] sm:$0xff]
        %v1715 = vld [vmem:[%s260 + $0x688] sm:$0xff]
        %v1716 = vld [vmem:[%s260 + $0x690] sm:$0xff]
        %v1717 = vld [vmem:[%s260 + $0x698] sm:$0xff]
        %v1718 = vld [vmem:[%s260 + $0x6a0] sm:$0xff]
        %v1719 = vld [vmem:[%s260 + $0x6a8] sm:$0xff]
        %v1720 = vld [vmem:[%s260 + $0x6b0] sm:$0xff]
        %v1721 = vld [vmem:[%s260 + $0x6b8] sm:$0xff]
        %v1722 = vld [vmem:[%s260 + $0x6c0] sm:$0xff]
        %v1723 = vld [vmem:[%s260 + $0x6c8] sm:$0xff]
        %v1724 = vld [vmem:[%s260 + $0x6d0] sm:$0xff]
        %v1725 = vld [vmem:[%s260 + $0x6d8] sm:$0xff]
        %v1726 = vld [vmem:[%s260 + $0x6e0] sm:$0xff]
        %v1727 = vld [vmem:[%s260 + $0x6e8] sm:$0xff]
        %v1728 = vld [vmem:[%s260 + $0x6f0] sm:$0xff]
        %v1729 = vld [vmem:[%s260 + $0x6f8] sm:$0xff]
        %v1730 = vld [vmem:[%s260 + $0x700] sm:$0xff]
        %v1731 = vld [vmem:[%s260 + $0x708] sm:$0xff]
        %v1732 = vld [vmem:[%s260 + $0x710] sm:$0xff]
        %v1733 = vld [vmem:[%s260 + $0x718] sm:$0xff]
        %v1734 = vld [vmem:[%s260 + $0x720] sm:$0xff]
        %v1735 = vld [vmem:[%s260 + $0x728] sm:$0xff]
        %v1736 = vld [vmem:[%s260 + $0x730] sm:$0xff]
        %v1737 = vld [vmem:[%s260 + $0x738] sm:$0xff]
        %v1738 = vld [vmem:[%s260 + $0x740] sm:$0xff]
        %v1739 = vld [vmem:[%s260 + $0x748] sm:$0xff]
        %v1740 = vld [vmem:[%s260 + $0x750] sm:$0xff]
        %v1741 = vld [vmem:[%s260 + $0x758] sm:$0xff]
        %v1742 = vld [vmem:[%s260 + $0x760] sm:$0xff]
        %v1743 = vld [vmem:[%s260 + $0x768] sm:$0xff]
        %v1744 = vld [vmem:[%s260 + $0x770] sm:$0xff]
        %v1745 = vld [vmem:[%s260 + $0x778] sm:$0xff]
        %v1746 = vld [vmem:[%s260 + $0x780] sm:$0xff]
        %v1747 = vld [vmem:[%s260 + $0x788] sm:$0xff]
        %v1748 = vld [vmem:[%s260 + $0x790] sm:$0xff]
        %v1749 = vld [vmem:[%s260 + $0x798] sm:$0xff]
        %v1750 = vld [vmem:[%s260 + $0x7a0] sm:$0xff]
        %v1751 = vld [vmem:[%s260 + $0x7a8] sm:$0xff]
        %v1752 = vld [vmem:[%s260 + $0x7b0] sm:$0xff]
        %v1753 = vld [vmem:[%s260 + $0x7b8] sm:$0xff]
        %v1754 = vld [vmem:[%s260 + $0x7c0] sm:$0xff]
        %v1755 = vld [vmem:[%s260 + $0x7c8] sm:$0xff]
        %v1756 = vld [vmem:[%s260 + $0x7d0] sm:$0xff]
        %v1757 = vld [vmem:[%s260 + $0x7d8] sm:$0xff]
        %v1758 = vld [vmem:[%s260 + $0x7e0] sm:$0xff]
        %v1759 = vld [vmem:[%s260 + $0x7e8] sm:$0xff]
        %v1760 = vld [vmem:[%s260 + $0x7f0] sm:$0xff]
        %v1761 = vld [vmem:[%s260 + $0x7f8] sm:$0xff]
        %v1762 = vld [vmem:[%s260 + $0x800] sm:$0xff]
        %v1763 = vld [vmem:[%s260 + $0x808] sm:$0xff]
        %v1764 = vld [vmem:[%s260 + $0x810] sm:$0xff]
        %v1765 = vld [vmem:[%s260 + $0x818] sm:$0xff]
        %v1766 = vld [vmem:[%s260 + $0x820] sm:$0xff]
        %v1767 = vld [vmem:[%s260 + $0x828] sm:$0xff]
        %v1768 = vld [vmem:[%s260 + $0x830] sm:$0xff]
        %v1769 = vld [vmem:[%s260 + $0x838] sm:$0xff]
        %v1770 = vld [vmem:[%s260 + $0x840] sm:$0xff]
        %v1771 = vld [vmem:[%s260 + $0x848] sm:$0xff]
        %v1772 = vld [vmem:[%s260 + $0x850] sm:$0xff]
        %v1773 = vld [vmem:[%s260 + $0x858] sm:$0xff]
        %v1774 = vld [vmem:[%s260 + $0x860] sm:$0xff]
        %v1775 = vld [vmem:[%s260 + $0x868] sm:$0xff]
        %v1776 = vld [vmem:[%s260 + $0x870] sm:$0xff]
        %v1777 = vld [vmem:[%s260 + $0x878] sm:$0xff]
        %v1778 = vld [vmem:[%s260 + $0x880] sm:$0xff]
        %v1779 = vld [vmem:[%s260 + $0x888] sm:$0xff]
        %v1780 = vld [vmem:[%s260 + $0x890] sm:$0xff]
        %v1781 = vld [vmem:[%s260 + $0x898] sm:$0xff]
        %v1782 = vld [vmem:[%s260 + $0x8a0] sm:$0xff]
        %v1783 = vld [vmem:[%s260 + $0x8a8] sm:$0xff]
        %v1784 = vld [vmem:[%s260 + $0x8b0] sm:$0xff]
        %v1785 = vld [vmem:[%s260 + $0x8b8] sm:$0xff]
        %v1786 = vld [vmem:[%s260 + $0x8c0] sm:$0xff]
        %v1787 = vld [vmem:[%s260 + $0x8c8] sm:$0xff]
        %v1788 = vld [vmem:[%s260 + $0x8d0] sm:$0xff]
        %v1789 = vld [vmem:[%s260 + $0x8d8] sm:$0xff]
        %v1790 = vld [vmem:[%s260 + $0x8e0] sm:$0xff]
        %v1791 = vld [vmem:[%s260 + $0x8e8] sm:$0xff]
        %v1792 = vld [vmem:[%s260 + $0x8f0] sm:$0xff]
        %v1793 = vld [vmem:[%s260 + $0x8f8] sm:$0xff]
        %v1794 = vld [vmem:[%s260 + $0x900] sm:$0xff]
        %v1795 = vld [vmem:[%s260 + $0x908] sm:$0xff]
        %v1796 = vld [vmem:[%s260 + $0x910] sm:$0xff]
        %v1797 = vld [vmem:[%s260 + $0x918] sm:$0xff]
        %v1798 = vld [vmem:[%s260 + $0x920] sm:$0xff]
        %v1799 = vld [vmem:[%s260 + $0x928] sm:$0xff]
        %v1800 = vld [vmem:[%s260 + $0x930] sm:$0xff]
        %v1801 = vld [vmem:[%s260 + $0x938] sm:$0xff]
        %v1802 = vld [vmem:[%s260 + $0x940] sm:$0xff]
        %v1803 = vld [vmem:[%s260 + $0x948] sm:$0xff]
        %v1804 = vld [vmem:[%s260 + $0x950] sm:$0xff]
        %v1805 = vld [vmem:[%s260 + $0x958] sm:$0xff]
        %v1806 = vld [vmem:[%s260 + $0x960] sm:$0xff]
        %v1807 = vld [vmem:[%s260 + $0x968] sm:$0xff]
        %v1808 = vld [vmem:[%s260 + $0x970] sm:$0xff]
        %v1809 = vld [vmem:[%s260 + $0x978] sm:$0xff]
        %v1810 = vld [vmem:[%s260 + $0x980] sm:$0xff]
        %v1811 = vld [vmem:[%s260 + $0x988] sm:$0xff]
        %v1812 = vld [vmem:[%s260 + $0x990] sm:$0xff]
        %v1813 = vld [vmem:[%s260 + $0x998] sm:$0xff]
        %v1814 = vld [vmem:[%s260 + $0x9a0] sm:$0xff]
        %v1815 = vld [vmem:[%s260 + $0x9a8] sm:$0xff]
        %v1816 = vld [vmem:[%s260 + $0x9b0] sm:$0xff]
        %v1817 = vld [vmem:[%s260 + $0x9b8] sm:$0xff]
        %v1818 = vld [vmem:[%s260 + $0x9c0] sm:$0xff]
        %v1819 = vld [vmem:[%s260 + $0x9c8] sm:$0xff]
        %v1820 = vld [vmem:[%s260 + $0x9d0] sm:$0xff]
        %v1821 = vld [vmem:[%s260 + $0x9d8] sm:$0xff]
        %v1822 = vld [vmem:[%s260 + $0x9e0] sm:$0xff]
        %v1823 = vld [vmem:[%s260 + $0x9e8] sm:$0xff]
        %v1824 = vld [vmem:[%s260 + $0x9f0] sm:$0xff]
        %v1825 = vld [vmem:[%s260 + $0x9f8] sm:$0xff]
        %v1826 = vld [vmem:[%s260 + $0xa00] sm:$0xff]
        %v1827 = vld [vmem:[%s260 + $0xa08] sm:$0xff]
        %v1828 = vld [vmem:[%s260 + $0xa10] sm:$0xff]
        %v1829 = vld [vmem:[%s260 + $0xa18] sm:$0xff]
        %v1830 = vld [vmem:[%s260 + $0xa20] sm:$0xff]
        %v1831 = vld [vmem:[%s260 + $0xa28] sm:$0xff]
        %v1832 = vld [vmem:[%s260 + $0xa30] sm:$0xff]
        %v1833 = vld [vmem:[%s260 + $0xa38] sm:$0xff]
        %v1834 = vld [vmem:[%s260 + $0xa40] sm:$0xff]
        %v1835 = vld [vmem:[%s260 + $0xa48] sm:$0xff]
        %v1836 = vld [vmem:[%s260 + $0xa50] sm:$0xff]
        %v1837 = vld [vmem:[%s260 + $0xa58] sm:$0xff]
        %v1838 = vld [vmem:[%s260 + $0xa60] sm:$0xff]
        %v1839 = vld [vmem:[%s260 + $0xa68] sm:$0xff]
        %v1840 = vld [vmem:[%s260 + $0xa70] sm:$0xff]
        %v1841 = vld [vmem:[%s260 + $0xa78] sm:$0xff]
        %v1842 = vld [vmem:[%s260 + $0xa80] sm:$0xff]
        %v1843 = vld [vmem:[%s260 + $0xa88] sm:$0xff]
        %v1844 = vld [vmem:[%s260 + $0xa90] sm:$0xff]
        %v1845 = vld [vmem:[%s260 + $0xa98] sm:$0xff]
        %v1846 = vld [vmem:[%s260 + $0xaa0] sm:$0xff]
        %v1847 = vld [vmem:[%s260 + $0xaa8] sm:$0xff]
        %v1848 = vld [vmem:[%s260 + $0xab0] sm:$0xff]
        %v1849 = vld [vmem:[%s260 + $0xab8] sm:$0xff]
        %v1850 = vld [vmem:[%s260 + $0xac0] sm:$0xff]
        %v1851 = vld [vmem:[%s260 + $0xac8] sm:$0xff]
        %v1852 = vld [vmem:[%s260 + $0xad0] sm:$0xff]
        %v1853 = vld [vmem:[%s260 + $0xad8] sm:$0xff]
        %v1854 = vld [vmem:[%s260 + $0xae0] sm:$0xff]
        %v1855 = vld [vmem:[%s260 + $0xae8] sm:$0xff]
        %v1856 = vld [vmem:[%s260 + $0xaf0] sm:$0xff]
        %v1857 = vld [vmem:[%s260 + $0xaf8] sm:$0xff]
        %v1858 = vld [vmem:[%s260 + $0xb00] sm:$0xff]
        %v1859 = vld [vmem:[%s260 + $0xb08] sm:$0xff]
        %v1860 = vld [vmem:[%s260 + $0xb10] sm:$0xff]
        %v1861 = vld [vmem:[%s260 + $0xb18] sm:$0xff]
        %v1862 = vld [vmem:[%s260 + $0xb20] sm:$0xff]
        %v1863 = vld [vmem:[%s260 + $0xb28] sm:$0xff]
        %v1864 = vld [vmem:[%s260 + $0xb30] sm:$0xff]
        %v1865 = vld [vmem:[%s260 + $0xb38] sm:$0xff]
        %v1866 = vld [vmem:[%s260 + $0xb40] sm:$0xff]
        %v1867 = vld [vmem:[%s260 + $0xb48] sm:$0xff]
        %v1868 = vld [vmem:[%s260 + $0xb50] sm:$0xff]
        %v1869 = vld [vmem:[%s260 + $0xb58] sm:$0xff]
        %v1870 = vld [vmem:[%s260 + $0xb60] sm:$0xff]
        %v1871 = vld [vmem:[%s260 + $0xb68] sm:$0xff]
        %v1872 = vld [vmem:[%s260 + $0xb70] sm:$0xff]
        %v1873 = vld [vmem:[%s260 + $0xb78] sm:$0xff]
        %v1874 = vld [vmem:[%s260 + $0xb80] sm:$0xff]
        %v1875 = vld [vmem:[%s260 + $0xb88] sm:$0xff]
        %v1876 = vld [vmem:[%s260 + $0xb90] sm:$0xff]
        %v1877 = vld [vmem:[%s260 + $0xb98] sm:$0xff]
        %v1878 = vld [vmem:[%s260 + $0xba0] sm:$0xff]
        %v1879 = vld [vmem:[%s260 + $0xba8] sm:$0xff]
        %v1880 = vld [vmem:[%s260 + $0xbb0] sm:$0xff]
        %v1881 = vld [vmem:[%s260 + $0xbb8] sm:$0xff]
        %v1882 = vld [vmem:[%s260 + $0xbc0] sm:$0xff]
        %v1883 = vld [vmem:[%s260 + $0xbc8] sm:$0xff]
        %v1884 = vld [vmem:[%s260 + $0xbd0] sm:$0xff]
        %v1885 = vld [vmem:[%s260 + $0xbd8] sm:$0xff]
        %v1886 = vld [vmem:[%s260 + $0xbe0] sm:$0xff]
        %v1887 = vld [vmem:[%s260 + $0xbe8] sm:$0xff]
        %v1888 = vld [vmem:[%s260 + $0xbf0] sm:$0xff]
        %v1889 = vld [vmem:[%s260 + $0xbf8] sm:$0xff]
        %v1890 = vld [vmem:[%s260 + $0xc00] sm:$0xff]
        %v1891 = vld [vmem:[%s260 + $0xc08] sm:$0xff]
        %v1892 = vld [vmem:[%s260 + $0xc10] sm:$0xff]
        %v1893 = vld [vmem:[%s260 + $0xc18] sm:$0xff]
        %v1894 = vld [vmem:[%s260 + $0xc20] sm:$0xff]
        %v1895 = vld [vmem:[%s260 + $0xc28] sm:$0xff]
        %v1896 = vld [vmem:[%s260 + $0xc30] sm:$0xff]
        %v1897 = vld [vmem:[%s260 + $0xc38] sm:$0xff]
        %v1898 = vld [vmem:[%s260 + $0xc40] sm:$0xff]
        %v1899 = vld [vmem:[%s260 + $0xc48] sm:$0xff]
        %v1900 = vld [vmem:[%s260 + $0xc50] sm:$0xff]
        %v1901 = vld [vmem:[%s260 + $0xc58] sm:$0xff]
        %v1902 = vld [vmem:[%s260 + $0xc60] sm:$0xff]
        %v1903 = vld [vmem:[%s260 + $0xc68] sm:$0xff]
        %v1904 = vld [vmem:[%s260 + $0xc70] sm:$0xff]
        %v1905 = vld [vmem:[%s260 + $0xc78] sm:$0xff]
        %v1906 = vld [vmem:[%s260 + $0xc80] sm:$0xff]
        %v1907 = vld [vmem:[%s260 + $0xc88] sm:$0xff]
        %v1908 = vld [vmem:[%s260 + $0xc90] sm:$0xff]
        %v1909 = vld [vmem:[%s260 + $0xc98] sm:$0xff]
        %v1910 = vld [vmem:[%s260 + $0xca0] sm:$0xff]
        %v1911 = vld [vmem:[%s260 + $0xca8] sm:$0xff]
        %v1912 = vld [vmem:[%s260 + $0xcb0] sm:$0xff]
        %v1913 = vld [vmem:[%s260 + $0xcb8] sm:$0xff]
        %v1914 = vld [vmem:[%s260 + $0xcc0] sm:$0xff]
        %v1915 = vld [vmem:[%s260 + $0xcc8] sm:$0xff]
        %v1916 = vld [vmem:[%s260 + $0xcd0] sm:$0xff]
        %v1917 = vld [vmem:[%s260 + $0xcd8] sm:$0xff]
        %v1918 = vld [vmem:[%s260 + $0xce0] sm:$0xff]
        %v1919 = vld [vmem:[%s260 + $0xce8] sm:$0xff]
        %v1920 = vld [vmem:[%s260 + $0xcf0] sm:$0xff]
        %v1921 = vld [vmem:[%s260 + $0xcf8] sm:$0xff]
        %v1922 = vld [vmem:[%s260 + $0xd00] sm:$0xff]
        %v1923 = vld [vmem:[%s260 + $0xd08] sm:$0xff]
        %v1924 = vld [vmem:[%s260 + $0xd10] sm:$0xff]
        %v1925 = vld [vmem:[%s260 + $0xd18] sm:$0xff]
        %v1926 = vld [vmem:[%s260 + $0xd20] sm:$0xff]
        %v1927 = vld [vmem:[%s260 + $0xd28] sm:$0xff]
        %v1928 = vld [vmem:[%s260 + $0xd30] sm:$0xff]
        %v1929 = vld [vmem:[%s260 + $0xd38] sm:$0xff]
        %v1930 = vld [vmem:[%s260 + $0xd40] sm:$0xff]
        %v1931 = vld [vmem:[%s260 + $0xd48] sm:$0xff]
        %v1932 = vld [vmem:[%s260 + $0xd50] sm:$0xff]
        %v1933 = vld [vmem:[%s260 + $0xd58] sm:$0xff]
        %v1934 = vld [vmem:[%s260 + $0xd60] sm:$0xff]
        %v1935 = vld [vmem:[%s260 + $0xd68] sm:$0xff]
        %v1936 = vld [vmem:[%s260 + $0xd70] sm:$0xff]
        %v1937 = vld [vmem:[%s260 + $0xd78] sm:$0xff]
        %v1938 = vld [vmem:[%s260 + $0xd80] sm:$0xff]
        %v1939 = vld [vmem:[%s260 + $0xd88] sm:$0xff]
        %v1940 = vld [vmem:[%s260 + $0xd90] sm:$0xff]
        %v1941 = vld [vmem:[%s260 + $0xd98] sm:$0xff]
        %v1942 = vld [vmem:[%s260 + $0xda0] sm:$0xff]
        %v1943 = vld [vmem:[%s260 + $0xda8] sm:$0xff]
        %v1944 = vld [vmem:[%s260 + $0xdb0] sm:$0xff]
        %v1945 = vld [vmem:[%s260 + $0xdb8] sm:$0xff]
        %v1946 = vld [vmem:[%s260 + $0xdc0] sm:$0xff]
        %v1947 = vld [vmem:[%s260 + $0xdc8] sm:$0xff]
        %v1948 = vld [vmem:[%s260 + $0xdd0] sm:$0xff]
        %v1949 = vld [vmem:[%s260 + $0xdd8] sm:$0xff]
        %v1950 = vld [vmem:[%s260 + $0xde0] sm:$0xff]
        %v1951 = vld [vmem:[%s260 + $0xde8] sm:$0xff]
        %v1952 = vld [vmem:[%s260 + $0xdf0] sm:$0xff]
        %v1953 = vld [vmem:[%s260 + $0xdf8] sm:$0xff]
        %v1954 = vld [vmem:[%s260 + $0xe00] sm:$0xff]
        %v1955 = vld [vmem:[%s260 + $0xe08] sm:$0xff]
        %v1956 = vld [vmem:[%s260 + $0xe10] sm:$0xff]
        %v1957 = vld [vmem:[%s260 + $0xe18] sm:$0xff]
        %v1958 = vld [vmem:[%s260 + $0xe20] sm:$0xff]
        %v1959 = vld [vmem:[%s260 + $0xe28] sm:$0xff]
        %v1960 = vld [vmem:[%s260 + $0xe30] sm:$0xff]
        %v1961 = vld [vmem:[%s260 + $0xe38] sm:$0xff]
        %v1962 = vld [vmem:[%s260 + $0xe40] sm:$0xff]
        %v1963 = vld [vmem:[%s260 + $0xe48] sm:$0xff]
        %v1964 = vld [vmem:[%s260 + $0xe50] sm:$0xff]
        %v1965 = vld [vmem:[%s260 + $0xe58] sm:$0xff]
        %v1966 = vld [vmem:[%s260 + $0xe60] sm:$0xff]
        %v1967 = vld [vmem:[%s260 + $0xe68] sm:$0xff]
        %v1968 = vld [vmem:[%s260 + $0xe70] sm:$0xff]
        %v1969 = vld [vmem:[%s260 + $0xe78] sm:$0xff]
        %v1970 = vld [vmem:[%s260 + $0xe80] sm:$0xff]
        %v1971 = vld [vmem:[%s260 + $0xe88] sm:$0xff]
        %v1972 = vld [vmem:[%s260 + $0xe90] sm:$0xff]
        %v1973 = vld [vmem:[%s260 + $0xe98] sm:$0xff]
        %v1974 = vld [vmem:[%s260 + $0xea0] sm:$0xff]
        %v1975 = vld [vmem:[%s260 + $0xea8] sm:$0xff]
        %v1976 = vld [vmem:[%s260 + $0xeb0] sm:$0xff]
        %v1977 = vld [vmem:[%s260 + $0xeb8] sm:$0xff]
        %v1978 = vld [vmem:[%s260 + $0xec0] sm:$0xff]
        %v1979 = vld [vmem:[%s260 + $0xec8] sm:$0xff]
        %v1980 = vld [vmem:[%s260 + $0xed0] sm:$0xff]
        %v1981 = vld [vmem:[%s260 + $0xed8] sm:$0xff]
        %v1982 = vld [vmem:[%s260 + $0xee0] sm:$0xff]
        %v1983 = vld [vmem:[%s260 + $0xee8] sm:$0xff]
        %v1984 = vld [vmem:[%s260 + $0xef0] sm:$0xff]
        %v1985 = vld [vmem:[%s260 + $0xef8] sm:$0xff]
        %v1986 = vld [vmem:[%s260 + $0xf00] sm:$0xff]
        %v1987 = vld [vmem:[%s260 + $0xf08] sm:$0xff]
        %v1988 = vld [vmem:[%s260 + $0xf10] sm:$0xff]
        %v1989 = vld [vmem:[%s260 + $0xf18] sm:$0xff]
        %v1990 = vld [vmem:[%s260 + $0xf20] sm:$0xff]
        %v1991 = vld [vmem:[%s260 + $0xf28] sm:$0xff]
        %v1992 = vld [vmem:[%s260 + $0xf30] sm:$0xff]
        %v1993 = vld [vmem:[%s260 + $0xf38] sm:$0xff]
        %v1994 = vld [vmem:[%s260 + $0xf40] sm:$0xff]
        %v1995 = vld [vmem:[%s260 + $0xf48] sm:$0xff]
        %v1996 = vld [vmem:[%s260 + $0xf50] sm:$0xff]
        %v1997 = vld [vmem:[%s260 + $0xf58] sm:$0xff]
        %v1998 = vld [vmem:[%s260 + $0xf60] sm:$0xff]
        %v1999 = vld [vmem:[%s260 + $0xf68] sm:$0xff]
        %v2000 = vld [vmem:[%s260 + $0xf70] sm:$0xff]
        %v2001 = vld [vmem:[%s260 + $0xf78] sm:$0xff]
        %v2002 = vld [vmem:[%s260 + $0xf80] sm:$0xff]
        %v2003 = vld [vmem:[%s260 + $0xf88] sm:$0xff]
        %v2004 = vld [vmem:[%s260 + $0xf90] sm:$0xff]
        %v2005 = vld [vmem:[%s260 + $0xf98] sm:$0xff]
        %v2006 = vld [vmem:[%s260 + $0xfa0] sm:$0xff]
        %v2007 = vld [vmem:[%s260 + $0xfa8] sm:$0xff]
        %v2008 = vld [vmem:[%s260 + $0xfb0] sm:$0xff]
        %v2009 = vld [vmem:[%s260 + $0xfb8] sm:$0xff]
        %v2010 = vld [vmem:[%s260 + $0xfc0] sm:$0xff]
        %v2011 = vld [vmem:[%s260 + $0xfc8] sm:$0xff]
        %v2012 = vld [vmem:[%s260 + $0xfd0] sm:$0xff]
        %v2013 = vld [vmem:[%s260 + $0xfd8] sm:$0xff]
        %v2014 = vld [vmem:[%s260 + $0xfe0] sm:$0xff]
        %v2015 = vld [vmem:[%s260 + $0xfe8] sm:$0xff]
        %v2016 = vld [vmem:[%s260 + $0xff0] sm:$0xff]
        %v2017 = vld [vmem:[%s260 + $0xff8] sm:$0xff]
        %v2018 = vld [vmem:[%s260 + $0x1000] sm:$0xff]
        %v2019 = vld [vmem:[%s260 + $0x1008] sm:$0xff]
        %v2020 = vld [vmem:[%s260 + $0x1010] sm:$0xff]
        %v2021 = vld [vmem:[%s260 + $0x1018] sm:$0xff]
        %v2022 = vld [vmem:[%s260 + $0x1020] sm:$0xff]
        %v2023 = vld [vmem:[%s260 + $0x1028] sm:$0xff]
        %v2024 = vld [vmem:[%s260 + $0x1030] sm:$0xff]
        %v2025 = vld [vmem:[%s260 + $0x1038] sm:$0xff]
        %v2026 = vld [vmem:[%s260 + $0x1040] sm:$0xff]
        %v2027 = vld [vmem:[%s260 + $0x1048] sm:$0xff]
        %v2028 = vld [vmem:[%s260 + $0x1050] sm:$0xff]
        %v2029 = vld [vmem:[%s260 + $0x1058] sm:$0xff]
        %v2030 = vld [vmem:[%s260 + $0x1060] sm:$0xff]
        %v2031 = vld [vmem:[%s260 + $0x1068] sm:$0xff]
        %v2032 = vld [vmem:[%s260 + $0x1070] sm:$0xff]
        %v2033 = vld [vmem:[%s260 + $0x1078] sm:$0xff]
        %v2034 = vld [vmem:[%s260 + $0x1080] sm:$0xff]
        %v2035 = vld [vmem:[%s260 + $0x1088] sm:$0xff]
        %v2036 = vld [vmem:[%s260 + $0x1090] sm:$0xff]
        %v2037 = vld [vmem:[%s260 + $0x1098] sm:$0xff]
        %v2038 = vld [vmem:[%s260 + $0x10a0] sm:$0xff]
        %v2039 = vld [vmem:[%s260 + $0x10a8] sm:$0xff]
        %v2040 = vld [vmem:[%s260 + $0x10b0] sm:$0xff]
        %v2041 = vld [vmem:[%s260 + $0x10b8] sm:$0xff]
        %v2042 = vld [vmem:[%s260 + $0x10c0] sm:$0xff]
        %v2043 = vld [vmem:[%s260 + $0x10c8] sm:$0xff]
        %v2044 = vld [vmem:[%s260 + $0x10d0] sm:$0xff]
        %v2045 = vld [vmem:[%s260 + $0x10d8] sm:$0xff]
        %v2046 = vld [vmem:[%s260 + $0x10e0] sm:$0xff]
        %v2047 = vld [vmem:[%s260 + $0x10e8] sm:$0xff]
        %v2048 = vld [vmem:[%s260 + $0x10f0] sm:$0xff]
        %v2049 = vld [vmem:[%s260 + $0x10f8] sm:$0xff]
        %v2050 = vld [vmem:[%s260 + $0x1100] sm:$0xff]
        %v2051 = vld [vmem:[%s260 + $0x1108] sm:$0xff]
        %v2052 = vld [vmem:[%s260 + $0x1110] sm:$0xff]
        %v2053 = vld [vmem:[%s260 + $0x1118] sm:$0xff]
        %v2054 = vld [vmem:[%s260 + $0x1120] sm:$0xff]
        %v2055 = vld [vmem:[%s260 + $0x1128] sm:$0xff]
        %v2056 = vld [vmem:[%s260 + $0x1130] sm:$0xff]
        %v2057 = vld [vmem:[%s260 + $0x1138] sm:$0xff]
        %v2058 = vld [vmem:[%s260 + $0x1140] sm:$0xff]
        %v2059 = vld [vmem:[%s260 + $0x1148] sm:$0xff]
        %v2060 = vld [vmem:[%s260 + $0x1150] sm:$0xff]
        %v2061 = vld [vmem:[%s260 + $0x1158] sm:$0xff]
        %v2062 = vld [vmem:[%s260 + $0x1160] sm:$0xff]
        %v2063 = vld [vmem:[%s260 + $0x1168] sm:$0xff]
        %v2064 = vld [vmem:[%s260 + $0x1170] sm:$0xff]
        %v2065 = vld [vmem:[%s260 + $0x1178] sm:$0xff]
        %v2066 = vld [vmem:[%s260 + $0x1180] sm:$0xff]
        %v2067 = vld [vmem:[%s260 + $0x1188] sm:$0xff]
        %v2068 = vld [vmem:[%s260 + $0x1190] sm:$0xff]
        %v2069 = vld [vmem:[%s260 + $0x1198] sm:$0xff]
        %v2070 = vld [vmem:[%s260 + $0x11a0] sm:$0xff]
        %v2071 = vld [vmem:[%s260 + $0x11a8] sm:$0xff]
        %v2072 = vld [vmem:[%s260 + $0x11b0] sm:$0xff]
        %v2073 = vld [vmem:[%s260 + $0x11b8] sm:$0xff]
        %v2074 = vld [vmem:[%s260 + $0x11c0] sm:$0xff]
        %v2075 = vld [vmem:[%s260 + $0x11c8] sm:$0xff]
        %v2076 = vld [vmem:[%s260 + $0x11d0] sm:$0xff]
        %v2077 = vld [vmem:[%s260 + $0x11d8] sm:$0xff]
        %v2078 = vld [vmem:[%s260 + $0x11e0] sm:$0xff]
        %v2079 = vld [vmem:[%s260 + $0x11e8] sm:$0xff]
        %v2080 = vld [vmem:[%s260 + $0x11f0] sm:$0xff]
        %v2081 = vld [vmem:[%s260 + $0x11f8] sm:$0xff]
        %v2082 = vld [vmem:[%s260 + $0x1200] sm:$0xff]
        %v2083 = vld [vmem:[%s260 + $0x1208] sm:$0xff]
        %v2084 = vld [vmem:[%s260 + $0x1210] sm:$0xff]
        %v2085 = vld [vmem:[%s260 + $0x1218] sm:$0xff]
        %v2086 = vld [vmem:[%s260 + $0x1220] sm:$0xff]
        %v2087 = vld [vmem:[%s260 + $0x1228] sm:$0xff]
        %v2088 = vld [vmem:[%s260 + $0x1230] sm:$0xff]
        %v2089 = vld [vmem:[%s260 + $0x1238] sm:$0xff]
        %v2090 = vld [vmem:[%s260 + $0x1240] sm:$0xff]
        %v2091 = vld [vmem:[%s260 + $0x1248] sm:$0xff]
        %v2092 = vld [vmem:[%s260 + $0x1250] sm:$0xff]
        %v2093 = vld [vmem:[%s260 + $0x1258] sm:$0xff]
        %v2094 = vld [vmem:[%s260 + $0x1260] sm:$0xff]
        %v2095 = vld [vmem:[%s260 + $0x1268] sm:$0xff]
        %v2096 = vld [vmem:[%s260 + $0x1270] sm:$0xff]
        %v2097 = vld [vmem:[%s260 + $0x1278] sm:$0xff]
        %v2098 = vld [vmem:[%s260 + $0x1280] sm:$0xff]
        %v2099 = vld [vmem:[%s260 + $0x1288] sm:$0xff]
        %v2100 = vld [vmem:[%s260 + $0x1290] sm:$0xff]
        %v2101 = vld [vmem:[%s260 + $0x1298] sm:$0xff]
        %v2102 = vld [vmem:[%s260 + $0x12a0] sm:$0xff]
        %v2103 = vld [vmem:[%s260 + $0x12a8] sm:$0xff]
        %v2104 = vld [vmem:[%s260 + $0x12b0] sm:$0xff]
        %v2105 = vld [vmem:[%s260 + $0x12b8] sm:$0xff]
        %v2106 = vld [vmem:[%s260 + $0x12c0] sm:$0xff]
        %v2107 = vld [vmem:[%s260 + $0x12c8] sm:$0xff]
        %v2108 = vld [vmem:[%s260 + $0x12d0] sm:$0xff]
        %v2109 = vld [vmem:[%s260 + $0x12d8] sm:$0xff]
        %v2110 = vld [vmem:[%s260 + $0x12e0] sm:$0xff]
        %v2111 = vld [vmem:[%s260 + $0x12e8] sm:$0xff]
        %v2112 = vld [vmem:[%s260 + $0x12f0] sm:$0xff]
        %v2113 = vld [vmem:[%s260 + $0x12f8] sm:$0xff]
        %v2114 = vld [vmem:[%s260 + $0x1300] sm:$0xff]
        %v2115 = vld [vmem:[%s260 + $0x1308] sm:$0xff]
        %v2116 = vld [vmem:[%s260 + $0x1310] sm:$0xff]
        %v2117 = vld [vmem:[%s260 + $0x1318] sm:$0xff]
        %v2118 = vld [vmem:[%s260 + $0x1320] sm:$0xff]
        %v2119 = vld [vmem:[%s260 + $0x1328] sm:$0xff]
        %v2120 = vld [vmem:[%s260 + $0x1330] sm:$0xff]
        %v2121 = vld [vmem:[%s260 + $0x1338] sm:$0xff]
        %v2122 = vld [vmem:[%s260 + $0x1340] sm:$0xff]
        %v2123 = vld [vmem:[%s260 + $0x1348] sm:$0xff]
        %v2124 = vld [vmem:[%s260 + $0x1350] sm:$0xff]
        %v2125 = vld [vmem:[%s260 + $0x1358] sm:$0xff]
        %v2126 = vld [vmem:[%s260 + $0x1360] sm:$0xff]
        %v2127 = vld [vmem:[%s260 + $0x1368] sm:$0xff]
        %v2128 = vld [vmem:[%s260 + $0x1370] sm:$0xff]
        %v2129 = vld [vmem:[%s260 + $0x1378] sm:$0xff]
        %v2130 = vld [vmem:[%s260 + $0x1380] sm:$0xff]
        %v2131 = vld [vmem:[%s260 + $0x1388] sm:$0xff]
        %v2132 = vld [vmem:[%s260 + $0x1390] sm:$0xff]
        %v2133 = vld [vmem:[%s260 + $0x1398] sm:$0xff]
        %v2134 = vld [vmem:[%s260 + $0x13a0] sm:$0xff]
        %v2135 = vld [vmem:[%s260 + $0x13a8] sm:$0xff]
        %v2136 = vld [vmem:[%s260 + $0x13b0] sm:$0xff]
        %v2137 = vld [vmem:[%s260 + $0x13b8] sm:$0xff]
        %v2138 = vld [vmem:[%s260 + $0x13c0] sm:$0xff]
        %v2139 = vld [vmem:[%s260 + $0x13c8] sm:$0xff]
        %v2140 = vld [vmem:[%s260 + $0x13d0] sm:$0xff]
        %v2141 = vld [vmem:[%s260 + $0x13d8] sm:$0xff]
        %v2142 = vld [vmem:[%s260 + $0x13e0] sm:$0xff]
        %v2143 = vld [vmem:[%s260 + $0x13e8] sm:$0xff]
        %v2144 = vld [vmem:[%s260 + $0x13f0] sm:$0xff]
        %v2145 = vld [vmem:[%s260 + $0x13f8] sm:$0xff]
        %v2146 = vld [vmem:[%s260 + $0x1400] sm:$0xff]
        %v2147 = vld [vmem:[%s260 + $0x1408] sm:$0xff]
        %v2148 = vld [vmem:[%s260 + $0x1410] sm:$0xff]
        %v2149 = vld [vmem:[%s260 + $0x1418] sm:$0xff]
        %v2150 = vld [vmem:[%s260 + $0x1420] sm:$0xff]
        %v2151 = vld [vmem:[%s260 + $0x1428] sm:$0xff]
        %v2152 = vld [vmem:[%s260 + $0x1430] sm:$0xff]
        %v2153 = vld [vmem:[%s260 + $0x1438] sm:$0xff]
        %v2154 = vld [vmem:[%s260 + $0x1440] sm:$0xff]
        %v2155 = vld [vmem:[%s260 + $0x1448] sm:$0xff]
        %v2156 = vld [vmem:[%s260 + $0x1450] sm:$0xff]
        %v2157 = vld [vmem:[%s260 + $0x1458] sm:$0xff]
        %v2158 = vld [vmem:[%s260 + $0x1460] sm:$0xff]
        %v2159 = vld [vmem:[%s260 + $0x1468] sm:$0xff]
        %v2160 = vld [vmem:[%s260 + $0x1470] sm:$0xff]
        %v2161 = vld [vmem:[%s260 + $0x1478] sm:$0xff]
        %v2162 = vld [vmem:[%s260 + $0x1480] sm:$0xff]
        %v2163 = vld [vmem:[%s260 + $0x1488] sm:$0xff]
        %v2164 = vld [vmem:[%s260 + $0x1490] sm:$0xff]
        %v2165 = vld [vmem:[%s260 + $0x1498] sm:$0xff]
        %v2166 = vld [vmem:[%s260 + $0x14a0] sm:$0xff]
        %v2167 = vld [vmem:[%s260 + $0x14a8] sm:$0xff]
        %v2168 = vld [vmem:[%s260 + $0x14b0] sm:$0xff]
        %v2169 = vld [vmem:[%s260 + $0x14b8] sm:$0xff]
        %v2170 = vld [vmem:[%s260 + $0x14c0] sm:$0xff]
        %v2171 = vld [vmem:[%s260 + $0x14c8] sm:$0xff]
        %v2172 = vld [vmem:[%s260 + $0x14d0] sm:$0xff]
        %v2173 = vld [vmem:[%s260 + $0x14d8] sm:$0xff]
        %v2174 = vld [vmem:[%s260 + $0x14e0] sm:$0xff]
        %v2175 = vld [vmem:[%s260 + $0x14e8] sm:$0xff]
        %v2176 = vld [vmem:[%s260 + $0x14f0] sm:$0xff]
        %v2177 = vld [vmem:[%s260 + $0x14f8] sm:$0xff]
        %v2178 = vld [vmem:[%s260 + $0x1500] sm:$0xff]
        %v2179 = vld [vmem:[%s260 + $0x1508] sm:$0xff]
        %v2180 = vld [vmem:[%s260 + $0x1510] sm:$0xff]
        %v2181 = vld [vmem:[%s260 + $0x1518] sm:$0xff]
        %v2182 = vld [vmem:[%s260 + $0x1520] sm:$0xff]
        %v2183 = vld [vmem:[%s260 + $0x1528] sm:$0xff]
        %v2184 = vld [vmem:[%s260 + $0x1530] sm:$0xff]
        %v2185 = vld [vmem:[%s260 + $0x1538] sm:$0xff]
        %v2186 = vld [vmem:[%s260 + $0x1540] sm:$0xff]
        %v2187 = vld [vmem:[%s260 + $0x1548] sm:$0xff]
        %v2188 = vld [vmem:[%s260 + $0x1550] sm:$0xff]
        %v2189 = vld [vmem:[%s260 + $0x1558] sm:$0xff]
        %v2190 = vld [vmem:[%s260 + $0x1560] sm:$0xff]
        %v2191 = vld [vmem:[%s260 + $0x1568] sm:$0xff]
        %v2192 = vld [vmem:[%s260 + $0x1570] sm:$0xff]
        %v2193 = vld [vmem:[%s260 + $0x1578] sm:$0xff]
        %v2194 = vld [vmem:[%s260 + $0x1580] sm:$0xff]
        %v2195 = vld [vmem:[%s260 + $0x1588] sm:$0xff]
        %v2196 = vld [vmem:[%s260 + $0x1590] sm:$0xff]
        %v2197 = vld [vmem:[%s260 + $0x1598] sm:$0xff]
        %v2198 = vld [vmem:[%s260 + $0x15a0] sm:$0xff]
        %v2199 = vld [vmem:[%s260 + $0x15a8] sm:$0xff]
        %v2200 = vld [vmem:[%s260 + $0x15b0] sm:$0xff]
        %v2201 = vld [vmem:[%s260 + $0x15b8] sm:$0xff]
        %v2202 = vld [vmem:[%s260 + $0x15c0] sm:$0xff]
        %v2203 = vld [vmem:[%s260 + $0x15c8] sm:$0xff]
        %v2204 = vld [vmem:[%s260 + $0x15d0] sm:$0xff]
        %v2205 = vld [vmem:[%s260 + $0x15d8] sm:$0xff]
        %v2206 = vld [vmem:[%s260 + $0x15e0] sm:$0xff]
        %v2207 = vld [vmem:[%s260 + $0x15e8] sm:$0xff]
        %v2208 = vld [vmem:[%s260 + $0x15f0] sm:$0xff]
        %v2209 = vld [vmem:[%s260 + $0x15f8] sm:$0xff]
        %v2210 = vld [vmem:[%s260 + $0x1600] sm:$0xff]
        %v2211 = vld [vmem:[%s260 + $0x1608] sm:$0xff]
        %v2212 = vld [vmem:[%s260 + $0x1610] sm:$0xff]
        %v2213 = vld [vmem:[%s260 + $0x1618] sm:$0xff]
        %v2214 = vld [vmem:[%s260 + $0x1620] sm:$0xff]
        %v2215 = vld [vmem:[%s260 + $0x1628] sm:$0xff]
        %v2216 = vld [vmem:[%s260 + $0x1630] sm:$0xff]
        %v2217 = vld [vmem:[%s260 + $0x1638] sm:$0xff]
        %v2218 = vld [vmem:[%s260 + $0x1640] sm:$0xff]
        %v2219 = vld [vmem:[%s260 + $0x1648] sm:$0xff]
        %v2220 = vld [vmem:[%s260 + $0x1650] sm:$0xff]
        %v2221 = vld [vmem:[%s260 + $0x1658] sm:$0xff]
        %v2222 = vld [vmem:[%s260 + $0x1660] sm:$0xff]
        %v2223 = vld [vmem:[%s260 + $0x1668] sm:$0xff]
        %v2224 = vld [vmem:[%s260 + $0x1670] sm:$0xff]
        %v2225 = vld [vmem:[%s260 + $0x1678] sm:$0xff]
        %v2226 = vld [vmem:[%s260 + $0x1680] sm:$0xff]
        %v2227 = vld [vmem:[%s260 + $0x1688] sm:$0xff]
        %v2228 = vld [vmem:[%s260 + $0x1690] sm:$0xff]
        %v2229 = vld [vmem:[%s260 + $0x1698] sm:$0xff]
        %v2230 = vld [vmem:[%s260 + $0x16a0] sm:$0xff]
        %v2231 = vld [vmem:[%s260 + $0x16a8] sm:$0xff]
        %v2232 = vld [vmem:[%s260 + $0x16b0] sm:$0xff]
        %v2233 = vld [vmem:[%s260 + $0x16b8] sm:$0xff]
        %v2234 = vld [vmem:[%s260 + $0x16c0] sm:$0xff]
        %v2235 = vld [vmem:[%s260 + $0x16c8] sm:$0xff]
        %v2236 = vld [vmem:[%s260 + $0x16d0] sm:$0xff]
        %v2237 = vld [vmem:[%s260 + $0x16d8] sm:$0xff]
        %v2238 = vld [vmem:[%s260 + $0x16e0] sm:$0xff]
        %v2239 = vld [vmem:[%s260 + $0x16e8] sm:$0xff]
        %v2240 = vld [vmem:[%s260 + $0x16f0] sm:$0xff]
        %v2241 = vld [vmem:[%s260 + $0x16f8] sm:$0xff]
        %v2242 = vld [vmem:[%s260 + $0x1700] sm:$0xff]
        %v2243 = vld [vmem:[%s260 + $0x1708] sm:$0xff]
        %v2244 = vld [vmem:[%s260 + $0x1710] sm:$0xff]
        %v2245 = vld [vmem:[%s260 + $0x1718] sm:$0xff]
        %v2246 = vld [vmem:[%s260 + $0x1720] sm:$0xff]
        %v2247 = vld [vmem:[%s260 + $0x1728] sm:$0xff]
        %v2248 = vld [vmem:[%s260 + $0x1730] sm:$0xff]
        %v2249 = vld [vmem:[%s260 + $0x1738] sm:$0xff]
        %v2250 = vld [vmem:[%s260 + $0x1740] sm:$0xff]
        %v2251 = vld [vmem:[%s260 + $0x1748] sm:$0xff]
        %v2252 = vld [vmem:[%s260 + $0x1750] sm:$0xff]
        %v2253 = vld [vmem:[%s260 + $0x1758] sm:$0xff]
        %v2254 = vld [vmem:[%s260 + $0x1760] sm:$0xff]
        %v2255 = vld [vmem:[%s260 + $0x1768] sm:$0xff]
        %v2256 = vld [vmem:[%s260 + $0x1770] sm:$0xff]
        %v2257 = vld [vmem:[%s260 + $0x1778] sm:$0xff]
        %v2258 = vld [vmem:[%s260 + $0x1780] sm:$0xff]
        %v2259 = vld [vmem:[%s260 + $0x1788] sm:$0xff]
        %v2260 = vld [vmem:[%s260 + $0x1790] sm:$0xff]
        %v2261 = vld [vmem:[%s260 + $0x1798] sm:$0xff]
        %v2262 = vld [vmem:[%s260 + $0x17a0] sm:$0xff]
        %v2263 = vld [vmem:[%s260 + $0x17a8] sm:$0xff]
        %v2264 = vld [vmem:[%s260 + $0x17b0] sm:$0xff]
        %v2265 = vld [vmem:[%s260 + $0x17b8] sm:$0xff]
        %v2266 = vld [vmem:[%s260 + $0x17c0] sm:$0xff]
        %v2267 = vld [vmem:[%s260 + $0x17c8] sm:$0xff]
        %v2268 = vld [vmem:[%s260 + $0x17d0] sm:$0xff]
        %v2269 = vld [vmem:[%s260 + $0x17d8] sm:$0xff]
        %v2270 = vld [vmem:[%s260 + $0x17e0] sm:$0xff]
        %v2271 = vld [vmem:[%s260 + $0x17e8] sm:$0xff]
        %v2272 = vld [vmem:[%s260 + $0x17f0] sm:$0xff]
        %v2273 = vld [vmem:[%s260 + $0x17f8] sm:$0xff]
        %v2274 = vld [vmem:[%s260 + $0x1800] sm:$0xff]
        %v2275 = vld [vmem:[%s260 + $0x1808] sm:$0xff]
        %v2276 = vld [vmem:[%s260 + $0x1810] sm:$0xff]
        %v2277 = vld [vmem:[%s260 + $0x1818] sm:$0xff]
        %v2278 = vld [vmem:[%s260 + $0x1820] sm:$0xff]
        %v2279 = vld [vmem:[%s260 + $0x1828] sm:$0xff]
        %v2280 = vld [vmem:[%s260 + $0x1830] sm:$0xff]
        %v2281 = vld [vmem:[%s260 + $0x1838] sm:$0xff]
        %v2282 = vld [vmem:[%s260 + $0x1840] sm:$0xff]
        %v2283 = vld [vmem:[%s260 + $0x1848] sm:$0xff]
        %v2284 = vld [vmem:[%s260 + $0x1850] sm:$0xff]
        %v2285 = vld [vmem:[%s260 + $0x1858] sm:$0xff]
        %v2286 = vld [vmem:[%s260 + $0x1860] sm:$0xff]
        %v2287 = vld [vmem:[%s260 + $0x1868] sm:$0xff]
        %v2288 = vld [vmem:[%s260 + $0x1870] sm:$0xff]
        %v2289 = vld [vmem:[%s260 + $0x1878] sm:$0xff]
        %v2290 = vld [vmem:[%s260 + $0x1880] sm:$0xff]
        %v2291 = vld [vmem:[%s260 + $0x1888] sm:$0xff]
        %v2292 = vld [vmem:[%s260 + $0x1890] sm:$0xff]
        %v2293 = vld [vmem:[%s260 + $0x1898] sm:$0xff]
        %v2294 = vld [vmem:[%s260 + $0x18a0] sm:$0xff]
        %v2295 = vld [vmem:[%s260 + $0x18a8] sm:$0xff]
        %v2296 = vld [vmem:[%s260 + $0x18b0] sm:$0xff]
        %v2297 = vld [vmem:[%s260 + $0x18b8] sm:$0xff]
        %v2298 = vld [vmem:[%s260 + $0x18c0] sm:$0xff]
        %v2299 = vld [vmem:[%s260 + $0x18c8] sm:$0xff]
        %v2300 = vld [vmem:[%s260 + $0x18d0] sm:$0xff]
        %v2301 = vld [vmem:[%s260 + $0x18d8] sm:$0xff]
        %v2302 = vld [vmem:[%s260 + $0x18e0] sm:$0xff]
        %v2303 = vld [vmem:[%s260 + $0x18e8] sm:$0xff]
        %v2304 = vld [vmem:[%s260 + $0x18f0] sm:$0xff]
        %v2305 = vld [vmem:[%s260 + $0x18f8] sm:$0xff]
        %v2306 = vld [vmem:[%s260 + $0x1900] sm:$0xff]
        %v2307 = vld [vmem:[%s260 + $0x1908] sm:$0xff]
        %v2308 = vld [vmem:[%s260 + $0x1910] sm:$0xff]
        %v2309 = vld [vmem:[%s260 + $0x1918] sm:$0xff]
        %v2310 = vld [vmem:[%s260 + $0x1920] sm:$0xff]
        %v2311 = vld [vmem:[%s260 + $0x1928] sm:$0xff]
        %v2312 = vld [vmem:[%s260 + $0x1930] sm:$0xff]
        %v2313 = vld [vmem:[%s260 + $0x1938] sm:$0xff]
        %v2314 = vld [vmem:[%s260 + $0x1940] sm:$0xff]
        %v2315 = vld [vmem:[%s260 + $0x1948] sm:$0xff]
        %v2316 = vld [vmem:[%s260 + $0x1950] sm:$0xff]
        %v2317 = vld [vmem:[%s260 + $0x1958] sm:$0xff]
        %v2318 = vld [vmem:[%s260 + $0x1960] sm:$0xff]
        %v2319 = vld [vmem:[%s260 + $0x1968] sm:$0xff]
        %v2320 = vld [vmem:[%s260 + $0x1970] sm:$0xff]
        %v2321 = vld [vmem:[%s260 + $0x1978] sm:$0xff]
        %v2322 = vld [vmem:[%s260 + $0x1980] sm:$0xff]
        %v2323 = vld [vmem:[%s260 + $0x1988] sm:$0xff]
        %v2324 = vld [vmem:[%s260 + $0x1990] sm:$0xff]
        %v2325 = vld [vmem:[%s260 + $0x1998] sm:$0xff]
        %v2326 = vld [vmem:[%s260 + $0x19a0] sm:$0xff]
        %v2327 = vld [vmem:[%s260 + $0x19a8] sm:$0xff]
        %v2328 = vld [vmem:[%s260 + $0x19b0] sm:$0xff]
        %v2329 = vld [vmem:[%s260 + $0x19b8] sm:$0xff]
        %v2330 = vld [vmem:[%s260 + $0x19c0] sm:$0xff]
        %v2331 = vld [vmem:[%s260 + $0x19c8] sm:$0xff]
        %v2332 = vld [vmem:[%s260 + $0x19d0] sm:$0xff]
        %v2333 = vld [vmem:[%s260 + $0x19d8] sm:$0xff]
        %v2334 = vld [vmem:[%s260 + $0x19e0] sm:$0xff]
        %v2335 = vld [vmem:[%s260 + $0x19e8] sm:$0xff]
        %v2336 = vld [vmem:[%s260 + $0x19f0] sm:$0xff]
        %v2337 = vld [vmem:[%s260 + $0x19f8] sm:$0xff]
        %v2338 = vld [vmem:[%s260 + $0x1a00] sm:$0xff]
        %v2339 = vld [vmem:[%s260 + $0x1a08] sm:$0xff]
        %v2340 = vld [vmem:[%s260 + $0x1a10] sm:$0xff]
        %v2341 = vld [vmem:[%s260 + $0x1a18] sm:$0xff]
        %v2342 = vld [vmem:[%s260 + $0x1a20] sm:$0xff]
        %v2343 = vld [vmem:[%s260 + $0x1a28] sm:$0xff]
        %v2344 = vld [vmem:[%s260 + $0x1a30] sm:$0xff]
        %v2345 = vld [vmem:[%s260 + $0x1a38] sm:$0xff]
        %v2346 = vld [vmem:[%s260 + $0x1a40] sm:$0xff]
        %v2347 = vld [vmem:[%s260 + $0x1a48] sm:$0xff]
        %v2348 = vld [vmem:[%s260 + $0x1a50] sm:$0xff]
        %v2349 = vld [vmem:[%s260 + $0x1a58] sm:$0xff]
        %v2350 = vld [vmem:[%s260 + $0x1a60] sm:$0xff]
        %v2351 = vld [vmem:[%s260 + $0x1a68] sm:$0xff]
        %v2352 = vld [vmem:[%s260 + $0x1a70] sm:$0xff]
        %v2353 = vld [vmem:[%s260 + $0x1a78] sm:$0xff]
        %v2354 = vld [vmem:[%s260 + $0x1a80] sm:$0xff]
        %v2355 = vld [vmem:[%s260 + $0x1a88] sm:$0xff]
        %v2356 = vld [vmem:[%s260 + $0x1a90] sm:$0xff]
        %v2357 = vld [vmem:[%s260 + $0x1a98] sm:$0xff]
        %v2358 = vld [vmem:[%s260 + $0x1aa0] sm:$0xff]
        %v2359 = vld [vmem:[%s260 + $0x1aa8] sm:$0xff]
        %v2360 = vld [vmem:[%s260 + $0x1ab0] sm:$0xff]
        %v2361 = vld [vmem:[%s260 + $0x1ab8] sm:$0xff]
        %v2362 = vld [vmem:[%s260 + $0x1ac0] sm:$0xff]
        %v2363 = vld [vmem:[%s260 + $0x1ac8] sm:$0xff]
        %v2364 = vld [vmem:[%s260 + $0x1ad0] sm:$0xff]
        %v2365 = vld [vmem:[%s260 + $0x1ad8] sm:$0xff]
        %v2366 = vld [vmem:[%s260 + $0x1ae0] sm:$0xff]
        %v2367 = vld [vmem:[%s260 + $0x1ae8] sm:$0xff]
        %v2368 = vld [vmem:[%s260 + $0x1af0] sm:$0xff]
        %v2369 = vld [vmem:[%s260 + $0x1af8] sm:$0xff]
        %v2370 = vld [vmem:[%s260 + $0x1b00] sm:$0xff]
        %v2371 = vld [vmem:[%s260 + $0x1b08] sm:$0xff]
        %v2372 = vld [vmem:[%s260 + $0x1b10] sm:$0xff]
        %v2373 = vld [vmem:[%s260 + $0x1b18] sm:$0xff]
        %v2374 = vld [vmem:[%s260 + $0x1b20] sm:$0xff]
        %v2375 = vld [vmem:[%s260 + $0x1b28] sm:$0xff]
        %v2376 = vld [vmem:[%s260 + $0x1b30] sm:$0xff]
        %v2377 = vld [vmem:[%s260 + $0x1b38] sm:$0xff]
        %v2378 = vld [vmem:[%s260 + $0x1b40] sm:$0xff]
        %v2379 = vld [vmem:[%s260 + $0x1b48] sm:$0xff]
        %v2380 = vld [vmem:[%s260 + $0x1b50] sm:$0xff]
        %v2381 = vld [vmem:[%s260 + $0x1b58] sm:$0xff]
        %v2382 = vld [vmem:[%s260 + $0x1b60] sm:$0xff]
        %v2383 = vld [vmem:[%s260 + $0x1b68] sm:$0xff]
        %v2384 = vld [vmem:[%s260 + $0x1b70] sm:$0xff]
        %v2385 = vld [vmem:[%s260 + $0x1b78] sm:$0xff]
        %v2386 = vld [vmem:[%s260 + $0x1b80] sm:$0xff]
        %v2387 = vld [vmem:[%s260 + $0x1b88] sm:$0xff]
        %v2388 = vld [vmem:[%s260 + $0x1b90] sm:$0xff]
        %v2389 = vld [vmem:[%s260 + $0x1b98] sm:$0xff]
        %v2390 = vld [vmem:[%s260 + $0x1ba0] sm:$0xff]
        %v2391 = vld [vmem:[%s260 + $0x1ba8] sm:$0xff]
        %v2392 = vld [vmem:[%s260 + $0x1bb0] sm:$0xff]
        %v2393 = vld [vmem:[%s260 + $0x1bb8] sm:$0xff]
        %v2394 = vld [vmem:[%s260 + $0x1bc0] sm:$0xff]
        %v2395 = vld [vmem:[%s260 + $0x1bc8] sm:$0xff]
        %v2396 = vld [vmem:[%s260 + $0x1bd0] sm:$0xff]
        %v2397 = vld [vmem:[%s260 + $0x1bd8] sm:$0xff]
        %v2398 = vld [vmem:[%s260 + $0x1be0] sm:$0xff]
        %v2399 = vld [vmem:[%s260 + $0x1be8] sm:$0xff]
        %v2400 = vld [vmem:[%s260 + $0x1bf0] sm:$0xff]
        %v2401 = vld [vmem:[%s260 + $0x1bf8] sm:$0xff]
        %v2402 = vld [vmem:[%s260 + $0x1c00] sm:$0xff]
        %v2403 = vld [vmem:[%s260 + $0x1c08] sm:$0xff]
        %v2404 = vld [vmem:[%s260 + $0x1c10] sm:$0xff]
        %v2405 = vld [vmem:[%s260 + $0x1c18] sm:$0xff]
        %v2406 = vld [vmem:[%s260 + $0x1c20] sm:$0xff]
        %v2407 = vld [vmem:[%s260 + $0x1c28] sm:$0xff]
        %v2408 = vld [vmem:[%s260 + $0x1c30] sm:$0xff]
        %v2409 = vld [vmem:[%s260 + $0x1c38] sm:$0xff]
        %v2410 = vld [vmem:[%s260 + $0x1c40] sm:$0xff]
        %v2411 = vld [vmem:[%s260 + $0x1c48] sm:$0xff]
        %v2412 = vld [vmem:[%s260 + $0x1c50] sm:$0xff]
        %v2413 = vld [vmem:[%s260 + $0x1c58] sm:$0xff]
        %v2414 = vld [vmem:[%s260 + $0x1c60] sm:$0xff]
        %v2415 = vld [vmem:[%s260 + $0x1c68] sm:$0xff]
        %v2416 = vld [vmem:[%s260 + $0x1c70] sm:$0xff]
        %v2417 = vld [vmem:[%s260 + $0x1c78] sm:$0xff]
        %v2418 = vld [vmem:[%s260 + $0x1c80] sm:$0xff]
        %v2419 = vld [vmem:[%s260 + $0x1c88] sm:$0xff]
        %v2420 = vld [vmem:[%s260 + $0x1c90] sm:$0xff]
        %v2421 = vld [vmem:[%s260 + $0x1c98] sm:$0xff]
        %v2422 = vld [vmem:[%s260 + $0x1ca0] sm:$0xff]
        %v2423 = vld [vmem:[%s260 + $0x1ca8] sm:$0xff]
        %v2424 = vld [vmem:[%s260 + $0x1cb0] sm:$0xff]
        %v2425 = vld [vmem:[%s260 + $0x1cb8] sm:$0xff]
        %v2426 = vld [vmem:[%s260 + $0x1cc0] sm:$0xff]
        %v2427 = vld [vmem:[%s260 + $0x1cc8] sm:$0xff]
        %v2428 = vld [vmem:[%s260 + $0x1cd0] sm:$0xff]
        %v2429 = vld [vmem:[%s260 + $0x1cd8] sm:$0xff]
        %v2430 = vld [vmem:[%s260 + $0x1ce0] sm:$0xff]
        %v2431 = vld [vmem:[%s260 + $0x1ce8] sm:$0xff]
        %v2432 = vld [vmem:[%s260 + $0x1cf0] sm:$0xff]
        %v2433 = vld [vmem:[%s260 + $0x1cf8] sm:$0xff]
        %v2434 = vld [vmem:[%s269] sm:$0xf]
        %v2436 = vlaneseq
        %v2437 = vshrl.u32 %v2436, 7
        %v2438 = vsub.s32 0, %v2437
        %v2439 = vrot.slane %v2434, %v2438
        %v2440 = vlaneseq
        %v2441 = vshrl.u32 %v2440, 7
        %v2442 = vsub.s32 1, %v2441
        %v2443 = vrot.slane %v2434, %v2442
        %v2444 = vlaneseq
        %v2445 = vshrl.u32 %v2444, 7
        %v2446 = vsub.s32 2, %v2445
        %v2447 = vrot.slane %v2434, %v2446
        %v2448 = vlaneseq
        %v2449 = vshrl.u32 %v2448, 7
        %v2450 = vsub.s32 3, %v2449
        %v2451 = vrot.slane %v2434, %v2450
        %v3384 = vunpack.c.l.b16 %v1506
        %v3385 = vunpack.c.h.b16 %v1506
        %v3386 = vunpack.c.l.b16 %v1507
        %v3387 = vunpack.c.h.b16 %v1507
        %v3388 = vunpack.c.l.b16 %v1508
        %v3389 = vunpack.c.h.b16 %v1508
        %v3390 = vunpack.c.l.b16 %v1509
        %v3391 = vunpack.c.h.b16 %v1509
        %v3392 = vunpack.c.l.b16 %v1510
        %v3393 = vunpack.c.h.b16 %v1510
        %v3394 = vunpack.c.l.b16 %v1511
        %v3395 = vunpack.c.h.b16 %v1511
        %v3396 = vunpack.c.l.b16 %v1512
        %v3397 = vunpack.c.h.b16 %v1512
        %v3398 = vunpack.c.l.b16 %v1513
        %v3399 = vunpack.c.h.b16 %v1513
        %v3400 = vunpack.c.l.b16 %v1514
        %v3401 = vunpack.c.h.b16 %v1514
        %v3402 = vunpack.c.l.b16 %v1515
        %v3403 = vunpack.c.h.b16 %v1515
        %v3404 = vunpack.c.l.b16 %v1516
        %v3405 = vunpack.c.h.b16 %v1516
        %v3406 = vunpack.c.l.b16 %v1517
        %v3407 = vunpack.c.h.b16 %v1517
        %v3408 = vunpack.c.l.b16 %v1518
        %v3409 = vunpack.c.h.b16 %v1518
        %v3410 = vunpack.c.l.b16 %v1519
        %v3411 = vunpack.c.h.b16 %v1519
        %v3412 = vunpack.c.l.b16 %v1520
        %v3413 = vunpack.c.h.b16 %v1520
        %v3414 = vunpack.c.l.b16 %v1521
        %v3415 = vunpack.c.h.b16 %v1521
        %v3416 = vunpack.c.l.b16 %v1522
        %v3417 = vunpack.c.h.b16 %v1522
        %v3418 = vunpack.c.l.b16 %v1523
        %v3419 = vunpack.c.h.b16 %v1523
        %v3420 = vunpack.c.l.b16 %v1524
        %v3421 = vunpack.c.h.b16 %v1524
        %v3422 = vunpack.c.l.b16 %v1525
        %v3423 = vunpack.c.h.b16 %v1525
        %v3424 = vunpack.c.l.b16 %v1526
        %v3425 = vunpack.c.h.b16 %v1526
        %v3426 = vunpack.c.l.b16 %v1527
        %v3427 = vunpack.c.h.b16 %v1527
        %v3428 = vunpack.c.l.b16 %v1528
        %v3429 = vunpack.c.h.b16 %v1528
        %v3430 = vunpack.c.l.b16 %v1529
        %v3431 = vunpack.c.h.b16 %v1529
        %v3432 = vunpack.c.l.b16 %v1530
        %v3433 = vunpack.c.h.b16 %v1530
        %v3434 = vunpack.c.l.b16 %v1531
        %v3435 = vunpack.c.h.b16 %v1531
        %v3436 = vunpack.c.l.b16 %v1532
        %v3437 = vunpack.c.h.b16 %v1532
        %v3438 = vunpack.c.l.b16 %v1533
        %v3439 = vunpack.c.h.b16 %v1533
        %v3440 = vunpack.c.l.b16 %v1534
        %v3441 = vunpack.c.h.b16 %v1534
        %v3442 = vunpack.c.l.b16 %v1535
        %v3443 = vunpack.c.h.b16 %v1535
        %v3444 = vunpack.c.l.b16 %v1536
        %v3445 = vunpack.c.h.b16 %v1536
        %v3446 = vunpack.c.l.b16 %v1537
        %v3447 = vunpack.c.h.b16 %v1537
        %v3448 = vunpack.c.l.b16 %v1538
        %v3449 = vunpack.c.h.b16 %v1538
        %v3450 = vunpack.c.l.b16 %v1539
        %v3451 = vunpack.c.h.b16 %v1539
        %v3452 = vunpack.c.l.b16 %v1540
        %v3453 = vunpack.c.h.b16 %v1540
        %v3454 = vunpack.c.l.b16 %v1541
        %v3455 = vunpack.c.h.b16 %v1541
        %v3456 = vunpack.c.l.b16 %v1542
        %v3457 = vunpack.c.h.b16 %v1542
        %v3458 = vunpack.c.l.b16 %v1543
        %v3459 = vunpack.c.h.b16 %v1543
        %v3460 = vunpack.c.l.b16 %v1544
        %v3461 = vunpack.c.h.b16 %v1544
        %v3462 = vunpack.c.l.b16 %v1545
        %v3463 = vunpack.c.h.b16 %v1545
        %v3464 = vunpack.c.l.b16 %v1546
        %v3465 = vunpack.c.h.b16 %v1546
        %v3466 = vunpack.c.l.b16 %v1547
        %v3467 = vunpack.c.h.b16 %v1547
        %v3468 = vunpack.c.l.b16 %v1548
        %v3469 = vunpack.c.h.b16 %v1548
        %v3470 = vunpack.c.l.b16 %v1549
        %v3471 = vunpack.c.h.b16 %v1549
        %v3472 = vunpack.c.l.b16 %v1550
        %v3473 = vunpack.c.h.b16 %v1550
        %v3474 = vunpack.c.l.b16 %v1551
        %v3475 = vunpack.c.h.b16 %v1551
        %v3476 = vunpack.c.l.b16 %v1552
        %v3477 = vunpack.c.h.b16 %v1552
        %v3478 = vunpack.c.l.b16 %v1553
        %v3479 = vunpack.c.h.b16 %v1553
        %v3480 = vunpack.c.l.b16 %v1554
        %v3481 = vunpack.c.h.b16 %v1554
        %v3482 = vunpack.c.l.b16 %v1555
        %v3483 = vunpack.c.h.b16 %v1555
        %v3484 = vunpack.c.l.b16 %v1556
        %v3485 = vunpack.c.h.b16 %v1556
        %v3486 = vunpack.c.l.b16 %v1557
        %v3487 = vunpack.c.h.b16 %v1557
        %v3488 = vunpack.c.l.b16 %v1558
        %v3489 = vunpack.c.h.b16 %v1558
        %v3490 = vunpack.c.l.b16 %v1559
        %v3491 = vunpack.c.h.b16 %v1559
        %v3492 = vunpack.c.l.b16 %v1560
        %v3493 = vunpack.c.h.b16 %v1560
        %v3494 = vunpack.c.l.b16 %v1561
        %v3495 = vunpack.c.h.b16 %v1561
        %v3496 = vunpack.c.l.b16 %v1562
        %v3497 = vunpack.c.h.b16 %v1562
        %v3498 = vunpack.c.l.b16 %v1563
        %v3499 = vunpack.c.h.b16 %v1563
        %v3500 = vunpack.c.l.b16 %v1564
        %v3501 = vunpack.c.h.b16 %v1564
        %v3502 = vunpack.c.l.b16 %v1565
        %v3503 = vunpack.c.h.b16 %v1565
        %v3504 = vunpack.c.l.b16 %v1566
        %v3505 = vunpack.c.h.b16 %v1566
        %v3506 = vunpack.c.l.b16 %v1567
        %v3507 = vunpack.c.h.b16 %v1567
        %v3508 = vunpack.c.l.b16 %v1568
        %v3509 = vunpack.c.h.b16 %v1568
        %v3510 = vunpack.c.l.b16 %v1569
        %v3511 = vunpack.c.h.b16 %v1569
        %v3512 = vunpack.c.l.b16 %v1570
        %v3513 = vunpack.c.h.b16 %v1570
        %v3514 = vunpack.c.l.b16 %v1571
        %v3515 = vunpack.c.h.b16 %v1571
        %v3516 = vunpack.c.l.b16 %v1572
        %v3517 = vunpack.c.h.b16 %v1572
        %v3518 = vunpack.c.l.b16 %v1573
        %v3519 = vunpack.c.h.b16 %v1573
        %v3520 = vunpack.c.l.b16 %v1574
        %v3521 = vunpack.c.h.b16 %v1574
        %v3522 = vunpack.c.l.b16 %v1575
        %v3523 = vunpack.c.h.b16 %v1575
        %v3524 = vunpack.c.l.b16 %v1576
        %v3525 = vunpack.c.h.b16 %v1576
        %v3526 = vunpack.c.l.b16 %v1577
        %v3527 = vunpack.c.h.b16 %v1577
        %v3528 = vunpack.c.l.b16 %v1578
        %v3529 = vunpack.c.h.b16 %v1578
        %v3530 = vunpack.c.l.b16 %v1579
        %v3531 = vunpack.c.h.b16 %v1579
        %v3532 = vunpack.c.l.b16 %v1580
        %v3533 = vunpack.c.h.b16 %v1580
        %v3534 = vunpack.c.l.b16 %v1581
        %v3535 = vunpack.c.h.b16 %v1581
        %v3536 = vunpack.c.l.b16 %v1582
        %v3537 = vunpack.c.h.b16 %v1582
        %v3538 = vunpack.c.l.b16 %v1583
        %v3539 = vunpack.c.h.b16 %v1583
        %v3540 = vunpack.c.l.b16 %v1584
        %v3541 = vunpack.c.h.b16 %v1584
        %v3542 = vunpack.c.l.b16 %v1585
        %v3543 = vunpack.c.h.b16 %v1585
        %v3544 = vunpack.c.l.b16 %v1586
        %v3545 = vunpack.c.h.b16 %v1586
        %v3546 = vunpack.c.l.b16 %v1587
        %v3547 = vunpack.c.h.b16 %v1587
        %v3548 = vunpack.c.l.b16 %v1588
        %v3549 = vunpack.c.h.b16 %v1588
        %v3550 = vunpack.c.l.b16 %v1589
        %v3551 = vunpack.c.h.b16 %v1589
        %v3552 = vunpack.c.l.b16 %v1590
        %v3553 = vunpack.c.h.b16 %v1590
        %v3554 = vunpack.c.l.b16 %v1591
        %v3555 = vunpack.c.h.b16 %v1591
        %v3556 = vunpack.c.l.b16 %v1592
        %v3557 = vunpack.c.h.b16 %v1592
        %v3558 = vunpack.c.l.b16 %v1593
        %v3559 = vunpack.c.h.b16 %v1593
        %v3560 = vunpack.c.l.b16 %v1594
        %v3561 = vunpack.c.h.b16 %v1594
        %v3562 = vunpack.c.l.b16 %v1595
        %v3563 = vunpack.c.h.b16 %v1595
        %v3564 = vunpack.c.l.b16 %v1596
        %v3565 = vunpack.c.h.b16 %v1596
        %v3566 = vunpack.c.l.b16 %v1597
        %v3567 = vunpack.c.h.b16 %v1597
        %v3568 = vunpack.c.l.b16 %v1598
        %v3569 = vunpack.c.h.b16 %v1598
        %v3570 = vunpack.c.l.b16 %v1599
        %v3571 = vunpack.c.h.b16 %v1599
        %v3572 = vunpack.c.l.b16 %v1600
        %v3573 = vunpack.c.h.b16 %v1600
        %v3574 = vunpack.c.l.b16 %v1601
        %v3575 = vunpack.c.h.b16 %v1601
        %v3576 = vunpack.c.l.b16 %v1602
        %v3577 = vunpack.c.h.b16 %v1602
        %v3578 = vunpack.c.l.b16 %v1603
        %v3579 = vunpack.c.h.b16 %v1603
        %v3580 = vunpack.c.l.b16 %v1604
        %v3581 = vunpack.c.h.b16 %v1604
        %v3582 = vunpack.c.l.b16 %v1605
        %v3583 = vunpack.c.h.b16 %v1605
        %v3584 = vunpack.c.l.b16 %v1606
        %v3585 = vunpack.c.h.b16 %v1606
        %v3586 = vunpack.c.l.b16 %v1607
        %v3587 = vunpack.c.h.b16 %v1607
        %v3588 = vunpack.c.l.b16 %v1608
        %v3589 = vunpack.c.h.b16 %v1608
        %v3590 = vunpack.c.l.b16 %v1609
        %v3591 = vunpack.c.h.b16 %v1609
        %v3592 = vunpack.c.l.b16 %v1610
        %v3593 = vunpack.c.h.b16 %v1610
        %v3594 = vunpack.c.l.b16 %v1611
        %v3595 = vunpack.c.h.b16 %v1611
        %v3596 = vunpack.c.l.b16 %v1612
        %v3597 = vunpack.c.h.b16 %v1612
        %v3598 = vunpack.c.l.b16 %v1613
        %v3599 = vunpack.c.h.b16 %v1613
        %v3600 = vunpack.c.l.b16 %v1614
        %v3601 = vunpack.c.h.b16 %v1614
        %v3602 = vunpack.c.l.b16 %v1615
        %v3603 = vunpack.c.h.b16 %v1615
        %v3604 = vunpack.c.l.b16 %v1616
        %v3605 = vunpack.c.h.b16 %v1616
        %v3606 = vunpack.c.l.b16 %v1617
        %v3607 = vunpack.c.h.b16 %v1617
        %v3608 = vunpack.c.l.b16 %v1618
        %v3609 = vunpack.c.h.b16 %v1618
        %v3610 = vunpack.c.l.b16 %v1619
        %v3611 = vunpack.c.h.b16 %v1619
        %v3612 = vunpack.c.l.b16 %v1620
        %v3613 = vunpack.c.h.b16 %v1620
        %v3614 = vunpack.c.l.b16 %v1621
        %v3615 = vunpack.c.h.b16 %v1621
        %v3616 = vunpack.c.l.b16 %v1622
        %v3617 = vunpack.c.h.b16 %v1622
        %v3618 = vunpack.c.l.b16 %v1623
        %v3619 = vunpack.c.h.b16 %v1623
        %v3620 = vunpack.c.l.b16 %v1624
        %v3621 = vunpack.c.h.b16 %v1624
        %v3622 = vunpack.c.l.b16 %v1625
        %v3623 = vunpack.c.h.b16 %v1625
        %v3624 = vunpack.c.l.b16 %v1626
        %v3625 = vunpack.c.h.b16 %v1626
        %v3626 = vunpack.c.l.b16 %v1627
        %v3627 = vunpack.c.h.b16 %v1627
        %v3628 = vunpack.c.l.b16 %v1628
        %v3629 = vunpack.c.h.b16 %v1628
        %v3630 = vunpack.c.l.b16 %v1629
        %v3631 = vunpack.c.h.b16 %v1629
        %v3632 = vunpack.c.l.b16 %v1630
        %v3633 = vunpack.c.h.b16 %v1630
        %v3634 = vunpack.c.l.b16 %v1631
        %v3635 = vunpack.c.h.b16 %v1631
        %v3636 = vunpack.c.l.b16 %v1632
        %v3637 = vunpack.c.h.b16 %v1632
        %v3638 = vunpack.c.l.b16 %v1633
        %v3639 = vunpack.c.h.b16 %v1633
        %v3640 = vunpack.c.l.b16 %v1634
        %v3641 = vunpack.c.h.b16 %v1634
        %v3642 = vunpack.c.l.b16 %v1635
        %v3643 = vunpack.c.h.b16 %v1635
        %v3644 = vunpack.c.l.b16 %v1636
        %v3645 = vunpack.c.h.b16 %v1636
        %v3646 = vunpack.c.l.b16 %v1637
        %v3647 = vunpack.c.h.b16 %v1637
        %v3648 = vunpack.c.l.b16 %v1638
        %v3649 = vunpack.c.h.b16 %v1638
        %v3650 = vunpack.c.l.b16 %v1639
        %v3651 = vunpack.c.h.b16 %v1639
        %v3652 = vunpack.c.l.b16 %v1640
        %v3653 = vunpack.c.h.b16 %v1640
        %v3654 = vunpack.c.l.b16 %v1641
        %v3655 = vunpack.c.h.b16 %v1641
        %v3656 = vunpack.c.l.b16 %v1642
        %v3657 = vunpack.c.h.b16 %v1642
        %v3658 = vunpack.c.l.b16 %v1643
        %v3659 = vunpack.c.h.b16 %v1643
        %v3660 = vunpack.c.l.b16 %v1644
        %v3661 = vunpack.c.h.b16 %v1644
        %v3662 = vunpack.c.l.b16 %v1645
        %v3663 = vunpack.c.h.b16 %v1645
        %v3664 = vunpack.c.l.b16 %v1646
        %v3665 = vunpack.c.h.b16 %v1646
        %v3666 = vunpack.c.l.b16 %v1647
        %v3667 = vunpack.c.h.b16 %v1647
        %v3668 = vunpack.c.l.b16 %v1648
        %v3669 = vunpack.c.h.b16 %v1648
        %v3670 = vunpack.c.l.b16 %v1649
        %v3671 = vunpack.c.h.b16 %v1649
        %v3672 = vunpack.c.l.b16 %v1650
        %v3673 = vunpack.c.h.b16 %v1650
        %v3674 = vunpack.c.l.b16 %v1651
        %v3675 = vunpack.c.h.b16 %v1651
        %v3676 = vunpack.c.l.b16 %v1652
        %v3677 = vunpack.c.h.b16 %v1652
        %v3678 = vunpack.c.l.b16 %v1653
        %v3679 = vunpack.c.h.b16 %v1653
        %v3680 = vunpack.c.l.b16 %v1654
        %v3681 = vunpack.c.h.b16 %v1654
        %v3682 = vunpack.c.l.b16 %v1655
        %v3683 = vunpack.c.h.b16 %v1655
        %v3684 = vunpack.c.l.b16 %v1656
        %v3685 = vunpack.c.h.b16 %v1656
        %v3686 = vunpack.c.l.b16 %v1657
        %v3687 = vunpack.c.h.b16 %v1657
        %v3688 = vunpack.c.l.b16 %v1658
        %v3689 = vunpack.c.h.b16 %v1658
        %v3690 = vunpack.c.l.b16 %v1659
        %v3691 = vunpack.c.h.b16 %v1659
        %v3692 = vunpack.c.l.b16 %v1660
        %v3693 = vunpack.c.h.b16 %v1660
        %v3694 = vunpack.c.l.b16 %v1661
        %v3695 = vunpack.c.h.b16 %v1661
        %v3696 = vunpack.c.l.b16 %v1662
        %v3697 = vunpack.c.h.b16 %v1662
        %v3698 = vunpack.c.l.b16 %v1663
        %v3699 = vunpack.c.h.b16 %v1663
        %v3700 = vunpack.c.l.b16 %v1664
        %v3701 = vunpack.c.h.b16 %v1664
        %v3702 = vunpack.c.l.b16 %v1665
        %v3703 = vunpack.c.h.b16 %v1665
        %v3704 = vunpack.c.l.b16 %v1666
        %v3705 = vunpack.c.h.b16 %v1666
        %v3706 = vunpack.c.l.b16 %v1667
        %v3707 = vunpack.c.h.b16 %v1667
        %v3708 = vunpack.c.l.b16 %v1668
        %v3709 = vunpack.c.h.b16 %v1668
        %v3710 = vunpack.c.l.b16 %v1669
        %v3711 = vunpack.c.h.b16 %v1669
        %v3712 = vunpack.c.l.b16 %v1670
        %v3713 = vunpack.c.h.b16 %v1670
        %v3714 = vunpack.c.l.b16 %v1671
        %v3715 = vunpack.c.h.b16 %v1671
        %v3716 = vunpack.c.l.b16 %v1672
        %v3717 = vunpack.c.h.b16 %v1672
        %v3718 = vunpack.c.l.b16 %v1673
        %v3719 = vunpack.c.h.b16 %v1673
        %v3720 = vunpack.c.l.b16 %v1674
        %v3721 = vunpack.c.h.b16 %v1674
        %v3722 = vunpack.c.l.b16 %v1675
        %v3723 = vunpack.c.h.b16 %v1675
        %v3724 = vunpack.c.l.b16 %v1676
        %v3725 = vunpack.c.h.b16 %v1676
        %v3726 = vunpack.c.l.b16 %v1677
        %v3727 = vunpack.c.h.b16 %v1677
        %v3728 = vunpack.c.l.b16 %v1678
        %v3729 = vunpack.c.h.b16 %v1678
        %v3730 = vunpack.c.l.b16 %v1679
        %v3731 = vunpack.c.h.b16 %v1679
        %v3732 = vunpack.c.l.b16 %v1680
        %v3733 = vunpack.c.h.b16 %v1680
        %v3734 = vunpack.c.l.b16 %v1681
        %v3735 = vunpack.c.h.b16 %v1681
        %v3736 = vunpack.c.l.b16 %v1682
        %v3737 = vunpack.c.h.b16 %v1682
        %v3738 = vunpack.c.l.b16 %v1683
        %v3739 = vunpack.c.h.b16 %v1683
        %v3740 = vunpack.c.l.b16 %v1684
        %v3741 = vunpack.c.h.b16 %v1684
        %v3742 = vunpack.c.l.b16 %v1685
        %v3743 = vunpack.c.h.b16 %v1685
        %v3744 = vunpack.c.l.b16 %v1686
        %v3745 = vunpack.c.h.b16 %v1686
        %v3746 = vunpack.c.l.b16 %v1687
        %v3747 = vunpack.c.h.b16 %v1687
        %v3748 = vunpack.c.l.b16 %v1688
        %v3749 = vunpack.c.h.b16 %v1688
        %v3750 = vunpack.c.l.b16 %v1689
        %v3751 = vunpack.c.h.b16 %v1689
        %v3752 = vunpack.c.l.b16 %v1690
        %v3753 = vunpack.c.h.b16 %v1690
        %v3754 = vunpack.c.l.b16 %v1691
        %v3755 = vunpack.c.h.b16 %v1691
        %v3756 = vunpack.c.l.b16 %v1692
        %v3757 = vunpack.c.h.b16 %v1692
        %v3758 = vunpack.c.l.b16 %v1693
        %v3759 = vunpack.c.h.b16 %v1693
        %v3760 = vunpack.c.l.b16 %v1694
        %v3761 = vunpack.c.h.b16 %v1694
        %v3762 = vunpack.c.l.b16 %v1695
        %v3763 = vunpack.c.h.b16 %v1695
        %v3764 = vunpack.c.l.b16 %v1696
        %v3765 = vunpack.c.h.b16 %v1696
        %v3766 = vunpack.c.l.b16 %v1697
        %v3767 = vunpack.c.h.b16 %v1697
        %v3768 = vunpack.c.l.b16 %v1698
        %v3769 = vunpack.c.h.b16 %v1698
        %v3770 = vunpack.c.l.b16 %v1699
        %v3771 = vunpack.c.h.b16 %v1699
        %v3772 = vunpack.c.l.b16 %v1700
        %v3773 = vunpack.c.h.b16 %v1700
        %v3774 = vunpack.c.l.b16 %v1701
        %v3775 = vunpack.c.h.b16 %v1701
        %v3776 = vunpack.c.l.b16 %v1702
        %v3777 = vunpack.c.h.b16 %v1702
        %v3778 = vunpack.c.l.b16 %v1703
        %v3779 = vunpack.c.h.b16 %v1703
        %v3780 = vunpack.c.l.b16 %v1704
        %v3781 = vunpack.c.h.b16 %v1704
        %v3782 = vunpack.c.l.b16 %v1705
        %v3783 = vunpack.c.h.b16 %v1705
        %v3784 = vunpack.c.l.b16 %v1706
        %v3785 = vunpack.c.h.b16 %v1706
        %v3786 = vunpack.c.l.b16 %v1707
        %v3787 = vunpack.c.h.b16 %v1707
        %v3788 = vunpack.c.l.b16 %v1708
        %v3789 = vunpack.c.h.b16 %v1708
        %v3790 = vunpack.c.l.b16 %v1709
        %v3791 = vunpack.c.h.b16 %v1709
        %v3792 = vunpack.c.l.b16 %v1710
        %v3793 = vunpack.c.h.b16 %v1710
        %v3794 = vunpack.c.l.b16 %v1711
        %v3795 = vunpack.c.h.b16 %v1711
        %v3796 = vunpack.c.l.b16 %v1712
        %v3797 = vunpack.c.h.b16 %v1712
        %v3798 = vunpack.c.l.b16 %v1713
        %v3799 = vunpack.c.h.b16 %v1713
        %v3800 = vunpack.c.l.b16 %v1714
        %v3801 = vunpack.c.h.b16 %v1714
        %v3802 = vunpack.c.l.b16 %v1715
        %v3803 = vunpack.c.h.b16 %v1715
        %v3804 = vunpack.c.l.b16 %v1716
        %v3805 = vunpack.c.h.b16 %v1716
        %v3806 = vunpack.c.l.b16 %v1717
        %v3807 = vunpack.c.h.b16 %v1717
        %v3808 = vunpack.c.l.b16 %v1718
        %v3809 = vunpack.c.h.b16 %v1718
        %v3810 = vunpack.c.l.b16 %v1719
        %v3811 = vunpack.c.h.b16 %v1719
        %v3812 = vunpack.c.l.b16 %v1720
        %v3813 = vunpack.c.h.b16 %v1720
        %v3814 = vunpack.c.l.b16 %v1721
        %v3815 = vunpack.c.h.b16 %v1721
        %v3816 = vunpack.c.l.b16 %v1722
        %v3817 = vunpack.c.h.b16 %v1722
        %v3818 = vunpack.c.l.b16 %v1723
        %v3819 = vunpack.c.h.b16 %v1723
        %v3820 = vunpack.c.l.b16 %v1724
        %v3821 = vunpack.c.h.b16 %v1724
        %v3822 = vunpack.c.l.b16 %v1725
        %v3823 = vunpack.c.h.b16 %v1725
        %v3824 = vunpack.c.l.b16 %v1726
        %v3825 = vunpack.c.h.b16 %v1726
        %v3826 = vunpack.c.l.b16 %v1727
        %v3827 = vunpack.c.h.b16 %v1727
        %v3828 = vunpack.c.l.b16 %v1728
        %v3829 = vunpack.c.h.b16 %v1728
        %v3830 = vunpack.c.l.b16 %v1729
        %v3831 = vunpack.c.h.b16 %v1729
        %v3832 = vunpack.c.l.b16 %v1730
        %v3833 = vunpack.c.h.b16 %v1730
        %v3834 = vunpack.c.l.b16 %v1731
        %v3835 = vunpack.c.h.b16 %v1731
        %v3836 = vunpack.c.l.b16 %v1732
        %v3837 = vunpack.c.h.b16 %v1732
        %v3838 = vunpack.c.l.b16 %v1733
        %v3839 = vunpack.c.h.b16 %v1733
        %v3840 = vunpack.c.l.b16 %v1734
        %v3841 = vunpack.c.h.b16 %v1734
        %v3842 = vunpack.c.l.b16 %v1735
        %v3843 = vunpack.c.h.b16 %v1735
        %v3844 = vunpack.c.l.b16 %v1736
        %v3845 = vunpack.c.h.b16 %v1736
        %v3846 = vunpack.c.l.b16 %v1737
        %v3847 = vunpack.c.h.b16 %v1737
        %v3848 = vunpack.c.l.b16 %v1738
        %v3849 = vunpack.c.h.b16 %v1738
        %v3850 = vunpack.c.l.b16 %v1739
        %v3851 = vunpack.c.h.b16 %v1739
        %v3852 = vunpack.c.l.b16 %v1740
        %v3853 = vunpack.c.h.b16 %v1740
        %v3854 = vunpack.c.l.b16 %v1741
        %v3855 = vunpack.c.h.b16 %v1741
        %v3856 = vunpack.c.l.b16 %v1742
        %v3857 = vunpack.c.h.b16 %v1742
        %v3858 = vunpack.c.l.b16 %v1743
        %v3859 = vunpack.c.h.b16 %v1743
        %v3860 = vunpack.c.l.b16 %v1744
        %v3861 = vunpack.c.h.b16 %v1744
        %v3862 = vunpack.c.l.b16 %v1745
        %v3863 = vunpack.c.h.b16 %v1745
        %v3864 = vunpack.c.l.b16 %v1746
        %v3865 = vunpack.c.h.b16 %v1746
        %v3866 = vunpack.c.l.b16 %v1747
        %v3867 = vunpack.c.h.b16 %v1747
        %v3868 = vunpack.c.l.b16 %v1748
        %v3869 = vunpack.c.h.b16 %v1748
        %v3870 = vunpack.c.l.b16 %v1749
        %v3871 = vunpack.c.h.b16 %v1749
        %v3872 = vunpack.c.l.b16 %v1750
        %v3873 = vunpack.c.h.b16 %v1750
        %v3874 = vunpack.c.l.b16 %v1751
        %v3875 = vunpack.c.h.b16 %v1751
        %v3876 = vunpack.c.l.b16 %v1752
        %v3877 = vunpack.c.h.b16 %v1752
        %v3878 = vunpack.c.l.b16 %v1753
        %v3879 = vunpack.c.h.b16 %v1753
        %v3880 = vunpack.c.l.b16 %v1754
        %v3881 = vunpack.c.h.b16 %v1754
        %v3882 = vunpack.c.l.b16 %v1755
        %v3883 = vunpack.c.h.b16 %v1755
        %v3884 = vunpack.c.l.b16 %v1756
        %v3885 = vunpack.c.h.b16 %v1756
        %v3886 = vunpack.c.l.b16 %v1757
        %v3887 = vunpack.c.h.b16 %v1757
        %v3888 = vunpack.c.l.b16 %v1758
        %v3889 = vunpack.c.h.b16 %v1758
        %v3890 = vunpack.c.l.b16 %v1759
        %v3891 = vunpack.c.h.b16 %v1759
        %v3892 = vunpack.c.l.b16 %v1760
        %v3893 = vunpack.c.h.b16 %v1760
        %v3894 = vunpack.c.l.b16 %v1761
        %v3895 = vunpack.c.h.b16 %v1761
        %v3896 = vunpack.c.l.b16 %v1762
        %v3897 = vunpack.c.h.b16 %v1762
        %v3898 = vunpack.c.l.b16 %v1763
        %v3899 = vunpack.c.h.b16 %v1763
        %v3900 = vunpack.c.l.b16 %v1764
        %v3901 = vunpack.c.h.b16 %v1764
        %v3902 = vunpack.c.l.b16 %v1765
        %v3903 = vunpack.c.h.b16 %v1765
        %v3904 = vunpack.c.l.b16 %v1766
        %v3905 = vunpack.c.h.b16 %v1766
        %v3906 = vunpack.c.l.b16 %v1767
        %v3907 = vunpack.c.h.b16 %v1767
        %v3908 = vunpack.c.l.b16 %v1768
        %v3909 = vunpack.c.h.b16 %v1768
        %v3910 = vunpack.c.l.b16 %v1769
        %v3911 = vunpack.c.h.b16 %v1769
        %v3912 = vunpack.c.l.b16 %v1770
        %v3913 = vunpack.c.h.b16 %v1770
        %v3914 = vunpack.c.l.b16 %v1771
        %v3915 = vunpack.c.h.b16 %v1771
        %v3916 = vunpack.c.l.b16 %v1772
        %v3917 = vunpack.c.h.b16 %v1772
        %v3918 = vunpack.c.l.b16 %v1773
        %v3919 = vunpack.c.h.b16 %v1773
        %v3920 = vunpack.c.l.b16 %v1774
        %v3921 = vunpack.c.h.b16 %v1774
        %v3922 = vunpack.c.l.b16 %v1775
        %v3923 = vunpack.c.h.b16 %v1775
        %v3924 = vunpack.c.l.b16 %v1776
        %v3925 = vunpack.c.h.b16 %v1776
        %v3926 = vunpack.c.l.b16 %v1777
        %v3927 = vunpack.c.h.b16 %v1777
        %v3928 = vunpack.c.l.b16 %v1778
        %v3929 = vunpack.c.h.b16 %v1778
        %v3930 = vunpack.c.l.b16 %v1779
        %v3931 = vunpack.c.h.b16 %v1779
        %v3932 = vunpack.c.l.b16 %v1780
        %v3933 = vunpack.c.h.b16 %v1780
        %v3934 = vunpack.c.l.b16 %v1781
        %v3935 = vunpack.c.h.b16 %v1781
        %v3936 = vunpack.c.l.b16 %v1782
        %v3937 = vunpack.c.h.b16 %v1782
        %v3938 = vunpack.c.l.b16 %v1783
        %v3939 = vunpack.c.h.b16 %v1783
        %v3940 = vunpack.c.l.b16 %v1784
        %v3941 = vunpack.c.h.b16 %v1784
        %v3942 = vunpack.c.l.b16 %v1785
        %v3943 = vunpack.c.h.b16 %v1785
        %v3944 = vunpack.c.l.b16 %v1786
        %v3945 = vunpack.c.h.b16 %v1786
        %v3946 = vunpack.c.l.b16 %v1787
        %v3947 = vunpack.c.h.b16 %v1787
        %v3948 = vunpack.c.l.b16 %v1788
        %v3949 = vunpack.c.h.b16 %v1788
        %v3950 = vunpack.c.l.b16 %v1789
        %v3951 = vunpack.c.h.b16 %v1789
        %v3952 = vunpack.c.l.b16 %v1790
        %v3953 = vunpack.c.h.b16 %v1790
        %v3954 = vunpack.c.l.b16 %v1791
        %v3955 = vunpack.c.h.b16 %v1791
        %v3956 = vunpack.c.l.b16 %v1792
        %v3957 = vunpack.c.h.b16 %v1792
        %v3958 = vunpack.c.l.b16 %v1793
        %v3959 = vunpack.c.h.b16 %v1793
        %v3960 = vunpack.c.l.b16 %v1794
        %v3961 = vunpack.c.h.b16 %v1794
        %v3962 = vunpack.c.l.b16 %v1795
        %v3963 = vunpack.c.h.b16 %v1795
        %v3964 = vunpack.c.l.b16 %v1796
        %v3965 = vunpack.c.h.b16 %v1796
        %v3966 = vunpack.c.l.b16 %v1797
        %v3967 = vunpack.c.h.b16 %v1797
        %v3968 = vunpack.c.l.b16 %v1798
        %v3969 = vunpack.c.h.b16 %v1798
        %v3970 = vunpack.c.l.b16 %v1799
        %v3971 = vunpack.c.h.b16 %v1799
        %v3972 = vunpack.c.l.b16 %v1800
        %v3973 = vunpack.c.h.b16 %v1800
        %v3974 = vunpack.c.l.b16 %v1801
        %v3975 = vunpack.c.h.b16 %v1801
        %v3976 = vunpack.c.l.b16 %v1802
        %v3977 = vunpack.c.h.b16 %v1802
        %v3978 = vunpack.c.l.b16 %v1803
        %v3979 = vunpack.c.h.b16 %v1803
        %v3980 = vunpack.c.l.b16 %v1804
        %v3981 = vunpack.c.h.b16 %v1804
        %v3982 = vunpack.c.l.b16 %v1805
        %v3983 = vunpack.c.h.b16 %v1805
        %v3984 = vunpack.c.l.b16 %v1806
        %v3985 = vunpack.c.h.b16 %v1806
        %v3986 = vunpack.c.l.b16 %v1807
        %v3987 = vunpack.c.h.b16 %v1807
        %v3988 = vunpack.c.l.b16 %v1808
        %v3989 = vunpack.c.h.b16 %v1808
        %v3990 = vunpack.c.l.b16 %v1809
        %v3991 = vunpack.c.h.b16 %v1809
        %v3992 = vunpack.c.l.b16 %v1810
        %v3993 = vunpack.c.h.b16 %v1810
        %v3994 = vunpack.c.l.b16 %v1811
        %v3995 = vunpack.c.h.b16 %v1811
        %v3996 = vunpack.c.l.b16 %v1812
        %v3997 = vunpack.c.h.b16 %v1812
        %v3998 = vunpack.c.l.b16 %v1813
        %v3999 = vunpack.c.h.b16 %v1813
        %v4000 = vunpack.c.l.b16 %v1814
        %v4001 = vunpack.c.h.b16 %v1814
        %v4002 = vunpack.c.l.b16 %v1815
        %v4003 = vunpack.c.h.b16 %v1815
        %v4004 = vunpack.c.l.b16 %v1816
        %v4005 = vunpack.c.h.b16 %v1816
        %v4006 = vunpack.c.l.b16 %v1817
        %v4007 = vunpack.c.h.b16 %v1817
        %v4008 = vunpack.c.l.b16 %v1818
        %v4009 = vunpack.c.h.b16 %v1818
        %v4010 = vunpack.c.l.b16 %v1819
        %v4011 = vunpack.c.h.b16 %v1819
        %v4012 = vunpack.c.l.b16 %v1820
        %v4013 = vunpack.c.h.b16 %v1820
        %v4014 = vunpack.c.l.b16 %v1821
        %v4015 = vunpack.c.h.b16 %v1821
        %v4016 = vunpack.c.l.b16 %v1822
        %v4017 = vunpack.c.h.b16 %v1822
        %v4018 = vunpack.c.l.b16 %v1823
        %v4019 = vunpack.c.h.b16 %v1823
        %v4020 = vunpack.c.l.b16 %v1824
        %v4021 = vunpack.c.h.b16 %v1824
        %v4022 = vunpack.c.l.b16 %v1825
        %v4023 = vunpack.c.h.b16 %v1825
        %v4024 = vunpack.c.l.b16 %v1826
        %v4025 = vunpack.c.h.b16 %v1826
        %v4026 = vunpack.c.l.b16 %v1827
        %v4027 = vunpack.c.h.b16 %v1827
        %v4028 = vunpack.c.l.b16 %v1828
        %v4029 = vunpack.c.h.b16 %v1828
        %v4030 = vunpack.c.l.b16 %v1829
        %v4031 = vunpack.c.h.b16 %v1829
        %v4032 = vunpack.c.l.b16 %v1830
        %v4033 = vunpack.c.h.b16 %v1830
        %v4034 = vunpack.c.l.b16 %v1831
        %v4035 = vunpack.c.h.b16 %v1831
        %v4036 = vunpack.c.l.b16 %v1832
        %v4037 = vunpack.c.h.b16 %v1832
        %v4038 = vunpack.c.l.b16 %v1833
        %v4039 = vunpack.c.h.b16 %v1833
        %v4040 = vunpack.c.l.b16 %v1834
        %v4041 = vunpack.c.h.b16 %v1834
        %v4042 = vunpack.c.l.b16 %v1835
        %v4043 = vunpack.c.h.b16 %v1835
        %v4044 = vunpack.c.l.b16 %v1836
        %v4045 = vunpack.c.h.b16 %v1836
        %v4046 = vunpack.c.l.b16 %v1837
        %v4047 = vunpack.c.h.b16 %v1837
        %v4048 = vunpack.c.l.b16 %v1838
        %v4049 = vunpack.c.h.b16 %v1838
        %v4050 = vunpack.c.l.b16 %v1839
        %v4051 = vunpack.c.h.b16 %v1839
        %v4052 = vunpack.c.l.b16 %v1840
        %v4053 = vunpack.c.h.b16 %v1840
        %v4054 = vunpack.c.l.b16 %v1841
        %v4055 = vunpack.c.h.b16 %v1841
        %v4056 = vunpack.c.l.b16 %v1842
        %v4057 = vunpack.c.h.b16 %v1842
        %v4058 = vunpack.c.l.b16 %v1843
        %v4059 = vunpack.c.h.b16 %v1843
        %v4060 = vunpack.c.l.b16 %v1844
        %v4061 = vunpack.c.h.b16 %v1844
        %v4062 = vunpack.c.l.b16 %v1845
        %v4063 = vunpack.c.h.b16 %v1845
        %v4064 = vunpack.c.l.b16 %v1846
        %v4065 = vunpack.c.h.b16 %v1846
        %v4066 = vunpack.c.l.b16 %v1847
        %v4067 = vunpack.c.h.b16 %v1847
        %v4068 = vunpack.c.l.b16 %v1848
        %v4069 = vunpack.c.h.b16 %v1848
        %v4070 = vunpack.c.l.b16 %v1849
        %v4071 = vunpack.c.h.b16 %v1849
        %v4072 = vunpack.c.l.b16 %v1850
        %v4073 = vunpack.c.h.b16 %v1850
        %v4074 = vunpack.c.l.b16 %v1851
        %v4075 = vunpack.c.h.b16 %v1851
        %v4076 = vunpack.c.l.b16 %v1852
        %v4077 = vunpack.c.h.b16 %v1852
        %v4078 = vunpack.c.l.b16 %v1853
        %v4079 = vunpack.c.h.b16 %v1853
        %v4080 = vunpack.c.l.b16 %v1854
        %v4081 = vunpack.c.h.b16 %v1854
        %v4082 = vunpack.c.l.b16 %v1855
        %v4083 = vunpack.c.h.b16 %v1855
        %v4084 = vunpack.c.l.b16 %v1856
        %v4085 = vunpack.c.h.b16 %v1856
        %v4086 = vunpack.c.l.b16 %v1857
        %v4087 = vunpack.c.h.b16 %v1857
        %v4088 = vunpack.c.l.b16 %v1858
        %v4089 = vunpack.c.h.b16 %v1858
        %v4090 = vunpack.c.l.b16 %v1859
        %v4091 = vunpack.c.h.b16 %v1859
        %v4092 = vunpack.c.l.b16 %v1860
        %v4093 = vunpack.c.h.b16 %v1860
        %v4094 = vunpack.c.l.b16 %v1861
        %v4095 = vunpack.c.h.b16 %v1861
        %v4096 = vunpack.c.l.b16 %v1862
        %v4097 = vunpack.c.h.b16 %v1862
        %v4098 = vunpack.c.l.b16 %v1863
        %v4099 = vunpack.c.h.b16 %v1863
        %v4100 = vunpack.c.l.b16 %v1864
        %v4101 = vunpack.c.h.b16 %v1864
        %v4102 = vunpack.c.l.b16 %v1865
        %v4103 = vunpack.c.h.b16 %v1865
        %v4104 = vunpack.c.l.b16 %v1866
        %v4105 = vunpack.c.h.b16 %v1866
        %v4106 = vunpack.c.l.b16 %v1867
        %v4107 = vunpack.c.h.b16 %v1867
        %v4108 = vunpack.c.l.b16 %v1868
        %v4109 = vunpack.c.h.b16 %v1868
        %v4110 = vunpack.c.l.b16 %v1869
        %v4111 = vunpack.c.h.b16 %v1869
        %v4112 = vunpack.c.l.b16 %v1870
        %v4113 = vunpack.c.h.b16 %v1870
        %v4114 = vunpack.c.l.b16 %v1871
        %v4115 = vunpack.c.h.b16 %v1871
        %v4116 = vunpack.c.l.b16 %v1872
        %v4117 = vunpack.c.h.b16 %v1872
        %v4118 = vunpack.c.l.b16 %v1873
        %v4119 = vunpack.c.h.b16 %v1873
        %v4120 = vunpack.c.l.b16 %v1874
        %v4121 = vunpack.c.h.b16 %v1874
        %v4122 = vunpack.c.l.b16 %v1875
        %v4123 = vunpack.c.h.b16 %v1875
        %v4124 = vunpack.c.l.b16 %v1876
        %v4125 = vunpack.c.h.b16 %v1876
        %v4126 = vunpack.c.l.b16 %v1877
        %v4127 = vunpack.c.h.b16 %v1877
        %v4128 = vunpack.c.l.b16 %v1878
        %v4129 = vunpack.c.h.b16 %v1878
        %v4130 = vunpack.c.l.b16 %v1879
        %v4131 = vunpack.c.h.b16 %v1879
        %v4132 = vunpack.c.l.b16 %v1880
        %v4133 = vunpack.c.h.b16 %v1880
        %v4134 = vunpack.c.l.b16 %v1881
        %v4135 = vunpack.c.h.b16 %v1881
        %v4136 = vunpack.c.l.b16 %v1882
        %v4137 = vunpack.c.h.b16 %v1882
        %v4138 = vunpack.c.l.b16 %v1883
        %v4139 = vunpack.c.h.b16 %v1883
        %v4140 = vunpack.c.l.b16 %v1884
        %v4141 = vunpack.c.h.b16 %v1884
        %v4142 = vunpack.c.l.b16 %v1885
        %v4143 = vunpack.c.h.b16 %v1885
        %v4144 = vunpack.c.l.b16 %v1886
        %v4145 = vunpack.c.h.b16 %v1886
        %v4146 = vunpack.c.l.b16 %v1887
        %v4147 = vunpack.c.h.b16 %v1887
        %v4148 = vunpack.c.l.b16 %v1888
        %v4149 = vunpack.c.h.b16 %v1888
        %v4150 = vunpack.c.l.b16 %v1889
        %v4151 = vunpack.c.h.b16 %v1889
        %v4152 = vunpack.c.l.b16 %v1890
        %v4153 = vunpack.c.h.b16 %v1890
        %v4154 = vunpack.c.l.b16 %v1891
        %v4155 = vunpack.c.h.b16 %v1891
        %v4156 = vunpack.c.l.b16 %v1892
        %v4157 = vunpack.c.h.b16 %v1892
        %v4158 = vunpack.c.l.b16 %v1893
        %v4159 = vunpack.c.h.b16 %v1893
        %v4160 = vunpack.c.l.b16 %v1894
        %v4161 = vunpack.c.h.b16 %v1894
        %v4162 = vunpack.c.l.b16 %v1895
        %v4163 = vunpack.c.h.b16 %v1895
        %v4164 = vunpack.c.l.b16 %v1896
        %v4165 = vunpack.c.h.b16 %v1896
        %v4166 = vunpack.c.l.b16 %v1897
        %v4167 = vunpack.c.h.b16 %v1897
        %v4168 = vunpack.c.l.b16 %v1898
        %v4169 = vunpack.c.h.b16 %v1898
        %v4170 = vunpack.c.l.b16 %v1899
        %v4171 = vunpack.c.h.b16 %v1899
        %v4172 = vunpack.c.l.b16 %v1900
        %v4173 = vunpack.c.h.b16 %v1900
        %v4174 = vunpack.c.l.b16 %v1901
        %v4175 = vunpack.c.h.b16 %v1901
        %v4176 = vunpack.c.l.b16 %v1902
        %v4177 = vunpack.c.h.b16 %v1902
        %v4178 = vunpack.c.l.b16 %v1903
        %v4179 = vunpack.c.h.b16 %v1903
        %v4180 = vunpack.c.l.b16 %v1904
        %v4181 = vunpack.c.h.b16 %v1904
        %v4182 = vunpack.c.l.b16 %v1905
        %v4183 = vunpack.c.h.b16 %v1905
        %v4184 = vunpack.c.l.b16 %v1906
        %v4185 = vunpack.c.h.b16 %v1906
        %v4186 = vunpack.c.l.b16 %v1907
        %v4187 = vunpack.c.h.b16 %v1907
        %v4188 = vunpack.c.l.b16 %v1908
        %v4189 = vunpack.c.h.b16 %v1908
        %v4190 = vunpack.c.l.b16 %v1909
        %v4191 = vunpack.c.h.b16 %v1909
        %v4192 = vunpack.c.l.b16 %v1910
        %v4193 = vunpack.c.h.b16 %v1910
        %v4194 = vunpack.c.l.b16 %v1911
        %v4195 = vunpack.c.h.b16 %v1911
        %v4196 = vunpack.c.l.b16 %v1912
        %v4197 = vunpack.c.h.b16 %v1912
        %v4198 = vunpack.c.l.b16 %v1913
        %v4199 = vunpack.c.h.b16 %v1913
        %v4200 = vunpack.c.l.b16 %v1914
        %v4201 = vunpack.c.h.b16 %v1914
        %v4202 = vunpack.c.l.b16 %v1915
        %v4203 = vunpack.c.h.b16 %v1915
        %v4204 = vunpack.c.l.b16 %v1916
        %v4205 = vunpack.c.h.b16 %v1916
        %v4206 = vunpack.c.l.b16 %v1917
        %v4207 = vunpack.c.h.b16 %v1917
        %v4208 = vunpack.c.l.b16 %v1918
        %v4209 = vunpack.c.h.b16 %v1918
        %v4210 = vunpack.c.l.b16 %v1919
        %v4211 = vunpack.c.h.b16 %v1919
        %v4212 = vunpack.c.l.b16 %v1920
        %v4213 = vunpack.c.h.b16 %v1920
        %v4214 = vunpack.c.l.b16 %v1921
        %v4215 = vunpack.c.h.b16 %v1921
        %v4216 = vunpack.c.l.b16 %v1922
        %v4217 = vunpack.c.h.b16 %v1922
        %v4218 = vunpack.c.l.b16 %v1923
        %v4219 = vunpack.c.h.b16 %v1923
        %v4220 = vunpack.c.l.b16 %v1924
        %v4221 = vunpack.c.h.b16 %v1924
        %v4222 = vunpack.c.l.b16 %v1925
        %v4223 = vunpack.c.h.b16 %v1925
        %v4224 = vunpack.c.l.b16 %v1926
        %v4225 = vunpack.c.h.b16 %v1926
        %v4226 = vunpack.c.l.b16 %v1927
        %v4227 = vunpack.c.h.b16 %v1927
        %v4228 = vunpack.c.l.b16 %v1928
        %v4229 = vunpack.c.h.b16 %v1928
        %v4230 = vunpack.c.l.b16 %v1929
        %v4231 = vunpack.c.h.b16 %v1929
        %v4232 = vunpack.c.l.b16 %v1930
        %v4233 = vunpack.c.h.b16 %v1930
        %v4234 = vunpack.c.l.b16 %v1931
        %v4235 = vunpack.c.h.b16 %v1931
        %v4236 = vunpack.c.l.b16 %v1932
        %v4237 = vunpack.c.h.b16 %v1932
        %v4238 = vunpack.c.l.b16 %v1933
        %v4239 = vunpack.c.h.b16 %v1933
        %v4240 = vunpack.c.l.b16 %v1934
        %v4241 = vunpack.c.h.b16 %v1934
        %v4242 = vunpack.c.l.b16 %v1935
        %v4243 = vunpack.c.h.b16 %v1935
        %v4244 = vunpack.c.l.b16 %v1936
        %v4245 = vunpack.c.h.b16 %v1936
        %v4246 = vunpack.c.l.b16 %v1937
        %v4247 = vunpack.c.h.b16 %v1937
        %v4248 = vunpack.c.l.b16 %v1938
        %v4249 = vunpack.c.h.b16 %v1938
        %v4250 = vunpack.c.l.b16 %v1939
        %v4251 = vunpack.c.h.b16 %v1939
        %v4252 = vunpack.c.l.b16 %v1940
        %v4253 = vunpack.c.h.b16 %v1940
        %v4254 = vunpack.c.l.b16 %v1941
        %v4255 = vunpack.c.h.b16 %v1941
        %v4256 = vunpack.c.l.b16 %v1942
        %v4257 = vunpack.c.h.b16 %v1942
        %v4258 = vunpack.c.l.b16 %v1943
        %v4259 = vunpack.c.h.b16 %v1943
        %v4260 = vunpack.c.l.b16 %v1944
        %v4261 = vunpack.c.h.b16 %v1944
        %v4262 = vunpack.c.l.b16 %v1945
        %v4263 = vunpack.c.h.b16 %v1945
        %v4264 = vunpack.c.l.b16 %v1946
        %v4265 = vunpack.c.h.b16 %v1946
        %v4266 = vunpack.c.l.b16 %v1947
        %v4267 = vunpack.c.h.b16 %v1947
        %v4268 = vunpack.c.l.b16 %v1948
        %v4269 = vunpack.c.h.b16 %v1948
        %v4270 = vunpack.c.l.b16 %v1949
        %v4271 = vunpack.c.h.b16 %v1949
        %v4272 = vunpack.c.l.b16 %v1950
        %v4273 = vunpack.c.h.b16 %v1950
        %v4274 = vunpack.c.l.b16 %v1951
        %v4275 = vunpack.c.h.b16 %v1951
        %v4276 = vunpack.c.l.b16 %v1952
        %v4277 = vunpack.c.h.b16 %v1952
        %v4278 = vunpack.c.l.b16 %v1953
        %v4279 = vunpack.c.h.b16 %v1953
        %v4280 = vunpack.c.l.b16 %v1954
        %v4281 = vunpack.c.h.b16 %v1954
        %v4282 = vunpack.c.l.b16 %v1955
        %v4283 = vunpack.c.h.b16 %v1955
        %v4284 = vunpack.c.l.b16 %v1956
        %v4285 = vunpack.c.h.b16 %v1956
        %v4286 = vunpack.c.l.b16 %v1957
        %v4287 = vunpack.c.h.b16 %v1957
        %v4288 = vunpack.c.l.b16 %v1958
        %v4289 = vunpack.c.h.b16 %v1958
        %v4290 = vunpack.c.l.b16 %v1959
        %v4291 = vunpack.c.h.b16 %v1959
        %v4292 = vunpack.c.l.b16 %v1960
        %v4293 = vunpack.c.h.b16 %v1960
        %v4294 = vunpack.c.l.b16 %v1961
        %v4295 = vunpack.c.h.b16 %v1961
        %v4296 = vunpack.c.l.b16 %v1962
        %v4297 = vunpack.c.h.b16 %v1962
        %v4298 = vunpack.c.l.b16 %v1963
        %v4299 = vunpack.c.h.b16 %v1963
        %v4300 = vunpack.c.l.b16 %v1964
        %v4301 = vunpack.c.h.b16 %v1964
        %v4302 = vunpack.c.l.b16 %v1965
        %v4303 = vunpack.c.h.b16 %v1965
        %v4304 = vunpack.c.l.b16 %v1966
        %v4305 = vunpack.c.h.b16 %v1966
        %v4306 = vunpack.c.l.b16 %v1967
        %v4307 = vunpack.c.h.b16 %v1967
        %v4308 = vunpack.c.l.b16 %v1968
        %v4309 = vunpack.c.h.b16 %v1968
        %v4310 = vunpack.c.l.b16 %v1969
        %v4311 = vunpack.c.h.b16 %v1969
        %v4312 = vunpack.c.l.b16 %v1970
        %v4313 = vunpack.c.h.b16 %v1970
        %v4314 = vunpack.c.l.b16 %v1971
        %v4315 = vunpack.c.h.b16 %v1971
        %v4316 = vunpack.c.l.b16 %v1972
        %v4317 = vunpack.c.h.b16 %v1972
        %v4318 = vunpack.c.l.b16 %v1973
        %v4319 = vunpack.c.h.b16 %v1973
        %v4320 = vunpack.c.l.b16 %v1974
        %v4321 = vunpack.c.h.b16 %v1974
        %v4322 = vunpack.c.l.b16 %v1975
        %v4323 = vunpack.c.h.b16 %v1975
        %v4324 = vunpack.c.l.b16 %v1976
        %v4325 = vunpack.c.h.b16 %v1976
        %v4326 = vunpack.c.l.b16 %v1977
        %v4327 = vunpack.c.h.b16 %v1977
        %v4328 = vunpack.c.l.b16 %v1978
        %v4329 = vunpack.c.h.b16 %v1978
        %v4330 = vunpack.c.l.b16 %v1979
        %v4331 = vunpack.c.h.b16 %v1979
        %v4332 = vunpack.c.l.b16 %v1980
        %v4333 = vunpack.c.h.b16 %v1980
        %v4334 = vunpack.c.l.b16 %v1981
        %v4335 = vunpack.c.h.b16 %v1981
        %v4336 = vunpack.c.l.b16 %v1982
        %v4337 = vunpack.c.h.b16 %v1982
        %v4338 = vunpack.c.l.b16 %v1983
        %v4339 = vunpack.c.h.b16 %v1983
        %v4340 = vunpack.c.l.b16 %v1984
        %v4341 = vunpack.c.h.b16 %v1984
        %v4342 = vunpack.c.l.b16 %v1985
        %v4343 = vunpack.c.h.b16 %v1985
        %v4344 = vunpack.c.l.b16 %v1986
        %v4345 = vunpack.c.h.b16 %v1986
        %v4346 = vunpack.c.l.b16 %v1987
        %v4347 = vunpack.c.h.b16 %v1987
        %v4348 = vunpack.c.l.b16 %v1988
        %v4349 = vunpack.c.h.b16 %v1988
        %v4350 = vunpack.c.l.b16 %v1989
        %v4351 = vunpack.c.h.b16 %v1989
        %v4352 = vunpack.c.l.b16 %v1990
        %v4353 = vunpack.c.h.b16 %v1990
        %v4354 = vunpack.c.l.b16 %v1991
        %v4355 = vunpack.c.h.b16 %v1991
        %v4356 = vunpack.c.l.b16 %v1992
        %v4357 = vunpack.c.h.b16 %v1992
        %v4358 = vunpack.c.l.b16 %v1993
        %v4359 = vunpack.c.h.b16 %v1993
        %v4360 = vunpack.c.l.b16 %v1994
        %v4361 = vunpack.c.h.b16 %v1994
        %v4362 = vunpack.c.l.b16 %v1995
        %v4363 = vunpack.c.h.b16 %v1995
        %v4364 = vunpack.c.l.b16 %v1996
        %v4365 = vunpack.c.h.b16 %v1996
        %v4366 = vunpack.c.l.b16 %v1997
        %v4367 = vunpack.c.h.b16 %v1997
        %v4368 = vunpack.c.l.b16 %v1998
        %v4369 = vunpack.c.h.b16 %v1998
        %v4370 = vunpack.c.l.b16 %v1999
        %v4371 = vunpack.c.h.b16 %v1999
        %v4372 = vunpack.c.l.b16 %v2000
        %v4373 = vunpack.c.h.b16 %v2000
        %v4374 = vunpack.c.l.b16 %v2001
        %v4375 = vunpack.c.h.b16 %v2001
        %v4376 = vunpack.c.l.b16 %v2002
        %v4377 = vunpack.c.h.b16 %v2002
        %v4378 = vunpack.c.l.b16 %v2003
        %v4379 = vunpack.c.h.b16 %v2003
        %v4380 = vunpack.c.l.b16 %v2004
        %v4381 = vunpack.c.h.b16 %v2004
        %v4382 = vunpack.c.l.b16 %v2005
        %v4383 = vunpack.c.h.b16 %v2005
        %v4384 = vunpack.c.l.b16 %v2006
        %v4385 = vunpack.c.h.b16 %v2006
        %v4386 = vunpack.c.l.b16 %v2007
        %v4387 = vunpack.c.h.b16 %v2007
        %v4388 = vunpack.c.l.b16 %v2008
        %v4389 = vunpack.c.h.b16 %v2008
        %v4390 = vunpack.c.l.b16 %v2009
        %v4391 = vunpack.c.h.b16 %v2009
        %v4392 = vunpack.c.l.b16 %v2010
        %v4393 = vunpack.c.h.b16 %v2010
        %v4394 = vunpack.c.l.b16 %v2011
        %v4395 = vunpack.c.h.b16 %v2011
        %v4396 = vunpack.c.l.b16 %v2012
        %v4397 = vunpack.c.h.b16 %v2012
        %v4398 = vunpack.c.l.b16 %v2013
        %v4399 = vunpack.c.h.b16 %v2013
        %v4400 = vunpack.c.l.b16 %v2014
        %v4401 = vunpack.c.h.b16 %v2014
        %v4402 = vunpack.c.l.b16 %v2015
        %v4403 = vunpack.c.h.b16 %v2015
        %v4404 = vunpack.c.l.b16 %v2016
        %v4405 = vunpack.c.h.b16 %v2016
        %v4406 = vunpack.c.l.b16 %v2017
        %v4407 = vunpack.c.h.b16 %v2017
        %v4408 = vunpack.c.l.b16 %v2018
        %v4409 = vunpack.c.h.b16 %v2018
        %v4410 = vunpack.c.l.b16 %v2019
        %v4411 = vunpack.c.h.b16 %v2019
        %v4412 = vunpack.c.l.b16 %v2020
        %v4413 = vunpack.c.h.b16 %v2020
        %v4414 = vunpack.c.l.b16 %v2021
        %v4415 = vunpack.c.h.b16 %v2021
        %v4416 = vunpack.c.l.b16 %v2022
        %v4417 = vunpack.c.h.b16 %v2022
        %v4418 = vunpack.c.l.b16 %v2023
        %v4419 = vunpack.c.h.b16 %v2023
        %v4420 = vunpack.c.l.b16 %v2024
        %v4421 = vunpack.c.h.b16 %v2024
        %v4422 = vunpack.c.l.b16 %v2025
        %v4423 = vunpack.c.h.b16 %v2025
        %v4424 = vunpack.c.l.b16 %v2026
        %v4425 = vunpack.c.h.b16 %v2026
        %v4426 = vunpack.c.l.b16 %v2027
        %v4427 = vunpack.c.h.b16 %v2027
        %v4428 = vunpack.c.l.b16 %v2028
        %v4429 = vunpack.c.h.b16 %v2028
        %v4430 = vunpack.c.l.b16 %v2029
        %v4431 = vunpack.c.h.b16 %v2029
        %v4432 = vunpack.c.l.b16 %v2030
        %v4433 = vunpack.c.h.b16 %v2030
        %v4434 = vunpack.c.l.b16 %v2031
        %v4435 = vunpack.c.h.b16 %v2031
        %v4436 = vunpack.c.l.b16 %v2032
        %v4437 = vunpack.c.h.b16 %v2032
        %v4438 = vunpack.c.l.b16 %v2033
        %v4439 = vunpack.c.h.b16 %v2033
        %v4440 = vunpack.c.l.b16 %v2034
        %v4441 = vunpack.c.h.b16 %v2034
        %v4442 = vunpack.c.l.b16 %v2035
        %v4443 = vunpack.c.h.b16 %v2035
        %v4444 = vunpack.c.l.b16 %v2036
        %v4445 = vunpack.c.h.b16 %v2036
        %v4446 = vunpack.c.l.b16 %v2037
        %v4447 = vunpack.c.h.b16 %v2037
        %v4448 = vunpack.c.l.b16 %v2038
        %v4449 = vunpack.c.h.b16 %v2038
        %v4450 = vunpack.c.l.b16 %v2039
        %v4451 = vunpack.c.h.b16 %v2039
        %v4452 = vunpack.c.l.b16 %v2040
        %v4453 = vunpack.c.h.b16 %v2040
        %v4454 = vunpack.c.l.b16 %v2041
        %v4455 = vunpack.c.h.b16 %v2041
        %v4456 = vunpack.c.l.b16 %v2042
        %v4457 = vunpack.c.h.b16 %v2042
        %v4458 = vunpack.c.l.b16 %v2043
        %v4459 = vunpack.c.h.b16 %v2043
        %v4460 = vunpack.c.l.b16 %v2044
        %v4461 = vunpack.c.h.b16 %v2044
        %v4462 = vunpack.c.l.b16 %v2045
        %v4463 = vunpack.c.h.b16 %v2045
        %v4464 = vunpack.c.l.b16 %v2046
        %v4465 = vunpack.c.h.b16 %v2046
        %v4466 = vunpack.c.l.b16 %v2047
        %v4467 = vunpack.c.h.b16 %v2047
        %v4468 = vunpack.c.l.b16 %v2048
        %v4469 = vunpack.c.h.b16 %v2048
        %v4470 = vunpack.c.l.b16 %v2049
        %v4471 = vunpack.c.h.b16 %v2049
        %v4472 = vunpack.c.l.b16 %v2050
        %v4473 = vunpack.c.h.b16 %v2050
        %v4474 = vunpack.c.l.b16 %v2051
        %v4475 = vunpack.c.h.b16 %v2051
        %v4476 = vunpack.c.l.b16 %v2052
        %v4477 = vunpack.c.h.b16 %v2052
        %v4478 = vunpack.c.l.b16 %v2053
        %v4479 = vunpack.c.h.b16 %v2053
        %v4480 = vunpack.c.l.b16 %v2054
        %v4481 = vunpack.c.h.b16 %v2054
        %v4482 = vunpack.c.l.b16 %v2055
        %v4483 = vunpack.c.h.b16 %v2055
        %v4484 = vunpack.c.l.b16 %v2056
        %v4485 = vunpack.c.h.b16 %v2056
        %v4486 = vunpack.c.l.b16 %v2057
        %v4487 = vunpack.c.h.b16 %v2057
        %v4488 = vunpack.c.l.b16 %v2058
        %v4489 = vunpack.c.h.b16 %v2058
        %v4490 = vunpack.c.l.b16 %v2059
        %v4491 = vunpack.c.h.b16 %v2059
        %v4492 = vunpack.c.l.b16 %v2060
        %v4493 = vunpack.c.h.b16 %v2060
        %v4494 = vunpack.c.l.b16 %v2061
        %v4495 = vunpack.c.h.b16 %v2061
        %v4496 = vunpack.c.l.b16 %v2062
        %v4497 = vunpack.c.h.b16 %v2062
        %v4498 = vunpack.c.l.b16 %v2063
        %v4499 = vunpack.c.h.b16 %v2063
        %v4500 = vunpack.c.l.b16 %v2064
        %v4501 = vunpack.c.h.b16 %v2064
        %v4502 = vunpack.c.l.b16 %v2065
        %v4503 = vunpack.c.h.b16 %v2065
        %v4504 = vunpack.c.l.b16 %v2066
        %v4505 = vunpack.c.h.b16 %v2066
        %v4506 = vunpack.c.l.b16 %v2067
        %v4507 = vunpack.c.h.b16 %v2067
        %v4508 = vunpack.c.l.b16 %v2068
        %v4509 = vunpack.c.h.b16 %v2068
        %v4510 = vunpack.c.l.b16 %v2069
        %v4511 = vunpack.c.h.b16 %v2069
        %v4512 = vunpack.c.l.b16 %v2070
        %v4513 = vunpack.c.h.b16 %v2070
        %v4514 = vunpack.c.l.b16 %v2071
        %v4515 = vunpack.c.h.b16 %v2071
        %v4516 = vunpack.c.l.b16 %v2072
        %v4517 = vunpack.c.h.b16 %v2072
        %v4518 = vunpack.c.l.b16 %v2073
        %v4519 = vunpack.c.h.b16 %v2073
        %v4520 = vunpack.c.l.b16 %v2074
        %v4521 = vunpack.c.h.b16 %v2074
        %v4522 = vunpack.c.l.b16 %v2075
        %v4523 = vunpack.c.h.b16 %v2075
        %v4524 = vunpack.c.l.b16 %v2076
        %v4525 = vunpack.c.h.b16 %v2076
        %v4526 = vunpack.c.l.b16 %v2077
        %v4527 = vunpack.c.h.b16 %v2077
        %v4528 = vunpack.c.l.b16 %v2078
        %v4529 = vunpack.c.h.b16 %v2078
        %v4530 = vunpack.c.l.b16 %v2079
        %v4531 = vunpack.c.h.b16 %v2079
        %v4532 = vunpack.c.l.b16 %v2080
        %v4533 = vunpack.c.h.b16 %v2080
        %v4534 = vunpack.c.l.b16 %v2081
        %v4535 = vunpack.c.h.b16 %v2081
        %v4536 = vunpack.c.l.b16 %v2082
        %v4537 = vunpack.c.h.b16 %v2082
        %v4538 = vunpack.c.l.b16 %v2083
        %v4539 = vunpack.c.h.b16 %v2083
        %v4540 = vunpack.c.l.b16 %v2084
        %v4541 = vunpack.c.h.b16 %v2084
        %v4542 = vunpack.c.l.b16 %v2085
        %v4543 = vunpack.c.h.b16 %v2085
        %v4544 = vunpack.c.l.b16 %v2086
        %v4545 = vunpack.c.h.b16 %v2086
        %v4546 = vunpack.c.l.b16 %v2087
        %v4547 = vunpack.c.h.b16 %v2087
        %v4548 = vunpack.c.l.b16 %v2088
        %v4549 = vunpack.c.h.b16 %v2088
        %v4550 = vunpack.c.l.b16 %v2089
        %v4551 = vunpack.c.h.b16 %v2089
        %v4552 = vunpack.c.l.b16 %v2090
        %v4553 = vunpack.c.h.b16 %v2090
        %v4554 = vunpack.c.l.b16 %v2091
        %v4555 = vunpack.c.h.b16 %v2091
        %v4556 = vunpack.c.l.b16 %v2092
        %v4557 = vunpack.c.h.b16 %v2092
        %v4558 = vunpack.c.l.b16 %v2093
        %v4559 = vunpack.c.h.b16 %v2093
        %v4560 = vunpack.c.l.b16 %v2094
        %v4561 = vunpack.c.h.b16 %v2094
        %v4562 = vunpack.c.l.b16 %v2095
        %v4563 = vunpack.c.h.b16 %v2095
        %v4564 = vunpack.c.l.b16 %v2096
        %v4565 = vunpack.c.h.b16 %v2096
        %v4566 = vunpack.c.l.b16 %v2097
        %v4567 = vunpack.c.h.b16 %v2097
        %v4568 = vunpack.c.l.b16 %v2098
        %v4569 = vunpack.c.h.b16 %v2098
        %v4570 = vunpack.c.l.b16 %v2099
        %v4571 = vunpack.c.h.b16 %v2099
        %v4572 = vunpack.c.l.b16 %v2100
        %v4573 = vunpack.c.h.b16 %v2100
        %v4574 = vunpack.c.l.b16 %v2101
        %v4575 = vunpack.c.h.b16 %v2101
        %v4576 = vunpack.c.l.b16 %v2102
        %v4577 = vunpack.c.h.b16 %v2102
        %v4578 = vunpack.c.l.b16 %v2103
        %v4579 = vunpack.c.h.b16 %v2103
        %v4580 = vunpack.c.l.b16 %v2104
        %v4581 = vunpack.c.h.b16 %v2104
        %v4582 = vunpack.c.l.b16 %v2105
        %v4583 = vunpack.c.h.b16 %v2105
        %v4584 = vunpack.c.l.b16 %v2106
        %v4585 = vunpack.c.h.b16 %v2106
        %v4586 = vunpack.c.l.b16 %v2107
        %v4587 = vunpack.c.h.b16 %v2107
        %v4588 = vunpack.c.l.b16 %v2108
        %v4589 = vunpack.c.h.b16 %v2108
        %v4590 = vunpack.c.l.b16 %v2109
        %v4591 = vunpack.c.h.b16 %v2109
        %v4592 = vunpack.c.l.b16 %v2110
        %v4593 = vunpack.c.h.b16 %v2110
        %v4594 = vunpack.c.l.b16 %v2111
        %v4595 = vunpack.c.h.b16 %v2111
        %v4596 = vunpack.c.l.b16 %v2112
        %v4597 = vunpack.c.h.b16 %v2112
        %v4598 = vunpack.c.l.b16 %v2113
        %v4599 = vunpack.c.h.b16 %v2113
        %v4600 = vunpack.c.l.b16 %v2114
        %v4601 = vunpack.c.h.b16 %v2114
        %v4602 = vunpack.c.l.b16 %v2115
        %v4603 = vunpack.c.h.b16 %v2115
        %v4604 = vunpack.c.l.b16 %v2116
        %v4605 = vunpack.c.h.b16 %v2116
        %v4606 = vunpack.c.l.b16 %v2117
        %v4607 = vunpack.c.h.b16 %v2117
        %v4608 = vunpack.c.l.b16 %v2118
        %v4609 = vunpack.c.h.b16 %v2118
        %v4610 = vunpack.c.l.b16 %v2119
        %v4611 = vunpack.c.h.b16 %v2119
        %v4612 = vunpack.c.l.b16 %v2120
        %v4613 = vunpack.c.h.b16 %v2120
        %v4614 = vunpack.c.l.b16 %v2121
        %v4615 = vunpack.c.h.b16 %v2121
        %v4616 = vunpack.c.l.b16 %v2122
        %v4617 = vunpack.c.h.b16 %v2122
        %v4618 = vunpack.c.l.b16 %v2123
        %v4619 = vunpack.c.h.b16 %v2123
        %v4620 = vunpack.c.l.b16 %v2124
        %v4621 = vunpack.c.h.b16 %v2124
        %v4622 = vunpack.c.l.b16 %v2125
        %v4623 = vunpack.c.h.b16 %v2125
        %v4624 = vunpack.c.l.b16 %v2126
        %v4625 = vunpack.c.h.b16 %v2126
        %v4626 = vunpack.c.l.b16 %v2127
        %v4627 = vunpack.c.h.b16 %v2127
        %v4628 = vunpack.c.l.b16 %v2128
        %v4629 = vunpack.c.h.b16 %v2128
        %v4630 = vunpack.c.l.b16 %v2129
        %v4631 = vunpack.c.h.b16 %v2129
        %v4632 = vunpack.c.l.b16 %v2130
        %v4633 = vunpack.c.h.b16 %v2130
        %v4634 = vunpack.c.l.b16 %v2131
        %v4635 = vunpack.c.h.b16 %v2131
        %v4636 = vunpack.c.l.b16 %v2132
        %v4637 = vunpack.c.h.b16 %v2132
        %v4638 = vunpack.c.l.b16 %v2133
        %v4639 = vunpack.c.h.b16 %v2133
        %v4640 = vunpack.c.l.b16 %v2134
        %v4641 = vunpack.c.h.b16 %v2134
        %v4642 = vunpack.c.l.b16 %v2135
        %v4643 = vunpack.c.h.b16 %v2135
        %v4644 = vunpack.c.l.b16 %v2136
        %v4645 = vunpack.c.h.b16 %v2136
        %v4646 = vunpack.c.l.b16 %v2137
        %v4647 = vunpack.c.h.b16 %v2137
        %v4648 = vunpack.c.l.b16 %v2138
        %v4649 = vunpack.c.h.b16 %v2138
        %v4650 = vunpack.c.l.b16 %v2139
        %v4651 = vunpack.c.h.b16 %v2139
        %v4652 = vunpack.c.l.b16 %v2140
        %v4653 = vunpack.c.h.b16 %v2140
        %v4654 = vunpack.c.l.b16 %v2141
        %v4655 = vunpack.c.h.b16 %v2141
        %v4656 = vunpack.c.l.b16 %v2142
        %v4657 = vunpack.c.h.b16 %v2142
        %v4658 = vunpack.c.l.b16 %v2143
        %v4659 = vunpack.c.h.b16 %v2143
        %v4660 = vunpack.c.l.b16 %v2144
        %v4661 = vunpack.c.h.b16 %v2144
        %v4662 = vunpack.c.l.b16 %v2145
        %v4663 = vunpack.c.h.b16 %v2145
        %v4664 = vunpack.c.l.b16 %v2146
        %v4665 = vunpack.c.h.b16 %v2146
        %v4666 = vunpack.c.l.b16 %v2147
        %v4667 = vunpack.c.h.b16 %v2147
        %v4668 = vunpack.c.l.b16 %v2148
        %v4669 = vunpack.c.h.b16 %v2148
        %v4670 = vunpack.c.l.b16 %v2149
        %v4671 = vunpack.c.h.b16 %v2149
        %v4672 = vunpack.c.l.b16 %v2150
        %v4673 = vunpack.c.h.b16 %v2150
        %v4674 = vunpack.c.l.b16 %v2151
        %v4675 = vunpack.c.h.b16 %v2151
        %v4676 = vunpack.c.l.b16 %v2152
        %v4677 = vunpack.c.h.b16 %v2152
        %v4678 = vunpack.c.l.b16 %v2153
        %v4679 = vunpack.c.h.b16 %v2153
        %v4680 = vunpack.c.l.b16 %v2154
        %v4681 = vunpack.c.h.b16 %v2154
        %v4682 = vunpack.c.l.b16 %v2155
        %v4683 = vunpack.c.h.b16 %v2155
        %v4684 = vunpack.c.l.b16 %v2156
        %v4685 = vunpack.c.h.b16 %v2156
        %v4686 = vunpack.c.l.b16 %v2157
        %v4687 = vunpack.c.h.b16 %v2157
        %v4688 = vunpack.c.l.b16 %v2158
        %v4689 = vunpack.c.h.b16 %v2158
        %v4690 = vunpack.c.l.b16 %v2159
        %v4691 = vunpack.c.h.b16 %v2159
        %v4692 = vunpack.c.l.b16 %v2160
        %v4693 = vunpack.c.h.b16 %v2160
        %v4694 = vunpack.c.l.b16 %v2161
        %v4695 = vunpack.c.h.b16 %v2161
        %v4696 = vunpack.c.l.b16 %v2162
        %v4697 = vunpack.c.h.b16 %v2162
        %v4698 = vunpack.c.l.b16 %v2163
        %v4699 = vunpack.c.h.b16 %v2163
        %v4700 = vunpack.c.l.b16 %v2164
        %v4701 = vunpack.c.h.b16 %v2164
        %v4702 = vunpack.c.l.b16 %v2165
        %v4703 = vunpack.c.h.b16 %v2165
        %v4704 = vunpack.c.l.b16 %v2166
        %v4705 = vunpack.c.h.b16 %v2166
        %v4706 = vunpack.c.l.b16 %v2167
        %v4707 = vunpack.c.h.b16 %v2167
        %v4708 = vunpack.c.l.b16 %v2168
        %v4709 = vunpack.c.h.b16 %v2168
        %v4710 = vunpack.c.l.b16 %v2169
        %v4711 = vunpack.c.h.b16 %v2169
        %v4712 = vunpack.c.l.b16 %v2170
        %v4713 = vunpack.c.h.b16 %v2170
        %v4714 = vunpack.c.l.b16 %v2171
        %v4715 = vunpack.c.h.b16 %v2171
        %v4716 = vunpack.c.l.b16 %v2172
        %v4717 = vunpack.c.h.b16 %v2172
        %v4718 = vunpack.c.l.b16 %v2173
        %v4719 = vunpack.c.h.b16 %v2173
        %v4720 = vunpack.c.l.b16 %v2174
        %v4721 = vunpack.c.h.b16 %v2174
        %v4722 = vunpack.c.l.b16 %v2175
        %v4723 = vunpack.c.h.b16 %v2175
        %v4724 = vunpack.c.l.b16 %v2176
        %v4725 = vunpack.c.h.b16 %v2176
        %v4726 = vunpack.c.l.b16 %v2177
        %v4727 = vunpack.c.h.b16 %v2177
        %v4728 = vunpack.c.l.b16 %v2178
        %v4729 = vunpack.c.h.b16 %v2178
        %v4730 = vunpack.c.l.b16 %v2179
        %v4731 = vunpack.c.h.b16 %v2179
        %v4732 = vunpack.c.l.b16 %v2180
        %v4733 = vunpack.c.h.b16 %v2180
        %v4734 = vunpack.c.l.b16 %v2181
        %v4735 = vunpack.c.h.b16 %v2181
        %v4736 = vunpack.c.l.b16 %v2182
        %v4737 = vunpack.c.h.b16 %v2182
        %v4738 = vunpack.c.l.b16 %v2183
        %v4739 = vunpack.c.h.b16 %v2183
        %v4740 = vunpack.c.l.b16 %v2184
        %v4741 = vunpack.c.h.b16 %v2184
        %v4742 = vunpack.c.l.b16 %v2185
        %v4743 = vunpack.c.h.b16 %v2185
        %v4744 = vunpack.c.l.b16 %v2186
        %v4745 = vunpack.c.h.b16 %v2186
        %v4746 = vunpack.c.l.b16 %v2187
        %v4747 = vunpack.c.h.b16 %v2187
        %v4748 = vunpack.c.l.b16 %v2188
        %v4749 = vunpack.c.h.b16 %v2188
        %v4750 = vunpack.c.l.b16 %v2189
        %v4751 = vunpack.c.h.b16 %v2189
        %v4752 = vunpack.c.l.b16 %v2190
        %v4753 = vunpack.c.h.b16 %v2190
        %v4754 = vunpack.c.l.b16 %v2191
        %v4755 = vunpack.c.h.b16 %v2191
        %v4756 = vunpack.c.l.b16 %v2192
        %v4757 = vunpack.c.h.b16 %v2192
        %v4758 = vunpack.c.l.b16 %v2193
        %v4759 = vunpack.c.h.b16 %v2193
        %v4760 = vunpack.c.l.b16 %v2194
        %v4761 = vunpack.c.h.b16 %v2194
        %v4762 = vunpack.c.l.b16 %v2195
        %v4763 = vunpack.c.h.b16 %v2195
        %v4764 = vunpack.c.l.b16 %v2196
        %v4765 = vunpack.c.h.b16 %v2196
        %v4766 = vunpack.c.l.b16 %v2197
        %v4767 = vunpack.c.h.b16 %v2197
        %v4768 = vunpack.c.l.b16 %v2198
        %v4769 = vunpack.c.h.b16 %v2198
        %v4770 = vunpack.c.l.b16 %v2199
        %v4771 = vunpack.c.h.b16 %v2199
        %v4772 = vunpack.c.l.b16 %v2200
        %v4773 = vunpack.c.h.b16 %v2200
        %v4774 = vunpack.c.l.b16 %v2201
        %v4775 = vunpack.c.h.b16 %v2201
        %v4776 = vunpack.c.l.b16 %v2202
        %v4777 = vunpack.c.h.b16 %v2202
        %v4778 = vunpack.c.l.b16 %v2203
        %v4779 = vunpack.c.h.b16 %v2203
        %v4780 = vunpack.c.l.b16 %v2204
        %v4781 = vunpack.c.h.b16 %v2204
        %v4782 = vunpack.c.l.b16 %v2205
        %v4783 = vunpack.c.h.b16 %v2205
        %v4784 = vunpack.c.l.b16 %v2206
        %v4785 = vunpack.c.h.b16 %v2206
        %v4786 = vunpack.c.l.b16 %v2207
        %v4787 = vunpack.c.h.b16 %v2207
        %v4788 = vunpack.c.l.b16 %v2208
        %v4789 = vunpack.c.h.b16 %v2208
        %v4790 = vunpack.c.l.b16 %v2209
        %v4791 = vunpack.c.h.b16 %v2209
        %v4792 = vunpack.c.l.b16 %v2210
        %v4793 = vunpack.c.h.b16 %v2210
        %v4794 = vunpack.c.l.b16 %v2211
        %v4795 = vunpack.c.h.b16 %v2211
        %v4796 = vunpack.c.l.b16 %v2212
        %v4797 = vunpack.c.h.b16 %v2212
        %v4798 = vunpack.c.l.b16 %v2213
        %v4799 = vunpack.c.h.b16 %v2213
        %v4800 = vunpack.c.l.b16 %v2214
        %v4801 = vunpack.c.h.b16 %v2214
        %v4802 = vunpack.c.l.b16 %v2215
        %v4803 = vunpack.c.h.b16 %v2215
        %v4804 = vunpack.c.l.b16 %v2216
        %v4805 = vunpack.c.h.b16 %v2216
        %v4806 = vunpack.c.l.b16 %v2217
        %v4807 = vunpack.c.h.b16 %v2217
        %v4808 = vunpack.c.l.b16 %v2218
        %v4809 = vunpack.c.h.b16 %v2218
        %v4810 = vunpack.c.l.b16 %v2219
        %v4811 = vunpack.c.h.b16 %v2219
        %v4812 = vunpack.c.l.b16 %v2220
        %v4813 = vunpack.c.h.b16 %v2220
        %v4814 = vunpack.c.l.b16 %v2221
        %v4815 = vunpack.c.h.b16 %v2221
        %v4816 = vunpack.c.l.b16 %v2222
        %v4817 = vunpack.c.h.b16 %v2222
        %v4818 = vunpack.c.l.b16 %v2223
        %v4819 = vunpack.c.h.b16 %v2223
        %v4820 = vunpack.c.l.b16 %v2224
        %v4821 = vunpack.c.h.b16 %v2224
        %v4822 = vunpack.c.l.b16 %v2225
        %v4823 = vunpack.c.h.b16 %v2225
        %v4824 = vunpack.c.l.b16 %v2226
        %v4825 = vunpack.c.h.b16 %v2226
        %v4826 = vunpack.c.l.b16 %v2227
        %v4827 = vunpack.c.h.b16 %v2227
        %v4828 = vunpack.c.l.b16 %v2228
        %v4829 = vunpack.c.h.b16 %v2228
        %v4830 = vunpack.c.l.b16 %v2229
        %v4831 = vunpack.c.h.b16 %v2229
        %v4832 = vunpack.c.l.b16 %v2230
        %v4833 = vunpack.c.h.b16 %v2230
        %v4834 = vunpack.c.l.b16 %v2231
        %v4835 = vunpack.c.h.b16 %v2231
        %v4836 = vunpack.c.l.b16 %v2232
        %v4837 = vunpack.c.h.b16 %v2232
        %v4838 = vunpack.c.l.b16 %v2233
        %v4839 = vunpack.c.h.b16 %v2233
        %v4840 = vunpack.c.l.b16 %v2234
        %v4841 = vunpack.c.h.b16 %v2234
        %v4842 = vunpack.c.l.b16 %v2235
        %v4843 = vunpack.c.h.b16 %v2235
        %v4844 = vunpack.c.l.b16 %v2236
        %v4845 = vunpack.c.h.b16 %v2236
        %v4846 = vunpack.c.l.b16 %v2237
        %v4847 = vunpack.c.h.b16 %v2237
        %v4848 = vunpack.c.l.b16 %v2238
        %v4849 = vunpack.c.h.b16 %v2238
        %v4850 = vunpack.c.l.b16 %v2239
        %v4851 = vunpack.c.h.b16 %v2239
        %v4852 = vunpack.c.l.b16 %v2240
        %v4853 = vunpack.c.h.b16 %v2240
        %v4854 = vunpack.c.l.b16 %v2241
        %v4855 = vunpack.c.h.b16 %v2241
        %v4856 = vunpack.c.l.b16 %v2242
        %v4857 = vunpack.c.h.b16 %v2242
        %v4858 = vunpack.c.l.b16 %v2243
        %v4859 = vunpack.c.h.b16 %v2243
        %v4860 = vunpack.c.l.b16 %v2244
        %v4861 = vunpack.c.h.b16 %v2244
        %v4862 = vunpack.c.l.b16 %v2245
        %v4863 = vunpack.c.h.b16 %v2245
        %v4864 = vunpack.c.l.b16 %v2246
        %v4865 = vunpack.c.h.b16 %v2246
        %v4866 = vunpack.c.l.b16 %v2247
        %v4867 = vunpack.c.h.b16 %v2247
        %v4868 = vunpack.c.l.b16 %v2248
        %v4869 = vunpack.c.h.b16 %v2248
        %v4870 = vunpack.c.l.b16 %v2249
        %v4871 = vunpack.c.h.b16 %v2249
        %v4872 = vunpack.c.l.b16 %v2250
        %v4873 = vunpack.c.h.b16 %v2250
        %v4874 = vunpack.c.l.b16 %v2251
        %v4875 = vunpack.c.h.b16 %v2251
        %v4876 = vunpack.c.l.b16 %v2252
        %v4877 = vunpack.c.h.b16 %v2252
        %v4878 = vunpack.c.l.b16 %v2253
        %v4879 = vunpack.c.h.b16 %v2253
        %v4880 = vunpack.c.l.b16 %v2254
        %v4881 = vunpack.c.h.b16 %v2254
        %v4882 = vunpack.c.l.b16 %v2255
        %v4883 = vunpack.c.h.b16 %v2255
        %v4884 = vunpack.c.l.b16 %v2256
        %v4885 = vunpack.c.h.b16 %v2256
        %v4886 = vunpack.c.l.b16 %v2257
        %v4887 = vunpack.c.h.b16 %v2257
        %v4888 = vunpack.c.l.b16 %v2258
        %v4889 = vunpack.c.h.b16 %v2258
        %v4890 = vunpack.c.l.b16 %v2259
        %v4891 = vunpack.c.h.b16 %v2259
        %v4892 = vunpack.c.l.b16 %v2260
        %v4893 = vunpack.c.h.b16 %v2260
        %v4894 = vunpack.c.l.b16 %v2261
        %v4895 = vunpack.c.h.b16 %v2261
        %v4896 = vunpack.c.l.b16 %v2262
        %v4897 = vunpack.c.h.b16 %v2262
        %v4898 = vunpack.c.l.b16 %v2263
        %v4899 = vunpack.c.h.b16 %v2263
        %v4900 = vunpack.c.l.b16 %v2264
        %v4901 = vunpack.c.h.b16 %v2264
        %v4902 = vunpack.c.l.b16 %v2265
        %v4903 = vunpack.c.h.b16 %v2265
        %v4904 = vunpack.c.l.b16 %v2266
        %v4905 = vunpack.c.h.b16 %v2266
        %v4906 = vunpack.c.l.b16 %v2267
        %v4907 = vunpack.c.h.b16 %v2267
        %v4908 = vunpack.c.l.b16 %v2268
        %v4909 = vunpack.c.h.b16 %v2268
        %v4910 = vunpack.c.l.b16 %v2269
        %v4911 = vunpack.c.h.b16 %v2269
        %v4912 = vunpack.c.l.b16 %v2270
        %v4913 = vunpack.c.h.b16 %v2270
        %v4914 = vunpack.c.l.b16 %v2271
        %v4915 = vunpack.c.h.b16 %v2271
        %v4916 = vunpack.c.l.b16 %v2272
        %v4917 = vunpack.c.h.b16 %v2272
        %v4918 = vunpack.c.l.b16 %v2273
        %v4919 = vunpack.c.h.b16 %v2273
        %v4920 = vunpack.c.l.b16 %v2274
        %v4921 = vunpack.c.h.b16 %v2274
        %v4922 = vunpack.c.l.b16 %v2275
        %v4923 = vunpack.c.h.b16 %v2275
        %v4924 = vunpack.c.l.b16 %v2276
        %v4925 = vunpack.c.h.b16 %v2276
        %v4926 = vunpack.c.l.b16 %v2277
        %v4927 = vunpack.c.h.b16 %v2277
        %v4928 = vunpack.c.l.b16 %v2278
        %v4929 = vunpack.c.h.b16 %v2278
        %v4930 = vunpack.c.l.b16 %v2279
        %v4931 = vunpack.c.h.b16 %v2279
        %v4932 = vunpack.c.l.b16 %v2280
        %v4933 = vunpack.c.h.b16 %v2280
        %v4934 = vunpack.c.l.b16 %v2281
        %v4935 = vunpack.c.h.b16 %v2281
        %v4936 = vunpack.c.l.b16 %v2282
        %v4937 = vunpack.c.h.b16 %v2282
        %v4938 = vunpack.c.l.b16 %v2283
        %v4939 = vunpack.c.h.b16 %v2283
        %v4940 = vunpack.c.l.b16 %v2284
        %v4941 = vunpack.c.h.b16 %v2284
        %v4942 = vunpack.c.l.b16 %v2285
        %v4943 = vunpack.c.h.b16 %v2285
        %v4944 = vunpack.c.l.b16 %v2286
        %v4945 = vunpack.c.h.b16 %v2286
        %v4946 = vunpack.c.l.b16 %v2287
        %v4947 = vunpack.c.h.b16 %v2287
        %v4948 = vunpack.c.l.b16 %v2288
        %v4949 = vunpack.c.h.b16 %v2288
        %v4950 = vunpack.c.l.b16 %v2289
        %v4951 = vunpack.c.h.b16 %v2289
        %v4952 = vunpack.c.l.b16 %v2290
        %v4953 = vunpack.c.h.b16 %v2290
        %v4954 = vunpack.c.l.b16 %v2291
        %v4955 = vunpack.c.h.b16 %v2291
        %v4956 = vunpack.c.l.b16 %v2292
        %v4957 = vunpack.c.h.b16 %v2292
        %v4958 = vunpack.c.l.b16 %v2293
        %v4959 = vunpack.c.h.b16 %v2293
        %v4960 = vunpack.c.l.b16 %v2294
        %v4961 = vunpack.c.h.b16 %v2294
        %v4962 = vunpack.c.l.b16 %v2295
        %v4963 = vunpack.c.h.b16 %v2295
        %v4964 = vunpack.c.l.b16 %v2296
        %v4965 = vunpack.c.h.b16 %v2296
        %v4966 = vunpack.c.l.b16 %v2297
        %v4967 = vunpack.c.h.b16 %v2297
        %v4968 = vunpack.c.l.b16 %v2298
        %v4969 = vunpack.c.h.b16 %v2298
        %v4970 = vunpack.c.l.b16 %v2299
        %v4971 = vunpack.c.h.b16 %v2299
        %v4972 = vunpack.c.l.b16 %v2300
        %v4973 = vunpack.c.h.b16 %v2300
        %v4974 = vunpack.c.l.b16 %v2301
        %v4975 = vunpack.c.h.b16 %v2301
        %v4976 = vunpack.c.l.b16 %v2302
        %v4977 = vunpack.c.h.b16 %v2302
        %v4978 = vunpack.c.l.b16 %v2303
        %v4979 = vunpack.c.h.b16 %v2303
        %v4980 = vunpack.c.l.b16 %v2304
        %v4981 = vunpack.c.h.b16 %v2304
        %v4982 = vunpack.c.l.b16 %v2305
        %v4983 = vunpack.c.h.b16 %v2305
        %v4984 = vunpack.c.l.b16 %v2306
        %v4985 = vunpack.c.h.b16 %v2306
        %v4986 = vunpack.c.l.b16 %v2307
        %v4987 = vunpack.c.h.b16 %v2307
        %v4988 = vunpack.c.l.b16 %v2308
        %v4989 = vunpack.c.h.b16 %v2308
        %v4990 = vunpack.c.l.b16 %v2309
        %v4991 = vunpack.c.h.b16 %v2309
        %v4992 = vunpack.c.l.b16 %v2310
        %v4993 = vunpack.c.h.b16 %v2310
        %v4994 = vunpack.c.l.b16 %v2311
        %v4995 = vunpack.c.h.b16 %v2311
        %v4996 = vunpack.c.l.b16 %v2312
        %v4997 = vunpack.c.h.b16 %v2312
        %v4998 = vunpack.c.l.b16 %v2313
        %v4999 = vunpack.c.h.b16 %v2313
        %v5000 = vunpack.c.l.b16 %v2314
        %v5001 = vunpack.c.h.b16 %v2314
        %v5002 = vunpack.c.l.b16 %v2315
        %v5003 = vunpack.c.h.b16 %v2315
        %v5004 = vunpack.c.l.b16 %v2316
        %v5005 = vunpack.c.h.b16 %v2316
        %v5006 = vunpack.c.l.b16 %v2317
        %v5007 = vunpack.c.h.b16 %v2317
        %v5008 = vunpack.c.l.b16 %v2318
        %v5009 = vunpack.c.h.b16 %v2318
        %v5010 = vunpack.c.l.b16 %v2319
        %v5011 = vunpack.c.h.b16 %v2319
        %v5012 = vunpack.c.l.b16 %v2320
        %v5013 = vunpack.c.h.b16 %v2320
        %v5014 = vunpack.c.l.b16 %v2321
        %v5015 = vunpack.c.h.b16 %v2321
        %v5016 = vunpack.c.l.b16 %v2322
        %v5017 = vunpack.c.h.b16 %v2322
        %v5018 = vunpack.c.l.b16 %v2323
        %v5019 = vunpack.c.h.b16 %v2323
        %v5020 = vunpack.c.l.b16 %v2324
        %v5021 = vunpack.c.h.b16 %v2324
        %v5022 = vunpack.c.l.b16 %v2325
        %v5023 = vunpack.c.h.b16 %v2325
        %v5024 = vunpack.c.l.b16 %v2326
        %v5025 = vunpack.c.h.b16 %v2326
        %v5026 = vunpack.c.l.b16 %v2327
        %v5027 = vunpack.c.h.b16 %v2327
        %v5028 = vunpack.c.l.b16 %v2328
        %v5029 = vunpack.c.h.b16 %v2328
        %v5030 = vunpack.c.l.b16 %v2329
        %v5031 = vunpack.c.h.b16 %v2329
        %v5032 = vunpack.c.l.b16 %v2330
        %v5033 = vunpack.c.h.b16 %v2330
        %v5034 = vunpack.c.l.b16 %v2331
        %v5035 = vunpack.c.h.b16 %v2331
        %v5036 = vunpack.c.l.b16 %v2332
        %v5037 = vunpack.c.h.b16 %v2332
        %v5038 = vunpack.c.l.b16 %v2333
        %v5039 = vunpack.c.h.b16 %v2333
        %v5040 = vunpack.c.l.b16 %v2334
        %v5041 = vunpack.c.h.b16 %v2334
        %v5042 = vunpack.c.l.b16 %v2335
        %v5043 = vunpack.c.h.b16 %v2335
        %v5044 = vunpack.c.l.b16 %v2336
        %v5045 = vunpack.c.h.b16 %v2336
        %v5046 = vunpack.c.l.b16 %v2337
        %v5047 = vunpack.c.h.b16 %v2337
        %v5048 = vunpack.c.l.b16 %v2338
        %v5049 = vunpack.c.h.b16 %v2338
        %v5050 = vunpack.c.l.b16 %v2339
        %v5051 = vunpack.c.h.b16 %v2339
        %v5052 = vunpack.c.l.b16 %v2340
        %v5053 = vunpack.c.h.b16 %v2340
        %v5054 = vunpack.c.l.b16 %v2341
        %v5055 = vunpack.c.h.b16 %v2341
        %v5056 = vunpack.c.l.b16 %v2342
        %v5057 = vunpack.c.h.b16 %v2342
        %v5058 = vunpack.c.l.b16 %v2343
        %v5059 = vunpack.c.h.b16 %v2343
        %v5060 = vunpack.c.l.b16 %v2344
        %v5061 = vunpack.c.h.b16 %v2344
        %v5062 = vunpack.c.l.b16 %v2345
        %v5063 = vunpack.c.h.b16 %v2345
        %v5064 = vunpack.c.l.b16 %v2346
        %v5065 = vunpack.c.h.b16 %v2346
        %v5066 = vunpack.c.l.b16 %v2347
        %v5067 = vunpack.c.h.b16 %v2347
        %v5068 = vunpack.c.l.b16 %v2348
        %v5069 = vunpack.c.h.b16 %v2348
        %v5070 = vunpack.c.l.b16 %v2349
        %v5071 = vunpack.c.h.b16 %v2349
        %v5072 = vunpack.c.l.b16 %v2350
        %v5073 = vunpack.c.h.b16 %v2350
        %v5074 = vunpack.c.l.b16 %v2351
        %v5075 = vunpack.c.h.b16 %v2351
        %v5076 = vunpack.c.l.b16 %v2352
        %v5077 = vunpack.c.h.b16 %v2352
        %v5078 = vunpack.c.l.b16 %v2353
        %v5079 = vunpack.c.h.b16 %v2353
        %v5080 = vunpack.c.l.b16 %v2354
        %v5081 = vunpack.c.h.b16 %v2354
        %v5082 = vunpack.c.l.b16 %v2355
        %v5083 = vunpack.c.h.b16 %v2355
        %v5084 = vunpack.c.l.b16 %v2356
        %v5085 = vunpack.c.h.b16 %v2356
        %v5086 = vunpack.c.l.b16 %v2357
        %v5087 = vunpack.c.h.b16 %v2357
        %v5088 = vunpack.c.l.b16 %v2358
        %v5089 = vunpack.c.h.b16 %v2358
        %v5090 = vunpack.c.l.b16 %v2359
        %v5091 = vunpack.c.h.b16 %v2359
        %v5092 = vunpack.c.l.b16 %v2360
        %v5093 = vunpack.c.h.b16 %v2360
        %v5094 = vunpack.c.l.b16 %v2361
        %v5095 = vunpack.c.h.b16 %v2361
        %v5096 = vunpack.c.l.b16 %v2362
        %v5097 = vunpack.c.h.b16 %v2362
        %v5098 = vunpack.c.l.b16 %v2363
        %v5099 = vunpack.c.h.b16 %v2363
        %v5100 = vunpack.c.l.b16 %v2364
        %v5101 = vunpack.c.h.b16 %v2364
        %v5102 = vunpack.c.l.b16 %v2365
        %v5103 = vunpack.c.h.b16 %v2365
        %v5104 = vunpack.c.l.b16 %v2366
        %v5105 = vunpack.c.h.b16 %v2366
        %v5106 = vunpack.c.l.b16 %v2367
        %v5107 = vunpack.c.h.b16 %v2367
        %v5108 = vunpack.c.l.b16 %v2368
        %v5109 = vunpack.c.h.b16 %v2368
        %v5110 = vunpack.c.l.b16 %v2369
        %v5111 = vunpack.c.h.b16 %v2369
        %v5112 = vunpack.c.l.b16 %v2370
        %v5113 = vunpack.c.h.b16 %v2370
        %v5114 = vunpack.c.l.b16 %v2371
        %v5115 = vunpack.c.h.b16 %v2371
        %v5116 = vunpack.c.l.b16 %v2372
        %v5117 = vunpack.c.h.b16 %v2372
        %v5118 = vunpack.c.l.b16 %v2373
        %v5119 = vunpack.c.h.b16 %v2373
        %v5120 = vunpack.c.l.b16 %v2374
        %v5121 = vunpack.c.h.b16 %v2374
        %v5122 = vunpack.c.l.b16 %v2375
        %v5123 = vunpack.c.h.b16 %v2375
        %v5124 = vunpack.c.l.b16 %v2376
        %v5125 = vunpack.c.h.b16 %v2376
        %v5126 = vunpack.c.l.b16 %v2377
        %v5127 = vunpack.c.h.b16 %v2377
        %v5128 = vunpack.c.l.b16 %v2378
        %v5129 = vunpack.c.h.b16 %v2378
        %v5130 = vunpack.c.l.b16 %v2379
        %v5131 = vunpack.c.h.b16 %v2379
        %v5132 = vunpack.c.l.b16 %v2380
        %v5133 = vunpack.c.h.b16 %v2380
        %v5134 = vunpack.c.l.b16 %v2381
        %v5135 = vunpack.c.h.b16 %v2381
        %v5136 = vunpack.c.l.b16 %v2382
        %v5137 = vunpack.c.h.b16 %v2382
        %v5138 = vunpack.c.l.b16 %v2383
        %v5139 = vunpack.c.h.b16 %v2383
        %v5140 = vunpack.c.l.b16 %v2384
        %v5141 = vunpack.c.h.b16 %v2384
        %v5142 = vunpack.c.l.b16 %v2385
        %v5143 = vunpack.c.h.b16 %v2385
        %v5144 = vunpack.c.l.b16 %v2386
        %v5145 = vunpack.c.h.b16 %v2386
        %v5146 = vunpack.c.l.b16 %v2387
        %v5147 = vunpack.c.h.b16 %v2387
        %v5148 = vunpack.c.l.b16 %v2388
        %v5149 = vunpack.c.h.b16 %v2388
        %v5150 = vunpack.c.l.b16 %v2389
        %v5151 = vunpack.c.h.b16 %v2389
        %v5152 = vunpack.c.l.b16 %v2390
        %v5153 = vunpack.c.h.b16 %v2390
        %v5154 = vunpack.c.l.b16 %v2391
        %v5155 = vunpack.c.h.b16 %v2391
        %v5156 = vunpack.c.l.b16 %v2392
        %v5157 = vunpack.c.h.b16 %v2392
        %v5158 = vunpack.c.l.b16 %v2393
        %v5159 = vunpack.c.h.b16 %v2393
        %v5160 = vunpack.c.l.b16 %v2394
        %v5161 = vunpack.c.h.b16 %v2394
        %v5162 = vunpack.c.l.b16 %v2395
        %v5163 = vunpack.c.h.b16 %v2395
        %v5164 = vunpack.c.l.b16 %v2396
        %v5165 = vunpack.c.h.b16 %v2396
        %v5166 = vunpack.c.l.b16 %v2397
        %v5167 = vunpack.c.h.b16 %v2397
        %v5168 = vunpack.c.l.b16 %v2398
        %v5169 = vunpack.c.h.b16 %v2398
        %v5170 = vunpack.c.l.b16 %v2399
        %v5171 = vunpack.c.h.b16 %v2399
        %v5172 = vunpack.c.l.b16 %v2400
        %v5173 = vunpack.c.h.b16 %v2400
        %v5174 = vunpack.c.l.b16 %v2401
        %v5175 = vunpack.c.h.b16 %v2401
        %v5176 = vunpack.c.l.b16 %v2402
        %v5177 = vunpack.c.h.b16 %v2402
        %v5178 = vunpack.c.l.b16 %v2403
        %v5179 = vunpack.c.h.b16 %v2403
        %v5180 = vunpack.c.l.b16 %v2404
        %v5181 = vunpack.c.h.b16 %v2404
        %v5182 = vunpack.c.l.b16 %v2405
        %v5183 = vunpack.c.h.b16 %v2405
        %v5184 = vunpack.c.l.b16 %v2406
        %v5185 = vunpack.c.h.b16 %v2406
        %v5186 = vunpack.c.l.b16 %v2407
        %v5187 = vunpack.c.h.b16 %v2407
        %v5188 = vunpack.c.l.b16 %v2408
        %v5189 = vunpack.c.h.b16 %v2408
        %v5190 = vunpack.c.l.b16 %v2409
        %v5191 = vunpack.c.h.b16 %v2409
        %v5192 = vunpack.c.l.b16 %v2410
        %v5193 = vunpack.c.h.b16 %v2410
        %v5194 = vunpack.c.l.b16 %v2411
        %v5195 = vunpack.c.h.b16 %v2411
        %v5196 = vunpack.c.l.b16 %v2412
        %v5197 = vunpack.c.h.b16 %v2412
        %v5198 = vunpack.c.l.b16 %v2413
        %v5199 = vunpack.c.h.b16 %v2413
        %v5200 = vunpack.c.l.b16 %v2414
        %v5201 = vunpack.c.h.b16 %v2414
        %v5202 = vunpack.c.l.b16 %v2415
        %v5203 = vunpack.c.h.b16 %v2415
        %v5204 = vunpack.c.l.b16 %v2416
        %v5205 = vunpack.c.h.b16 %v2416
        %v5206 = vunpack.c.l.b16 %v2417
        %v5207 = vunpack.c.h.b16 %v2417
        %v5208 = vunpack.c.l.b16 %v2418
        %v5209 = vunpack.c.h.b16 %v2418
        %v5210 = vunpack.c.l.b16 %v2419
        %v5211 = vunpack.c.h.b16 %v2419
        %v5212 = vunpack.c.l.b16 %v2420
        %v5213 = vunpack.c.h.b16 %v2420
        %v5214 = vunpack.c.l.b16 %v2421
        %v5215 = vunpack.c.h.b16 %v2421
        %v5216 = vunpack.c.l.b16 %v2422
        %v5217 = vunpack.c.h.b16 %v2422
        %v5218 = vunpack.c.l.b16 %v2423
        %v5219 = vunpack.c.h.b16 %v2423
        %v5220 = vunpack.c.l.b16 %v2424
        %v5221 = vunpack.c.h.b16 %v2424
        %v5222 = vunpack.c.l.b16 %v2425
        %v5223 = vunpack.c.h.b16 %v2425
        %v5224 = vunpack.c.l.b16 %v2426
        %v5225 = vunpack.c.h.b16 %v2426
        %v5226 = vunpack.c.l.b16 %v2427
        %v5227 = vunpack.c.h.b16 %v2427
        %v5228 = vunpack.c.l.b16 %v2428
        %v5229 = vunpack.c.h.b16 %v2428
        %v5230 = vunpack.c.l.b16 %v2429
        %v5231 = vunpack.c.h.b16 %v2429
        %v5232 = vunpack.c.l.b16 %v2430
        %v5233 = vunpack.c.h.b16 %v2430
        %v5234 = vunpack.c.l.b16 %v2431
        %v5235 = vunpack.c.h.b16 %v2431
        %v5236 = vunpack.c.l.b16 %v2432
        %v5237 = vunpack.c.h.b16 %v2432
        %v5238 = vunpack.c.l.b16 %v2433
        %v5239 = vunpack.c.h.b16 %v2433
        %v5240 = vpack.c.b16 %v3388, %v3384
        %v5241 = vpack.c.b16 %v3389, %v3385
        %v5242 = vpack.c.b16 %v3390, %v3386
        %v5243 = vpack.c.b16 %v3391, %v3387
        %v5244 = vpack.c.b16 %v3396, %v3392
        %v5245 = vpack.c.b16 %v3397, %v3393
        %v5246 = vpack.c.b16 %v3398, %v3394
        %v5247 = vpack.c.b16 %v3399, %v3395
        %v5248 = vpack.c.b16 %v3404, %v3400
        %v5249 = vpack.c.b16 %v3405, %v3401
        %v5250 = vpack.c.b16 %v3406, %v3402
        %v5251 = vpack.c.b16 %v3407, %v3403
        %v5252 = vpack.c.b16 %v3412, %v3408
        %v5253 = vpack.c.b16 %v3413, %v3409
        %v5254 = vpack.c.b16 %v3414, %v3410
        %v5255 = vpack.c.b16 %v3415, %v3411
        %v5256 = vpack.c.b16 %v3420, %v3416
        %v5257 = vpack.c.b16 %v3421, %v3417
        %v5258 = vpack.c.b16 %v3422, %v3418
        %v5259 = vpack.c.b16 %v3423, %v3419
        %v5260 = vpack.c.b16 %v3428, %v3424
        %v5261 = vpack.c.b16 %v3429, %v3425
        %v5262 = vpack.c.b16 %v3430, %v3426
        %v5263 = vpack.c.b16 %v3431, %v3427
        %v5264 = vpack.c.b16 %v3436, %v3432
        %v5265 = vpack.c.b16 %v3437, %v3433
        %v5266 = vpack.c.b16 %v3438, %v3434
        %v5267 = vpack.c.b16 %v3439, %v3435
        %v5268 = vpack.c.b16 %v3444, %v3440
        %v5269 = vpack.c.b16 %v3445, %v3441
        %v5270 = vpack.c.b16 %v3446, %v3442
        %v5271 = vpack.c.b16 %v3447, %v3443
        %v5272 = vpack.c.b16 %v3452, %v3448
        %v5273 = vpack.c.b16 %v3453, %v3449
        %v5274 = vpack.c.b16 %v3454, %v3450
        %v5275 = vpack.c.b16 %v3455, %v3451
        %v5276 = vpack.c.b16 %v3460, %v3456
        %v5277 = vpack.c.b16 %v3461, %v3457
        %v5278 = vpack.c.b16 %v3462, %v3458
        %v5279 = vpack.c.b16 %v3463, %v3459
        %v5280 = vpack.c.b16 %v3468, %v3464
        %v5281 = vpack.c.b16 %v3469, %v3465
        %v5282 = vpack.c.b16 %v3470, %v3466
        %v5283 = vpack.c.b16 %v3471, %v3467
        %v5284 = vpack.c.b16 %v3476, %v3472
        %v5285 = vpack.c.b16 %v3477, %v3473
        %v5286 = vpack.c.b16 %v3478, %v3474
        %v5287 = vpack.c.b16 %v3479, %v3475
        %v5288 = vpack.c.b16 %v3484, %v3480
        %v5289 = vpack.c.b16 %v3485, %v3481
        %v5290 = vpack.c.b16 %v3486, %v3482
        %v5291 = vpack.c.b16 %v3487, %v3483
        %v5292 = vpack.c.b16 %v3492, %v3488
        %v5293 = vpack.c.b16 %v3493, %v3489
        %v5294 = vpack.c.b16 %v3494, %v3490
        %v5295 = vpack.c.b16 %v3495, %v3491
        %v5296 = vpack.c.b16 %v3500, %v3496
        %v5297 = vpack.c.b16 %v3501, %v3497
        %v5298 = vpack.c.b16 %v3502, %v3498
        %v5299 = vpack.c.b16 %v3503, %v3499
        %v5300 = vpack.c.b16 %v3508, %v3504
        %v5301 = vpack.c.b16 %v3509, %v3505
        %v5302 = vpack.c.b16 %v3510, %v3506
        %v5303 = vpack.c.b16 %v3511, %v3507
        %v5304 = vpack.c.b16 %v3516, %v3512
        %v5305 = vpack.c.b16 %v3517, %v3513
        %v5306 = vpack.c.b16 %v3518, %v3514
        %v5307 = vpack.c.b16 %v3519, %v3515
        %v5308 = vpack.c.b16 %v3524, %v3520
        %v5309 = vpack.c.b16 %v3525, %v3521
        %v5310 = vpack.c.b16 %v3526, %v3522
        %v5311 = vpack.c.b16 %v3527, %v3523
        %v5312 = vpack.c.b16 %v3532, %v3528
        %v5313 = vpack.c.b16 %v3533, %v3529
        %v5314 = vpack.c.b16 %v3534, %v3530
        %v5315 = vpack.c.b16 %v3535, %v3531
        %v5316 = vpack.c.b16 %v3540, %v3536
        %v5317 = vpack.c.b16 %v3541, %v3537
        %v5318 = vpack.c.b16 %v3542, %v3538
        %v5319 = vpack.c.b16 %v3543, %v3539
        %v5320 = vpack.c.b16 %v3548, %v3544
        %v5321 = vpack.c.b16 %v3549, %v3545
        %v5322 = vpack.c.b16 %v3550, %v3546
        %v5323 = vpack.c.b16 %v3551, %v3547
        %v5324 = vpack.c.b16 %v3556, %v3552
        %v5325 = vpack.c.b16 %v3557, %v3553
        %v5326 = vpack.c.b16 %v3558, %v3554
        %v5327 = vpack.c.b16 %v3559, %v3555
        %v5328 = vpack.c.b16 %v3564, %v3560
        %v5329 = vpack.c.b16 %v3565, %v3561
        %v5330 = vpack.c.b16 %v3566, %v3562
        %v5331 = vpack.c.b16 %v3567, %v3563
        %v5332 = vpack.c.b16 %v3572, %v3568
        %v5333 = vpack.c.b16 %v3573, %v3569
        %v5334 = vpack.c.b16 %v3574, %v3570
        %v5335 = vpack.c.b16 %v3575, %v3571
        %v5336 = vpack.c.b16 %v3580, %v3576
        %v5337 = vpack.c.b16 %v3581, %v3577
        %v5338 = vpack.c.b16 %v3582, %v3578
        %v5339 = vpack.c.b16 %v3583, %v3579
        %v5340 = vpack.c.b16 %v3588, %v3584
        %v5341 = vpack.c.b16 %v3589, %v3585
        %v5342 = vpack.c.b16 %v3590, %v3586
        %v5343 = vpack.c.b16 %v3591, %v3587
        %v5344 = vpack.c.b16 %v3596, %v3592
        %v5345 = vpack.c.b16 %v3597, %v3593
        %v5346 = vpack.c.b16 %v3598, %v3594
        %v5347 = vpack.c.b16 %v3599, %v3595
        %v5348 = vpack.c.b16 %v3604, %v3600
        %v5349 = vpack.c.b16 %v3605, %v3601
        %v5350 = vpack.c.b16 %v3606, %v3602
        %v5351 = vpack.c.b16 %v3607, %v3603
        %v5352 = vpack.c.b16 %v3612, %v3608
        %v5353 = vpack.c.b16 %v3613, %v3609
        %v5354 = vpack.c.b16 %v3614, %v3610
        %v5355 = vpack.c.b16 %v3615, %v3611
        %v5356 = vpack.c.b16 %v3620, %v3616
        %v5357 = vpack.c.b16 %v3621, %v3617
        %v5358 = vpack.c.b16 %v3622, %v3618
        %v5359 = vpack.c.b16 %v3623, %v3619
        %v5360 = vpack.c.b16 %v3628, %v3624
        %v5361 = vpack.c.b16 %v3629, %v3625
        %v5362 = vpack.c.b16 %v3630, %v3626
        %v5363 = vpack.c.b16 %v3631, %v3627
        %v5364 = vpack.c.b16 %v3636, %v3632
        %v5365 = vpack.c.b16 %v3637, %v3633
        %v5366 = vpack.c.b16 %v3638, %v3634
        %v5367 = vpack.c.b16 %v3639, %v3635
        %v5368 = vpack.c.b16 %v3644, %v3640
        %v5369 = vpack.c.b16 %v3645, %v3641
        %v5370 = vpack.c.b16 %v3646, %v3642
        %v5371 = vpack.c.b16 %v3647, %v3643
        %v5372 = vpack.c.b16 %v3652, %v3648
        %v5373 = vpack.c.b16 %v3653, %v3649
        %v5374 = vpack.c.b16 %v3654, %v3650
        %v5375 = vpack.c.b16 %v3655, %v3651
        %v5376 = vpack.c.b16 %v3660, %v3656
        %v5377 = vpack.c.b16 %v3661, %v3657
        %v5378 = vpack.c.b16 %v3662, %v3658
        %v5379 = vpack.c.b16 %v3663, %v3659
        %v5380 = vpack.c.b16 %v3668, %v3664
        %v5381 = vpack.c.b16 %v3669, %v3665
        %v5382 = vpack.c.b16 %v3670, %v3666
        %v5383 = vpack.c.b16 %v3671, %v3667
        %v5384 = vpack.c.b16 %v3676, %v3672
        %v5385 = vpack.c.b16 %v3677, %v3673
        %v5386 = vpack.c.b16 %v3678, %v3674
        %v5387 = vpack.c.b16 %v3679, %v3675
        %v5388 = vpack.c.b16 %v3684, %v3680
        %v5389 = vpack.c.b16 %v3685, %v3681
        %v5390 = vpack.c.b16 %v3686, %v3682
        %v5391 = vpack.c.b16 %v3687, %v3683
        %v5392 = vpack.c.b16 %v3692, %v3688
        %v5393 = vpack.c.b16 %v3693, %v3689
        %v5394 = vpack.c.b16 %v3694, %v3690
        %v5395 = vpack.c.b16 %v3695, %v3691
        %v5396 = vpack.c.b16 %v3700, %v3696
        %v5397 = vpack.c.b16 %v3701, %v3697
        %v5398 = vpack.c.b16 %v3702, %v3698
        %v5399 = vpack.c.b16 %v3703, %v3699
        %v5400 = vpack.c.b16 %v3708, %v3704
        %v5401 = vpack.c.b16 %v3709, %v3705
        %v5402 = vpack.c.b16 %v3710, %v3706
        %v5403 = vpack.c.b16 %v3711, %v3707
        %v5404 = vpack.c.b16 %v3716, %v3712
        %v5405 = vpack.c.b16 %v3717, %v3713
        %v5406 = vpack.c.b16 %v3718, %v3714
        %v5407 = vpack.c.b16 %v3719, %v3715
        %v5408 = vpack.c.b16 %v3724, %v3720
        %v5409 = vpack.c.b16 %v3725, %v3721
        %v5410 = vpack.c.b16 %v3726, %v3722
        %v5411 = vpack.c.b16 %v3727, %v3723
        %v5412 = vpack.c.b16 %v3732, %v3728
        %v5413 = vpack.c.b16 %v3733, %v3729
        %v5414 = vpack.c.b16 %v3734, %v3730
        %v5415 = vpack.c.b16 %v3735, %v3731
        %v5416 = vpack.c.b16 %v3740, %v3736
        %v5417 = vpack.c.b16 %v3741, %v3737
        %v5418 = vpack.c.b16 %v3742, %v3738
        %v5419 = vpack.c.b16 %v3743, %v3739
        %v5420 = vpack.c.b16 %v3748, %v3744
        %v5421 = vpack.c.b16 %v3749, %v3745
        %v5422 = vpack.c.b16 %v3750, %v3746
        %v5423 = vpack.c.b16 %v3751, %v3747
        %v5424 = vpack.c.b16 %v3756, %v3752
        %v5425 = vpack.c.b16 %v3757, %v3753
        %v5426 = vpack.c.b16 %v3758, %v3754
        %v5427 = vpack.c.b16 %v3759, %v3755
        %v5428 = vpack.c.b16 %v3764, %v3760
        %v5429 = vpack.c.b16 %v3765, %v3761
        %v5430 = vpack.c.b16 %v3766, %v3762
        %v5431 = vpack.c.b16 %v3767, %v3763
        %v5432 = vpack.c.b16 %v3772, %v3768
        %v5433 = vpack.c.b16 %v3773, %v3769
        %v5434 = vpack.c.b16 %v3774, %v3770
        %v5435 = vpack.c.b16 %v3775, %v3771
        %v5436 = vpack.c.b16 %v3780, %v3776
        %v5437 = vpack.c.b16 %v3781, %v3777
        %v5438 = vpack.c.b16 %v3782, %v3778
        %v5439 = vpack.c.b16 %v3783, %v3779
        %v5440 = vpack.c.b16 %v3788, %v3784
        %v5441 = vpack.c.b16 %v3789, %v3785
        %v5442 = vpack.c.b16 %v3790, %v3786
        %v5443 = vpack.c.b16 %v3791, %v3787
        %v5444 = vpack.c.b16 %v3796, %v3792
        %v5445 = vpack.c.b16 %v3797, %v3793
        %v5446 = vpack.c.b16 %v3798, %v3794
        %v5447 = vpack.c.b16 %v3799, %v3795
        %v5448 = vpack.c.b16 %v3804, %v3800
        %v5449 = vpack.c.b16 %v3805, %v3801
        %v5450 = vpack.c.b16 %v3806, %v3802
        %v5451 = vpack.c.b16 %v3807, %v3803
        %v5452 = vpack.c.b16 %v3812, %v3808
        %v5453 = vpack.c.b16 %v3813, %v3809
        %v5454 = vpack.c.b16 %v3814, %v3810
        %v5455 = vpack.c.b16 %v3815, %v3811
        %v5456 = vpack.c.b16 %v3820, %v3816
        %v5457 = vpack.c.b16 %v3821, %v3817
        %v5458 = vpack.c.b16 %v3822, %v3818
        %v5459 = vpack.c.b16 %v3823, %v3819
        %v5460 = vpack.c.b16 %v3828, %v3824
        %v5461 = vpack.c.b16 %v3829, %v3825
        %v5462 = vpack.c.b16 %v3830, %v3826
        %v5463 = vpack.c.b16 %v3831, %v3827
        %v5464 = vpack.c.b16 %v3836, %v3832
        %v5465 = vpack.c.b16 %v3837, %v3833
        %v5466 = vpack.c.b16 %v3838, %v3834
        %v5467 = vpack.c.b16 %v3839, %v3835
        %v5468 = vpack.c.b16 %v3844, %v3840
        %v5469 = vpack.c.b16 %v3845, %v3841
        %v5470 = vpack.c.b16 %v3846, %v3842
        %v5471 = vpack.c.b16 %v3847, %v3843
        %v5472 = vpack.c.b16 %v3852, %v3848
        %v5473 = vpack.c.b16 %v3853, %v3849
        %v5474 = vpack.c.b16 %v3854, %v3850
        %v5475 = vpack.c.b16 %v3855, %v3851
        %v5476 = vpack.c.b16 %v3860, %v3856
        %v5477 = vpack.c.b16 %v3861, %v3857
        %v5478 = vpack.c.b16 %v3862, %v3858
        %v5479 = vpack.c.b16 %v3863, %v3859
        %v5480 = vpack.c.b16 %v3868, %v3864
        %v5481 = vpack.c.b16 %v3869, %v3865
        %v5482 = vpack.c.b16 %v3870, %v3866
        %v5483 = vpack.c.b16 %v3871, %v3867
        %v5484 = vpack.c.b16 %v3876, %v3872
        %v5485 = vpack.c.b16 %v3877, %v3873
        %v5486 = vpack.c.b16 %v3878, %v3874
        %v5487 = vpack.c.b16 %v3879, %v3875
        %v5488 = vpack.c.b16 %v3884, %v3880
        %v5489 = vpack.c.b16 %v3885, %v3881
        %v5490 = vpack.c.b16 %v3886, %v3882
        %v5491 = vpack.c.b16 %v3887, %v3883
        %v5492 = vpack.c.b16 %v3892, %v3888
        %v5493 = vpack.c.b16 %v3893, %v3889
        %v5494 = vpack.c.b16 %v3894, %v3890
        %v5495 = vpack.c.b16 %v3895, %v3891
        %v5496 = vpack.c.b16 %v3900, %v3896
        %v5497 = vpack.c.b16 %v3901, %v3897
        %v5498 = vpack.c.b16 %v3902, %v3898
        %v5499 = vpack.c.b16 %v3903, %v3899
        %v5500 = vpack.c.b16 %v3908, %v3904
        %v5501 = vpack.c.b16 %v3909, %v3905
        %v5502 = vpack.c.b16 %v3910, %v3906
        %v5503 = vpack.c.b16 %v3911, %v3907
        %v5504 = vpack.c.b16 %v3916, %v3912
        %v5505 = vpack.c.b16 %v3917, %v3913
        %v5506 = vpack.c.b16 %v3918, %v3914
        %v5507 = vpack.c.b16 %v3919, %v3915
        %v5508 = vpack.c.b16 %v3924, %v3920
        %v5509 = vpack.c.b16 %v3925, %v3921
        %v5510 = vpack.c.b16 %v3926, %v3922
        %v5511 = vpack.c.b16 %v3927, %v3923
        %v5512 = vpack.c.b16 %v3932, %v3928
        %v5513 = vpack.c.b16 %v3933, %v3929
        %v5514 = vpack.c.b16 %v3934, %v3930
        %v5515 = vpack.c.b16 %v3935, %v3931
        %v5516 = vpack.c.b16 %v3940, %v3936
        %v5517 = vpack.c.b16 %v3941, %v3937
        %v5518 = vpack.c.b16 %v3942, %v3938
        %v5519 = vpack.c.b16 %v3943, %v3939
        %v5520 = vpack.c.b16 %v3948, %v3944
        %v5521 = vpack.c.b16 %v3949, %v3945
        %v5522 = vpack.c.b16 %v3950, %v3946
        %v5523 = vpack.c.b16 %v3951, %v3947
        %v5524 = vpack.c.b16 %v3956, %v3952
        %v5525 = vpack.c.b16 %v3957, %v3953
        %v5526 = vpack.c.b16 %v3958, %v3954
        %v5527 = vpack.c.b16 %v3959, %v3955
        %v5528 = vpack.c.b16 %v3964, %v3960
        %v5529 = vpack.c.b16 %v3965, %v3961
        %v5530 = vpack.c.b16 %v3966, %v3962
        %v5531 = vpack.c.b16 %v3967, %v3963
        %v5532 = vpack.c.b16 %v3972, %v3968
        %v5533 = vpack.c.b16 %v3973, %v3969
        %v5534 = vpack.c.b16 %v3974, %v3970
        %v5535 = vpack.c.b16 %v3975, %v3971
        %v5536 = vpack.c.b16 %v3980, %v3976
        %v5537 = vpack.c.b16 %v3981, %v3977
        %v5538 = vpack.c.b16 %v3982, %v3978
        %v5539 = vpack.c.b16 %v3983, %v3979
        %v5540 = vpack.c.b16 %v3988, %v3984
        %v5541 = vpack.c.b16 %v3989, %v3985
        %v5542 = vpack.c.b16 %v3990, %v3986
        %v5543 = vpack.c.b16 %v3991, %v3987
        %v5544 = vpack.c.b16 %v3996, %v3992
        %v5545 = vpack.c.b16 %v3997, %v3993
        %v5546 = vpack.c.b16 %v3998, %v3994
        %v5547 = vpack.c.b16 %v3999, %v3995
        %v5548 = vpack.c.b16 %v4004, %v4000
        %v5549 = vpack.c.b16 %v4005, %v4001
        %v5550 = vpack.c.b16 %v4006, %v4002
        %v5551 = vpack.c.b16 %v4007, %v4003
        %v5552 = vpack.c.b16 %v4012, %v4008
        %v5553 = vpack.c.b16 %v4013, %v4009
        %v5554 = vpack.c.b16 %v4014, %v4010
        %v5555 = vpack.c.b16 %v4015, %v4011
        %v5556 = vpack.c.b16 %v4020, %v4016
        %v5557 = vpack.c.b16 %v4021, %v4017
        %v5558 = vpack.c.b16 %v4022, %v4018
        %v5559 = vpack.c.b16 %v4023, %v4019
        %v5560 = vpack.c.b16 %v4028, %v4024
        %v5561 = vpack.c.b16 %v4029, %v4025
        %v5562 = vpack.c.b16 %v4030, %v4026
        %v5563 = vpack.c.b16 %v4031, %v4027
        %v5564 = vpack.c.b16 %v4036, %v4032
        %v5565 = vpack.c.b16 %v4037, %v4033
        %v5566 = vpack.c.b16 %v4038, %v4034
        %v5567 = vpack.c.b16 %v4039, %v4035
        %v5568 = vpack.c.b16 %v4044, %v4040
        %v5569 = vpack.c.b16 %v4045, %v4041
        %v5570 = vpack.c.b16 %v4046, %v4042
        %v5571 = vpack.c.b16 %v4047, %v4043
        %v5572 = vpack.c.b16 %v4052, %v4048
        %v5573 = vpack.c.b16 %v4053, %v4049
        %v5574 = vpack.c.b16 %v4054, %v4050
        %v5575 = vpack.c.b16 %v4055, %v4051
        %v5576 = vpack.c.b16 %v4060, %v4056
        %v5577 = vpack.c.b16 %v4061, %v4057
        %v5578 = vpack.c.b16 %v4062, %v4058
        %v5579 = vpack.c.b16 %v4063, %v4059
        %v5580 = vpack.c.b16 %v4068, %v4064
        %v5581 = vpack.c.b16 %v4069, %v4065
        %v5582 = vpack.c.b16 %v4070, %v4066
        %v5583 = vpack.c.b16 %v4071, %v4067
        %v5584 = vpack.c.b16 %v4076, %v4072
        %v5585 = vpack.c.b16 %v4077, %v4073
        %v5586 = vpack.c.b16 %v4078, %v4074
        %v5587 = vpack.c.b16 %v4079, %v4075
        %v5588 = vpack.c.b16 %v4084, %v4080
        %v5589 = vpack.c.b16 %v4085, %v4081
        %v5590 = vpack.c.b16 %v4086, %v4082
        %v5591 = vpack.c.b16 %v4087, %v4083
        %v5592 = vpack.c.b16 %v4092, %v4088
        %v5593 = vpack.c.b16 %v4093, %v4089
        %v5594 = vpack.c.b16 %v4094, %v4090
        %v5595 = vpack.c.b16 %v4095, %v4091
        %v5596 = vpack.c.b16 %v4100, %v4096
        %v5597 = vpack.c.b16 %v4101, %v4097
        %v5598 = vpack.c.b16 %v4102, %v4098
        %v5599 = vpack.c.b16 %v4103, %v4099
        %v5600 = vpack.c.b16 %v4108, %v4104
        %v5601 = vpack.c.b16 %v4109, %v4105
        %v5602 = vpack.c.b16 %v4110, %v4106
        %v5603 = vpack.c.b16 %v4111, %v4107
        %v5604 = vpack.c.b16 %v4116, %v4112
        %v5605 = vpack.c.b16 %v4117, %v4113
        %v5606 = vpack.c.b16 %v4118, %v4114
        %v5607 = vpack.c.b16 %v4119, %v4115
        %v5608 = vpack.c.b16 %v4124, %v4120
        %v5609 = vpack.c.b16 %v4125, %v4121
        %v5610 = vpack.c.b16 %v4126, %v4122
        %v5611 = vpack.c.b16 %v4127, %v4123
        %v5612 = vpack.c.b16 %v4132, %v4128
        %v5613 = vpack.c.b16 %v4133, %v4129
        %v5614 = vpack.c.b16 %v4134, %v4130
        %v5615 = vpack.c.b16 %v4135, %v4131
        %v5616 = vpack.c.b16 %v4140, %v4136
        %v5617 = vpack.c.b16 %v4141, %v4137
        %v5618 = vpack.c.b16 %v4142, %v4138
        %v5619 = vpack.c.b16 %v4143, %v4139
        %v5620 = vpack.c.b16 %v4148, %v4144
        %v5621 = vpack.c.b16 %v4149, %v4145
        %v5622 = vpack.c.b16 %v4150, %v4146
        %v5623 = vpack.c.b16 %v4151, %v4147
        %v5624 = vpack.c.b16 %v4156, %v4152
        %v5625 = vpack.c.b16 %v4157, %v4153
        %v5626 = vpack.c.b16 %v4158, %v4154
        %v5627 = vpack.c.b16 %v4159, %v4155
        %v5628 = vpack.c.b16 %v4164, %v4160
        %v5629 = vpack.c.b16 %v4165, %v4161
        %v5630 = vpack.c.b16 %v4166, %v4162
        %v5631 = vpack.c.b16 %v4167, %v4163
        %v5632 = vpack.c.b16 %v4172, %v4168
        %v5633 = vpack.c.b16 %v4173, %v4169
        %v5634 = vpack.c.b16 %v4174, %v4170
        %v5635 = vpack.c.b16 %v4175, %v4171
        %v5636 = vpack.c.b16 %v4180, %v4176
        %v5637 = vpack.c.b16 %v4181, %v4177
        %v5638 = vpack.c.b16 %v4182, %v4178
        %v5639 = vpack.c.b16 %v4183, %v4179
        %v5640 = vpack.c.b16 %v4188, %v4184
        %v5641 = vpack.c.b16 %v4189, %v4185
        %v5642 = vpack.c.b16 %v4190, %v4186
        %v5643 = vpack.c.b16 %v4191, %v4187
        %v5644 = vpack.c.b16 %v4196, %v4192
        %v5645 = vpack.c.b16 %v4197, %v4193
        %v5646 = vpack.c.b16 %v4198, %v4194
        %v5647 = vpack.c.b16 %v4199, %v4195
        %v5648 = vpack.c.b16 %v4204, %v4200
        %v5649 = vpack.c.b16 %v4205, %v4201
        %v5650 = vpack.c.b16 %v4206, %v4202
        %v5651 = vpack.c.b16 %v4207, %v4203
        %v5652 = vpack.c.b16 %v4212, %v4208
        %v5653 = vpack.c.b16 %v4213, %v4209
        %v5654 = vpack.c.b16 %v4214, %v4210
        %v5655 = vpack.c.b16 %v4215, %v4211
        %v5656 = vpack.c.b16 %v4220, %v4216
        %v5657 = vpack.c.b16 %v4221, %v4217
        %v5658 = vpack.c.b16 %v4222, %v4218
        %v5659 = vpack.c.b16 %v4223, %v4219
        %v5660 = vpack.c.b16 %v4228, %v4224
        %v5661 = vpack.c.b16 %v4229, %v4225
        %v5662 = vpack.c.b16 %v4230, %v4226
        %v5663 = vpack.c.b16 %v4231, %v4227
        %v5664 = vpack.c.b16 %v4236, %v4232
        %v5665 = vpack.c.b16 %v4237, %v4233
        %v5666 = vpack.c.b16 %v4238, %v4234
        %v5667 = vpack.c.b16 %v4239, %v4235
        %v5668 = vpack.c.b16 %v4244, %v4240
        %v5669 = vpack.c.b16 %v4245, %v4241
        %v5670 = vpack.c.b16 %v4246, %v4242
        %v5671 = vpack.c.b16 %v4247, %v4243
        %v5672 = vpack.c.b16 %v4252, %v4248
        %v5673 = vpack.c.b16 %v4253, %v4249
        %v5674 = vpack.c.b16 %v4254, %v4250
        %v5675 = vpack.c.b16 %v4255, %v4251
        %v5676 = vpack.c.b16 %v4260, %v4256
        %v5677 = vpack.c.b16 %v4261, %v4257
        %v5678 = vpack.c.b16 %v4262, %v4258
        %v5679 = vpack.c.b16 %v4263, %v4259
        %v5680 = vpack.c.b16 %v4268, %v4264
        %v5681 = vpack.c.b16 %v4269, %v4265
        %v5682 = vpack.c.b16 %v4270, %v4266
        %v5683 = vpack.c.b16 %v4271, %v4267
        %v5684 = vpack.c.b16 %v4276, %v4272
        %v5685 = vpack.c.b16 %v4277, %v4273
        %v5686 = vpack.c.b16 %v4278, %v4274
        %v5687 = vpack.c.b16 %v4279, %v4275
        %v5688 = vpack.c.b16 %v4284, %v4280
        %v5689 = vpack.c.b16 %v4285, %v4281
        %v5690 = vpack.c.b16 %v4286, %v4282
        %v5691 = vpack.c.b16 %v4287, %v4283
        %v5692 = vpack.c.b16 %v4292, %v4288
        %v5693 = vpack.c.b16 %v4293, %v4289
        %v5694 = vpack.c.b16 %v4294, %v4290
        %v5695 = vpack.c.b16 %v4295, %v4291
        %v5696 = vpack.c.b16 %v4300, %v4296
        %v5697 = vpack.c.b16 %v4301, %v4297
        %v5698 = vpack.c.b16 %v4302, %v4298
        %v5699 = vpack.c.b16 %v4303, %v4299
        %v5700 = vpack.c.b16 %v4308, %v4304
        %v5701 = vpack.c.b16 %v4309, %v4305
        %v5702 = vpack.c.b16 %v4310, %v4306
        %v5703 = vpack.c.b16 %v4311, %v4307
        %v5704 = vpack.c.b16 %v4316, %v4312
        %v5705 = vpack.c.b16 %v4317, %v4313
        %v5706 = vpack.c.b16 %v4318, %v4314
        %v5707 = vpack.c.b16 %v4319, %v4315
        %v5708 = vpack.c.b16 %v4324, %v4320
        %v5709 = vpack.c.b16 %v4325, %v4321
        %v5710 = vpack.c.b16 %v4326, %v4322
        %v5711 = vpack.c.b16 %v4327, %v4323
        %v5712 = vpack.c.b16 %v4332, %v4328
        %v5713 = vpack.c.b16 %v4333, %v4329
        %v5714 = vpack.c.b16 %v4334, %v4330
        %v5715 = vpack.c.b16 %v4335, %v4331
        %v5716 = vpack.c.b16 %v4340, %v4336
        %v5717 = vpack.c.b16 %v4341, %v4337
        %v5718 = vpack.c.b16 %v4342, %v4338
        %v5719 = vpack.c.b16 %v4343, %v4339
        %v5720 = vpack.c.b16 %v4348, %v4344
        %v5721 = vpack.c.b16 %v4349, %v4345
        %v5722 = vpack.c.b16 %v4350, %v4346
        %v5723 = vpack.c.b16 %v4351, %v4347
        %v5724 = vpack.c.b16 %v4356, %v4352
        %v5725 = vpack.c.b16 %v4357, %v4353
        %v5726 = vpack.c.b16 %v4358, %v4354
        %v5727 = vpack.c.b16 %v4359, %v4355
        %v5728 = vpack.c.b16 %v4364, %v4360
        %v5729 = vpack.c.b16 %v4365, %v4361
        %v5730 = vpack.c.b16 %v4366, %v4362
        %v5731 = vpack.c.b16 %v4367, %v4363
        %v5732 = vpack.c.b16 %v4372, %v4368
        %v5733 = vpack.c.b16 %v4373, %v4369
        %v5734 = vpack.c.b16 %v4374, %v4370
        %v5735 = vpack.c.b16 %v4375, %v4371
        %v5736 = vpack.c.b16 %v4380, %v4376
        %v5737 = vpack.c.b16 %v4381, %v4377
        %v5738 = vpack.c.b16 %v4382, %v4378
        %v5739 = vpack.c.b16 %v4383, %v4379
        %v5740 = vpack.c.b16 %v4388, %v4384
        %v5741 = vpack.c.b16 %v4389, %v4385
        %v5742 = vpack.c.b16 %v4390, %v4386
        %v5743 = vpack.c.b16 %v4391, %v4387
        %v5744 = vpack.c.b16 %v4396, %v4392
        %v5745 = vpack.c.b16 %v4397, %v4393
        %v5746 = vpack.c.b16 %v4398, %v4394
        %v5747 = vpack.c.b16 %v4399, %v4395
        %v5748 = vpack.c.b16 %v4404, %v4400
        %v5749 = vpack.c.b16 %v4405, %v4401
        %v5750 = vpack.c.b16 %v4406, %v4402
        %v5751 = vpack.c.b16 %v4407, %v4403
        %v5752 = vpack.c.b16 %v4412, %v4408
        %v5753 = vpack.c.b16 %v4413, %v4409
        %v5754 = vpack.c.b16 %v4414, %v4410
        %v5755 = vpack.c.b16 %v4415, %v4411
        %v5756 = vpack.c.b16 %v4420, %v4416
        %v5757 = vpack.c.b16 %v4421, %v4417
        %v5758 = vpack.c.b16 %v4422, %v4418
        %v5759 = vpack.c.b16 %v4423, %v4419
        %v5760 = vpack.c.b16 %v4428, %v4424
        %v5761 = vpack.c.b16 %v4429, %v4425
        %v5762 = vpack.c.b16 %v4430, %v4426
        %v5763 = vpack.c.b16 %v4431, %v4427
        %v5764 = vpack.c.b16 %v4436, %v4432
        %v5765 = vpack.c.b16 %v4437, %v4433
        %v5766 = vpack.c.b16 %v4438, %v4434
        %v5767 = vpack.c.b16 %v4439, %v4435
        %v5768 = vpack.c.b16 %v4444, %v4440
        %v5769 = vpack.c.b16 %v4445, %v4441
        %v5770 = vpack.c.b16 %v4446, %v4442
        %v5771 = vpack.c.b16 %v4447, %v4443
        %v5772 = vpack.c.b16 %v4452, %v4448
        %v5773 = vpack.c.b16 %v4453, %v4449
        %v5774 = vpack.c.b16 %v4454, %v4450
        %v5775 = vpack.c.b16 %v4455, %v4451
        %v5776 = vpack.c.b16 %v4460, %v4456
        %v5777 = vpack.c.b16 %v4461, %v4457
        %v5778 = vpack.c.b16 %v4462, %v4458
        %v5779 = vpack.c.b16 %v4463, %v4459
        %v5780 = vpack.c.b16 %v4468, %v4464
        %v5781 = vpack.c.b16 %v4469, %v4465
        %v5782 = vpack.c.b16 %v4470, %v4466
        %v5783 = vpack.c.b16 %v4471, %v4467
        %v5784 = vpack.c.b16 %v4476, %v4472
        %v5785 = vpack.c.b16 %v4477, %v4473
        %v5786 = vpack.c.b16 %v4478, %v4474
        %v5787 = vpack.c.b16 %v4479, %v4475
        %v5788 = vpack.c.b16 %v4484, %v4480
        %v5789 = vpack.c.b16 %v4485, %v4481
        %v5790 = vpack.c.b16 %v4486, %v4482
        %v5791 = vpack.c.b16 %v4487, %v4483
        %v5792 = vpack.c.b16 %v4492, %v4488
        %v5793 = vpack.c.b16 %v4493, %v4489
        %v5794 = vpack.c.b16 %v4494, %v4490
        %v5795 = vpack.c.b16 %v4495, %v4491
        %v5796 = vpack.c.b16 %v4500, %v4496
        %v5797 = vpack.c.b16 %v4501, %v4497
        %v5798 = vpack.c.b16 %v4502, %v4498
        %v5799 = vpack.c.b16 %v4503, %v4499
        %v5800 = vpack.c.b16 %v4508, %v4504
        %v5801 = vpack.c.b16 %v4509, %v4505
        %v5802 = vpack.c.b16 %v4510, %v4506
        %v5803 = vpack.c.b16 %v4511, %v4507
        %v5804 = vpack.c.b16 %v4516, %v4512
        %v5805 = vpack.c.b16 %v4517, %v4513
        %v5806 = vpack.c.b16 %v4518, %v4514
        %v5807 = vpack.c.b16 %v4519, %v4515
        %v5808 = vpack.c.b16 %v4524, %v4520
        %v5809 = vpack.c.b16 %v4525, %v4521
        %v5810 = vpack.c.b16 %v4526, %v4522
        %v5811 = vpack.c.b16 %v4527, %v4523
        %v5812 = vpack.c.b16 %v4532, %v4528
        %v5813 = vpack.c.b16 %v4533, %v4529
        %v5814 = vpack.c.b16 %v4534, %v4530
        %v5815 = vpack.c.b16 %v4535, %v4531
        %v5816 = vpack.c.b16 %v4540, %v4536
        %v5817 = vpack.c.b16 %v4541, %v4537
        %v5818 = vpack.c.b16 %v4542, %v4538
        %v5819 = vpack.c.b16 %v4543, %v4539
        %v5820 = vpack.c.b16 %v4548, %v4544
        %v5821 = vpack.c.b16 %v4549, %v4545
        %v5822 = vpack.c.b16 %v4550, %v4546
        %v5823 = vpack.c.b16 %v4551, %v4547
        %v5824 = vpack.c.b16 %v4556, %v4552
        %v5825 = vpack.c.b16 %v4557, %v4553
        %v5826 = vpack.c.b16 %v4558, %v4554
        %v5827 = vpack.c.b16 %v4559, %v4555
        %v5828 = vpack.c.b16 %v4564, %v4560
        %v5829 = vpack.c.b16 %v4565, %v4561
        %v5830 = vpack.c.b16 %v4566, %v4562
        %v5831 = vpack.c.b16 %v4567, %v4563
        %v5832 = vpack.c.b16 %v4572, %v4568
        %v5833 = vpack.c.b16 %v4573, %v4569
        %v5834 = vpack.c.b16 %v4574, %v4570
        %v5835 = vpack.c.b16 %v4575, %v4571
        %v5836 = vpack.c.b16 %v4580, %v4576
        %v5837 = vpack.c.b16 %v4581, %v4577
        %v5838 = vpack.c.b16 %v4582, %v4578
        %v5839 = vpack.c.b16 %v4583, %v4579
        %v5840 = vpack.c.b16 %v4588, %v4584
        %v5841 = vpack.c.b16 %v4589, %v4585
        %v5842 = vpack.c.b16 %v4590, %v4586
        %v5843 = vpack.c.b16 %v4591, %v4587
        %v5844 = vpack.c.b16 %v4596, %v4592
        %v5845 = vpack.c.b16 %v4597, %v4593
        %v5846 = vpack.c.b16 %v4598, %v4594
        %v5847 = vpack.c.b16 %v4599, %v4595
        %v5848 = vpack.c.b16 %v4604, %v4600
        %v5849 = vpack.c.b16 %v4605, %v4601
        %v5850 = vpack.c.b16 %v4606, %v4602
        %v5851 = vpack.c.b16 %v4607, %v4603
        %v5852 = vpack.c.b16 %v4612, %v4608
        %v5853 = vpack.c.b16 %v4613, %v4609
        %v5854 = vpack.c.b16 %v4614, %v4610
        %v5855 = vpack.c.b16 %v4615, %v4611
        %v5856 = vpack.c.b16 %v4620, %v4616
        %v5857 = vpack.c.b16 %v4621, %v4617
        %v5858 = vpack.c.b16 %v4622, %v4618
        %v5859 = vpack.c.b16 %v4623, %v4619
        %v5860 = vpack.c.b16 %v4628, %v4624
        %v5861 = vpack.c.b16 %v4629, %v4625
        %v5862 = vpack.c.b16 %v4630, %v4626
        %v5863 = vpack.c.b16 %v4631, %v4627
        %v5864 = vpack.c.b16 %v4636, %v4632
        %v5865 = vpack.c.b16 %v4637, %v4633
        %v5866 = vpack.c.b16 %v4638, %v4634
        %v5867 = vpack.c.b16 %v4639, %v4635
        %v5868 = vpack.c.b16 %v4644, %v4640
        %v5869 = vpack.c.b16 %v4645, %v4641
        %v5870 = vpack.c.b16 %v4646, %v4642
        %v5871 = vpack.c.b16 %v4647, %v4643
        %v5872 = vpack.c.b16 %v4652, %v4648
        %v5873 = vpack.c.b16 %v4653, %v4649
        %v5874 = vpack.c.b16 %v4654, %v4650
        %v5875 = vpack.c.b16 %v4655, %v4651
        %v5876 = vpack.c.b16 %v4660, %v4656
        %v5877 = vpack.c.b16 %v4661, %v4657
        %v5878 = vpack.c.b16 %v4662, %v4658
        %v5879 = vpack.c.b16 %v4663, %v4659
        %v5880 = vpack.c.b16 %v4668, %v4664
        %v5881 = vpack.c.b16 %v4669, %v4665
        %v5882 = vpack.c.b16 %v4670, %v4666
        %v5883 = vpack.c.b16 %v4671, %v4667
        %v5884 = vpack.c.b16 %v4676, %v4672
        %v5885 = vpack.c.b16 %v4677, %v4673
        %v5886 = vpack.c.b16 %v4678, %v4674
        %v5887 = vpack.c.b16 %v4679, %v4675
        %v5888 = vpack.c.b16 %v4684, %v4680
        %v5889 = vpack.c.b16 %v4685, %v4681
        %v5890 = vpack.c.b16 %v4686, %v4682
        %v5891 = vpack.c.b16 %v4687, %v4683
        %v5892 = vpack.c.b16 %v4692, %v4688
        %v5893 = vpack.c.b16 %v4693, %v4689
        %v5894 = vpack.c.b16 %v4694, %v4690
        %v5895 = vpack.c.b16 %v4695, %v4691
        %v5896 = vpack.c.b16 %v4700, %v4696
        %v5897 = vpack.c.b16 %v4701, %v4697
        %v5898 = vpack.c.b16 %v4702, %v4698
        %v5899 = vpack.c.b16 %v4703, %v4699
        %v5900 = vpack.c.b16 %v4708, %v4704
        %v5901 = vpack.c.b16 %v4709, %v4705
        %v5902 = vpack.c.b16 %v4710, %v4706
        %v5903 = vpack.c.b16 %v4711, %v4707
        %v5904 = vpack.c.b16 %v4716, %v4712
        %v5905 = vpack.c.b16 %v4717, %v4713
        %v5906 = vpack.c.b16 %v4718, %v4714
        %v5907 = vpack.c.b16 %v4719, %v4715
        %v5908 = vpack.c.b16 %v4724, %v4720
        %v5909 = vpack.c.b16 %v4725, %v4721
        %v5910 = vpack.c.b16 %v4726, %v4722
        %v5911 = vpack.c.b16 %v4727, %v4723
        %v5912 = vpack.c.b16 %v4732, %v4728
        %v5913 = vpack.c.b16 %v4733, %v4729
        %v5914 = vpack.c.b16 %v4734, %v4730
        %v5915 = vpack.c.b16 %v4735, %v4731
        %v5916 = vpack.c.b16 %v4740, %v4736
        %v5917 = vpack.c.b16 %v4741, %v4737
        %v5918 = vpack.c.b16 %v4742, %v4738
        %v5919 = vpack.c.b16 %v4743, %v4739
        %v5920 = vpack.c.b16 %v4748, %v4744
        %v5921 = vpack.c.b16 %v4749, %v4745
        %v5922 = vpack.c.b16 %v4750, %v4746
        %v5923 = vpack.c.b16 %v4751, %v4747
        %v5924 = vpack.c.b16 %v4756, %v4752
        %v5925 = vpack.c.b16 %v4757, %v4753
        %v5926 = vpack.c.b16 %v4758, %v4754
        %v5927 = vpack.c.b16 %v4759, %v4755
        %v5928 = vpack.c.b16 %v4764, %v4760
        %v5929 = vpack.c.b16 %v4765, %v4761
        %v5930 = vpack.c.b16 %v4766, %v4762
        %v5931 = vpack.c.b16 %v4767, %v4763
        %v5932 = vpack.c.b16 %v4772, %v4768
        %v5933 = vpack.c.b16 %v4773, %v4769
        %v5934 = vpack.c.b16 %v4774, %v4770
        %v5935 = vpack.c.b16 %v4775, %v4771
        %v5936 = vpack.c.b16 %v4780, %v4776
        %v5937 = vpack.c.b16 %v4781, %v4777
        %v5938 = vpack.c.b16 %v4782, %v4778
        %v5939 = vpack.c.b16 %v4783, %v4779
        %v5940 = vpack.c.b16 %v4788, %v4784
        %v5941 = vpack.c.b16 %v4789, %v4785
        %v5942 = vpack.c.b16 %v4790, %v4786
        %v5943 = vpack.c.b16 %v4791, %v4787
        %v5944 = vpack.c.b16 %v4796, %v4792
        %v5945 = vpack.c.b16 %v4797, %v4793
        %v5946 = vpack.c.b16 %v4798, %v4794
        %v5947 = vpack.c.b16 %v4799, %v4795
        %v5948 = vpack.c.b16 %v4804, %v4800
        %v5949 = vpack.c.b16 %v4805, %v4801
        %v5950 = vpack.c.b16 %v4806, %v4802
        %v5951 = vpack.c.b16 %v4807, %v4803
        %v5952 = vpack.c.b16 %v4812, %v4808
        %v5953 = vpack.c.b16 %v4813, %v4809
        %v5954 = vpack.c.b16 %v4814, %v4810
        %v5955 = vpack.c.b16 %v4815, %v4811
        %v5956 = vpack.c.b16 %v4820, %v4816
        %v5957 = vpack.c.b16 %v4821, %v4817
        %v5958 = vpack.c.b16 %v4822, %v4818
        %v5959 = vpack.c.b16 %v4823, %v4819
        %v5960 = vpack.c.b16 %v4828, %v4824
        %v5961 = vpack.c.b16 %v4829, %v4825
        %v5962 = vpack.c.b16 %v4830, %v4826
        %v5963 = vpack.c.b16 %v4831, %v4827
        %v5964 = vpack.c.b16 %v4836, %v4832
        %v5965 = vpack.c.b16 %v4837, %v4833
        %v5966 = vpack.c.b16 %v4838, %v4834
        %v5967 = vpack.c.b16 %v4839, %v4835
        %v5968 = vpack.c.b16 %v4844, %v4840
        %v5969 = vpack.c.b16 %v4845, %v4841
        %v5970 = vpack.c.b16 %v4846, %v4842
        %v5971 = vpack.c.b16 %v4847, %v4843
        %v5972 = vpack.c.b16 %v4852, %v4848
        %v5973 = vpack.c.b16 %v4853, %v4849
        %v5974 = vpack.c.b16 %v4854, %v4850
        %v5975 = vpack.c.b16 %v4855, %v4851
        %v5976 = vpack.c.b16 %v4860, %v4856
        %v5977 = vpack.c.b16 %v4861, %v4857
        %v5978 = vpack.c.b16 %v4862, %v4858
        %v5979 = vpack.c.b16 %v4863, %v4859
        %v5980 = vpack.c.b16 %v4868, %v4864
        %v5981 = vpack.c.b16 %v4869, %v4865
        %v5982 = vpack.c.b16 %v4870, %v4866
        %v5983 = vpack.c.b16 %v4871, %v4867
        %v5984 = vpack.c.b16 %v4876, %v4872
        %v5985 = vpack.c.b16 %v4877, %v4873
        %v5986 = vpack.c.b16 %v4878, %v4874
        %v5987 = vpack.c.b16 %v4879, %v4875
        %v5988 = vpack.c.b16 %v4884, %v4880
        %v5989 = vpack.c.b16 %v4885, %v4881
        %v5990 = vpack.c.b16 %v4886, %v4882
        %v5991 = vpack.c.b16 %v4887, %v4883
        %v5992 = vpack.c.b16 %v4892, %v4888
        %v5993 = vpack.c.b16 %v4893, %v4889
        %v5994 = vpack.c.b16 %v4894, %v4890
        %v5995 = vpack.c.b16 %v4895, %v4891
        %v5996 = vpack.c.b16 %v4900, %v4896
        %v5997 = vpack.c.b16 %v4901, %v4897
        %v5998 = vpack.c.b16 %v4902, %v4898
        %v5999 = vpack.c.b16 %v4903, %v4899
        %v6000 = vpack.c.b16 %v4908, %v4904
        %v6001 = vpack.c.b16 %v4909, %v4905
        %v6002 = vpack.c.b16 %v4910, %v4906
        %v6003 = vpack.c.b16 %v4911, %v4907
        %v6004 = vpack.c.b16 %v4916, %v4912
        %v6005 = vpack.c.b16 %v4917, %v4913
        %v6006 = vpack.c.b16 %v4918, %v4914
        %v6007 = vpack.c.b16 %v4919, %v4915
        %v6008 = vpack.c.b16 %v4924, %v4920
        %v6009 = vpack.c.b16 %v4925, %v4921
        %v6010 = vpack.c.b16 %v4926, %v4922
        %v6011 = vpack.c.b16 %v4927, %v4923
        %v6012 = vpack.c.b16 %v4932, %v4928
        %v6013 = vpack.c.b16 %v4933, %v4929
        %v6014 = vpack.c.b16 %v4934, %v4930
        %v6015 = vpack.c.b16 %v4935, %v4931
        %v6016 = vpack.c.b16 %v4940, %v4936
        %v6017 = vpack.c.b16 %v4941, %v4937
        %v6018 = vpack.c.b16 %v4942, %v4938
        %v6019 = vpack.c.b16 %v4943, %v4939
        %v6020 = vpack.c.b16 %v4948, %v4944
        %v6021 = vpack.c.b16 %v4949, %v4945
        %v6022 = vpack.c.b16 %v4950, %v4946
        %v6023 = vpack.c.b16 %v4951, %v4947
        %v6024 = vpack.c.b16 %v4956, %v4952
        %v6025 = vpack.c.b16 %v4957, %v4953
        %v6026 = vpack.c.b16 %v4958, %v4954
        %v6027 = vpack.c.b16 %v4959, %v4955
        %v6028 = vpack.c.b16 %v4964, %v4960
        %v6029 = vpack.c.b16 %v4965, %v4961
        %v6030 = vpack.c.b16 %v4966, %v4962
        %v6031 = vpack.c.b16 %v4967, %v4963
        %v6032 = vpack.c.b16 %v4972, %v4968
        %v6033 = vpack.c.b16 %v4973, %v4969
        %v6034 = vpack.c.b16 %v4974, %v4970
        %v6035 = vpack.c.b16 %v4975, %v4971
        %v6036 = vpack.c.b16 %v4980, %v4976
        %v6037 = vpack.c.b16 %v4981, %v4977
        %v6038 = vpack.c.b16 %v4982, %v4978
        %v6039 = vpack.c.b16 %v4983, %v4979
        %v6040 = vpack.c.b16 %v4988, %v4984
        %v6041 = vpack.c.b16 %v4989, %v4985
        %v6042 = vpack.c.b16 %v4990, %v4986
        %v6043 = vpack.c.b16 %v4991, %v4987
        %v6044 = vpack.c.b16 %v4996, %v4992
        %v6045 = vpack.c.b16 %v4997, %v4993
        %v6046 = vpack.c.b16 %v4998, %v4994
        %v6047 = vpack.c.b16 %v4999, %v4995
        %v6048 = vpack.c.b16 %v5004, %v5000
        %v6049 = vpack.c.b16 %v5005, %v5001
        %v6050 = vpack.c.b16 %v5006, %v5002
        %v6051 = vpack.c.b16 %v5007, %v5003
        %v6052 = vpack.c.b16 %v5012, %v5008
        %v6053 = vpack.c.b16 %v5013, %v5009
        %v6054 = vpack.c.b16 %v5014, %v5010
        %v6055 = vpack.c.b16 %v5015, %v5011
        %v6056 = vpack.c.b16 %v5020, %v5016
        %v6057 = vpack.c.b16 %v5021, %v5017
        %v6058 = vpack.c.b16 %v5022, %v5018
        %v6059 = vpack.c.b16 %v5023, %v5019
        %v6060 = vpack.c.b16 %v5028, %v5024
        %v6061 = vpack.c.b16 %v5029, %v5025
        %v6062 = vpack.c.b16 %v5030, %v5026
        %v6063 = vpack.c.b16 %v5031, %v5027
        %v6064 = vpack.c.b16 %v5036, %v5032
        %v6065 = vpack.c.b16 %v5037, %v5033
        %v6066 = vpack.c.b16 %v5038, %v5034
        %v6067 = vpack.c.b16 %v5039, %v5035
        %v6068 = vpack.c.b16 %v5044, %v5040
        %v6069 = vpack.c.b16 %v5045, %v5041
        %v6070 = vpack.c.b16 %v5046, %v5042
        %v6071 = vpack.c.b16 %v5047, %v5043
        %v6072 = vpack.c.b16 %v5052, %v5048
        %v6073 = vpack.c.b16 %v5053, %v5049
        %v6074 = vpack.c.b16 %v5054, %v5050
        %v6075 = vpack.c.b16 %v5055, %v5051
        %v6076 = vpack.c.b16 %v5060, %v5056
        %v6077 = vpack.c.b16 %v5061, %v5057
        %v6078 = vpack.c.b16 %v5062, %v5058
        %v6079 = vpack.c.b16 %v5063, %v5059
        %v6080 = vpack.c.b16 %v5068, %v5064
        %v6081 = vpack.c.b16 %v5069, %v5065
        %v6082 = vpack.c.b16 %v5070, %v5066
        %v6083 = vpack.c.b16 %v5071, %v5067
        %v6084 = vpack.c.b16 %v5076, %v5072
        %v6085 = vpack.c.b16 %v5077, %v5073
        %v6086 = vpack.c.b16 %v5078, %v5074
        %v6087 = vpack.c.b16 %v5079, %v5075
        %v6088 = vpack.c.b16 %v5084, %v5080
        %v6089 = vpack.c.b16 %v5085, %v5081
        %v6090 = vpack.c.b16 %v5086, %v5082
        %v6091 = vpack.c.b16 %v5087, %v5083
        %v6092 = vpack.c.b16 %v5092, %v5088
        %v6093 = vpack.c.b16 %v5093, %v5089
        %v6094 = vpack.c.b16 %v5094, %v5090
        %v6095 = vpack.c.b16 %v5095, %v5091
        %v6096 = vpack.c.b16 %v5100, %v5096
        %v6097 = vpack.c.b16 %v5101, %v5097
        %v6098 = vpack.c.b16 %v5102, %v5098
        %v6099 = vpack.c.b16 %v5103, %v5099
        %v6100 = vpack.c.b16 %v5108, %v5104
        %v6101 = vpack.c.b16 %v5109, %v5105
        %v6102 = vpack.c.b16 %v5110, %v5106
        %v6103 = vpack.c.b16 %v5111, %v5107
        %v6104 = vpack.c.b16 %v5116, %v5112
        %v6105 = vpack.c.b16 %v5117, %v5113
        %v6106 = vpack.c.b16 %v5118, %v5114
        %v6107 = vpack.c.b16 %v5119, %v5115
        %v6108 = vpack.c.b16 %v5124, %v5120
        %v6109 = vpack.c.b16 %v5125, %v5121
        %v6110 = vpack.c.b16 %v5126, %v5122
        %v6111 = vpack.c.b16 %v5127, %v5123
        %v6112 = vpack.c.b16 %v5132, %v5128
        %v6113 = vpack.c.b16 %v5133, %v5129
        %v6114 = vpack.c.b16 %v5134, %v5130
        %v6115 = vpack.c.b16 %v5135, %v5131
        %v6116 = vpack.c.b16 %v5140, %v5136
        %v6117 = vpack.c.b16 %v5141, %v5137
        %v6118 = vpack.c.b16 %v5142, %v5138
        %v6119 = vpack.c.b16 %v5143, %v5139
        %v6120 = vpack.c.b16 %v5148, %v5144
        %v6121 = vpack.c.b16 %v5149, %v5145
        %v6122 = vpack.c.b16 %v5150, %v5146
        %v6123 = vpack.c.b16 %v5151, %v5147
        %v6124 = vpack.c.b16 %v5156, %v5152
        %v6125 = vpack.c.b16 %v5157, %v5153
        %v6126 = vpack.c.b16 %v5158, %v5154
        %v6127 = vpack.c.b16 %v5159, %v5155
        %v6128 = vpack.c.b16 %v5164, %v5160
        %v6129 = vpack.c.b16 %v5165, %v5161
        %v6130 = vpack.c.b16 %v5166, %v5162
        %v6131 = vpack.c.b16 %v5167, %v5163
        %v6132 = vpack.c.b16 %v5172, %v5168
        %v6133 = vpack.c.b16 %v5173, %v5169
        %v6134 = vpack.c.b16 %v5174, %v5170
        %v6135 = vpack.c.b16 %v5175, %v5171
        %v6136 = vpack.c.b16 %v5180, %v5176
        %v6137 = vpack.c.b16 %v5181, %v5177
        %v6138 = vpack.c.b16 %v5182, %v5178
        %v6139 = vpack.c.b16 %v5183, %v5179
        %v6140 = vpack.c.b16 %v5188, %v5184
        %v6141 = vpack.c.b16 %v5189, %v5185
        %v6142 = vpack.c.b16 %v5190, %v5186
        %v6143 = vpack.c.b16 %v5191, %v5187
        %v6144 = vpack.c.b16 %v5196, %v5192
        %v6145 = vpack.c.b16 %v5197, %v5193
        %v6146 = vpack.c.b16 %v5198, %v5194
        %v6147 = vpack.c.b16 %v5199, %v5195
        %v6148 = vpack.c.b16 %v5204, %v5200
        %v6149 = vpack.c.b16 %v5205, %v5201
        %v6150 = vpack.c.b16 %v5206, %v5202
        %v6151 = vpack.c.b16 %v5207, %v5203
        %v6152 = vpack.c.b16 %v5212, %v5208
        %v6153 = vpack.c.b16 %v5213, %v5209
        %v6154 = vpack.c.b16 %v5214, %v5210
        %v6155 = vpack.c.b16 %v5215, %v5211
        %v6156 = vpack.c.b16 %v5220, %v5216
        %v6157 = vpack.c.b16 %v5221, %v5217
        %v6158 = vpack.c.b16 %v5222, %v5218
        %v6159 = vpack.c.b16 %v5223, %v5219
        %v6160 = vpack.c.b16 %v5228, %v5224
        %v6161 = vpack.c.b16 %v5229, %v5225
        %v6162 = vpack.c.b16 %v5230, %v5226
        %v6163 = vpack.c.b16 %v5231, %v5227
        %v6164 = vpack.c.b16 %v5236, %v5232
        %v6165 = vpack.c.b16 %v5237, %v5233
        %v6166 = vpack.c.b16 %v5238, %v5234
        %v6167 = vpack.c.b16 %v5239, %v5235
        %7096 = vmatprep.subr.bf16.mxu0 %v5241
        %7097 = vmatpush1.bf16.msra.mxu0 %v5240
        %7098 = vmatprep.subr.bf16.mxu0 %v5245
        %7099 = vmatpush1.bf16.msra.mxu0 %v5244
        %7100 = vmatprep.subr.bf16.mxu0 %v5249
        %7101 = vmatpush1.bf16.msra.mxu0 %v5248
        %7102 = vmatprep.subr.bf16.mxu0 %v5253
        %7103 = vmatpush1.bf16.msra.mxu0 %v5252
        %7104 = vmatprep.subr.bf16.mxu0 %v5257
        %7105 = vmatpush1.bf16.msra.mxu0 %v5256
        %7106 = vmatprep.subr.bf16.mxu0 %v5261
        %7107 = vmatpush1.bf16.msra.mxu0 %v5260
        %7108 = vmatprep.subr.bf16.mxu0 %v5265
        %7109 = vmatpush1.bf16.msra.mxu0 %v5264
        %7110 = vmatprep.subr.bf16.mxu0 %v5269
        %7111 = vmatpush1.bf16.msra.mxu0 %v5268
        %7112 = vmatprep.subr.bf16.mxu0 %v5273
        %7113 = vmatpush1.bf16.msra.mxu0 %v5272
        %7114 = vmatprep.subr.bf16.mxu0 %v5277
        %7115 = vmatpush1.bf16.msra.mxu0 %v5276
        %7116 = vmatprep.subr.bf16.mxu0 %v5281
        %7117 = vmatpush1.bf16.msra.mxu0 %v5280
        %7118 = vmatprep.subr.bf16.mxu0 %v5285
        %7119 = vmatpush1.bf16.msra.mxu0 %v5284
        %7120 = vmatprep.subr.bf16.mxu0 %v5289
        %7121 = vmatpush1.bf16.msra.mxu0 %v5288
        %7122 = vmatprep.subr.bf16.mxu0 %v5293
        %7123 = vmatpush1.bf16.msra.mxu0 %v5292
        %7124 = vmatprep.subr.bf16.mxu0 %v5297
        %7125 = vmatpush1.bf16.msra.mxu0 %v5296
        %7126 = vmatprep.subr.bf16.mxu0 %v5301
        %7127 = vmatpush1.bf16.msra.mxu0 %v5300
        %7128 = vmatprep.mubr.bf16.mxu0 %v1478
        %7129 = vmatmul.mubr.bf16.gmra.mrb[0].mxu0 %v1477
        %v7130 = vpop.f32.mrb[0].mxu0
        %v7131 = vadd.f32 %v2439, %v7130
        %v7132 = vpop.f32.mrb[0].mxu0
        %v7133 = vadd.f32 %v2443, %v7132
        %v7134 = vpop.f32.mrb[0].mxu0
        %v7135 = vpop.f32.mrb[0].mxu0
        %7136 = vdwg.mxu0
        %7137 = vmatprep.subr.bf16.mxu0 %v5305
        %7138 = vmatpush1.bf16.msra.mxu0 %v5304
        %7139 = vmatprep.subr.bf16.mxu0 %v5309
        %7140 = vmatpush1.bf16.msra.mxu0 %v5308
        %7141 = vmatprep.subr.bf16.mxu0 %v5313
        %7142 = vmatpush1.bf16.msra.mxu0 %v5312
        %7143 = vmatprep.subr.bf16.mxu0 %v5317
        %7144 = vmatpush1.bf16.msra.mxu0 %v5316
        %7145 = vmatprep.subr.bf16.mxu0 %v5321
        %7146 = vmatpush1.bf16.msra.mxu0 %v5320
        %7147 = vmatprep.subr.bf16.mxu0 %v5325
        %7148 = vmatpush1.bf16.msra.mxu0 %v5324
        %7149 = vmatprep.subr.bf16.mxu0 %v5329
        %7150 = vmatpush1.bf16.msra.mxu0 %v5328
        %7151 = vmatprep.subr.bf16.mxu0 %v5333
        %7152 = vmatpush1.bf16.msra.mxu0 %v5332
        %7153 = vmatprep.subr.bf16.mxu0 %v5337
        %7154 = vmatpush1.bf16.msra.mxu0 %v5336
        %7155 = vmatprep.subr.bf16.mxu0 %v5341
        %7156 = vmatpush1.bf16.msra.mxu0 %v5340
        %7157 = vmatprep.subr.bf16.mxu0 %v5345
        %7158 = vmatpush1.bf16.msra.mxu0 %v5344
        %7159 = vmatprep.subr.bf16.mxu0 %v5349
        %7160 = vmatpush1.bf16.msra.mxu0 %v5348
        %7161 = vmatprep.subr.bf16.mxu0 %v5353
        %7162 = vmatpush1.bf16.msra.mxu0 %v5352
        %7163 = vmatprep.subr.bf16.mxu0 %v5357
        %7164 = vmatpush1.bf16.msra.mxu0 %v5356
        %7165 = vmatprep.subr.bf16.mxu0 %v5361
        %7166 = vmatpush1.bf16.msra.mxu0 %v5360
        %7167 = vmatprep.subr.bf16.mxu0 %v5365
        %7168 = vmatpush1.bf16.msra.mxu0 %v5364
        %7169 = vmatprep.mubr.bf16.mxu0 %v1480
        %7170 = vmatmul.mubr.bf16.gmra.mrb[0].mxu0 %v1479
        %v7171 = vpop.f32.mrb[0].mxu0
        %v7172 = vadd.f32 %v7131, %v7171
        %v7173 = vpop.f32.mrb[0].mxu0
        %v7174 = vadd.f32 %v7133, %v7173
        %v7175 = vpop.f32.mrb[0].mxu0
        %v7176 = vpop.f32.mrb[0].mxu0
        %7177 = vdwg.mxu0
        %7178 = vmatprep.subr.bf16.mxu0 %v5369
        %7179 = vmatpush1.bf16.msra.mxu0 %v5368
        %7180 = vmatprep.subr.bf16.mxu0 %v5373
        %7181 = vmatpush1.bf16.msra.mxu0 %v5372
        %7182 = vmatprep.subr.bf16.mxu0 %v5377
        %7183 = vmatpush1.bf16.msra.mxu0 %v5376
        %7184 = vmatprep.subr.bf16.mxu0 %v5381
        %7185 = vmatpush1.bf16.msra.mxu0 %v5380
        %7186 = vmatprep.subr.bf16.mxu0 %v5385
        %7187 = vmatpush1.bf16.msra.mxu0 %v5384
        %7188 = vmatprep.subr.bf16.mxu0 %v5389
        %7189 = vmatpush1.bf16.msra.mxu0 %v5388
        %7190 = vmatprep.subr.bf16.mxu0 %v5393
        %7191 = vmatpush1.bf16.msra.mxu0 %v5392
        %7192 = vmatprep.subr.bf16.mxu0 %v5397
        %7193 = vmatpush1.bf16.msra.mxu0 %v5396
        %7194 = vmatprep.subr.bf16.mxu0 %v5401
        %7195 = vmatpush1.bf16.msra.mxu0 %v5400
        %7196 = vmatprep.subr.bf16.mxu0 %v5405
        %7197 = vmatpush1.bf16.msra.mxu0 %v5404
        %7198 = vmatprep.subr.bf16.mxu0 %v5409
        %7199 = vmatpush1.bf16.msra.mxu0 %v5408
        %7200 = vmatprep.subr.bf16.mxu0 %v5413
        %7201 = vmatpush1.bf16.msra.mxu0 %v5412
        %7202 = vmatprep.subr.bf16.mxu0 %v5417
        %7203 = vmatpush1.bf16.msra.mxu0 %v5416
        %7204 = vmatprep.subr.bf16.mxu0 %v5421
        %7205 = vmatpush1.bf16.msra.mxu0 %v5420
        %7206 = vmatprep.subr.bf16.mxu0 %v5425
        %7207 = vmatpush1.bf16.msra.mxu0 %v5424
        %7208 = vmatprep.subr.bf16.mxu0 %v5429
        %7209 = vmatpush1.bf16.msra.mxu0 %v5428
        %7210 = vmatprep.mubr.bf16.mxu0 %v1482
        %7211 = vmatmul.mubr.bf16.gmra.mrb[0].mxu0 %v1481
        %v7212 = vpop.f32.mrb[0].mxu0
        %v7213 = vadd.f32 %v7172, %v7212
        %v7214 = vpop.f32.mrb[0].mxu0
        %v7215 = vadd.f32 %v7174, %v7214
        %v7216 = vpop.f32.mrb[0].mxu0
        %v7217 = vpop.f32.mrb[0].mxu0
        %7218 = vdwg.mxu0
        %7219 = vmatprep.subr.bf16.mxu0 %v5433
        %7220 = vmatpush1.bf16.msra.mxu0 %v5432
        %7221 = vmatprep.subr.bf16.mxu0 %v5437
        %7222 = vmatpush1.bf16.msra.mxu0 %v5436
        %7223 = vmatprep.subr.bf16.mxu0 %v5441
        %7224 = vmatpush1.bf16.msra.mxu0 %v5440
        %7225 = vmatprep.subr.bf16.mxu0 %v5445
        %7226 = vmatpush1.bf16.msra.mxu0 %v5444
        %7227 = vmatprep.subr.bf16.mxu0 %v5449
        %7228 = vmatpush1.bf16.msra.mxu0 %v5448
        %7229 = vmatprep.subr.bf16.mxu0 %v5453
        %7230 = vmatpush1.bf16.msra.mxu0 %v5452
        %7231 = vmatprep.subr.bf16.mxu0 %v5457
        %7232 = vmatpush1.bf16.msra.mxu0 %v5456
        %7233 = vmatprep.subr.bf16.mxu0 %v5461
        %7234 = vmatpush1.bf16.msra.mxu0 %v5460
        %7235 = vmatprep.subr.bf16.mxu0 %v5465
        %7236 = vmatpush1.bf16.msra.mxu0 %v5464
        %7237 = vmatprep.subr.bf16.mxu0 %v5469
        %7238 = vmatpush1.bf16.msra.mxu0 %v5468
        %7239 = vmatprep.subr.bf16.mxu0 %v5473
        %7240 = vmatpush1.bf16.msra.mxu0 %v5472
        %7241 = vmatprep.subr.bf16.mxu0 %v5477
        %7242 = vmatpush1.bf16.msra.mxu0 %v5476
        %7243 = vmatprep.subr.bf16.mxu0 %v5481
        %7244 = vmatpush1.bf16.msra.mxu0 %v5480
        %7245 = vmatprep.subr.bf16.mxu0 %v5485
        %7246 = vmatpush1.bf16.msra.mxu0 %v5484
        %7247 = vmatprep.subr.bf16.mxu0 %v5489
        %7248 = vmatpush1.bf16.msra.mxu0 %v5488
        %7249 = vmatprep.subr.bf16.mxu0 %v5493
        %7250 = vmatpush1.bf16.msra.mxu0 %v5492
        %7251 = vmatprep.mubr.bf16.mxu0 %v1484
        %7252 = vmatmul.mubr.bf16.gmra.mrb[0].mxu0 %v1483
        %v7253 = vpop.f32.mrb[0].mxu0
        %v7254 = vadd.f32 %v7213, %v7253
        %v7255 = vpop.f32.mrb[0].mxu0
        %v7256 = vadd.f32 %v7215, %v7255
        %v7257 = vpop.f32.mrb[0].mxu0
        %v7258 = vpop.f32.mrb[0].mxu0
        %7259 = vdwg.mxu0
        %7260 = vmatprep.subr.bf16.mxu0 %v5497
        %7261 = vmatpush1.bf16.msra.mxu0 %v5496
        %7262 = vmatprep.subr.bf16.mxu0 %v5501
        %7263 = vmatpush1.bf16.msra.mxu0 %v5500
        %7264 = vmatprep.subr.bf16.mxu0 %v5505
        %7265 = vmatpush1.bf16.msra.mxu0 %v5504
        %7266 = vmatprep.subr.bf16.mxu0 %v5509
        %7267 = vmatpush1.bf16.msra.mxu0 %v5508
        %7268 = vmatprep.subr.bf16.mxu0 %v5513
        %7269 = vmatpush1.bf16.msra.mxu0 %v5512
        %7270 = vmatprep.subr.bf16.mxu0 %v5517
        %7271 = vmatpush1.bf16.msra.mxu0 %v5516
        %7272 = vmatprep.subr.bf16.mxu0 %v5521
        %7273 = vmatpush1.bf16.msra.mxu0 %v5520
        %7274 = vmatprep.subr.bf16.mxu0 %v5525
        %7275 = vmatpush1.bf16.msra.mxu0 %v5524
        %7276 = vmatprep.subr.bf16.mxu0 %v5529
        %7277 = vmatpush1.bf16.msra.mxu0 %v5528
        %7278 = vmatprep.subr.bf16.mxu0 %v5533
        %7279 = vmatpush1.bf16.msra.mxu0 %v5532
        %7280 = vmatprep.subr.bf16.mxu0 %v5537
        %7281 = vmatpush1.bf16.msra.mxu0 %v5536
        %7282 = vmatprep.subr.bf16.mxu0 %v5541
        %7283 = vmatpush1.bf16.msra.mxu0 %v5540
        %7284 = vmatprep.subr.bf16.mxu0 %v5545
        %7285 = vmatpush1.bf16.msra.mxu0 %v5544
        %7286 = vmatprep.subr.bf16.mxu0 %v5549
        %7287 = vmatpush1.bf16.msra.mxu0 %v5548
        %7288 = vmatprep.subr.bf16.mxu0 %v5553
        %7289 = vmatpush1.bf16.msra.mxu0 %v5552
        %7290 = vmatprep.subr.bf16.mxu0 %v5557
        %7291 = vmatpush1.bf16.msra.mxu0 %v5556
        %7292 = vmatprep.mubr.bf16.mxu0 %v1486
        %7293 = vmatmul.mubr.bf16.gmra.mrb[0].mxu0 %v1485
        %v7294 = vpop.f32.mrb[0].mxu0
        %v7295 = vadd.f32 %v7254, %v7294
        %v7296 = vpop.f32.mrb[0].mxu0
        %v7297 = vadd.f32 %v7256, %v7296
        %v7298 = vpop.f32.mrb[0].mxu0
        %v7299 = vpop.f32.mrb[0].mxu0
        %7300 = vdwg.mxu0
        %7301 = vmatprep.subr.bf16.mxu0 %v5561
        %7302 = vmatpush1.bf16.msra.mxu0 %v5560
        %7303 = vmatprep.subr.bf16.mxu0 %v5565
        %7304 = vmatpush1.bf16.msra.mxu0 %v5564
        %7305 = vmatprep.subr.bf16.mxu0 %v5569
        %7306 = vmatpush1.bf16.msra.mxu0 %v5568
        %7307 = vmatprep.subr.bf16.mxu0 %v5573
        %7308 = vmatpush1.bf16.msra.mxu0 %v5572
        %7309 = vmatprep.subr.bf16.mxu0 %v5577
        %7310 = vmatpush1.bf16.msra.mxu0 %v5576
        %7311 = vmatprep.subr.bf16.mxu0 %v5581
        %7312 = vmatpush1.bf16.msra.mxu0 %v5580
        %7313 = vmatprep.subr.bf16.mxu0 %v5585
        %7314 = vmatpush1.bf16.msra.mxu0 %v5584
        %7315 = vmatprep.subr.bf16.mxu0 %v5589
        %7316 = vmatpush1.bf16.msra.mxu0 %v5588
        %7317 = vmatprep.subr.bf16.mxu0 %v5593
        %7318 = vmatpush1.bf16.msra.mxu0 %v5592
        %7319 = vmatprep.subr.bf16.mxu0 %v5597
        %7320 = vmatpush1.bf16.msra.mxu0 %v5596
        %7321 = vmatprep.subr.bf16.mxu0 %v5601
        %7322 = vmatpush1.bf16.msra.mxu0 %v5600
        %7323 = vmatprep.subr.bf16.mxu0 %v5605
        %7324 = vmatpush1.bf16.msra.mxu0 %v5604
        %7325 = vmatprep.subr.bf16.mxu0 %v5609
        %7326 = vmatpush1.bf16.msra.mxu0 %v5608
        %7327 = vmatprep.subr.bf16.mxu0 %v5613
        %7328 = vmatpush1.bf16.msra.mxu0 %v5612
        %7329 = vmatprep.subr.bf16.mxu0 %v5617
        %7330 = vmatpush1.bf16.msra.mxu0 %v5616
        %7331 = vmatprep.subr.bf16.mxu0 %v5621
        %7332 = vmatpush1.bf16.msra.mxu0 %v5620
        %7333 = vmatprep.mubr.bf16.mxu0 %v1488
        %7334 = vmatmul.mubr.bf16.gmra.mrb[0].mxu0 %v1487
        %v7335 = vpop.f32.mrb[0].mxu0
        %v7336 = vadd.f32 %v7295, %v7335
        %v7337 = vpop.f32.mrb[0].mxu0
        %v7338 = vadd.f32 %v7297, %v7337
        %v7339 = vpop.f32.mrb[0].mxu0
        %v7340 = vpop.f32.mrb[0].mxu0
        %7341 = vdwg.mxu0
        %7342 = vmatprep.subr.bf16.mxu0 %v5625
        %7343 = vmatpush1.bf16.msra.mxu0 %v5624
        %7344 = vmatprep.subr.bf16.mxu0 %v5629
        %7345 = vmatpush1.bf16.msra.mxu0 %v5628
        %7346 = vmatprep.subr.bf16.mxu0 %v5633
        %7347 = vmatpush1.bf16.msra.mxu0 %v5632
        %7348 = vmatprep.subr.bf16.mxu0 %v5637
        %7349 = vmatpush1.bf16.msra.mxu0 %v5636
        %7350 = vmatprep.subr.bf16.mxu0 %v5641
        %7351 = vmatpush1.bf16.msra.mxu0 %v5640
        %7352 = vmatprep.subr.bf16.mxu0 %v5645
        %7353 = vmatpush1.bf16.msra.mxu0 %v5644
        %7354 = vmatprep.subr.bf16.mxu0 %v5649
        %7355 = vmatpush1.bf16.msra.mxu0 %v5648
        %7356 = vmatprep.subr.bf16.mxu0 %v5653
        %7357 = vmatpush1.bf16.msra.mxu0 %v5652
        %7358 = vmatprep.subr.bf16.mxu0 %v5657
        %7359 = vmatpush1.bf16.msra.mxu0 %v5656
        %7360 = vmatprep.subr.bf16.mxu0 %v5661
        %7361 = vmatpush1.bf16.msra.mxu0 %v5660
        %7362 = vmatprep.subr.bf16.mxu0 %v5665
        %7363 = vmatpush1.bf16.msra.mxu0 %v5664
        %7364 = vmatprep.subr.bf16.mxu0 %v5669
        %7365 = vmatpush1.bf16.msra.mxu0 %v5668
        %7366 = vmatprep.subr.bf16.mxu0 %v5673
        %7367 = vmatpush1.bf16.msra.mxu0 %v5672
        %7368 = vmatprep.subr.bf16.mxu0 %v5677
        %7369 = vmatpush1.bf16.msra.mxu0 %v5676
        %7370 = vmatprep.subr.bf16.mxu0 %v5681
        %7371 = vmatpush1.bf16.msra.mxu0 %v5680
        %7372 = vmatprep.subr.bf16.mxu0 %v5685
        %7373 = vmatpush1.bf16.msra.mxu0 %v5684
        %7374 = vmatprep.mubr.bf16.mxu0 %v1490
        %7375 = vmatmul.mubr.bf16.gmra.mrb[0].mxu0 %v1489
        %v7376 = vpop.f32.mrb[0].mxu0
        %v7377 = vadd.f32 %v7336, %v7376
        %v7378 = vpop.f32.mrb[0].mxu0
        %v7379 = vadd.f32 %v7338, %v7378
        %v7380 = vpop.f32.mrb[0].mxu0
        %v7381 = vpop.f32.mrb[0].mxu0
        %7382 = vdwg.mxu0
        %7383 = vmatprep.subr.bf16.mxu0 %v5689
        %7384 = vmatpush1.bf16.msra.mxu0 %v5688
        %7385 = vmatprep.subr.bf16.mxu0 %v5693
        %7386 = vmatpush1.bf16.msra.mxu0 %v5692
        %7387 = vmatprep.subr.bf16.mxu0 %v5697
        %7388 = vmatpush1.bf16.msra.mxu0 %v5696
        %7389 = vmatprep.subr.bf16.mxu0 %v5701
        %7390 = vmatpush1.bf16.msra.mxu0 %v5700
        %7391 = vmatprep.subr.bf16.mxu0 %v5705
        %7392 = vmatpush1.bf16.msra.mxu0 %v5704
        %7393 = vmatprep.subr.bf16.mxu0 %v5709
        %7394 = vmatpush1.bf16.msra.mxu0 %v5708
        %7395 = vmatprep.subr.bf16.mxu0 %v5713
        %7396 = vmatpush1.bf16.msra.mxu0 %v5712
        %7397 = vmatprep.subr.bf16.mxu0 %v5717
        %7398 = vmatpush1.bf16.msra.mxu0 %v5716
        %7399 = vmatprep.subr.bf16.mxu0 %v5721
        %7400 = vmatpush1.bf16.msra.mxu0 %v5720
        %7401 = vmatprep.subr.bf16.mxu0 %v5725
        %7402 = vmatpush1.bf16.msra.mxu0 %v5724
        %7403 = vmatprep.subr.bf16.mxu0 %v5729
        %7404 = vmatpush1.bf16.msra.mxu0 %v5728
        %7405 = vmatprep.subr.bf16.mxu0 %v5733
        %7406 = vmatpush1.bf16.msra.mxu0 %v5732
        %7407 = vmatprep.subr.bf16.mxu0 %v5737
        %7408 = vmatpush1.bf16.msra.mxu0 %v5736
        %7409 = vmatprep.subr.bf16.mxu0 %v5741
        %7410 = vmatpush1.bf16.msra.mxu0 %v5740
        %7411 = vmatprep.subr.bf16.mxu0 %v5745
        %7412 = vmatpush1.bf16.msra.mxu0 %v5744
        %7413 = vmatprep.subr.bf16.mxu0 %v5749
        %7414 = vmatpush1.bf16.msra.mxu0 %v5748
        %7415 = vmatprep.mubr.bf16.mxu0 %v1492
        %7416 = vmatmul.mubr.bf16.gmra.mrb[0].mxu0 %v1491
        %v7417 = vpop.f32.mrb[0].mxu0
        %v7418 = vadd.f32 %v7377, %v7417
        %v7419 = vpop.f32.mrb[0].mxu0
        %v7420 = vadd.f32 %v7379, %v7419
        %v7421 = vpop.f32.mrb[0].mxu0
        %v7422 = vpop.f32.mrb[0].mxu0
        %7423 = vdwg.mxu0
        %7424 = vmatprep.subr.bf16.mxu0 %v5753
        %7425 = vmatpush1.bf16.msra.mxu0 %v5752
        %7426 = vmatprep.subr.bf16.mxu0 %v5757
        %7427 = vmatpush1.bf16.msra.mxu0 %v5756
        %7428 = vmatprep.subr.bf16.mxu0 %v5761
        %7429 = vmatpush1.bf16.msra.mxu0 %v5760
        %7430 = vmatprep.subr.bf16.mxu0 %v5765
        %7431 = vmatpush1.bf16.msra.mxu0 %v5764
        %7432 = vmatprep.subr.bf16.mxu0 %v5769
        %7433 = vmatpush1.bf16.msra.mxu0 %v5768
        %7434 = vmatprep.subr.bf16.mxu0 %v5773
        %7435 = vmatpush1.bf16.msra.mxu0 %v5772
        %7436 = vmatprep.subr.bf16.mxu0 %v5777
        %7437 = vmatpush1.bf16.msra.mxu0 %v5776
        %7438 = vmatprep.subr.bf16.mxu0 %v5781
        %7439 = vmatpush1.bf16.msra.mxu0 %v5780
        %7440 = vmatprep.subr.bf16.mxu0 %v5785
        %7441 = vmatpush1.bf16.msra.mxu0 %v5784
        %7442 = vmatprep.subr.bf16.mxu0 %v5789
        %7443 = vmatpush1.bf16.msra.mxu0 %v5788
        %7444 = vmatprep.subr.bf16.mxu0 %v5793
        %7445 = vmatpush1.bf16.msra.mxu0 %v5792
        %7446 = vmatprep.subr.bf16.mxu0 %v5797
        %7447 = vmatpush1.bf16.msra.mxu0 %v5796
        %7448 = vmatprep.subr.bf16.mxu0 %v5801
        %7449 = vmatpush1.bf16.msra.mxu0 %v5800
        %7450 = vmatprep.subr.bf16.mxu0 %v5805
        %7451 = vmatpush1.bf16.msra.mxu0 %v5804
        %7452 = vmatprep.subr.bf16.mxu0 %v5809
        %7453 = vmatpush1.bf16.msra.mxu0 %v5808
        %7454 = vmatprep.subr.bf16.mxu0 %v5813
        %7455 = vmatpush1.bf16.msra.mxu0 %v5812
        %7456 = vmatprep.mubr.bf16.mxu0 %v1494
        %7457 = vmatmul.mubr.bf16.gmra.mrb[0].mxu0 %v1493
        %v7458 = vpop.f32.mrb[0].mxu0
        %v7459 = vadd.f32 %v7418, %v7458
        %v7460 = vpop.f32.mrb[0].mxu0
        %v7461 = vadd.f32 %v7420, %v7460
        %v7462 = vpop.f32.mrb[0].mxu0
        %v7463 = vpop.f32.mrb[0].mxu0
        %7464 = vdwg.mxu0
        %7465 = vmatprep.subr.bf16.mxu0 %v5817
        %7466 = vmatpush1.bf16.msra.mxu0 %v5816
        %7467 = vmatprep.subr.bf16.mxu0 %v5821
        %7468 = vmatpush1.bf16.msra.mxu0 %v5820
        %7469 = vmatprep.subr.bf16.mxu0 %v5825
        %7470 = vmatpush1.bf16.msra.mxu0 %v5824
        %7471 = vmatprep.subr.bf16.mxu0 %v5829
        %7472 = vmatpush1.bf16.msra.mxu0 %v5828
        %7473 = vmatprep.subr.bf16.mxu0 %v5833
        %7474 = vmatpush1.bf16.msra.mxu0 %v5832
        %7475 = vmatprep.subr.bf16.mxu0 %v5837
        %7476 = vmatpush1.bf16.msra.mxu0 %v5836
        %7477 = vmatprep.subr.bf16.mxu0 %v5841
        %7478 = vmatpush1.bf16.msra.mxu0 %v5840
        %7479 = vmatprep.subr.bf16.mxu0 %v5845
        %7480 = vmatpush1.bf16.msra.mxu0 %v5844
        %7481 = vmatprep.subr.bf16.mxu0 %v5849
        %7482 = vmatpush1.bf16.msra.mxu0 %v5848
        %7483 = vmatprep.subr.bf16.mxu0 %v5853
        %7484 = vmatpush1.bf16.msra.mxu0 %v5852
        %7485 = vmatprep.subr.bf16.mxu0 %v5857
        %7486 = vmatpush1.bf16.msra.mxu0 %v5856
        %7487 = vmatprep.subr.bf16.mxu0 %v5861
        %7488 = vmatpush1.bf16.msra.mxu0 %v5860
        %7489 = vmatprep.subr.bf16.mxu0 %v5865
        %7490 = vmatpush1.bf16.msra.mxu0 %v5864
        %7491 = vmatprep.subr.bf16.mxu0 %v5869
        %7492 = vmatpush1.bf16.msra.mxu0 %v5868
        %7493 = vmatprep.subr.bf16.mxu0 %v5873
        %7494 = vmatpush1.bf16.msra.mxu0 %v5872
        %7495 = vmatprep.subr.bf16.mxu0 %v5877
        %7496 = vmatpush1.bf16.msra.mxu0 %v5876
        %7497 = vmatprep.mubr.bf16.mxu0 %v1496
        %7498 = vmatmul.mubr.bf16.gmra.mrb[0].mxu0 %v1495
        %v7499 = vpop.f32.mrb[0].mxu0
        %v7500 = vadd.f32 %v7459, %v7499
        %v7501 = vpop.f32.mrb[0].mxu0
        %v7502 = vadd.f32 %v7461, %v7501
        %v7503 = vpop.f32.mrb[0].mxu0
        %v7504 = vpop.f32.mrb[0].mxu0
        %7505 = vdwg.mxu0
        %7506 = vmatprep.subr.bf16.mxu0 %v5881
        %7507 = vmatpush1.bf16.msra.mxu0 %v5880
        %7508 = vmatprep.subr.bf16.mxu0 %v5885
        %7509 = vmatpush1.bf16.msra.mxu0 %v5884
        %7510 = vmatprep.subr.bf16.mxu0 %v5889
        %7511 = vmatpush1.bf16.msra.mxu0 %v5888
        %7512 = vmatprep.subr.bf16.mxu0 %v5893
        %7513 = vmatpush1.bf16.msra.mxu0 %v5892
        %7514 = vmatprep.subr.bf16.mxu0 %v5897
        %7515 = vmatpush1.bf16.msra.mxu0 %v5896
        %7516 = vmatprep.subr.bf16.mxu0 %v5901
        %7517 = vmatpush1.bf16.msra.mxu0 %v5900
        %7518 = vmatprep.subr.bf16.mxu0 %v5905
        %7519 = vmatpush1.bf16.msra.mxu0 %v5904
        %7520 = vmatprep.subr.bf16.mxu0 %v5909
        %7521 = vmatpush1.bf16.msra.mxu0 %v5908
        %7522 = vmatprep.subr.bf16.mxu0 %v5913
        %7523 = vmatpush1.bf16.msra.mxu0 %v5912
        %7524 = vmatprep.subr.bf16.mxu0 %v5917
        %7525 = vmatpush1.bf16.msra.mxu0 %v5916
        %7526 = vmatprep.subr.bf16.mxu0 %v5921
        %7527 = vmatpush1.bf16.msra.mxu0 %v5920
        %7528 = vmatprep.subr.bf16.mxu0 %v5925
        %7529 = vmatpush1.bf16.msra.mxu0 %v5924
        %7530 = vmatprep.subr.bf16.mxu0 %v5929
        %7531 = vmatpush1.bf16.msra.mxu0 %v5928
        %7532 = vmatprep.subr.bf16.mxu0 %v5933
        %7533 = vmatpush1.bf16.msra.mxu0 %v5932
        %7534 = vmatprep.subr.bf16.mxu0 %v5937
        %7535 = vmatpush1.bf16.msra.mxu0 %v5936
        %7536 = vmatprep.subr.bf16.mxu0 %v5941
        %7537 = vmatpush1.bf16.msra.mxu0 %v5940
        %7538 = vmatprep.mubr.bf16.mxu0 %v1498
        %7539 = vmatmul.mubr.bf16.gmra.mrb[0].mxu0 %v1497
        %v7540 = vpop.f32.mrb[0].mxu0
        %v7541 = vadd.f32 %v7500, %v7540
        %v7542 = vpop.f32.mrb[0].mxu0
        %v7543 = vadd.f32 %v7502, %v7542
        %v7544 = vpop.f32.mrb[0].mxu0
        %v7545 = vpop.f32.mrb[0].mxu0
        %7546 = vdwg.mxu0
        %7547 = vmatprep.subr.bf16.mxu0 %v5945
        %7548 = vmatpush1.bf16.msra.mxu0 %v5944
        %7549 = vmatprep.subr.bf16.mxu0 %v5949
        %7550 = vmatpush1.bf16.msra.mxu0 %v5948
        %7551 = vmatprep.subr.bf16.mxu0 %v5953
        %7552 = vmatpush1.bf16.msra.mxu0 %v5952
        %7553 = vmatprep.subr.bf16.mxu0 %v5957
        %7554 = vmatpush1.bf16.msra.mxu0 %v5956
        %7555 = vmatprep.subr.bf16.mxu0 %v5961
        %7556 = vmatpush1.bf16.msra.mxu0 %v5960
        %7557 = vmatprep.subr.bf16.mxu0 %v5965
        %7558 = vmatpush1.bf16.msra.mxu0 %v5964
        %7559 = vmatprep.subr.bf16.mxu0 %v5969
        %7560 = vmatpush1.bf16.msra.mxu0 %v5968
        %7561 = vmatprep.subr.bf16.mxu0 %v5973
        %7562 = vmatpush1.bf16.msra.mxu0 %v5972
        %7563 = vmatprep.subr.bf16.mxu0 %v5977
        %7564 = vmatpush1.bf16.msra.mxu0 %v5976
        %7565 = vmatprep.subr.bf16.mxu0 %v5981
        %7566 = vmatpush1.bf16.msra.mxu0 %v5980
        %7567 = vmatprep.subr.bf16.mxu0 %v5985
        %7568 = vmatpush1.bf16.msra.mxu0 %v5984
        %7569 = vmatprep.subr.bf16.mxu0 %v5989
        %7570 = vmatpush1.bf16.msra.mxu0 %v5988
        %7571 = vmatprep.subr.bf16.mxu0 %v5993
        %7572 = vmatpush1.bf16.msra.mxu0 %v5992
        %7573 = vmatprep.subr.bf16.mxu0 %v5997
        %7574 = vmatpush1.bf16.msra.mxu0 %v5996
        %7575 = vmatprep.subr.bf16.mxu0 %v6001
        %7576 = vmatpush1.bf16.msra.mxu0 %v6000
        %7577 = vmatprep.subr.bf16.mxu0 %v6005
        %7578 = vmatpush1.bf16.msra.mxu0 %v6004
        %7579 = vmatprep.mubr.bf16.mxu0 %v1500
        %7580 = vmatmul.mubr.bf16.gmra.mrb[0].mxu0 %v1499
        %v7581 = vpop.f32.mrb[0].mxu0
        %v7582 = vadd.f32 %v7541, %v7581
        %v7583 = vpop.f32.mrb[0].mxu0
        %v7584 = vadd.f32 %v7543, %v7583
        %v7585 = vpop.f32.mrb[0].mxu0
        %v7586 = vpop.f32.mrb[0].mxu0
        %7587 = vdwg.mxu0
        %7588 = vmatprep.subr.bf16.mxu0 %v6009
        %7589 = vmatpush1.bf16.msra.mxu0 %v6008
        %7590 = vmatprep.subr.bf16.mxu0 %v6013
        %7591 = vmatpush1.bf16.msra.mxu0 %v6012
        %7592 = vmatprep.subr.bf16.mxu0 %v6017
        %7593 = vmatpush1.bf16.msra.mxu0 %v6016
        %7594 = vmatprep.subr.bf16.mxu0 %v6021
        %7595 = vmatpush1.bf16.msra.mxu0 %v6020
        %7596 = vmatprep.subr.bf16.mxu0 %v6025
        %7597 = vmatpush1.bf16.msra.mxu0 %v6024
        %7598 = vmatprep.subr.bf16.mxu0 %v6029
        %7599 = vmatpush1.bf16.msra.mxu0 %v6028
        %7600 = vmatprep.subr.bf16.mxu0 %v6033
        %7601 = vmatpush1.bf16.msra.mxu0 %v6032
        %7602 = vmatprep.subr.bf16.mxu0 %v6037
        %7603 = vmatpush1.bf16.msra.mxu0 %v6036
        %7604 = vmatprep.subr.bf16.mxu0 %v6041
        %7605 = vmatpush1.bf16.msra.mxu0 %v6040
        %7606 = vmatprep.subr.bf16.mxu0 %v6045
        %7607 = vmatpush1.bf16.msra.mxu0 %v6044
        %7608 = vmatprep.subr.bf16.mxu0 %v6049
        %7609 = vmatpush1.bf16.msra.mxu0 %v6048
        %7610 = vmatprep.subr.bf16.mxu0 %v6053
        %7611 = vmatpush1.bf16.msra.mxu0 %v6052
        %7612 = vmatprep.subr.bf16.mxu0 %v6057
        %7613 = vmatpush1.bf16.msra.mxu0 %v6056
        %7614 = vmatprep.subr.bf16.mxu0 %v6061
        %7615 = vmatpush1.bf16.msra.mxu0 %v6060
        %7616 = vmatprep.subr.bf16.mxu0 %v6065
        %7617 = vmatpush1.bf16.msra.mxu0 %v6064
        %7618 = vmatprep.subr.bf16.mxu0 %v6069
        %7619 = vmatpush1.bf16.msra.mxu0 %v6068
        %7620 = vmatprep.mubr.bf16.mxu0 %v1502
        %7621 = vmatmul.mubr.bf16.gmra.mrb[0].mxu0 %v1501
        %v7622 = vpop.f32.mrb[0].mxu0
        %v7623 = vadd.f32 %v7582, %v7622
        %v7624 = vpop.f32.mrb[0].mxu0
        %v7625 = vadd.f32 %v7584, %v7624
        %v7626 = vpop.f32.mrb[0].mxu0
        %v7627 = vpop.f32.mrb[0].mxu0
        %7628 = vdwg.mxu0
        %7629 = vmatprep.subr.bf16.mxu0 %v6073
        %7630 = vmatpush1.bf16.msra.mxu0 %v6072
        %7631 = vmatprep.subr.bf16.mxu0 %v6077
        %7632 = vmatpush1.bf16.msra.mxu0 %v6076
        %7633 = vmatprep.subr.bf16.mxu0 %v6081
        %7634 = vmatpush1.bf16.msra.mxu0 %v6080
        %7635 = vmatprep.subr.bf16.mxu0 %v6085
        %7636 = vmatpush1.bf16.msra.mxu0 %v6084
        %7637 = vmatprep.subr.bf16.mxu0 %v6089
        %7638 = vmatpush1.bf16.msra.mxu0 %v6088
        %7639 = vmatprep.subr.bf16.mxu0 %v6093
        %7640 = vmatpush1.bf16.msra.mxu0 %v6092
        %7641 = vmatprep.subr.bf16.mxu0 %v6097
        %7642 = vmatpush1.bf16.msra.mxu0 %v6096
        %7643 = vmatprep.subr.bf16.mxu0 %v6101
        %7644 = vmatpush1.bf16.msra.mxu0 %v6100
        %7645 = vmatprep.subr.bf16.mxu0 %v6105
        %7646 = vmatpush1.bf16.msra.mxu0 %v6104
        %7647 = vmatprep.subr.bf16.mxu0 %v6109
        %7648 = vmatpush1.bf16.msra.mxu0 %v6108
        %7649 = vmatprep.subr.bf16.mxu0 %v6113
        %7650 = vmatpush1.bf16.msra.mxu0 %v6112
        %7651 = vmatprep.subr.bf16.mxu0 %v6117
        %7652 = vmatpush1.bf16.msra.mxu0 %v6116
        %7653 = vmatprep.subr.bf16.mxu0 %v6121
        %7654 = vmatpush1.bf16.msra.mxu0 %v6120
        %7655 = vmatprep.subr.bf16.mxu0 %v6125
        %7656 = vmatpush1.bf16.msra.mxu0 %v6124
        %7657 = vmatprep.subr.bf16.mxu0 %v6129
        %7658 = vmatpush1.bf16.msra.mxu0 %v6128
        %7659 = vmatprep.subr.bf16.mxu0 %v6133
        %7660 = vmatpush1.bf16.msra.mxu0 %v6132
        %7661 = vmatprep.mubr.bf16.mxu0 %v1504
        %7662 = vmatmul.mubr.bf16.gmra.mrb[0].mxu0 %v1503
        %v7663 = vpop.f32.mrb[0].mxu0
        %v7664 = vadd.f32 %v7623, %v7663
        %v7665 = vpop.f32.mrb[0].mxu0
        %v7666 = vadd.f32 %v7625, %v7665
        %v7667 = vpop.f32.mrb[0].mxu0
        %v7668 = vpop.f32.mrb[0].mxu0
        %7669 = vdwg.mxu0
        %7670 = vmatprep.subr.bf16.mxu0 %v6137
        %7671 = vmatpush1.bf16.msra.mxu0 %v6136
        %7672 = vmatprep.subr.bf16.mxu0 %v6141
        %7673 = vmatpush1.bf16.msra.mxu0 %v6140
        %7674 = vmatprep.subr.bf16.mxu0 %v6145
        %7675 = vmatpush1.bf16.msra.mxu0 %v6144
        %7676 = vmatprep.subr.bf16.mxu0 %v6149
        %7677 = vmatpush1.bf16.msra.mxu0 %v6148
        %7678 = vmatprep.subr.bf16.mxu0 %v6153
        %7679 = vmatpush1.bf16.msra.mxu0 %v6152
        %7680 = vmatprep.subr.bf16.mxu0 %v6157
        %7681 = vmatpush1.bf16.msra.mxu0 %v6156
        %7682 = vmatprep.subr.bf16.mxu0 %v6161
        %7683 = vmatpush1.bf16.msra.mxu0 %v6160
        %7684 = vmatprep.subr.bf16.mxu0 %v6165
        %7685 = vmatpush1.bf16.msra.mxu0 %v6164
        %7686 = vmatprep.subr.bf16.mxu0 0
        %7687 = vmatpush1.bf16.msra.mxu0 0
        %7688 = vmatprep.subr.bf16.mxu0 0
        %7689 = vmatpush1.bf16.msra.mxu0 0
        %7690 = vmatprep.subr.bf16.mxu0 0
        %7691 = vmatpush1.bf16.msra.mxu0 0
        %7692 = vmatprep.subr.bf16.mxu0 0
        %7693 = vmatpush1.bf16.msra.mxu0 0
        %7694 = vmatprep.subr.bf16.mxu0 0
        %7695 = vmatpush1.bf16.msra.mxu0 0
        %7696 = vmatprep.subr.bf16.mxu0 0
        %7697 = vmatpush1.bf16.msra.mxu0 0
        %7698 = vmatprep.subr.bf16.mxu0 0
        %7699 = vmatpush1.bf16.msra.mxu0 0
        %7700 = vmatprep.subr.bf16.mxu0 0
        %7701 = vmatpush1.bf16.msra.mxu0 0
        %7702 = vmatprep.mubr.bf16.mxu0 0
        %7703 = vmatmul.mubr.bf16.gmra.mrb[0].mxu0 %v1505
        %v7704 = vpop.f32.mrb[0].mxu0
        %v7705 = vadd.f32 %v7664, %v7704
        %v7706 = vpop.f32.mrb[0].mxu0
        %v7707 = vadd.f32 %v7666, %v7706
        %v7708 = vpop.f32.mrb[0].mxu0
        %v7709 = vpop.f32.mrb[0].mxu0
        %7710 = vdwg.mxu0
        %7711 = vmatprep.subr.bf16.mxu0 %v5243
        %7712 = vmatpush1.bf16.msra.mxu0 %v5242
        %7713 = vmatprep.subr.bf16.mxu0 %v5247
        %7714 = vmatpush1.bf16.msra.mxu0 %v5246
        %7715 = vmatprep.subr.bf16.mxu0 %v5251
        %7716 = vmatpush1.bf16.msra.mxu0 %v5250
        %7717 = vmatprep.subr.bf16.mxu0 %v5255
        %7718 = vmatpush1.bf16.msra.mxu0 %v5254
        %7719 = vmatprep.subr.bf16.mxu0 %v5259
        %7720 = vmatpush1.bf16.msra.mxu0 %v5258
        %7721 = vmatprep.subr.bf16.mxu0 %v5263
        %7722 = vmatpush1.bf16.msra.mxu0 %v5262
        %7723 = vmatprep.subr.bf16.mxu0 %v5267
        %7724 = vmatpush1.bf16.msra.mxu0 %v5266
        %7725 = vmatprep.subr.bf16.mxu0 %v5271
        %7726 = vmatpush1.bf16.msra.mxu0 %v5270
        %7727 = vmatprep.subr.bf16.mxu0 %v5275
        %7728 = vmatpush1.bf16.msra.mxu0 %v5274
        %7729 = vmatprep.subr.bf16.mxu0 %v5279
        %7730 = vmatpush1.bf16.msra.mxu0 %v5278
        %7731 = vmatprep.subr.bf16.mxu0 %v5283
        %7732 = vmatpush1.bf16.msra.mxu0 %v5282
        %7733 = vmatprep.subr.bf16.mxu0 %v5287
        %7734 = vmatpush1.bf16.msra.mxu0 %v5286
        %7735 = vmatprep.subr.bf16.mxu0 %v5291
        %7736 = vmatpush1.bf16.msra.mxu0 %v5290
        %7737 = vmatprep.subr.bf16.mxu0 %v5295
        %7738 = vmatpush1.bf16.msra.mxu0 %v5294
        %7739 = vmatprep.subr.bf16.mxu0 %v5299
        %7740 = vmatpush1.bf16.msra.mxu0 %v5298
        %7741 = vmatprep.subr.bf16.mxu0 %v5303
        %7742 = vmatpush1.bf16.msra.mxu0 %v5302
        %7743 = vmatprep.mubr.bf16.mxu0 %v1478
        %7744 = vmatmul.mubr.bf16.gmra.mrb[0].mxu0 %v1477
        %v7745 = vpop.f32.mrb[0].mxu0
        %v7746 = vadd.f32 %v2447, %v7745
        %v7747 = vpop.f32.mrb[0].mxu0
        %v7748 = vadd.f32 %v2451, %v7747
        %v7749 = vpop.f32.mrb[0].mxu0
        %v7750 = vpop.f32.mrb[0].mxu0
        %7751 = vdwg.mxu0
        %7752 = vmatprep.subr.bf16.mxu0 %v5307
        %7753 = vmatpush1.bf16.msra.mxu0 %v5306
        %7754 = vmatprep.subr.bf16.mxu0 %v5311
        %7755 = vmatpush1.bf16.msra.mxu0 %v5310
        %7756 = vmatprep.subr.bf16.mxu0 %v5315
        %7757 = vmatpush1.bf16.msra.mxu0 %v5314
        %7758 = vmatprep.subr.bf16.mxu0 %v5319
        %7759 = vmatpush1.bf16.msra.mxu0 %v5318
        %7760 = vmatprep.subr.bf16.mxu0 %v5323
        %7761 = vmatpush1.bf16.msra.mxu0 %v5322
        %7762 = vmatprep.subr.bf16.mxu0 %v5327
        %7763 = vmatpush1.bf16.msra.mxu0 %v5326
        %7764 = vmatprep.subr.bf16.mxu0 %v5331
        %7765 = vmatpush1.bf16.msra.mxu0 %v5330
        %7766 = vmatprep.subr.bf16.mxu0 %v5335
        %7767 = vmatpush1.bf16.msra.mxu0 %v5334
        %7768 = vmatprep.subr.bf16.mxu0 %v5339
        %7769 = vmatpush1.bf16.msra.mxu0 %v5338
        %7770 = vmatprep.subr.bf16.mxu0 %v5343
        %7771 = vmatpush1.bf16.msra.mxu0 %v5342
        %7772 = vmatprep.subr.bf16.mxu0 %v5347
        %7773 = vmatpush1.bf16.msra.mxu0 %v5346
        %7774 = vmatprep.subr.bf16.mxu0 %v5351
        %7775 = vmatpush1.bf16.msra.mxu0 %v5350
        %7776 = vmatprep.subr.bf16.mxu0 %v5355
        %7777 = vmatpush1.bf16.msra.mxu0 %v5354
        %7778 = vmatprep.subr.bf16.mxu0 %v5359
        %7779 = vmatpush1.bf16.msra.mxu0 %v5358
        %7780 = vmatprep.subr.bf16.mxu0 %v5363
        %7781 = vmatpush1.bf16.msra.mxu0 %v5362
        %7782 = vmatprep.subr.bf16.mxu0 %v5367
        %7783 = vmatpush1.bf16.msra.mxu0 %v5366
        %7784 = vmatprep.mubr.bf16.mxu0 %v1480
        %7785 = vmatmul.mubr.bf16.gmra.mrb[0].mxu0 %v1479
        %v7786 = vpop.f32.mrb[0].mxu0
        %v7787 = vadd.f32 %v7746, %v7786
        %v7788 = vpop.f32.mrb[0].mxu0
        %v7789 = vadd.f32 %v7748, %v7788
        %v7790 = vpop.f32.mrb[0].mxu0
        %v7791 = vpop.f32.mrb[0].mxu0
        %7792 = vdwg.mxu0
        %7793 = vmatprep.subr.bf16.mxu0 %v5371
        %7794 = vmatpush1.bf16.msra.mxu0 %v5370
        %7795 = vmatprep.subr.bf16.mxu0 %v5375
        %7796 = vmatpush1.bf16.msra.mxu0 %v5374
        %7797 = vmatprep.subr.bf16.mxu0 %v5379
        %7798 = vmatpush1.bf16.msra.mxu0 %v5378
        %7799 = vmatprep.subr.bf16.mxu0 %v5383
        %7800 = vmatpush1.bf16.msra.mxu0 %v5382
        %7801 = vmatprep.subr.bf16.mxu0 %v5387
        %7802 = vmatpush1.bf16.msra.mxu0 %v5386
        %7803 = vmatprep.subr.bf16.mxu0 %v5391
        %7804 = vmatpush1.bf16.msra.mxu0 %v5390
        %7805 = vmatprep.subr.bf16.mxu0 %v5395
        %7806 = vmatpush1.bf16.msra.mxu0 %v5394
        %7807 = vmatprep.subr.bf16.mxu0 %v5399
        %7808 = vmatpush1.bf16.msra.mxu0 %v5398
        %7809 = vmatprep.subr.bf16.mxu0 %v5403
        %7810 = vmatpush1.bf16.msra.mxu0 %v5402
        %7811 = vmatprep.subr.bf16.mxu0 %v5407
        %7812 = vmatpush1.bf16.msra.mxu0 %v5406
        %7813 = vmatprep.subr.bf16.mxu0 %v5411
        %7814 = vmatpush1.bf16.msra.mxu0 %v5410
        %7815 = vmatprep.subr.bf16.mxu0 %v5415
        %7816 = vmatpush1.bf16.msra.mxu0 %v5414
        %7817 = vmatprep.subr.bf16.mxu0 %v5419
        %7818 = vmatpush1.bf16.msra.mxu0 %v5418
        %7819 = vmatprep.subr.bf16.mxu0 %v5423
        %7820 = vmatpush1.bf16.msra.mxu0 %v5422
        %7821 = vmatprep.subr.bf16.mxu0 %v5427
        %7822 = vmatpush1.bf16.msra.mxu0 %v5426
        %7823 = vmatprep.subr.bf16.mxu0 %v5431
        %7824 = vmatpush1.bf16.msra.mxu0 %v5430
        %7825 = vmatprep.mubr.bf16.mxu0 %v1482
        %7826 = vmatmul.mubr.bf16.gmra.mrb[0].mxu0 %v1481
        %v7827 = vpop.f32.mrb[0].mxu0
        %v7828 = vadd.f32 %v7787, %v7827
        %v7829 = vpop.f32.mrb[0].mxu0
        %v7830 = vadd.f32 %v7789, %v7829
        %v7831 = vpop.f32.mrb[0].mxu0
        %v7832 = vpop.f32.mrb[0].mxu0
        %7833 = vdwg.mxu0
        %7834 = vmatprep.subr.bf16.mxu0 %v5435
        %7835 = vmatpush1.bf16.msra.mxu0 %v5434
        %7836 = vmatprep.subr.bf16.mxu0 %v5439
        %7837 = vmatpush1.bf16.msra.mxu0 %v5438
        %7838 = vmatprep.subr.bf16.mxu0 %v5443
        %7839 = vmatpush1.bf16.msra.mxu0 %v5442
        %7840 = vmatprep.subr.bf16.mxu0 %v5447
        %7841 = vmatpush1.bf16.msra.mxu0 %v5446
        %7842 = vmatprep.subr.bf16.mxu0 %v5451
        %7843 = vmatpush1.bf16.msra.mxu0 %v5450
        %7844 = vmatprep.subr.bf16.mxu0 %v5455
        %7845 = vmatpush1.bf16.msra.mxu0 %v5454
        %7846 = vmatprep.subr.bf16.mxu0 %v5459
        %7847 = vmatpush1.bf16.msra.mxu0 %v5458
        %7848 = vmatprep.subr.bf16.mxu0 %v5463
        %7849 = vmatpush1.bf16.msra.mxu0 %v5462
        %7850 = vmatprep.subr.bf16.mxu0 %v5467
        %7851 = vmatpush1.bf16.msra.mxu0 %v5466
        %7852 = vmatprep.subr.bf16.mxu0 %v5471
        %7853 = vmatpush1.bf16.msra.mxu0 %v5470
        %7854 = vmatprep.subr.bf16.mxu0 %v5475
        %7855 = vmatpush1.bf16.msra.mxu0 %v5474
        %7856 = vmatprep.subr.bf16.mxu0 %v5479
        %7857 = vmatpush1.bf16.msra.mxu0 %v5478
        %7858 = vmatprep.subr.bf16.mxu0 %v5483
        %7859 = vmatpush1.bf16.msra.mxu0 %v5482
        %7860 = vmatprep.subr.bf16.mxu0 %v5487
        %7861 = vmatpush1.bf16.msra.mxu0 %v5486
        %7862 = vmatprep.subr.bf16.mxu0 %v5491
        %7863 = vmatpush1.bf16.msra.mxu0 %v5490
        %7864 = vmatprep.subr.bf16.mxu0 %v5495
        %7865 = vmatpush1.bf16.msra.mxu0 %v5494
        %7866 = vmatprep.mubr.bf16.mxu0 %v1484
        %7867 = vmatmul.mubr.bf16.gmra.mrb[0].mxu0 %v1483
        %v7868 = vpop.f32.mrb[0].mxu0
        %v7869 = vadd.f32 %v7828, %v7868
        %v7870 = vpop.f32.mrb[0].mxu0
        %v7871 = vadd.f32 %v7830, %v7870
        %v7872 = vpop.f32.mrb[0].mxu0
        %v7873 = vpop.f32.mrb[0].mxu0
        %7874 = vdwg.mxu0
        %7875 = vmatprep.subr.bf16.mxu0 %v5499
        %7876 = vmatpush1.bf16.msra.mxu0 %v5498
        %7877 = vmatprep.subr.bf16.mxu0 %v5503
        %7878 = vmatpush1.bf16.msra.mxu0 %v5502
        %7879 = vmatprep.subr.bf16.mxu0 %v5507
        %7880 = vmatpush1.bf16.msra.mxu0 %v5506
        %7881 = vmatprep.subr.bf16.mxu0 %v5511
        %7882 = vmatpush1.bf16.msra.mxu0 %v5510
        %7883 = vmatprep.subr.bf16.mxu0 %v5515
        %7884 = vmatpush1.bf16.msra.mxu0 %v5514
        %7885 = vmatprep.subr.bf16.mxu0 %v5519
        %7886 = vmatpush1.bf16.msra.mxu0 %v5518
        %7887 = vmatprep.subr.bf16.mxu0 %v5523
        %7888 = vmatpush1.bf16.msra.mxu0 %v5522
        %7889 = vmatprep.subr.bf16.mxu0 %v5527
        %7890 = vmatpush1.bf16.msra.mxu0 %v5526
        %7891 = vmatprep.subr.bf16.mxu0 %v5531
        %7892 = vmatpush1.bf16.msra.mxu0 %v5530
        %7893 = vmatprep.subr.bf16.mxu0 %v5535
        %7894 = vmatpush1.bf16.msra.mxu0 %v5534
        %7895 = vmatprep.subr.bf16.mxu0 %v5539
        %7896 = vmatpush1.bf16.msra.mxu0 %v5538
        %7897 = vmatprep.subr.bf16.mxu0 %v5543
        %7898 = vmatpush1.bf16.msra.mxu0 %v5542
        %7899 = vmatprep.subr.bf16.mxu0 %v5547
        %7900 = vmatpush1.bf16.msra.mxu0 %v5546
        %7901 = vmatprep.subr.bf16.mxu0 %v5551
        %7902 = vmatpush1.bf16.msra.mxu0 %v5550
        %7903 = vmatprep.subr.bf16.mxu0 %v5555
        %7904 = vmatpush1.bf16.msra.mxu0 %v5554
        %7905 = vmatprep.subr.bf16.mxu0 %v5559
        %7906 = vmatpush1.bf16.msra.mxu0 %v5558
        %7907 = vmatprep.mubr.bf16.mxu0 %v1486
        %7908 = vmatmul.mubr.bf16.gmra.mrb[0].mxu0 %v1485
        %v7909 = vpop.f32.mrb[0].mxu0
        %v7910 = vadd.f32 %v7869, %v7909
        %v7911 = vpop.f32.mrb[0].mxu0
        %v7912 = vadd.f32 %v7871, %v7911
        %v7913 = vpop.f32.mrb[0].mxu0
        %v7914 = vpop.f32.mrb[0].mxu0
        %7915 = vdwg.mxu0
        %7916 = vmatprep.subr.bf16.mxu0 %v5563
        %7917 = vmatpush1.bf16.msra.mxu0 %v5562
        %7918 = vmatprep.subr.bf16.mxu0 %v5567
        %7919 = vmatpush1.bf16.msra.mxu0 %v5566
        %7920 = vmatprep.subr.bf16.mxu0 %v5571
        %7921 = vmatpush1.bf16.msra.mxu0 %v5570
        %7922 = vmatprep.subr.bf16.mxu0 %v5575
        %7923 = vmatpush1.bf16.msra.mxu0 %v5574
        %7924 = vmatprep.subr.bf16.mxu0 %v5579
        %7925 = vmatpush1.bf16.msra.mxu0 %v5578
        %7926 = vmatprep.subr.bf16.mxu0 %v5583
        %7927 = vmatpush1.bf16.msra.mxu0 %v5582
        %7928 = vmatprep.subr.bf16.mxu0 %v5587
        %7929 = vmatpush1.bf16.msra.mxu0 %v5586
        %7930 = vmatprep.subr.bf16.mxu0 %v5591
        %7931 = vmatpush1.bf16.msra.mxu0 %v5590
        %7932 = vmatprep.subr.bf16.mxu0 %v5595
        %7933 = vmatpush1.bf16.msra.mxu0 %v5594
        %7934 = vmatprep.subr.bf16.mxu0 %v5599
        %7935 = vmatpush1.bf16.msra.mxu0 %v5598
        %7936 = vmatprep.subr.bf16.mxu0 %v5603
        %7937 = vmatpush1.bf16.msra.mxu0 %v5602
        %7938 = vmatprep.subr.bf16.mxu0 %v5607
        %7939 = vmatpush1.bf16.msra.mxu0 %v5606
        %7940 = vmatprep.subr.bf16.mxu0 %v5611
        %7941 = vmatpush1.bf16.msra.mxu0 %v5610
        %7942 = vmatprep.subr.bf16.mxu0 %v5615
        %7943 = vmatpush1.bf16.msra.mxu0 %v5614
        %7944 = vmatprep.subr.bf16.mxu0 %v5619
        %7945 = vmatpush1.bf16.msra.mxu0 %v5618
        %7946 = vmatprep.subr.bf16.mxu0 %v5623
        %7947 = vmatpush1.bf16.msra.mxu0 %v5622
        %7948 = vmatprep.mubr.bf16.mxu0 %v1488
        %7949 = vmatmul.mubr.bf16.gmra.mrb[0].mxu0 %v1487
        %v7950 = vpop.f32.mrb[0].mxu0
        %v7951 = vadd.f32 %v7910, %v7950
        %v7952 = vpop.f32.mrb[0].mxu0
        %v7953 = vadd.f32 %v7912, %v7952
        %v7954 = vpop.f32.mrb[0].mxu0
        %v7955 = vpop.f32.mrb[0].mxu0
        %7956 = vdwg.mxu0
        %7957 = vmatprep.subr.bf16.mxu0 %v5627
        %7958 = vmatpush1.bf16.msra.mxu0 %v5626
        %7959 = vmatprep.subr.bf16.mxu0 %v5631
        %7960 = vmatpush1.bf16.msra.mxu0 %v5630
        %7961 = vmatprep.subr.bf16.mxu0 %v5635
        %7962 = vmatpush1.bf16.msra.mxu0 %v5634
        %7963 = vmatprep.subr.bf16.mxu0 %v5639
        %7964 = vmatpush1.bf16.msra.mxu0 %v5638
        %7965 = vmatprep.subr.bf16.mxu0 %v5643
        %7966 = vmatpush1.bf16.msra.mxu0 %v5642
        %7967 = vmatprep.subr.bf16.mxu0 %v5647
        %7968 = vmatpush1.bf16.msra.mxu0 %v5646
        %7969 = vmatprep.subr.bf16.mxu0 %v5651
        %7970 = vmatpush1.bf16.msra.mxu0 %v5650
        %7971 = vmatprep.subr.bf16.mxu0 %v5655
        %7972 = vmatpush1.bf16.msra.mxu0 %v5654
        %7973 = vmatprep.subr.bf16.mxu0 %v5659
        %7974 = vmatpush1.bf16.msra.mxu0 %v5658
        %7975 = vmatprep.subr.bf16.mxu0 %v5663
        %7976 = vmatpush1.bf16.msra.mxu0 %v5662
        %7977 = vmatprep.subr.bf16.mxu0 %v5667
        %7978 = vmatpush1.bf16.msra.mxu0 %v5666
        %7979 = vmatprep.subr.bf16.mxu0 %v5671
        %7980 = vmatpush1.bf16.msra.mxu0 %v5670
        %7981 = vmatprep.subr.bf16.mxu0 %v5675
        %7982 = vmatpush1.bf16.msra.mxu0 %v5674
        %7983 = vmatprep.subr.bf16.mxu0 %v5679
        %7984 = vmatpush1.bf16.msra.mxu0 %v5678
        %7985 = vmatprep.subr.bf16.mxu0 %v5683
        %7986 = vmatpush1.bf16.msra.mxu0 %v5682
        %7987 = vmatprep.subr.bf16.mxu0 %v5687
        %7988 = vmatpush1.bf16.msra.mxu0 %v5686
        %7989 = vmatprep.mubr.bf16.mxu0 %v1490
        %7990 = vmatmul.mubr.bf16.gmra.mrb[0].mxu0 %v1489
        %v7991 = vpop.f32.mrb[0].mxu0
        %v7992 = vadd.f32 %v7951, %v7991
        %v7993 = vpop.f32.mrb[0].mxu0
        %v7994 = vadd.f32 %v7953, %v7993
        %v7995 = vpop.f32.mrb[0].mxu0
        %v7996 = vpop.f32.mrb[0].mxu0
        %7997 = vdwg.mxu0
        %7998 = vmatprep.subr.bf16.mxu0 %v5691
        %7999 = vmatpush1.bf16.msra.mxu0 %v5690
        %8000 = vmatprep.subr.bf16.mxu0 %v5695
        %8001 = vmatpush1.bf16.msra.mxu0 %v5694
        %8002 = vmatprep.subr.bf16.mxu0 %v5699
        %8003 = vmatpush1.bf16.msra.mxu0 %v5698
        %8004 = vmatprep.subr.bf16.mxu0 %v5703
        %8005 = vmatpush1.bf16.msra.mxu0 %v5702
        %8006 = vmatprep.subr.bf16.mxu0 %v5707
        %8007 = vmatpush1.bf16.msra.mxu0 %v5706
        %8008 = vmatprep.subr.bf16.mxu0 %v5711
        %8009 = vmatpush1.bf16.msra.mxu0 %v5710
        %8010 = vmatprep.subr.bf16.mxu0 %v5715
        %8011 = vmatpush1.bf16.msra.mxu0 %v5714
        %8012 = vmatprep.subr.bf16.mxu0 %v5719
        %8013 = vmatpush1.bf16.msra.mxu0 %v5718
        %8014 = vmatprep.subr.bf16.mxu0 %v5723
        %8015 = vmatpush1.bf16.msra.mxu0 %v5722
        %8016 = vmatprep.subr.bf16.mxu0 %v5727
        %8017 = vmatpush1.bf16.msra.mxu0 %v5726
        %8018 = vmatprep.subr.bf16.mxu0 %v5731
        %8019 = vmatpush1.bf16.msra.mxu0 %v5730
        %8020 = vmatprep.subr.bf16.mxu0 %v5735
        %8021 = vmatpush1.bf16.msra.mxu0 %v5734
        %8022 = vmatprep.subr.bf16.mxu0 %v5739
        %8023 = vmatpush1.bf16.msra.mxu0 %v5738
        %8024 = vmatprep.subr.bf16.mxu0 %v5743
        %8025 = vmatpush1.bf16.msra.mxu0 %v5742
        %8026 = vmatprep.subr.bf16.mxu0 %v5747
        %8027 = vmatpush1.bf16.msra.mxu0 %v5746
        %8028 = vmatprep.subr.bf16.mxu0 %v5751
        %8029 = vmatpush1.bf16.msra.mxu0 %v5750
        %8030 = vmatprep.mubr.bf16.mxu0 %v1492
        %8031 = vmatmul.mubr.bf16.gmra.mrb[0].mxu0 %v1491
        %v8032 = vpop.f32.mrb[0].mxu0
        %v8033 = vadd.f32 %v7992, %v8032
        %v8034 = vpop.f32.mrb[0].mxu0
        %v8035 = vadd.f32 %v7994, %v8034
        %v8036 = vpop.f32.mrb[0].mxu0
        %v8037 = vpop.f32.mrb[0].mxu0
        %8038 = vdwg.mxu0
        %8039 = vmatprep.subr.bf16.mxu0 %v5755
        %8040 = vmatpush1.bf16.msra.mxu0 %v5754
        %8041 = vmatprep.subr.bf16.mxu0 %v5759
        %8042 = vmatpush1.bf16.msra.mxu0 %v5758
        %8043 = vmatprep.subr.bf16.mxu0 %v5763
        %8044 = vmatpush1.bf16.msra.mxu0 %v5762
        %8045 = vmatprep.subr.bf16.mxu0 %v5767
        %8046 = vmatpush1.bf16.msra.mxu0 %v5766
        %8047 = vmatprep.subr.bf16.mxu0 %v5771
        %8048 = vmatpush1.bf16.msra.mxu0 %v5770
        %8049 = vmatprep.subr.bf16.mxu0 %v5775
        %8050 = vmatpush1.bf16.msra.mxu0 %v5774
        %8051 = vmatprep.subr.bf16.mxu0 %v5779
        %8052 = vmatpush1.bf16.msra.mxu0 %v5778
        %8053 = vmatprep.subr.bf16.mxu0 %v5783
        %8054 = vmatpush1.bf16.msra.mxu0 %v5782
        %8055 = vmatprep.subr.bf16.mxu0 %v5787
        %8056 = vmatpush1.bf16.msra.mxu0 %v5786
        %8057 = vmatprep.subr.bf16.mxu0 %v5791
        %8058 = vmatpush1.bf16.msra.mxu0 %v5790
        %8059 = vmatprep.subr.bf16.mxu0 %v5795
        %8060 = vmatpush1.bf16.msra.mxu0 %v5794
        %8061 = vmatprep.subr.bf16.mxu0 %v5799
        %8062 = vmatpush1.bf16.msra.mxu0 %v5798
        %8063 = vmatprep.subr.bf16.mxu0 %v5803
        %8064 = vmatpush1.bf16.msra.mxu0 %v5802
        %8065 = vmatprep.subr.bf16.mxu0 %v5807
        %8066 = vmatpush1.bf16.msra.mxu0 %v5806
        %8067 = vmatprep.subr.bf16.mxu0 %v5811
        %8068 = vmatpush1.bf16.msra.mxu0 %v5810
        %8069 = vmatprep.subr.bf16.mxu0 %v5815
        %8070 = vmatpush1.bf16.msra.mxu0 %v5814
        %8071 = vmatprep.mubr.bf16.mxu0 %v1494
        %8072 = vmatmul.mubr.bf16.gmra.mrb[0].mxu0 %v1493
        %v8073 = vpop.f32.mrb[0].mxu0
        %v8074 = vadd.f32 %v8033, %v8073
        %v8075 = vpop.f32.mrb[0].mxu0
        %v8076 = vadd.f32 %v8035, %v8075
        %v8077 = vpop.f32.mrb[0].mxu0
        %v8078 = vpop.f32.mrb[0].mxu0
        %8079 = vdwg.mxu0
        %8080 = vmatprep.subr.bf16.mxu0 %v5819
        %8081 = vmatpush1.bf16.msra.mxu0 %v5818
        %8082 = vmatprep.subr.bf16.mxu0 %v5823
        %8083 = vmatpush1.bf16.msra.mxu0 %v5822
        %8084 = vmatprep.subr.bf16.mxu0 %v5827
        %8085 = vmatpush1.bf16.msra.mxu0 %v5826
        %8086 = vmatprep.subr.bf16.mxu0 %v5831
        %8087 = vmatpush1.bf16.msra.mxu0 %v5830
        %8088 = vmatprep.subr.bf16.mxu0 %v5835
        %8089 = vmatpush1.bf16.msra.mxu0 %v5834
        %8090 = vmatprep.subr.bf16.mxu0 %v5839
        %8091 = vmatpush1.bf16.msra.mxu0 %v5838
        %8092 = vmatprep.subr.bf16.mxu0 %v5843
        %8093 = vmatpush1.bf16.msra.mxu0 %v5842
        %8094 = vmatprep.subr.bf16.mxu0 %v5847
        %8095 = vmatpush1.bf16.msra.mxu0 %v5846
        %8096 = vmatprep.subr.bf16.mxu0 %v5851
        %8097 = vmatpush1.bf16.msra.mxu0 %v5850
        %8098 = vmatprep.subr.bf16.mxu0 %v5855
        %8099 = vmatpush1.bf16.msra.mxu0 %v5854
        %8100 = vmatprep.subr.bf16.mxu0 %v5859
        %8101 = vmatpush1.bf16.msra.mxu0 %v5858
        %8102 = vmatprep.subr.bf16.mxu0 %v5863
        %8103 = vmatpush1.bf16.msra.mxu0 %v5862
        %8104 = vmatprep.subr.bf16.mxu0 %v5867
        %8105 = vmatpush1.bf16.msra.mxu0 %v5866
        %8106 = vmatprep.subr.bf16.mxu0 %v5871
        %8107 = vmatpush1.bf16.msra.mxu0 %v5870
        %8108 = vmatprep.subr.bf16.mxu0 %v5875
        %8109 = vmatpush1.bf16.msra.mxu0 %v5874
        %8110 = vmatprep.subr.bf16.mxu0 %v5879
        %8111 = vmatpush1.bf16.msra.mxu0 %v5878
        %8112 = vmatprep.mubr.bf16.mxu0 %v1496
        %8113 = vmatmul.mubr.bf16.gmra.mrb[0].mxu0 %v1495
        %v8114 = vpop.f32.mrb[0].mxu0
        %v8115 = vadd.f32 %v8074, %v8114
        %v8116 = vpop.f32.mrb[0].mxu0
        %v8117 = vadd.f32 %v8076, %v8116
        %v8118 = vpop.f32.mrb[0].mxu0
        %v8119 = vpop.f32.mrb[0].mxu0
        %8120 = vdwg.mxu0
        %8121 = vmatprep.subr.bf16.mxu0 %v5883
        %8122 = vmatpush1.bf16.msra.mxu0 %v5882
        %8123 = vmatprep.subr.bf16.mxu0 %v5887
        %8124 = vmatpush1.bf16.msra.mxu0 %v5886
        %8125 = vmatprep.subr.bf16.mxu0 %v5891
        %8126 = vmatpush1.bf16.msra.mxu0 %v5890
        %8127 = vmatprep.subr.bf16.mxu0 %v5895
        %8128 = vmatpush1.bf16.msra.mxu0 %v5894
        %8129 = vmatprep.subr.bf16.mxu0 %v5899
        %8130 = vmatpush1.bf16.msra.mxu0 %v5898
        %8131 = vmatprep.subr.bf16.mxu0 %v5903
        %8132 = vmatpush1.bf16.msra.mxu0 %v5902
        %8133 = vmatprep.subr.bf16.mxu0 %v5907
        %8134 = vmatpush1.bf16.msra.mxu0 %v5906
        %8135 = vmatprep.subr.bf16.mxu0 %v5911
        %8136 = vmatpush1.bf16.msra.mxu0 %v5910
        %8137 = vmatprep.subr.bf16.mxu0 %v5915
        %8138 = vmatpush1.bf16.msra.mxu0 %v5914
        %8139 = vmatprep.subr.bf16.mxu0 %v5919
        %8140 = vmatpush1.bf16.msra.mxu0 %v5918
        %8141 = vmatprep.subr.bf16.mxu0 %v5923
        %8142 = vmatpush1.bf16.msra.mxu0 %v5922
        %8143 = vmatprep.subr.bf16.mxu0 %v5927
        %8144 = vmatpush1.bf16.msra.mxu0 %v5926
        %8145 = vmatprep.subr.bf16.mxu0 %v5931
        %8146 = vmatpush1.bf16.msra.mxu0 %v5930
        %8147 = vmatprep.subr.bf16.mxu0 %v5935
        %8148 = vmatpush1.bf16.msra.mxu0 %v5934
        %8149 = vmatprep.subr.bf16.mxu0 %v5939
        %8150 = vmatpush1.bf16.msra.mxu0 %v5938
        %8151 = vmatprep.subr.bf16.mxu0 %v5943
        %8152 = vmatpush1.bf16.msra.mxu0 %v5942
        %8153 = vmatprep.mubr.bf16.mxu0 %v1498
        %8154 = vmatmul.mubr.bf16.gmra.mrb[0].mxu0 %v1497
        %v8155 = vpop.f32.mrb[0].mxu0
        %v8156 = vadd.f32 %v8115, %v8155
        %v8157 = vpop.f32.mrb[0].mxu0
        %v8158 = vadd.f32 %v8117, %v8157
        %v8159 = vpop.f32.mrb[0].mxu0
        %v8160 = vpop.f32.mrb[0].mxu0
        %8161 = vdwg.mxu0
        %8162 = vmatprep.subr.bf16.mxu0 %v5947
        %8163 = vmatpush1.bf16.msra.mxu0 %v5946
        %8164 = vmatprep.subr.bf16.mxu0 %v5951
        %8165 = vmatpush1.bf16.msra.mxu0 %v5950
        %8166 = vmatprep.subr.bf16.mxu0 %v5955
        %8167 = vmatpush1.bf16.msra.mxu0 %v5954
        %8168 = vmatprep.subr.bf16.mxu0 %v5959
        %8169 = vmatpush1.bf16.msra.mxu0 %v5958
        %8170 = vmatprep.subr.bf16.mxu0 %v5963
        %8171 = vmatpush1.bf16.msra.mxu0 %v5962
        %8172 = vmatprep.subr.bf16.mxu0 %v5967
        %8173 = vmatpush1.bf16.msra.mxu0 %v5966
        %8174 = vmatprep.subr.bf16.mxu0 %v5971
        %8175 = vmatpush1.bf16.msra.mxu0 %v5970
        %8176 = vmatprep.subr.bf16.mxu0 %v5975
        %8177 = vmatpush1.bf16.msra.mxu0 %v5974
        %8178 = vmatprep.subr.bf16.mxu0 %v5979
        %8179 = vmatpush1.bf16.msra.mxu0 %v5978
        %8180 = vmatprep.subr.bf16.mxu0 %v5983
        %8181 = vmatpush1.bf16.msra.mxu0 %v5982
        %8182 = vmatprep.subr.bf16.mxu0 %v5987
        %8183 = vmatpush1.bf16.msra.mxu0 %v5986
        %8184 = vmatprep.subr.bf16.mxu0 %v5991
        %8185 = vmatpush1.bf16.msra.mxu0 %v5990
        %8186 = vmatprep.subr.bf16.mxu0 %v5995
        %8187 = vmatpush1.bf16.msra.mxu0 %v5994
        %8188 = vmatprep.subr.bf16.mxu0 %v5999
        %8189 = vmatpush1.bf16.msra.mxu0 %v5998
        %8190 = vmatprep.subr.bf16.mxu0 %v6003
        %8191 = vmatpush1.bf16.msra.mxu0 %v6002
        %8192 = vmatprep.subr.bf16.mxu0 %v6007
        %8193 = vmatpush1.bf16.msra.mxu0 %v6006
        %8194 = vmatprep.mubr.bf16.mxu0 %v1500
        %8195 = vmatmul.mubr.bf16.gmra.mrb[0].mxu0 %v1499
        %v8196 = vpop.f32.mrb[0].mxu0
        %v8197 = vadd.f32 %v8156, %v8196
        %v8198 = vpop.f32.mrb[0].mxu0
        %v8199 = vadd.f32 %v8158, %v8198
        %v8200 = vpop.f32.mrb[0].mxu0
        %v8201 = vpop.f32.mrb[0].mxu0
        %8202 = vdwg.mxu0
        %8203 = vmatprep.subr.bf16.mxu0 %v6011
        %8204 = vmatpush1.bf16.msra.mxu0 %v6010
        %8205 = vmatprep.subr.bf16.mxu0 %v6015
        %8206 = vmatpush1.bf16.msra.mxu0 %v6014
        %8207 = vmatprep.subr.bf16.mxu0 %v6019
        %8208 = vmatpush1.bf16.msra.mxu0 %v6018
        %8209 = vmatprep.subr.bf16.mxu0 %v6023
        %8210 = vmatpush1.bf16.msra.mxu0 %v6022
        %8211 = vmatprep.subr.bf16.mxu0 %v6027
        %8212 = vmatpush1.bf16.msra.mxu0 %v6026
        %8213 = vmatprep.subr.bf16.mxu0 %v6031
        %8214 = vmatpush1.bf16.msra.mxu0 %v6030
        %8215 = vmatprep.subr.bf16.mxu0 %v6035
        %8216 = vmatpush1.bf16.msra.mxu0 %v6034
        %8217 = vmatprep.subr.bf16.mxu0 %v6039
        %8218 = vmatpush1.bf16.msra.mxu0 %v6038
        %8219 = vmatprep.subr.bf16.mxu0 %v6043
        %8220 = vmatpush1.bf16.msra.mxu0 %v6042
        %8221 = vmatprep.subr.bf16.mxu0 %v6047
        %8222 = vmatpush1.bf16.msra.mxu0 %v6046
        %8223 = vmatprep.subr.bf16.mxu0 %v6051
        %8224 = vmatpush1.bf16.msra.mxu0 %v6050
        %8225 = vmatprep.subr.bf16.mxu0 %v6055
        %8226 = vmatpush1.bf16.msra.mxu0 %v6054
        %8227 = vmatprep.subr.bf16.mxu0 %v6059
        %8228 = vmatpush1.bf16.msra.mxu0 %v6058
        %8229 = vmatprep.subr.bf16.mxu0 %v6063
        %8230 = vmatpush1.bf16.msra.mxu0 %v6062
        %8231 = vmatprep.subr.bf16.mxu0 %v6067
        %8232 = vmatpush1.bf16.msra.mxu0 %v6066
        %8233 = vmatprep.subr.bf16.mxu0 %v6071
        %8234 = vmatpush1.bf16.msra.mxu0 %v6070
        %8235 = vmatprep.mubr.bf16.mxu0 %v1502
        %8236 = vmatmul.mubr.bf16.gmra.mrb[0].mxu0 %v1501
        %v8237 = vpop.f32.mrb[0].mxu0
        %v8238 = vadd.f32 %v8197, %v8237
        %v8239 = vpop.f32.mrb[0].mxu0
        %v8240 = vadd.f32 %v8199, %v8239
        %v8241 = vpop.f32.mrb[0].mxu0
        %v8242 = vpop.f32.mrb[0].mxu0
        %8243 = vdwg.mxu0
        %8244 = vmatprep.subr.bf16.mxu0 %v6075
        %8245 = vmatpush1.bf16.msra.mxu0 %v6074
        %8246 = vmatprep.subr.bf16.mxu0 %v6079
        %8247 = vmatpush1.bf16.msra.mxu0 %v6078
        %8248 = vmatprep.subr.bf16.mxu0 %v6083
        %8249 = vmatpush1.bf16.msra.mxu0 %v6082
        %8250 = vmatprep.subr.bf16.mxu0 %v6087
        %8251 = vmatpush1.bf16.msra.mxu0 %v6086
        %8252 = vmatprep.subr.bf16.mxu0 %v6091
        %8253 = vmatpush1.bf16.msra.mxu0 %v6090
        %8254 = vmatprep.subr.bf16.mxu0 %v6095
        %8255 = vmatpush1.bf16.msra.mxu0 %v6094
        %8256 = vmatprep.subr.bf16.mxu0 %v6099
        %8257 = vmatpush1.bf16.msra.mxu0 %v6098
        %8258 = vmatprep.subr.bf16.mxu0 %v6103
        %8259 = vmatpush1.bf16.msra.mxu0 %v6102
        %8260 = vmatprep.subr.bf16.mxu0 %v6107
        %8261 = vmatpush1.bf16.msra.mxu0 %v6106
        %8262 = vmatprep.subr.bf16.mxu0 %v6111
        %8263 = vmatpush1.bf16.msra.mxu0 %v6110
        %8264 = vmatprep.subr.bf16.mxu0 %v6115
        %8265 = vmatpush1.bf16.msra.mxu0 %v6114
        %8266 = vmatprep.subr.bf16.mxu0 %v6119
        %8267 = vmatpush1.bf16.msra.mxu0 %v6118
        %8268 = vmatprep.subr.bf16.mxu0 %v6123
        %8269 = vmatpush1.bf16.msra.mxu0 %v6122
        %8270 = vmatprep.subr.bf16.mxu0 %v6127
        %8271 = vmatpush1.bf16.msra.mxu0 %v6126
        %8272 = vmatprep.subr.bf16.mxu0 %v6131
        %8273 = vmatpush1.bf16.msra.mxu0 %v6130
        %8274 = vmatprep.subr.bf16.mxu0 %v6135
        %8275 = vmatpush1.bf16.msra.mxu0 %v6134
        %8276 = vmatprep.mubr.bf16.mxu0 %v1504
        %8277 = vmatmul.mubr.bf16.gmra.mrb[0].mxu0 %v1503
        %v8278 = vpop.f32.mrb[0].mxu0
        %v8279 = vadd.f32 %v8238, %v8278
        %v8280 = vpop.f32.mrb[0].mxu0
        %v8281 = vadd.f32 %v8240, %v8280
        %v8282 = vpop.f32.mrb[0].mxu0
        %v8283 = vpop.f32.mrb[0].mxu0
        %8284 = vdwg.mxu0
        %8285 = vmatprep.subr.bf16.mxu0 %v6139
        %8286 = vmatpush1.bf16.msra.mxu0 %v6138
        %8287 = vmatprep.subr.bf16.mxu0 %v6143
        %8288 = vmatpush1.bf16.msra.mxu0 %v6142
        %8289 = vmatprep.subr.bf16.mxu0 %v6147
        %8290 = vmatpush1.bf16.msra.mxu0 %v6146
        %8291 = vmatprep.subr.bf16.mxu0 %v6151
        %8292 = vmatpush1.bf16.msra.mxu0 %v6150
        %8293 = vmatprep.subr.bf16.mxu0 %v6155
        %8294 = vmatpush1.bf16.msra.mxu0 %v6154
        %8295 = vmatprep.subr.bf16.mxu0 %v6159
        %8296 = vmatpush1.bf16.msra.mxu0 %v6158
        %8297 = vmatprep.subr.bf16.mxu0 %v6163
        %8298 = vmatpush1.bf16.msra.mxu0 %v6162
        %8299 = vmatprep.subr.bf16.mxu0 %v6167
        %8300 = vmatpush1.bf16.msra.mxu0 %v6166
        %8301 = vmatprep.subr.bf16.mxu0 0
        %8302 = vmatpush1.bf16.msra.mxu0 0
        %8303 = vmatprep.subr.bf16.mxu0 0
        %8304 = vmatpush1.bf16.msra.mxu0 0
        %8305 = vmatprep.subr.bf16.mxu0 0
        %8306 = vmatpush1.bf16.msra.mxu0 0
        %8307 = vmatprep.subr.bf16.mxu0 0
        %8308 = vmatpush1.bf16.msra.mxu0 0
        %8309 = vmatprep.subr.bf16.mxu0 0
        %8310 = vmatpush1.bf16.msra.mxu0 0
        %8311 = vmatprep.subr.bf16.mxu0 0
        %8312 = vmatpush1.bf16.msra.mxu0 0
        %8313 = vmatprep.subr.bf16.mxu0 0
        %8314 = vmatpush1.bf16.msra.mxu0 0
        %8315 = vmatprep.subr.bf16.mxu0 0
        %8316 = vmatpush1.bf16.msra.mxu0 0
        %8317 = vmatprep.mubr.bf16.mxu0 0
        %8318 = vmatmul.mubr.bf16.gmra.mrb[0].mxu0 %v1505
        %v8319 = vpop.f32.mrb[0].mxu0
        %v8320 = vadd.f32 %v8279, %v8319
        %v8321 = vpop.f32.mrb[0].mxu0
        %v8322 = vadd.f32 %v8281, %v8321
        %v8323 = vpop.f32.mrb[0].mxu0
        %v8324 = vpop.f32.mrb[0].mxu0
        %8325 = vdwg.mxu0
        %8326 = vst [vmem:[%s300] sm:$0xff] %v7705
        %8327 = vst [vmem:[%s300 + $0x8] sm:$0xff] %v7707
        %8328 = vst [vmem:[%s300 + $0x10] sm:$0xff] %v8320
        %8329 = vst [vmem:[%s300 + $0x18] sm:$0xff] %v8322
        %s8330 = sand.u32 %s144, 1
        %s8331 = scalar_lea.sflag [#allocation4], %s8330
        %s8332 = sand.u32 %s144, 1
        %s8333 = smul.addr %s8332, 32
        %s8334 = scalar_lea.vmem [#allocation9], %s8333
        // Predicated region
        $region57: #{tpu_custom_call.1} parent=39 // pred_check
          %p8335 = pneg %p154
        $region58: #{tpu_custom_call.1} parent=39 // pred_check_branch
          %8337 = sbr.rel (%p8335) target = $region60
        $region59: #{tpu_custom_call.1} parent=39 // pred_region
          %s8338 = smul.u32 4, %s21
          %s8340 = ssub.s32 512, 512
          %8341 = vsyncadd %s8331, %s8340
          %s8342 = smul.addr %s8338, 128
          %s8343 = scalar_lea.hbm %s5, %s8342
          %s8345 = sshll.u32 %s8334, 4
          %s8346 = int_to_ptr.vmem [resolvable:$true] %s8345
          %8348 = dma.vmem_to_hbm [thread:$0]  %s8346, 512, %s8343, %s8331
        $region60: #{tpu_custom_call.1} parent=39 // pred_fallthru
          _
      $region40: #{tpu_custom_call.1} parent=5 // pred_fallthru
        _
      %p8349 = scmp.le.s32.totalorder 2, %s16
      // Predicated region
      $region61: #{tpu_custom_call.1} parent=5 // pred_check
        %p8350 = pneg %p8349
      $region62: #{tpu_custom_call.1} parent=5 // pred_check_branch
        %8352 = sbr.rel (%p8350) target = $region64
      $region63: #{tpu_custom_call.1} parent=5 // pred_region
        %s8353 = ssub.s32 %s16, 2
        // Predicated region
        $region65: #{tpu_custom_call.1} parent=63 // pred_check
          %p8354 = pneg %p160
        $region66: #{tpu_custom_call.1} parent=63 // pred_check_branch
          %8356 = sbr.rel (%p8354) target = $region68
        $region67: #{tpu_custom_call.1} parent=63 // pred_region
          %s8357 = sand.u32 %s145, 1
          %s8358 = scalar_lea.sflag [#allocation4], %s8357
          %s8359 = sand.u32 %s145, 1
          %s8360 = smul.addr %s8359, 32
          %s8361 = scalar_lea.vmem [#allocation9], %s8360
          %8362 = dma.done %s8358, 512
        $region68: #{tpu_custom_call.1} parent=63 // pred_fallthru
          _
      $region64: #{tpu_custom_call.1} parent=5 // pred_fallthru
        _
    $region6: #{tpu_custom_call.1} parent=1 // loop_footer
      %s20 = sadd.s32 1, %s16
    $region7: #{tpu_custom_call.1} parent=1 // loop_footer_branch
      %15 = sbr.rel target = $region3
    $region8: #{tpu_custom_call.1} parent=1 // loop_exit
      _
    %8363 = vsyncpa [#allocation3], 1
    %s8364 = scalar_lea.sflag [#allocation3], 1
    %8365 = vsyncpa %s8364, 1
    %8366 = vsyncpa [#allocation6], 1
    %8367 = vsyncpa [#allocation4], 1
    %s8368 = scalar_lea.sflag [#allocation4], 1
    %8369 = vsyncpa %s8368, 1

</llo_original>
